<compile_context>
chip_gen: v6e
topology: v6e:2x2x1
jax: 0.10.0
libtpu: 0.0.40
codegen_flags: <defaults>
</compile_context>

<pallas_src>
import jax
import jax.numpy as jnp
from jax.experimental import pallas as pl
from jax.experimental.pallas import tpu as pltpu

IMG = 28
H1, W1 = 36, 48          # conv1 padded raster
OY, OX = 6, 6            # image offset inside the conv1 raster
R1 = H1 * W1             # 1728 flattened conv1-input rows
R1_PAD = R1 + 8          # room for the widest ky-chunk read
H2, W2 = 18, 24          # conv2 raster (= pooled conv1 raster)
R2 = H2 * W2             # 432
R2_PAD = R2 + 8
C1, C2 = 32, 64
FC1, NCLS = 128, 10


# ---------------------------------------------------------------------------
# Fused kernel: conv1+pool1 -> conv2+pool2 -> fc1 -> fc2 (one sample / step)
# ---------------------------------------------------------------------------
def mnist_kernel(x_ref, w1_ref, b1_ref, w2_ref, b2_ref,
                 w3_ref, b3_ref, w4_ref, b4_ref, o_ref,
                 x2_ref, row1_ref, row2_ref, fc1_ref):
    f32 = jnp.float32

    # Per-sample init: zero conv2 input raster (its padding ring must be 0)
    # and the fc1 accumulator.  Scratch persists across grid steps.
    x2_ref[...] = jnp.zeros_like(x2_ref)
    fc1_ref[...] = jnp.zeros_like(fc1_ref)

    b1 = b1_ref[...]                                   # (1, 32)
    b2 = b2_ref[...]                                   # (1, 64)

    # Valid pooled columns live at [2, 16) of the 24-wide pooled raster.
    col = jax.lax.broadcasted_iota(jnp.int32, (W2, C1), 0)
    col_mask = jnp.logical_and(col >= 2, col < 2 + 14)

    # ---------------- conv1 (5x5, Cin=1) + bias + ReLU ----------------------
    def conv1_row(r):                                  # r: conv1 raster row
        acc = jnp.zeros((W1, C1), f32)
        for ky in range(5):
            # 8-aligned dynamic start; kx handled by static value slices.
            chunk = x_ref[0, pl.ds((r + ky) * W1, W1 + 8), :]     # (56, 1)
            for kx in range(5):
                t = ky * 5 + kx
                acc = acc + chunk[kx:kx + W1, :] * w1_ref[pl.ds(t, 1), :]
        return jnp.maximum(acc + b1, 0.0)              # (48, 32)

    # pooled row m (valid m in [2,16)) = max over conv1 raster rows 2m, 2m+1
    @pl.loop(2, 2 + 14)
    def _pool1(m):
        row1_ref[...] = jnp.maximum(conv1_row(2 * m), conv1_row(2 * m + 1))
        pooled = jnp.maximum(row1_ref[pl.ds(0, W2, 2), :],
                             row1_ref[pl.ds(1, W2, 2), :])        # (24, 32)
        x2_ref[pl.ds(m * W2, W2), :] = jnp.where(col_mask, pooled, 0.0)

    # ------------- conv2 (5x5) + bias + ReLU + pool2 + fc1 ------------------
    def conv2_row(r):                                  # r: conv2 raster row
        acc = jnp.zeros((W2, C2), f32)
        for ky in range(5):
            chunk = x2_ref[pl.ds((r + ky) * W2, W2 + 8), :]       # (32, 32)
            for kx in range(5):
                lhs = chunk[kx:kx + W2, :].astype(jnp.bfloat16)   # (24, 32)
                acc = acc + jnp.dot(lhs, w2_ref[ky * 5 + kx],
                                    preferred_element_type=f32)
        return jnp.maximum(acc + b2, 0.0)              # (24, 64)

    @pl.loop(0, 7)
    def _pool2(p):
        row2_ref[...] = jnp.maximum(conv2_row(2 * p), conv2_row(2 * p + 1))
        pooled = jnp.maximum(row2_ref[pl.ds(0, W2 // 2, 2), :],
                             row2_ref[pl.ds(1, W2 // 2, 2), :])   # (12, 64)
        for q in range(7):
            feat = pooled[q:q + 1, :].astype(jnp.bfloat16)        # (1, 64)
            fc1_ref[...] += jnp.dot(feat, w3_ref[p * 7 + q],
                                    preferred_element_type=f32)

    # --------------------------------- head ---------------------------------
    h = fc1_ref[...] + b3_ref[...]                                # (1, 128)
    logits = jnp.dot(h.astype(jnp.bfloat16), w4_ref[...],
                     preferred_element_type=f32) + b4_ref[...]    # (1, 10)
    o_ref[0] = logits


# ---------------------------------------------------------------------------
# Wrapper
# ---------------------------------------------------------------------------
def mnist500k_forward(x_nchw, params):
    n = x_nchw.shape[0]
    img = x_nchw[:, 0, :, :].astype(jnp.float32)                  # (N, 28, 28)
    xpad = jnp.pad(img, ((0, 0), (OY, H1 - IMG - OY), (OX, W1 - IMG - OX)))
    xflat = jnp.pad(xpad.reshape(n, R1), ((0, 0), (0, R1_PAD - R1)))
    xflat = xflat[..., None]                                      # (N, 1736, 1)

    operands = (xflat, params["w1"], params["b1"], params["w2"], params["b2"],
                params["w3"], params["b3"], params["w4"], params["b4"])

    flops = n * (IMG * IMG * 25 * C1 * 2
                 + 14 * 14 * 25 * C1 * C2 * 2
                 + 49 * C2 * FC1 * 2
                 + FC1 * NCLS * 2)
    bytes_accessed = int(sum(a.size * a.dtype.itemsize for a in operands)
                         + n * NCLS * 4)

    grid_spec = pltpu.PrefetchScalarGridSpec(
        num_scalar_prefetch=0,
        grid=(n,),
        in_specs=[
            pl.BlockSpec((1, R1_PAD, 1), lambda i: (i, 0, 0)),    # input
            pl.BlockSpec((25, C1), lambda i: (0, 0)),             # w1
            pl.BlockSpec((1, C1), lambda i: (0, 0)),              # b1
            pl.BlockSpec((25, C1, C2), lambda i: (0, 0, 0)),      # w2 (bf16)
            pl.BlockSpec((1, C2), lambda i: (0, 0)),              # b2
            pl.BlockSpec((49, C2, FC1), lambda i: (0, 0, 0)),     # w3 (bf16)
            pl.BlockSpec((1, FC1), lambda i: (0, 0)),             # b3
            pl.BlockSpec((FC1, NCLS), lambda i: (0, 0)),          # w4 (bf16)
            pl.BlockSpec((1, NCLS), lambda i: (0, 0)),            # b4
        ],
        out_specs=pl.BlockSpec((1, 1, NCLS), lambda i: (i, 0, 0)),
        scratch_shapes=[
            pltpu.VMEM((R2_PAD, C1), jnp.float32),   # conv2 input raster
            pltpu.VMEM((W1, C1), jnp.float32),       # conv1 row buffer
            pltpu.VMEM((W2, C2), jnp.float32),       # conv2 row buffer
            pltpu.VMEM((1, FC1), jnp.float32),       # fc1 accumulator
        ],
    )

    logits = pl.pallas_call(
        mnist_kernel,
        out_shape=jax.ShapeDtypeStruct((n, 1, NCLS), jnp.float32),
        grid_spec=grid_spec,
        compiler_params=pltpu.CompilerParams(
            dimension_semantics=("parallel",),
            vmem_limit_bytes=32 << 20,
        ),
        cost_estimate=pl.CostEstimate(flops=int(flops), transcendentals=0,
                                      bytes_accessed=bytes_accessed),
    )(*operands)

    logits = logits.reshape(n, NCLS)
    # TODO(synk): log_softmax over dim=0 (across the batch) runs as one tiny
    # XLA op outside the batch-parallel kernel (20 elements).
    return jax.nn.log_softmax(logits, axis=0)


# ---------------------------------------------------------------------------
# Deterministic synthetic parameters (eval-mode).
# Layouts:  w1[ky*5+kx, co]          <-> conv1.weight[co, 0, ky, kx]
#           w2[ky*5+kx, ci, co]      <-> conv2.weight[co, ci, ky, kx]
#           w3[p*7+q, ci, o]         <-> fc1.weight[o, ci*49 + p*7 + q]
#           w4[h, o]                 <-> fc2.weight[o, h]
# ---------------------------------------------------------------------------
def init_params(key):
    ks = jax.random.split(key, 8)
    w1 = jax.random.normal(ks[0], (25, C1), jnp.float32) * (2.0 / 25) ** 0.5
    b1 = 0.01 * jax.random.normal(ks[1], (1, C1), jnp.float32)
    w2 = (jax.random.normal(ks[2], (25, C1, C2), jnp.float32)
          * (2.0 / (25 * C1)) ** 0.5).astype(jnp.bfloat16)
    b2 = 0.01 * jax.random.normal(ks[3], (1, C2), jnp.float32)
    w3 = (jax.random.normal(ks[4], (49, C2, FC1), jnp.float32)
          * (1.0 / (49 * C2)) ** 0.5).astype(jnp.bfloat16)
    b3 = 0.01 * jax.random.normal(ks[5], (1, FC1), jnp.float32)
    w4 = (jax.random.normal(ks[6], (FC1, NCLS), jnp.float32)
          * (1.0 / FC1) ** 0.5).astype(jnp.bfloat16)
    b4 = 0.01 * jax.random.normal(ks[7], (1, NCLS), jnp.float32)
    return dict(w1=w1, b1=b1, w2=w2, b2=b2, w3=w3, b3=b3, w4=w4, b4=b4)


if __name__ == "__main__":
    key = jax.random.PRNGKey(0)
    k_params, k_x = jax.random.split(key)
    params = init_params(k_params)

    # MNIST-shaped input, NCHW as PyTorch would provide: batch=2, 1x28x28.
    x = jax.random.normal(k_x, (2, 1, 28, 28), jnp.float32)

    fwd = jax.jit(mnist500k_forward)
    out = jax.block_until_ready(fwd(x, params))

    assert out.shape == (2, 10)
    assert bool(jnp.all(jnp.isfinite(out)))
    print("KERNEL_OK")
</pallas_src>

<mosaic_0001>
module attributes {stable_mosaic.version = 11 : i64} {
  func.func @mnist_kernel(%arg0: i32, %arg1: memref<1x1736x1xf32, #tpu.memory_space<vmem>>, %arg2: memref<25x32xf32, #tpu.memory_space<vmem>>, %arg3: memref<1x32xf32, #tpu.memory_space<vmem>>, %arg4: memref<25x32x64xbf16, #tpu.memory_space<vmem>>, %arg5: memref<1x64xf32, #tpu.memory_space<vmem>>, %arg6: memref<49x64x128xbf16, #tpu.memory_space<vmem>>, %arg7: memref<1x128xf32, #tpu.memory_space<vmem>>, %arg8: memref<128x10xbf16, #tpu.memory_space<vmem>>, %arg9: memref<1x10xf32, #tpu.memory_space<vmem>>, %arg10: memref<1x1x10xf32, #tpu.memory_space<vmem>>, %arg11: memref<440x32xf32, #tpu.memory_space<vmem>>, %arg12: memref<48x32xf32, #tpu.memory_space<vmem>>, %arg13: memref<24x64xf32, #tpu.memory_space<vmem>>, %arg14: memref<1x128xf32, #tpu.memory_space<vmem>>) attributes {dimension_semantics = [#tpu.dimension_semantics<parallel>], iteration_bounds = array<i64: 2>, scalar_prefetch = 0 : i64, scratch_operands = 4 : i64, tpu.core_type = #tpu.core_type<tc>, window_params = [{transform_indices = @transform_0, window_bounds = array<i64: 1, 1736, 1>}, {pipeline_mode = #tpu.pipeline_mode<synchronous>, transform_indices = @transform_1, window_bounds = array<i64: 25, 32>}, {pipeline_mode = #tpu.pipeline_mode<synchronous>, transform_indices = @transform_2, window_bounds = array<i64: 1, 32>}, {pipeline_mode = #tpu.pipeline_mode<synchronous>, transform_indices = @transform_3, window_bounds = array<i64: 25, 32, 64>}, {pipeline_mode = #tpu.pipeline_mode<synchronous>, transform_indices = @transform_4, window_bounds = array<i64: 1, 64>}, {pipeline_mode = #tpu.pipeline_mode<synchronous>, transform_indices = @transform_5, window_bounds = array<i64: 49, 64, 128>}, {pipeline_mode = #tpu.pipeline_mode<synchronous>, transform_indices = @transform_6, window_bounds = array<i64: 1, 128>}, {pipeline_mode = #tpu.pipeline_mode<synchronous>, transform_indices = @transform_7, window_bounds = array<i64: 128, 10>}, {pipeline_mode = #tpu.pipeline_mode<synchronous>, transform_indices = @transform_8, window_bounds = array<i64: 1, 10>}, {transform_indices = @transform_9, window_bounds = array<i64: 1, 1, 10>}]} {
    %cst = arith.constant 0.000000e+00 : f32
    %0 = vector.broadcast %cst : f32 to vector<440x32xf32>
    %c0 = arith.constant 0 : index
    %c0_0 = arith.constant 0 : index
    %1 = vector.load %arg11[%c0, %c0_0] : memref<440x32xf32, #tpu.memory_space<vmem>>, vector<440x32xf32>
    tpu.vector_store %arg11[%c0, %c0_0], %0 {strides = array<i32>} : memref<440x32xf32, #tpu.memory_space<vmem>>, vector<440x32xf32>,
    %cst_1 = arith.constant 0.000000e+00 : f32
    %2 = vector.broadcast %cst_1 : f32 to vector<1x128xf32>
    %c0_2 = arith.constant 0 : index
    %c0_3 = arith.constant 0 : index
    %3 = vector.load %arg14[%c0_2, %c0_3] : memref<1x128xf32, #tpu.memory_space<vmem>>, vector<1x128xf32>
    tpu.vector_store %arg14[%c0_2, %c0_3], %2 {strides = array<i32>} : memref<1x128xf32, #tpu.memory_space<vmem>>, vector<1x128xf32>,
    %c0_4 = arith.constant 0 : index
    %c0_5 = arith.constant 0 : index
    %4 = vector.load %arg3[%c0_4, %c0_5] : memref<1x32xf32, #tpu.memory_space<vmem>>, vector<1x32xf32>
    %c0_6 = arith.constant 0 : index
    %c0_7 = arith.constant 0 : index
    %5 = vector.load %arg5[%c0_6, %c0_7] : memref<1x64xf32, #tpu.memory_space<vmem>>, vector<1x64xf32>
    %6 = tpu.iota {dimensions = array<i32: 0>} : vector<24x32xi32>
    %c2_i32 = arith.constant 2 : i32
    %7 = vector.broadcast %c2_i32 : i32 to vector<24x32xi32>
    %8 = arith.cmpi sge, %6, %7 : vector<24x32xi32>
    %c16_i32 = arith.constant 16 : i32
    %9 = vector.broadcast %c16_i32 : i32 to vector<24x32xi32>
    %10 = arith.cmpi slt, %6, %9 : vector<24x32xi32>
    %11 = arith.andi %8, %10 : vector<24x32xi1>
    %c0_i32 = arith.constant 0 : i32
    %c14_i32 = arith.constant 14 : i32
    %12 = arith.addi %c0_i32, %c14_i32 : i32
    %c1_i32 = arith.constant 1 : i32
    scf.for %arg15 = %c0_i32 to %12 step %c1_i32  : i32 {
      %c1_i32_24 = arith.constant 1 : i32
      %25 = arith.muli %arg15, %c1_i32_24 : i32
      %c2_i32_25 = arith.constant 2 : i32
      %26 = arith.addi %c2_i32_25, %25 : i32
      %c2_i32_26 = arith.constant 2 : i32
      %27 = arith.muli %c2_i32_26, %26 : i32
      %cst_27 = arith.constant 0.000000e+00 : f32
      %28 = vector.broadcast %cst_27 : f32 to vector<48x32xf32>
      %c0_i32_28 = arith.constant 0 : i32
      %29 = arith.addi %27, %c0_i32_28 : i32
      %c48_i32 = arith.constant 48 : i32
      %30 = arith.muli %29, %c48_i32 : i32
      %c0_29 = arith.constant 0 : index
      %31 = arith.index_cast %30 : i32 to index
      %c0_30 = arith.constant 0 : index
      %32 = vector.load %arg1[%c0_29, %31, %c0_30] : memref<1x1736x1xf32, #tpu.memory_space<vmem>>, vector<1x56x1xf32>
      %33 = vector.shape_cast %32 : vector<1x56x1xf32> to vector<56x1xf32>
      %34 = vector.extract_strided_slice %33 {offsets = [0, 0], sizes = [48, 1], strides = [1, 1]} : vector<56x1xf32> to vector<48x1xf32>
      %c0_31 = arith.constant 0 : index
      %c0_32 = arith.constant 0 : index
      %35 = vector.load %arg2[%c0_31, %c0_32] : memref<25x32xf32, #tpu.memory_space<vmem>>, vector<1x32xf32>
      %36 = vector.broadcast %34 : vector<48x1xf32> to vector<48x32xf32>
      %37 = vector.broadcast %35 : vector<1x32xf32> to vector<48x32xf32>
      %38 = arith.mulf %36, %37 : vector<48x32xf32>
      %39 = arith.addf %28, %38 : vector<48x32xf32>
      %40 = vector.extract_strided_slice %33 {offsets = [1, 0], sizes = [48, 1], strides = [1, 1]} : vector<56x1xf32> to vector<48x1xf32>
      %c1 = arith.constant 1 : index
      %c0_33 = arith.constant 0 : index
      %41 = vector.load %arg2[%c1, %c0_33] : memref<25x32xf32, #tpu.memory_space<vmem>>, vector<1x32xf32>
      %42 = vector.broadcast %40 : vector<48x1xf32> to vector<48x32xf32>
      %43 = vector.broadcast %41 : vector<1x32xf32> to vector<48x32xf32>
      %44 = arith.mulf %42, %43 : vector<48x32xf32>
      %45 = arith.addf %39, %44 : vector<48x32xf32>
      %46 = vector.extract_strided_slice %33 {offsets = [2, 0], sizes = [48, 1], strides = [1, 1]} : vector<56x1xf32> to vector<48x1xf32>
      %c2 = arith.constant 2 : index
      %c0_34 = arith.constant 0 : index
      %47 = vector.load %arg2[%c2, %c0_34] : memref<25x32xf32, #tpu.memory_space<vmem>>, vector<1x32xf32>
      %48 = vector.broadcast %46 : vector<48x1xf32> to vector<48x32xf32>
      %49 = vector.broadcast %47 : vector<1x32xf32> to vector<48x32xf32>
      %50 = arith.mulf %48, %49 : vector<48x32xf32>
      %51 = arith.addf %45, %50 : vector<48x32xf32>
      %52 = vector.extract_strided_slice %33 {offsets = [3, 0], sizes = [48, 1], strides = [1, 1]} : vector<56x1xf32> to vector<48x1xf32>
      %c3 = arith.constant 3 : index
      %c0_35 = arith.constant 0 : index
      %53 = vector.load %arg2[%c3, %c0_35] : memref<25x32xf32, #tpu.memory_space<vmem>>, vector<1x32xf32>
      %54 = vector.broadcast %52 : vector<48x1xf32> to vector<48x32xf32>
      %55 = vector.broadcast %53 : vector<1x32xf32> to vector<48x32xf32>
      %56 = arith.mulf %54, %55 : vector<48x32xf32>
      %57 = arith.addf %51, %56 : vector<48x32xf32>
      %58 = vector.extract_strided_slice %33 {offsets = [4, 0], sizes = [48, 1], strides = [1, 1]} : vector<56x1xf32> to vector<48x1xf32>
      %c4 = arith.constant 4 : index
      %c0_36 = arith.constant 0 : index
      %59 = vector.load %arg2[%c4, %c0_36] : memref<25x32xf32, #tpu.memory_space<vmem>>, vector<1x32xf32>
      %60 = vector.broadcast %58 : vector<48x1xf32> to vector<48x32xf32>
      %61 = vector.broadcast %59 : vector<1x32xf32> to vector<48x32xf32>
      %62 = arith.mulf %60, %61 : vector<48x32xf32>
      %63 = arith.addf %57, %62 : vector<48x32xf32>
      %c1_i32_37 = arith.constant 1 : i32
      %64 = arith.addi %27, %c1_i32_37 : i32
      %c48_i32_38 = arith.constant 48 : i32
      %65 = arith.muli %64, %c48_i32_38 : i32
      %c0_39 = arith.constant 0 : index
      %66 = arith.index_cast %65 : i32 to index
      %c0_40 = arith.constant 0 : index
      %67 = vector.load %arg1[%c0_39, %66, %c0_40] : memref<1x1736x1xf32, #tpu.memory_space<vmem>>, vector<1x56x1xf32>
      %68 = vector.shape_cast %67 : vector<1x56x1xf32> to vector<56x1xf32>
      %69 = vector.extract_strided_slice %68 {offsets = [0, 0], sizes = [48, 1], strides = [1, 1]} : vector<56x1xf32> to vector<48x1xf32>
      %c5 = arith.constant 5 : index
      %c0_41 = arith.constant 0 : index
      %70 = vector.load %arg2[%c5, %c0_41] : memref<25x32xf32, #tpu.memory_space<vmem>>, vector<1x32xf32>
      %71 = vector.broadcast %69 : vector<48x1xf32> to vector<48x32xf32>
      %72 = vector.broadcast %70 : vector<1x32xf32> to vector<48x32xf32>
      %73 = arith.mulf %71, %72 : vector<48x32xf32>
      %74 = arith.addf %63, %73 : vector<48x32xf32>
      %75 = vector.extract_strided_slice %68 {offsets = [1, 0], sizes = [48, 1], strides = [1, 1]} : vector<56x1xf32> to vector<48x1xf32>
      %c6 = arith.constant 6 : index
      %c0_42 = arith.constant 0 : index
      %76 = vector.load %arg2[%c6, %c0_42] : memref<25x32xf32, #tpu.memory_space<vmem>>, vector<1x32xf32>
      %77 = vector.broadcast %75 : vector<48x1xf32> to vector<48x32xf32>
      %78 = vector.broadcast %76 : vector<1x32xf32> to vector<48x32xf32>
      %79 = arith.mulf %77, %78 : vector<48x32xf32>
      %80 = arith.addf %74, %79 : vector<48x32xf32>
      %81 = vector.extract_strided_slice %68 {offsets = [2, 0], sizes = [48, 1], strides = [1, 1]} : vector<56x1xf32> to vector<48x1xf32>
      %c7 = arith.constant 7 : index
      %c0_43 = arith.constant 0 : index
      %82 = vector.load %arg2[%c7, %c0_43] : memref<25x32xf32, #tpu.memory_space<vmem>>, vector<1x32xf32>
      %83 = vector.broadcast %81 : vector<48x1xf32> to vector<48x32xf32>
      %84 = vector.broadcast %82 : vector<1x32xf32> to vector<48x32xf32>
      %85 = arith.mulf %83, %84 : vector<48x32xf32>
      %86 = arith.addf %80, %85 : vector<48x32xf32>
      %87 = vector.extract_strided_slice %68 {offsets = [3, 0], sizes = [48, 1], strides = [1, 1]} : vector<56x1xf32> to vector<48x1xf32>
      %c8 = arith.constant 8 : index
      %c0_44 = arith.constant 0 : index
      %88 = vector.load %arg2[%c8, %c0_44] : memref<25x32xf32, #tpu.memory_space<vmem>>, vector<1x32xf32>
      %89 = vector.broadcast %87 : vector<48x1xf32> to vector<48x32xf32>
      %90 = vector.broadcast %88 : vector<1x32xf32> to vector<48x32xf32>
      %91 = arith.mulf %89, %90 : vector<48x32xf32>
      %92 = arith.addf %86, %91 : vector<48x32xf32>
      %93 = vector.extract_strided_slice %68 {offsets = [4, 0], sizes = [48, 1], strides = [1, 1]} : vector<56x1xf32> to vector<48x1xf32>
      %c9 = arith.constant 9 : index
      %c0_45 = arith.constant 0 : index
      %94 = vector.load %arg2[%c9, %c0_45] : memref<25x32xf32, #tpu.memory_space<vmem>>, vector<1x32xf32>
      %95 = vector.broadcast %93 : vector<48x1xf32> to vector<48x32xf32>
      %96 = vector.broadcast %94 : vector<1x32xf32> to vector<48x32xf32>
      %97 = arith.mulf %95, %96 : vector<48x32xf32>
      %98 = arith.addf %92, %97 : vector<48x32xf32>
      %c2_i32_46 = arith.constant 2 : i32
      %99 = arith.addi %27, %c2_i32_46 : i32
      %c48_i32_47 = arith.constant 48 : i32
      %100 = arith.muli %99, %c48_i32_47 : i32
      %c0_48 = arith.constant 0 : index
      %101 = arith.index_cast %100 : i32 to index
      %c0_49 = arith.constant 0 : index
      %102 = vector.load %arg1[%c0_48, %101, %c0_49] : memref<1x1736x1xf32, #tpu.memory_space<vmem>>, vector<1x56x1xf32>
      %103 = vector.shape_cast %102 : vector<1x56x1xf32> to vector<56x1xf32>
      %104 = vector.extract_strided_slice %103 {offsets = [0, 0], sizes = [48, 1], strides = [1, 1]} : vector<56x1xf32> to vector<48x1xf32>
      %c10 = arith.constant 10 : index
      %c0_50 = arith.constant 0 : index
      %105 = vector.load %arg2[%c10, %c0_50] : memref<25x32xf32, #tpu.memory_space<vmem>>, vector<1x32xf32>
      %106 = vector.broadcast %104 : vector<48x1xf32> to vector<48x32xf32>
      %107 = vector.broadcast %105 : vector<1x32xf32> to vector<48x32xf32>
      %108 = arith.mulf %106, %107 : vector<48x32xf32>
      %109 = arith.addf %98, %108 : vector<48x32xf32>
      %110 = vector.extract_strided_slice %103 {offsets = [1, 0], sizes = [48, 1], strides = [1, 1]} : vector<56x1xf32> to vector<48x1xf32>
      %c11 = arith.constant 11 : index
      %c0_51 = arith.constant 0 : index
      %111 = vector.load %arg2[%c11, %c0_51] : memref<25x32xf32, #tpu.memory_space<vmem>>, vector<1x32xf32>
      %112 = vector.broadcast %110 : vector<48x1xf32> to vector<48x32xf32>
      %113 = vector.broadcast %111 : vector<1x32xf32> to vector<48x32xf32>
      %114 = arith.mulf %112, %113 : vector<48x32xf32>
      %115 = arith.addf %109, %114 : vector<48x32xf32>
      %116 = vector.extract_strided_slice %103 {offsets = [2, 0], sizes = [48, 1], strides = [1, 1]} : vector<56x1xf32> to vector<48x1xf32>
      %c12 = arith.constant 12 : index
      %c0_52 = arith.constant 0 : index
      %117 = vector.load %arg2[%c12, %c0_52] : memref<25x32xf32, #tpu.memory_space<vmem>>, vector<1x32xf32>
      %118 = vector.broadcast %116 : vector<48x1xf32> to vector<48x32xf32>
      %119 = vector.broadcast %117 : vector<1x32xf32> to vector<48x32xf32>
      %120 = arith.mulf %118, %119 : vector<48x32xf32>
      %121 = arith.addf %115, %120 : vector<48x32xf32>
      %122 = vector.extract_strided_slice %103 {offsets = [3, 0], sizes = [48, 1], strides = [1, 1]} : vector<56x1xf32> to vector<48x1xf32>
      %c13 = arith.constant 13 : index
      %c0_53 = arith.constant 0 : index
      %123 = vector.load %arg2[%c13, %c0_53] : memref<25x32xf32, #tpu.memory_space<vmem>>, vector<1x32xf32>
      %124 = vector.broadcast %122 : vector<48x1xf32> to vector<48x32xf32>
      %125 = vector.broadcast %123 : vector<1x32xf32> to vector<48x32xf32>
      %126 = arith.mulf %124, %125 : vector<48x32xf32>
      %127 = arith.addf %121, %126 : vector<48x32xf32>
      %128 = vector.extract_strided_slice %103 {offsets = [4, 0], sizes = [48, 1], strides = [1, 1]} : vector<56x1xf32> to vector<48x1xf32>
      %c14 = arith.constant 14 : index
      %c0_54 = arith.constant 0 : index
      %129 = vector.load %arg2[%c14, %c0_54] : memref<25x32xf32, #tpu.memory_space<vmem>>, vector<1x32xf32>
      %130 = vector.broadcast %128 : vector<48x1xf32> to vector<48x32xf32>
      %131 = vector.broadcast %129 : vector<1x32xf32> to vector<48x32xf32>
      %132 = arith.mulf %130, %131 : vector<48x32xf32>
      %133 = arith.addf %127, %132 : vector<48x32xf32>
      %c3_i32 = arith.constant 3 : i32
      %134 = arith.addi %27, %c3_i32 : i32
      %c48_i32_55 = arith.constant 48 : i32
      %135 = arith.muli %134, %c48_i32_55 : i32
      %c0_56 = arith.constant 0 : index
      %136 = arith.index_cast %135 : i32 to index
      %c0_57 = arith.constant 0 : index
      %137 = vector.load %arg1[%c0_56, %136, %c0_57] : memref<1x1736x1xf32, #tpu.memory_space<vmem>>, vector<1x56x1xf32>
      %138 = vector.shape_cast %137 : vector<1x56x1xf32> to vector<56x1xf32>
      %139 = vector.extract_strided_slice %138 {offsets = [0, 0], sizes = [48, 1], strides = [1, 1]} : vector<56x1xf32> to vector<48x1xf32>
      %c15 = arith.constant 15 : index
      %c0_58 = arith.constant 0 : index
      %140 = vector.load %arg2[%c15, %c0_58] : memref<25x32xf32, #tpu.memory_space<vmem>>, vector<1x32xf32>
      %141 = vector.broadcast %139 : vector<48x1xf32> to vector<48x32xf32>
      %142 = vector.broadcast %140 : vector<1x32xf32> to vector<48x32xf32>
      %143 = arith.mulf %141, %142 : vector<48x32xf32>
      %144 = arith.addf %133, %143 : vector<48x32xf32>
      %145 = vector.extract_strided_slice %138 {offsets = [1, 0], sizes = [48, 1], strides = [1, 1]} : vector<56x1xf32> to vector<48x1xf32>
      %c16 = arith.constant 16 : index
      %c0_59 = arith.constant 0 : index
      %146 = vector.load %arg2[%c16, %c0_59] : memref<25x32xf32, #tpu.memory_space<vmem>>, vector<1x32xf32>
      %147 = vector.broadcast %145 : vector<48x1xf32> to vector<48x32xf32>
      %148 = vector.broadcast %146 : vector<1x32xf32> to vector<48x32xf32>
      %149 = arith.mulf %147, %148 : vector<48x32xf32>
      %150 = arith.addf %144, %149 : vector<48x32xf32>
      %151 = vector.extract_strided_slice %138 {offsets = [2, 0], sizes = [48, 1], strides = [1, 1]} : vector<56x1xf32> to vector<48x1xf32>
      %c17 = arith.constant 17 : index
      %c0_60 = arith.constant 0 : index
      %152 = vector.load %arg2[%c17, %c0_60] : memref<25x32xf32, #tpu.memory_space<vmem>>, vector<1x32xf32>
      %153 = vector.broadcast %151 : vector<48x1xf32> to vector<48x32xf32>
      %154 = vector.broadcast %152 : vector<1x32xf32> to vector<48x32xf32>
      %155 = arith.mulf %153, %154 : vector<48x32xf32>
      %156 = arith.addf %150, %155 : vector<48x32xf32>
      %157 = vector.extract_strided_slice %138 {offsets = [3, 0], sizes = [48, 1], strides = [1, 1]} : vector<56x1xf32> to vector<48x1xf32>
      %c18 = arith.constant 18 : index
      %c0_61 = arith.constant 0 : index
      %158 = vector.load %arg2[%c18, %c0_61] : memref<25x32xf32, #tpu.memory_space<vmem>>, vector<1x32xf32>
      %159 = vector.broadcast %157 : vector<48x1xf32> to vector<48x32xf32>
      %160 = vector.broadcast %158 : vector<1x32xf32> to vector<48x32xf32>
      %161 = arith.mulf %159, %160 : vector<48x32xf32>
      %162 = arith.addf %156, %161 : vector<48x32xf32>
      %163 = vector.extract_strided_slice %138 {offsets = [4, 0], sizes = [48, 1], strides = [1, 1]} : vector<56x1xf32> to vector<48x1xf32>
      %c19 = arith.constant 19 : index
      %c0_62 = arith.constant 0 : index
      %164 = vector.load %arg2[%c19, %c0_62] : memref<25x32xf32, #tpu.memory_space<vmem>>, vector<1x32xf32>
      %165 = vector.broadcast %163 : vector<48x1xf32> to vector<48x32xf32>
      %166 = vector.broadcast %164 : vector<1x32xf32> to vector<48x32xf32>
      %167 = arith.mulf %165, %166 : vector<48x32xf32>
      %168 = arith.addf %162, %167 : vector<48x32xf32>
      %c4_i32 = arith.constant 4 : i32
      %169 = arith.addi %27, %c4_i32 : i32
      %c48_i32_63 = arith.constant 48 : i32
      %170 = arith.muli %169, %c48_i32_63 : i32
      %c0_64 = arith.constant 0 : index
      %171 = arith.index_cast %170 : i32 to index
      %c0_65 = arith.constant 0 : index
      %172 = vector.load %arg1[%c0_64, %171, %c0_65] : memref<1x1736x1xf32, #tpu.memory_space<vmem>>, vector<1x56x1xf32>
      %173 = vector.shape_cast %172 : vector<1x56x1xf32> to vector<56x1xf32>
      %174 = vector.extract_strided_slice %173 {offsets = [0, 0], sizes = [48, 1], strides = [1, 1]} : vector<56x1xf32> to vector<48x1xf32>
      %c20 = arith.constant 20 : index
      %c0_66 = arith.constant 0 : index
      %175 = vector.load %arg2[%c20, %c0_66] : memref<25x32xf32, #tpu.memory_space<vmem>>, vector<1x32xf32>
      %176 = vector.broadcast %174 : vector<48x1xf32> to vector<48x32xf32>
      %177 = vector.broadcast %175 : vector<1x32xf32> to vector<48x32xf32>
      %178 = arith.mulf %176, %177 : vector<48x32xf32>
      %179 = arith.addf %168, %178 : vector<48x32xf32>
      %180 = vector.extract_strided_slice %173 {offsets = [1, 0], sizes = [48, 1], strides = [1, 1]} : vector<56x1xf32> to vector<48x1xf32>
      %c21 = arith.constant 21 : index
      %c0_67 = arith.constant 0 : index
      %181 = vector.load %arg2[%c21, %c0_67] : memref<25x32xf32, #tpu.memory_space<vmem>>, vector<1x32xf32>
      %182 = vector.broadcast %180 : vector<48x1xf32> to vector<48x32xf32>
      %183 = vector.broadcast %181 : vector<1x32xf32> to vector<48x32xf32>
      %184 = arith.mulf %182, %183 : vector<48x32xf32>
      %185 = arith.addf %179, %184 : vector<48x32xf32>
      %186 = vector.extract_strided_slice %173 {offsets = [2, 0], sizes = [48, 1], strides = [1, 1]} : vector<56x1xf32> to vector<48x1xf32>
      %c22 = arith.constant 22 : index
      %c0_68 = arith.constant 0 : index
      %187 = vector.load %arg2[%c22, %c0_68] : memref<25x32xf32, #tpu.memory_space<vmem>>, vector<1x32xf32>
      %188 = vector.broadcast %186 : vector<48x1xf32> to vector<48x32xf32>
      %189 = vector.broadcast %187 : vector<1x32xf32> to vector<48x32xf32>
      %190 = arith.mulf %188, %189 : vector<48x32xf32>
      %191 = arith.addf %185, %190 : vector<48x32xf32>
      %192 = vector.extract_strided_slice %173 {offsets = [3, 0], sizes = [48, 1], strides = [1, 1]} : vector<56x1xf32> to vector<48x1xf32>
      %c23 = arith.constant 23 : index
      %c0_69 = arith.constant 0 : index
      %193 = vector.load %arg2[%c23, %c0_69] : memref<25x32xf32, #tpu.memory_space<vmem>>, vector<1x32xf32>
      %194 = vector.broadcast %192 : vector<48x1xf32> to vector<48x32xf32>
      %195 = vector.broadcast %193 : vector<1x32xf32> to vector<48x32xf32>
      %196 = arith.mulf %194, %195 : vector<48x32xf32>
      %197 = arith.addf %191, %196 : vector<48x32xf32>
      %198 = vector.extract_strided_slice %173 {offsets = [4, 0], sizes = [48, 1], strides = [1, 1]} : vector<56x1xf32> to vector<48x1xf32>
      %c24 = arith.constant 24 : index
      %c0_70 = arith.constant 0 : index
      %199 = vector.load %arg2[%c24, %c0_70] : memref<25x32xf32, #tpu.memory_space<vmem>>, vector<1x32xf32>
      %200 = vector.broadcast %198 : vector<48x1xf32> to vector<48x32xf32>
      %201 = vector.broadcast %199 : vector<1x32xf32> to vector<48x32xf32>
      %202 = arith.mulf %200, %201 : vector<48x32xf32>
      %203 = arith.addf %197, %202 : vector<48x32xf32>
      %204 = vector.broadcast %4 : vector<1x32xf32> to vector<48x32xf32>
      %205 = arith.addf %203, %204 : vector<48x32xf32>
      %cst_71 = arith.constant 0.000000e+00 : f32
      %206 = vector.broadcast %cst_71 : f32 to vector<48x32xf32>
      %207 = arith.maximumf %205, %206 : vector<48x32xf32>
      %c2_i32_72 = arith.constant 2 : i32
      %208 = arith.muli %c2_i32_72, %26 : i32
      %c1_i32_73 = arith.constant 1 : i32
      %209 = arith.addi %208, %c1_i32_73 : i32
      %cst_74 = arith.constant 0.000000e+00 : f32
      %210 = vector.broadcast %cst_74 : f32 to vector<48x32xf32>
      %c0_i32_75 = arith.constant 0 : i32
      %211 = arith.addi %209, %c0_i32_75 : i32
      %c48_i32_76 = arith.constant 48 : i32
      %212 = arith.muli %211, %c48_i32_76 : i32
      %c0_77 = arith.constant 0 : index
      %213 = arith.index_cast %212 : i32 to index
      %c0_78 = arith.constant 0 : index
      %214 = vector.load %arg1[%c0_77, %213, %c0_78] : memref<1x1736x1xf32, #tpu.memory_space<vmem>>, vector<1x56x1xf32>
      %215 = vector.shape_cast %214 : vector<1x56x1xf32> to vector<56x1xf32>
      %216 = vector.extract_strided_slice %215 {offsets = [0, 0], sizes = [48, 1], strides = [1, 1]} : vector<56x1xf32> to vector<48x1xf32>
      %c0_79 = arith.constant 0 : index
      %c0_80 = arith.constant 0 : index
      %217 = vector.load %arg2[%c0_79, %c0_80] : memref<25x32xf32, #tpu.memory_space<vmem>>, vector<1x32xf32>
      %218 = vector.broadcast %216 : vector<48x1xf32> to vector<48x32xf32>
      %219 = vector.broadcast %217 : vector<1x32xf32> to vector<48x32xf32>
      %220 = arith.mulf %218, %219 : vector<48x32xf32>
      %221 = arith.addf %210, %220 : vector<48x32xf32>
      %222 = vector.extract_strided_slice %215 {offsets = [1, 0], sizes = [48, 1], strides = [1, 1]} : vector<56x1xf32> to vector<48x1xf32>
      %c1_81 = arith.constant 1 : index
      %c0_82 = arith.constant 0 : index
      %223 = vector.load %arg2[%c1_81, %c0_82] : memref<25x32xf32, #tpu.memory_space<vmem>>, vector<1x32xf32>
      %224 = vector.broadcast %222 : vector<48x1xf32> to vector<48x32xf32>
      %225 = vector.broadcast %223 : vector<1x32xf32> to vector<48x32xf32>
      %226 = arith.mulf %224, %225 : vector<48x32xf32>
      %227 = arith.addf %221, %226 : vector<48x32xf32>
      %228 = vector.extract_strided_slice %215 {offsets = [2, 0], sizes = [48, 1], strides = [1, 1]} : vector<56x1xf32> to vector<48x1xf32>
      %c2_83 = arith.constant 2 : index
      %c0_84 = arith.constant 0 : index
      %229 = vector.load %arg2[%c2_83, %c0_84] : memref<25x32xf32, #tpu.memory_space<vmem>>, vector<1x32xf32>
      %230 = vector.broadcast %228 : vector<48x1xf32> to vector<48x32xf32>
      %231 = vector.broadcast %229 : vector<1x32xf32> to vector<48x32xf32>
      %232 = arith.mulf %230, %231 : vector<48x32xf32>
      %233 = arith.addf %227, %232 : vector<48x32xf32>
      %234 = vector.extract_strided_slice %215 {offsets = [3, 0], sizes = [48, 1], strides = [1, 1]} : vector<56x1xf32> to vector<48x1xf32>
      %c3_85 = arith.constant 3 : index
      %c0_86 = arith.constant 0 : index
      %235 = vector.load %arg2[%c3_85, %c0_86] : memref<25x32xf32, #tpu.memory_space<vmem>>, vector<1x32xf32>
      %236 = vector.broadcast %234 : vector<48x1xf32> to vector<48x32xf32>
      %237 = vector.broadcast %235 : vector<1x32xf32> to vector<48x32xf32>
      %238 = arith.mulf %236, %237 : vector<48x32xf32>
      %239 = arith.addf %233, %238 : vector<48x32xf32>
      %240 = vector.extract_strided_slice %215 {offsets = [4, 0], sizes = [48, 1], strides = [1, 1]} : vector<56x1xf32> to vector<48x1xf32>
      %c4_87 = arith.constant 4 : index
      %c0_88 = arith.constant 0 : index
      %241 = vector.load %arg2[%c4_87, %c0_88] : memref<25x32xf32, #tpu.memory_space<vmem>>, vector<1x32xf32>
      %242 = vector.broadcast %240 : vector<48x1xf32> to vector<48x32xf32>
      %243 = vector.broadcast %241 : vector<1x32xf32> to vector<48x32xf32>
      %244 = arith.mulf %242, %243 : vector<48x32xf32>
      %245 = arith.addf %239, %244 : vector<48x32xf32>
      %c1_i32_89 = arith.constant 1 : i32
      %246 = arith.addi %209, %c1_i32_89 : i32
      %c48_i32_90 = arith.constant 48 : i32
      %247 = arith.muli %246, %c48_i32_90 : i32
      %c0_91 = arith.constant 0 : index
      %248 = arith.index_cast %247 : i32 to index
      %c0_92 = arith.constant 0 : index
      %249 = vector.load %arg1[%c0_91, %248, %c0_92] : memref<1x1736x1xf32, #tpu.memory_space<vmem>>, vector<1x56x1xf32>
      %250 = vector.shape_cast %249 : vector<1x56x1xf32> to vector<56x1xf32>
      %251 = vector.extract_strided_slice %250 {offsets = [0, 0], sizes = [48, 1], strides = [1, 1]} : vector<56x1xf32> to vector<48x1xf32>
      %c5_93 = arith.constant 5 : index
      %c0_94 = arith.constant 0 : index
      %252 = vector.load %arg2[%c5_93, %c0_94] : memref<25x32xf32, #tpu.memory_space<vmem>>, vector<1x32xf32>
      %253 = vector.broadcast %251 : vector<48x1xf32> to vector<48x32xf32>
      %254 = vector.broadcast %252 : vector<1x32xf32> to vector<48x32xf32>
      %255 = arith.mulf %253, %254 : vector<48x32xf32>
      %256 = arith.addf %245, %255 : vector<48x32xf32>
      %257 = vector.extract_strided_slice %250 {offsets = [1, 0], sizes = [48, 1], strides = [1, 1]} : vector<56x1xf32> to vector<48x1xf32>
      %c6_95 = arith.constant 6 : index
      %c0_96 = arith.constant 0 : index
      %258 = vector.load %arg2[%c6_95, %c0_96] : memref<25x32xf32, #tpu.memory_space<vmem>>, vector<1x32xf32>
      %259 = vector.broadcast %257 : vector<48x1xf32> to vector<48x32xf32>
      %260 = vector.broadcast %258 : vector<1x32xf32> to vector<48x32xf32>
      %261 = arith.mulf %259, %260 : vector<48x32xf32>
      %262 = arith.addf %256, %261 : vector<48x32xf32>
      %263 = vector.extract_strided_slice %250 {offsets = [2, 0], sizes = [48, 1], strides = [1, 1]} : vector<56x1xf32> to vector<48x1xf32>
      %c7_97 = arith.constant 7 : index
      %c0_98 = arith.constant 0 : index
      %264 = vector.load %arg2[%c7_97, %c0_98] : memref<25x32xf32, #tpu.memory_space<vmem>>, vector<1x32xf32>
      %265 = vector.broadcast %263 : vector<48x1xf32> to vector<48x32xf32>
      %266 = vector.broadcast %264 : vector<1x32xf32> to vector<48x32xf32>
      %267 = arith.mulf %265, %266 : vector<48x32xf32>
      %268 = arith.addf %262, %267 : vector<48x32xf32>
      %269 = vector.extract_strided_slice %250 {offsets = [3, 0], sizes = [48, 1], strides = [1, 1]} : vector<56x1xf32> to vector<48x1xf32>
      %c8_99 = arith.constant 8 : index
      %c0_100 = arith.constant 0 : index
      %270 = vector.load %arg2[%c8_99, %c0_100] : memref<25x32xf32, #tpu.memory_space<vmem>>, vector<1x32xf32>
      %271 = vector.broadcast %269 : vector<48x1xf32> to vector<48x32xf32>
      %272 = vector.broadcast %270 : vector<1x32xf32> to vector<48x32xf32>
      %273 = arith.mulf %271, %272 : vector<48x32xf32>
      %274 = arith.addf %268, %273 : vector<48x32xf32>
      %275 = vector.extract_strided_slice %250 {offsets = [4, 0], sizes = [48, 1], strides = [1, 1]} : vector<56x1xf32> to vector<48x1xf32>
      %c9_101 = arith.constant 9 : index
      %c0_102 = arith.constant 0 : index
      %276 = vector.load %arg2[%c9_101, %c0_102] : memref<25x32xf32, #tpu.memory_space<vmem>>, vector<1x32xf32>
      %277 = vector.broadcast %275 : vector<48x1xf32> to vector<48x32xf32>
      %278 = vector.broadcast %276 : vector<1x32xf32> to vector<48x32xf32>
      %279 = arith.mulf %277, %278 : vector<48x32xf32>
      %280 = arith.addf %274, %279 : vector<48x32xf32>
      %c2_i32_103 = arith.constant 2 : i32
      %281 = arith.addi %209, %c2_i32_103 : i32
      %c48_i32_104 = arith.constant 48 : i32
      %282 = arith.muli %281, %c48_i32_104 : i32
      %c0_105 = arith.constant 0 : index
      %283 = arith.index_cast %282 : i32 to index
      %c0_106 = arith.constant 0 : index
      %284 = vector.load %arg1[%c0_105, %283, %c0_106] : memref<1x1736x1xf32, #tpu.memory_space<vmem>>, vector<1x56x1xf32>
      %285 = vector.shape_cast %284 : vector<1x56x1xf32> to vector<56x1xf32>
      %286 = vector.extract_strided_slice %285 {offsets = [0, 0], sizes = [48, 1], strides = [1, 1]} : vector<56x1xf32> to vector<48x1xf32>
      %c10_107 = arith.constant 10 : index
      %c0_108 = arith.constant 0 : index
      %287 = vector.load %arg2[%c10_107, %c0_108] : memref<25x32xf32, #tpu.memory_space<vmem>>, vector<1x32xf32>
      %288 = vector.broadcast %286 : vector<48x1xf32> to vector<48x32xf32>
      %289 = vector.broadcast %287 : vector<1x32xf32> to vector<48x32xf32>
      %290 = arith.mulf %288, %289 : vector<48x32xf32>
      %291 = arith.addf %280, %290 : vector<48x32xf32>
      %292 = vector.extract_strided_slice %285 {offsets = [1, 0], sizes = [48, 1], strides = [1, 1]} : vector<56x1xf32> to vector<48x1xf32>
      %c11_109 = arith.constant 11 : index
      %c0_110 = arith.constant 0 : index
      %293 = vector.load %arg2[%c11_109, %c0_110] : memref<25x32xf32, #tpu.memory_space<vmem>>, vector<1x32xf32>
      %294 = vector.broadcast %292 : vector<48x1xf32> to vector<48x32xf32>
      %295 = vector.broadcast %293 : vector<1x32xf32> to vector<48x32xf32>
      %296 = arith.mulf %294, %295 : vector<48x32xf32>
      %297 = arith.addf %291, %296 : vector<48x32xf32>
      %298 = vector.extract_strided_slice %285 {offsets = [2, 0], sizes = [48, 1], strides = [1, 1]} : vector<56x1xf32> to vector<48x1xf32>
      %c12_111 = arith.constant 12 : index
      %c0_112 = arith.constant 0 : index
      %299 = vector.load %arg2[%c12_111, %c0_112] : memref<25x32xf32, #tpu.memory_space<vmem>>, vector<1x32xf32>
      %300 = vector.broadcast %298 : vector<48x1xf32> to vector<48x32xf32>
      %301 = vector.broadcast %299 : vector<1x32xf32> to vector<48x32xf32>
      %302 = arith.mulf %300, %301 : vector<48x32xf32>
      %303 = arith.addf %297, %302 : vector<48x32xf32>
      %304 = vector.extract_strided_slice %285 {offsets = [3, 0], sizes = [48, 1], strides = [1, 1]} : vector<56x1xf32> to vector<48x1xf32>
      %c13_113 = arith.constant 13 : index
      %c0_114 = arith.constant 0 : index
      %305 = vector.load %arg2[%c13_113, %c0_114] : memref<25x32xf32, #tpu.memory_space<vmem>>, vector<1x32xf32>
      %306 = vector.broadcast %304 : vector<48x1xf32> to vector<48x32xf32>
      %307 = vector.broadcast %305 : vector<1x32xf32> to vector<48x32xf32>
      %308 = arith.mulf %306, %307 : vector<48x32xf32>
      %309 = arith.addf %303, %308 : vector<48x32xf32>
      %310 = vector.extract_strided_slice %285 {offsets = [4, 0], sizes = [48, 1], strides = [1, 1]} : vector<56x1xf32> to vector<48x1xf32>
      %c14_115 = arith.constant 14 : index
      %c0_116 = arith.constant 0 : index
      %311 = vector.load %arg2[%c14_115, %c0_116] : memref<25x32xf32, #tpu.memory_space<vmem>>, vector<1x32xf32>
      %312 = vector.broadcast %310 : vector<48x1xf32> to vector<48x32xf32>
      %313 = vector.broadcast %311 : vector<1x32xf32> to vector<48x32xf32>
      %314 = arith.mulf %312, %313 : vector<48x32xf32>
      %315 = arith.addf %309, %314 : vector<48x32xf32>
      %c3_i32_117 = arith.constant 3 : i32
      %316 = arith.addi %209, %c3_i32_117 : i32
      %c48_i32_118 = arith.constant 48 : i32
      %317 = arith.muli %316, %c48_i32_118 : i32
      %c0_119 = arith.constant 0 : index
      %318 = arith.index_cast %317 : i32 to index
      %c0_120 = arith.constant 0 : index
      %319 = vector.load %arg1[%c0_119, %318, %c0_120] : memref<1x1736x1xf32, #tpu.memory_space<vmem>>, vector<1x56x1xf32>
      %320 = vector.shape_cast %319 : vector<1x56x1xf32> to vector<56x1xf32>
      %321 = vector.extract_strided_slice %320 {offsets = [0, 0], sizes = [48, 1], strides = [1, 1]} : vector<56x1xf32> to vector<48x1xf32>
      %c15_121 = arith.constant 15 : index
      %c0_122 = arith.constant 0 : index
      %322 = vector.load %arg2[%c15_121, %c0_122] : memref<25x32xf32, #tpu.memory_space<vmem>>, vector<1x32xf32>
      %323 = vector.broadcast %321 : vector<48x1xf32> to vector<48x32xf32>
      %324 = vector.broadcast %322 : vector<1x32xf32> to vector<48x32xf32>
      %325 = arith.mulf %323, %324 : vector<48x32xf32>
      %326 = arith.addf %315, %325 : vector<48x32xf32>
      %327 = vector.extract_strided_slice %320 {offsets = [1, 0], sizes = [48, 1], strides = [1, 1]} : vector<56x1xf32> to vector<48x1xf32>
      %c16_123 = arith.constant 16 : index
      %c0_124 = arith.constant 0 : index
      %328 = vector.load %arg2[%c16_123, %c0_124] : memref<25x32xf32, #tpu.memory_space<vmem>>, vector<1x32xf32>
      %329 = vector.broadcast %327 : vector<48x1xf32> to vector<48x32xf32>
      %330 = vector.broadcast %328 : vector<1x32xf32> to vector<48x32xf32>
      %331 = arith.mulf %329, %330 : vector<48x32xf32>
      %332 = arith.addf %326, %331 : vector<48x32xf32>
      %333 = vector.extract_strided_slice %320 {offsets = [2, 0], sizes = [48, 1], strides = [1, 1]} : vector<56x1xf32> to vector<48x1xf32>
      %c17_125 = arith.constant 17 : index
      %c0_126 = arith.constant 0 : index
      %334 = vector.load %arg2[%c17_125, %c0_126] : memref<25x32xf32, #tpu.memory_space<vmem>>, vector<1x32xf32>
      %335 = vector.broadcast %333 : vector<48x1xf32> to vector<48x32xf32>
      %336 = vector.broadcast %334 : vector<1x32xf32> to vector<48x32xf32>
      %337 = arith.mulf %335, %336 : vector<48x32xf32>
      %338 = arith.addf %332, %337 : vector<48x32xf32>
      %339 = vector.extract_strided_slice %320 {offsets = [3, 0], sizes = [48, 1], strides = [1, 1]} : vector<56x1xf32> to vector<48x1xf32>
      %c18_127 = arith.constant 18 : index
      %c0_128 = arith.constant 0 : index
      %340 = vector.load %arg2[%c18_127, %c0_128] : memref<25x32xf32, #tpu.memory_space<vmem>>, vector<1x32xf32>
      %341 = vector.broadcast %339 : vector<48x1xf32> to vector<48x32xf32>
      %342 = vector.broadcast %340 : vector<1x32xf32> to vector<48x32xf32>
      %343 = arith.mulf %341, %342 : vector<48x32xf32>
      %344 = arith.addf %338, %343 : vector<48x32xf32>
      %345 = vector.extract_strided_slice %320 {offsets = [4, 0], sizes = [48, 1], strides = [1, 1]} : vector<56x1xf32> to vector<48x1xf32>
      %c19_129 = arith.constant 19 : index
      %c0_130 = arith.constant 0 : index
      %346 = vector.load %arg2[%c19_129, %c0_130] : memref<25x32xf32, #tpu.memory_space<vmem>>, vector<1x32xf32>
      %347 = vector.broadcast %345 : vector<48x1xf32> to vector<48x32xf32>
      %348 = vector.broadcast %346 : vector<1x32xf32> to vector<48x32xf32>
      %349 = arith.mulf %347, %348 : vector<48x32xf32>
      %350 = arith.addf %344, %349 : vector<48x32xf32>
      %c4_i32_131 = arith.constant 4 : i32
      %351 = arith.addi %209, %c4_i32_131 : i32
      %c48_i32_132 = arith.constant 48 : i32
      %352 = arith.muli %351, %c48_i32_132 : i32
      %c0_133 = arith.constant 0 : index
      %353 = arith.index_cast %352 : i32 to index
      %c0_134 = arith.constant 0 : index
      %354 = vector.load %arg1[%c0_133, %353, %c0_134] : memref<1x1736x1xf32, #tpu.memory_space<vmem>>, vector<1x56x1xf32>
      %355 = vector.shape_cast %354 : vector<1x56x1xf32> to vector<56x1xf32>
      %356 = vector.extract_strided_slice %355 {offsets = [0, 0], sizes = [48, 1], strides = [1, 1]} : vector<56x1xf32> to vector<48x1xf32>
      %c20_135 = arith.constant 20 : index
      %c0_136 = arith.constant 0 : index
      %357 = vector.load %arg2[%c20_135, %c0_136] : memref<25x32xf32, #tpu.memory_space<vmem>>, vector<1x32xf32>
      %358 = vector.broadcast %356 : vector<48x1xf32> to vector<48x32xf32>
      %359 = vector.broadcast %357 : vector<1x32xf32> to vector<48x32xf32>
      %360 = arith.mulf %358, %359 : vector<48x32xf32>
      %361 = arith.addf %350, %360 : vector<48x32xf32>
      %362 = vector.extract_strided_slice %355 {offsets = [1, 0], sizes = [48, 1], strides = [1, 1]} : vector<56x1xf32> to vector<48x1xf32>
      %c21_137 = arith.constant 21 : index
      %c0_138 = arith.constant 0 : index
      %363 = vector.load %arg2[%c21_137, %c0_138] : memref<25x32xf32, #tpu.memory_space<vmem>>, vector<1x32xf32>
      %364 = vector.broadcast %362 : vector<48x1xf32> to vector<48x32xf32>
      %365 = vector.broadcast %363 : vector<1x32xf32> to vector<48x32xf32>
      %366 = arith.mulf %364, %365 : vector<48x32xf32>
      %367 = arith.addf %361, %366 : vector<48x32xf32>
      %368 = vector.extract_strided_slice %355 {offsets = [2, 0], sizes = [48, 1], strides = [1, 1]} : vector<56x1xf32> to vector<48x1xf32>
      %c22_139 = arith.constant 22 : index
      %c0_140 = arith.constant 0 : index
      %369 = vector.load %arg2[%c22_139, %c0_140] : memref<25x32xf32, #tpu.memory_space<vmem>>, vector<1x32xf32>
      %370 = vector.broadcast %368 : vector<48x1xf32> to vector<48x32xf32>
      %371 = vector.broadcast %369 : vector<1x32xf32> to vector<48x32xf32>
      %372 = arith.mulf %370, %371 : vector<48x32xf32>
      %373 = arith.addf %367, %372 : vector<48x32xf32>
      %374 = vector.extract_strided_slice %355 {offsets = [3, 0], sizes = [48, 1], strides = [1, 1]} : vector<56x1xf32> to vector<48x1xf32>
      %c23_141 = arith.constant 23 : index
      %c0_142 = arith.constant 0 : index
      %375 = vector.load %arg2[%c23_141, %c0_142] : memref<25x32xf32, #tpu.memory_space<vmem>>, vector<1x32xf32>
      %376 = vector.broadcast %374 : vector<48x1xf32> to vector<48x32xf32>
      %377 = vector.broadcast %375 : vector<1x32xf32> to vector<48x32xf32>
      %378 = arith.mulf %376, %377 : vector<48x32xf32>
      %379 = arith.addf %373, %378 : vector<48x32xf32>
      %380 = vector.extract_strided_slice %355 {offsets = [4, 0], sizes = [48, 1], strides = [1, 1]} : vector<56x1xf32> to vector<48x1xf32>
      %c24_143 = arith.constant 24 : index
      %c0_144 = arith.constant 0 : index
      %381 = vector.load %arg2[%c24_143, %c0_144] : memref<25x32xf32, #tpu.memory_space<vmem>>, vector<1x32xf32>
      %382 = vector.broadcast %380 : vector<48x1xf32> to vector<48x32xf32>
      %383 = vector.broadcast %381 : vector<1x32xf32> to vector<48x32xf32>
      %384 = arith.mulf %382, %383 : vector<48x32xf32>
      %385 = arith.addf %379, %384 : vector<48x32xf32>
      %386 = vector.broadcast %4 : vector<1x32xf32> to vector<48x32xf32>
      %387 = arith.addf %385, %386 : vector<48x32xf32>
      %cst_145 = arith.constant 0.000000e+00 : f32
      %388 = vector.broadcast %cst_145 : f32 to vector<48x32xf32>
      %389 = arith.maximumf %387, %388 : vector<48x32xf32>
      %390 = arith.maximumf %207, %389 : vector<48x32xf32>
      %c0_146 = arith.constant 0 : index
      %c0_147 = arith.constant 0 : index
      %391 = vector.load %arg12[%c0_146, %c0_147] : memref<48x32xf32, #tpu.memory_space<vmem>>, vector<48x32xf32>
      tpu.vector_store %arg12[%c0_146, %c0_147], %390 {strides = array<i32>} : memref<48x32xf32, #tpu.memory_space<vmem>>, vector<48x32xf32>,
      %c0_148 = arith.constant 0 : index
      %c0_149 = arith.constant 0 : index
      %392 = tpu.strided_load %arg12[%c0_148, %c0_149] {strides = array<i32: 2, 1>} : memref<48x32xf32, #tpu.memory_space<vmem>>, vector<24x32xf32>
      %c1_150 = arith.constant 1 : index
      %c0_151 = arith.constant 0 : index
      %393 = tpu.strided_load %arg12[%c1_150, %c0_151] {strides = array<i32: 2, 1>} : memref<48x32xf32, #tpu.memory_space<vmem>>, vector<24x32xf32>
      %394 = arith.maximumf %392, %393 : vector<24x32xf32>
      %cst_152 = arith.constant 0.000000e+00 : f32
      %395 = vector.broadcast %cst_152 : f32 to vector<24x32xf32>
      %396 = arith.select %11, %394, %395 : vector<24x32xi1>, vector<24x32xf32>
      %c24_i32 = arith.constant 24 : i32
      %397 = arith.muli %26, %c24_i32 : i32
      %398 = arith.index_cast %397 : i32 to index
      %c0_153 = arith.constant 0 : index
      %399 = vector.load %arg11[%398, %c0_153] : memref<440x32xf32, #tpu.memory_space<vmem>>, vector<24x32xf32>
      tpu.vector_store %arg11[%398, %c0_153], %396 {strides = array<i32>} : memref<440x32xf32, #tpu.memory_space<vmem>>, vector<24x32xf32>,
    }
    %c14_i32_8 = arith.constant 14 : i32
    %c0_i32_9 = arith.constant 0 : i32
    %c7_i32 = arith.constant 7 : i32
    %13 = arith.addi %c0_i32_9, %c7_i32 : i32
    %c1_i32_10 = arith.constant 1 : i32
    scf.for %arg15 = %c0_i32_9 to %13 step %c1_i32_10  : i32 {
      %c1_i32_24 = arith.constant 1 : i32
      %25 = arith.muli %arg15, %c1_i32_24 : i32
      %c0_i32_25 = arith.constant 0 : i32
      %26 = arith.addi %c0_i32_25, %25 : i32
      %c2_i32_26 = arith.constant 2 : i32
      %27 = arith.muli %c2_i32_26, %26 : i32
      %cst_27 = arith.constant 0.000000e+00 : f32
      %28 = vector.broadcast %cst_27 : f32 to vector<24x64xf32>
      %c0_i32_28 = arith.constant 0 : i32
      %29 = arith.addi %27, %c0_i32_28 : i32
      %c24_i32 = arith.constant 24 : i32
      %30 = arith.muli %29, %c24_i32 : i32
      %31 = arith.index_cast %30 : i32 to index
      %c0_29 = arith.constant 0 : index
      %32 = vector.load %arg11[%31, %c0_29] : memref<440x32xf32, #tpu.memory_space<vmem>>, vector<32x32xf32>
      %33 = vector.extract_strided_slice %32 {offsets = [0, 0], sizes = [24, 32], strides = [1, 1]} : vector<32x32xf32> to vector<24x32xf32>
      %34 = arith.truncf %33 : vector<24x32xf32> to vector<24x32xbf16>
      %c0_30 = arith.constant 0 : index
      %c0_31 = arith.constant 0 : index
      %c0_32 = arith.constant 0 : index
      %35 = vector.load %arg4[%c0_30, %c0_31, %c0_32] : memref<25x32x64xbf16, #tpu.memory_space<vmem>>, vector<1x32x64xbf16>
      %36 = vector.shape_cast %35 : vector<1x32x64xbf16> to vector<32x64xbf16>
      %cst_33 = arith.constant dense<0.000000e+00> : vector<24x64xf32>
      %37 = tpu.matmul %34, %36, %cst_33 {dimension_numbers = #tpu.dot_dimension_numbers<[1], [0], [0], [1], [0, 0, 1, 1], [], []>} : vector<24x32xbf16>, vector<32x64xbf16>, vector<24x64xf32> -> vector<24x64xf32>
      %38 = arith.addf %28, %37 : vector<24x64xf32>
      %39 = vector.extract_strided_slice %32 {offsets = [1, 0], sizes = [24, 32], strides = [1, 1]} : vector<32x32xf32> to vector<24x32xf32>
      %40 = arith.truncf %39 : vector<24x32xf32> to vector<24x32xbf16>
      %c1 = arith.constant 1 : index
      %c0_34 = arith.constant 0 : index
      %c0_35 = arith.constant 0 : index
      %41 = vector.load %arg4[%c1, %c0_34, %c0_35] : memref<25x32x64xbf16, #tpu.memory_space<vmem>>, vector<1x32x64xbf16>
      %42 = vector.shape_cast %41 : vector<1x32x64xbf16> to vector<32x64xbf16>
      %cst_36 = arith.constant dense<0.000000e+00> : vector<24x64xf32>
      %43 = tpu.matmul %40, %42, %cst_36 {dimension_numbers = #tpu.dot_dimension_numbers<[1], [0], [0], [1], [0, 0, 1, 1], [], []>} : vector<24x32xbf16>, vector<32x64xbf16>, vector<24x64xf32> -> vector<24x64xf32>
      %44 = arith.addf %38, %43 : vector<24x64xf32>
      %45 = vector.extract_strided_slice %32 {offsets = [2, 0], sizes = [24, 32], strides = [1, 1]} : vector<32x32xf32> to vector<24x32xf32>
      %46 = arith.truncf %45 : vector<24x32xf32> to vector<24x32xbf16>
      %c2 = arith.constant 2 : index
      %c0_37 = arith.constant 0 : index
      %c0_38 = arith.constant 0 : index
      %47 = vector.load %arg4[%c2, %c0_37, %c0_38] : memref<25x32x64xbf16, #tpu.memory_space<vmem>>, vector<1x32x64xbf16>
      %48 = vector.shape_cast %47 : vector<1x32x64xbf16> to vector<32x64xbf16>
      %cst_39 = arith.constant dense<0.000000e+00> : vector<24x64xf32>
      %49 = tpu.matmul %46, %48, %cst_39 {dimension_numbers = #tpu.dot_dimension_numbers<[1], [0], [0], [1], [0, 0, 1, 1], [], []>} : vector<24x32xbf16>, vector<32x64xbf16>, vector<24x64xf32> -> vector<24x64xf32>
      %50 = arith.addf %44, %49 : vector<24x64xf32>
      %51 = vector.extract_strided_slice %32 {offsets = [3, 0], sizes = [24, 32], strides = [1, 1]} : vector<32x32xf32> to vector<24x32xf32>
      %52 = arith.truncf %51 : vector<24x32xf32> to vector<24x32xbf16>
      %c3 = arith.constant 3 : index
      %c0_40 = arith.constant 0 : index
      %c0_41 = arith.constant 0 : index
      %53 = vector.load %arg4[%c3, %c0_40, %c0_41] : memref<25x32x64xbf16, #tpu.memory_space<vmem>>, vector<1x32x64xbf16>
      %54 = vector.shape_cast %53 : vector<1x32x64xbf16> to vector<32x64xbf16>
      %cst_42 = arith.constant dense<0.000000e+00> : vector<24x64xf32>
      %55 = tpu.matmul %52, %54, %cst_42 {dimension_numbers = #tpu.dot_dimension_numbers<[1], [0], [0], [1], [0, 0, 1, 1], [], []>} : vector<24x32xbf16>, vector<32x64xbf16>, vector<24x64xf32> -> vector<24x64xf32>
      %56 = arith.addf %50, %55 : vector<24x64xf32>
      %57 = vector.extract_strided_slice %32 {offsets = [4, 0], sizes = [24, 32], strides = [1, 1]} : vector<32x32xf32> to vector<24x32xf32>
      %58 = arith.truncf %57 : vector<24x32xf32> to vector<24x32xbf16>
      %c4 = arith.constant 4 : index
      %c0_43 = arith.constant 0 : index
      %c0_44 = arith.constant 0 : index
      %59 = vector.load %arg4[%c4, %c0_43, %c0_44] : memref<25x32x64xbf16, #tpu.memory_space<vmem>>, vector<1x32x64xbf16>
      %60 = vector.shape_cast %59 : vector<1x32x64xbf16> to vector<32x64xbf16>
      %cst_45 = arith.constant dense<0.000000e+00> : vector<24x64xf32>
      %61 = tpu.matmul %58, %60, %cst_45 {dimension_numbers = #tpu.dot_dimension_numbers<[1], [0], [0], [1], [0, 0, 1, 1], [], []>} : vector<24x32xbf16>, vector<32x64xbf16>, vector<24x64xf32> -> vector<24x64xf32>
      %62 = arith.addf %56, %61 : vector<24x64xf32>
      %c1_i32_46 = arith.constant 1 : i32
      %63 = arith.addi %27, %c1_i32_46 : i32
      %c24_i32_47 = arith.constant 24 : i32
      %64 = arith.muli %63, %c24_i32_47 : i32
      %65 = arith.index_cast %64 : i32 to index
      %c0_48 = arith.constant 0 : index
      %66 = vector.load %arg11[%65, %c0_48] : memref<440x32xf32, #tpu.memory_space<vmem>>, vector<32x32xf32>
      %67 = vector.extract_strided_slice %66 {offsets = [0, 0], sizes = [24, 32], strides = [1, 1]} : vector<32x32xf32> to vector<24x32xf32>
      %68 = arith.truncf %67 : vector<24x32xf32> to vector<24x32xbf16>
      %c5 = arith.constant 5 : index
      %c0_49 = arith.constant 0 : index
      %c0_50 = arith.constant 0 : index
      %69 = vector.load %arg4[%c5, %c0_49, %c0_50] : memref<25x32x64xbf16, #tpu.memory_space<vmem>>, vector<1x32x64xbf16>
      %70 = vector.shape_cast %69 : vector<1x32x64xbf16> to vector<32x64xbf16>
      %cst_51 = arith.constant dense<0.000000e+00> : vector<24x64xf32>
      %71 = tpu.matmul %68, %70, %cst_51 {dimension_numbers = #tpu.dot_dimension_numbers<[1], [0], [0], [1], [0, 0, 1, 1], [], []>} : vector<24x32xbf16>, vector<32x64xbf16>, vector<24x64xf32> -> vector<24x64xf32>
      %72 = arith.addf %62, %71 : vector<24x64xf32>
      %73 = vector.extract_strided_slice %66 {offsets = [1, 0], sizes = [24, 32], strides = [1, 1]} : vector<32x32xf32> to vector<24x32xf32>
      %74 = arith.truncf %73 : vector<24x32xf32> to vector<24x32xbf16>
      %c6 = arith.constant 6 : index
      %c0_52 = arith.constant 0 : index
      %c0_53 = arith.constant 0 : index
      %75 = vector.load %arg4[%c6, %c0_52, %c0_53] : memref<25x32x64xbf16, #tpu.memory_space<vmem>>, vector<1x32x64xbf16>
      %76 = vector.shape_cast %75 : vector<1x32x64xbf16> to vector<32x64xbf16>
      %cst_54 = arith.constant dense<0.000000e+00> : vector<24x64xf32>
      %77 = tpu.matmul %74, %76, %cst_54 {dimension_numbers = #tpu.dot_dimension_numbers<[1], [0], [0], [1], [0, 0, 1, 1], [], []>} : vector<24x32xbf16>, vector<32x64xbf16>, vector<24x64xf32> -> vector<24x64xf32>
      %78 = arith.addf %72, %77 : vector<24x64xf32>
      %79 = vector.extract_strided_slice %66 {offsets = [2, 0], sizes = [24, 32], strides = [1, 1]} : vector<32x32xf32> to vector<24x32xf32>
      %80 = arith.truncf %79 : vector<24x32xf32> to vector<24x32xbf16>
      %c7 = arith.constant 7 : index
      %c0_55 = arith.constant 0 : index
      %c0_56 = arith.constant 0 : index
      %81 = vector.load %arg4[%c7, %c0_55, %c0_56] : memref<25x32x64xbf16, #tpu.memory_space<vmem>>, vector<1x32x64xbf16>
      %82 = vector.shape_cast %81 : vector<1x32x64xbf16> to vector<32x64xbf16>
      %cst_57 = arith.constant dense<0.000000e+00> : vector<24x64xf32>
      %83 = tpu.matmul %80, %82, %cst_57 {dimension_numbers = #tpu.dot_dimension_numbers<[1], [0], [0], [1], [0, 0, 1, 1], [], []>} : vector<24x32xbf16>, vector<32x64xbf16>, vector<24x64xf32> -> vector<24x64xf32>
      %84 = arith.addf %78, %83 : vector<24x64xf32>
      %85 = vector.extract_strided_slice %66 {offsets = [3, 0], sizes = [24, 32], strides = [1, 1]} : vector<32x32xf32> to vector<24x32xf32>
      %86 = arith.truncf %85 : vector<24x32xf32> to vector<24x32xbf16>
      %c8 = arith.constant 8 : index
      %c0_58 = arith.constant 0 : index
      %c0_59 = arith.constant 0 : index
      %87 = vector.load %arg4[%c8, %c0_58, %c0_59] : memref<25x32x64xbf16, #tpu.memory_space<vmem>>, vector<1x32x64xbf16>
      %88 = vector.shape_cast %87 : vector<1x32x64xbf16> to vector<32x64xbf16>
      %cst_60 = arith.constant dense<0.000000e+00> : vector<24x64xf32>
      %89 = tpu.matmul %86, %88, %cst_60 {dimension_numbers = #tpu.dot_dimension_numbers<[1], [0], [0], [1], [0, 0, 1, 1], [], []>} : vector<24x32xbf16>, vector<32x64xbf16>, vector<24x64xf32> -> vector<24x64xf32>
      %90 = arith.addf %84, %89 : vector<24x64xf32>
      %91 = vector.extract_strided_slice %66 {offsets = [4, 0], sizes = [24, 32], strides = [1, 1]} : vector<32x32xf32> to vector<24x32xf32>
      %92 = arith.truncf %91 : vector<24x32xf32> to vector<24x32xbf16>
      %c9 = arith.constant 9 : index
      %c0_61 = arith.constant 0 : index
      %c0_62 = arith.constant 0 : index
      %93 = vector.load %arg4[%c9, %c0_61, %c0_62] : memref<25x32x64xbf16, #tpu.memory_space<vmem>>, vector<1x32x64xbf16>
      %94 = vector.shape_cast %93 : vector<1x32x64xbf16> to vector<32x64xbf16>
      %cst_63 = arith.constant dense<0.000000e+00> : vector<24x64xf32>
      %95 = tpu.matmul %92, %94, %cst_63 {dimension_numbers = #tpu.dot_dimension_numbers<[1], [0], [0], [1], [0, 0, 1, 1], [], []>} : vector<24x32xbf16>, vector<32x64xbf16>, vector<24x64xf32> -> vector<24x64xf32>
      %96 = arith.addf %90, %95 : vector<24x64xf32>
      %c2_i32_64 = arith.constant 2 : i32
      %97 = arith.addi %27, %c2_i32_64 : i32
      %c24_i32_65 = arith.constant 24 : i32
      %98 = arith.muli %97, %c24_i32_65 : i32
      %99 = arith.index_cast %98 : i32 to index
      %c0_66 = arith.constant 0 : index
      %100 = vector.load %arg11[%99, %c0_66] : memref<440x32xf32, #tpu.memory_space<vmem>>, vector<32x32xf32>
      %101 = vector.extract_strided_slice %100 {offsets = [0, 0], sizes = [24, 32], strides = [1, 1]} : vector<32x32xf32> to vector<24x32xf32>
      %102 = arith.truncf %101 : vector<24x32xf32> to vector<24x32xbf16>
      %c10 = arith.constant 10 : index
      %c0_67 = arith.constant 0 : index
      %c0_68 = arith.constant 0 : index
      %103 = vector.load %arg4[%c10, %c0_67, %c0_68] : memref<25x32x64xbf16, #tpu.memory_space<vmem>>, vector<1x32x64xbf16>
      %104 = vector.shape_cast %103 : vector<1x32x64xbf16> to vector<32x64xbf16>
      %cst_69 = arith.constant dense<0.000000e+00> : vector<24x64xf32>
      %105 = tpu.matmul %102, %104, %cst_69 {dimension_numbers = #tpu.dot_dimension_numbers<[1], [0], [0], [1], [0, 0, 1, 1], [], []>} : vector<24x32xbf16>, vector<32x64xbf16>, vector<24x64xf32> -> vector<24x64xf32>
      %106 = arith.addf %96, %105 : vector<24x64xf32>
      %107 = vector.extract_strided_slice %100 {offsets = [1, 0], sizes = [24, 32], strides = [1, 1]} : vector<32x32xf32> to vector<24x32xf32>
      %108 = arith.truncf %107 : vector<24x32xf32> to vector<24x32xbf16>
      %c11 = arith.constant 11 : index
      %c0_70 = arith.constant 0 : index
      %c0_71 = arith.constant 0 : index
      %109 = vector.load %arg4[%c11, %c0_70, %c0_71] : memref<25x32x64xbf16, #tpu.memory_space<vmem>>, vector<1x32x64xbf16>
      %110 = vector.shape_cast %109 : vector<1x32x64xbf16> to vector<32x64xbf16>
      %cst_72 = arith.constant dense<0.000000e+00> : vector<24x64xf32>
      %111 = tpu.matmul %108, %110, %cst_72 {dimension_numbers = #tpu.dot_dimension_numbers<[1], [0], [0], [1], [0, 0, 1, 1], [], []>} : vector<24x32xbf16>, vector<32x64xbf16>, vector<24x64xf32> -> vector<24x64xf32>
      %112 = arith.addf %106, %111 : vector<24x64xf32>
      %113 = vector.extract_strided_slice %100 {offsets = [2, 0], sizes = [24, 32], strides = [1, 1]} : vector<32x32xf32> to vector<24x32xf32>
      %114 = arith.truncf %113 : vector<24x32xf32> to vector<24x32xbf16>
      %c12 = arith.constant 12 : index
      %c0_73 = arith.constant 0 : index
      %c0_74 = arith.constant 0 : index
      %115 = vector.load %arg4[%c12, %c0_73, %c0_74] : memref<25x32x64xbf16, #tpu.memory_space<vmem>>, vector<1x32x64xbf16>
      %116 = vector.shape_cast %115 : vector<1x32x64xbf16> to vector<32x64xbf16>
      %cst_75 = arith.constant dense<0.000000e+00> : vector<24x64xf32>
      %117 = tpu.matmul %114, %116, %cst_75 {dimension_numbers = #tpu.dot_dimension_numbers<[1], [0], [0], [1], [0, 0, 1, 1], [], []>} : vector<24x32xbf16>, vector<32x64xbf16>, vector<24x64xf32> -> vector<24x64xf32>
      %118 = arith.addf %112, %117 : vector<24x64xf32>
      %119 = vector.extract_strided_slice %100 {offsets = [3, 0], sizes = [24, 32], strides = [1, 1]} : vector<32x32xf32> to vector<24x32xf32>
      %120 = arith.truncf %119 : vector<24x32xf32> to vector<24x32xbf16>
      %c13 = arith.constant 13 : index
      %c0_76 = arith.constant 0 : index
      %c0_77 = arith.constant 0 : index
      %121 = vector.load %arg4[%c13, %c0_76, %c0_77] : memref<25x32x64xbf16, #tpu.memory_space<vmem>>, vector<1x32x64xbf16>
      %122 = vector.shape_cast %121 : vector<1x32x64xbf16> to vector<32x64xbf16>
      %cst_78 = arith.constant dense<0.000000e+00> : vector<24x64xf32>
      %123 = tpu.matmul %120, %122, %cst_78 {dimension_numbers = #tpu.dot_dimension_numbers<[1], [0], [0], [1], [0, 0, 1, 1], [], []>} : vector<24x32xbf16>, vector<32x64xbf16>, vector<24x64xf32> -> vector<24x64xf32>
      %124 = arith.addf %118, %123 : vector<24x64xf32>
      %125 = vector.extract_strided_slice %100 {offsets = [4, 0], sizes = [24, 32], strides = [1, 1]} : vector<32x32xf32> to vector<24x32xf32>
      %126 = arith.truncf %125 : vector<24x32xf32> to vector<24x32xbf16>
      %c14 = arith.constant 14 : index
      %c0_79 = arith.constant 0 : index
      %c0_80 = arith.constant 0 : index
      %127 = vector.load %arg4[%c14, %c0_79, %c0_80] : memref<25x32x64xbf16, #tpu.memory_space<vmem>>, vector<1x32x64xbf16>
      %128 = vector.shape_cast %127 : vector<1x32x64xbf16> to vector<32x64xbf16>
      %cst_81 = arith.constant dense<0.000000e+00> : vector<24x64xf32>
      %129 = tpu.matmul %126, %128, %cst_81 {dimension_numbers = #tpu.dot_dimension_numbers<[1], [0], [0], [1], [0, 0, 1, 1], [], []>} : vector<24x32xbf16>, vector<32x64xbf16>, vector<24x64xf32> -> vector<24x64xf32>
      %130 = arith.addf %124, %129 : vector<24x64xf32>
      %c3_i32 = arith.constant 3 : i32
      %131 = arith.addi %27, %c3_i32 : i32
      %c24_i32_82 = arith.constant 24 : i32
      %132 = arith.muli %131, %c24_i32_82 : i32
      %133 = arith.index_cast %132 : i32 to index
      %c0_83 = arith.constant 0 : index
      %134 = vector.load %arg11[%133, %c0_83] : memref<440x32xf32, #tpu.memory_space<vmem>>, vector<32x32xf32>
      %135 = vector.extract_strided_slice %134 {offsets = [0, 0], sizes = [24, 32], strides = [1, 1]} : vector<32x32xf32> to vector<24x32xf32>
      %136 = arith.truncf %135 : vector<24x32xf32> to vector<24x32xbf16>
      %c15 = arith.constant 15 : index
      %c0_84 = arith.constant 0 : index
      %c0_85 = arith.constant 0 : index
      %137 = vector.load %arg4[%c15, %c0_84, %c0_85] : memref<25x32x64xbf16, #tpu.memory_space<vmem>>, vector<1x32x64xbf16>
      %138 = vector.shape_cast %137 : vector<1x32x64xbf16> to vector<32x64xbf16>
      %cst_86 = arith.constant dense<0.000000e+00> : vector<24x64xf32>
      %139 = tpu.matmul %136, %138, %cst_86 {dimension_numbers = #tpu.dot_dimension_numbers<[1], [0], [0], [1], [0, 0, 1, 1], [], []>} : vector<24x32xbf16>, vector<32x64xbf16>, vector<24x64xf32> -> vector<24x64xf32>
      %140 = arith.addf %130, %139 : vector<24x64xf32>
      %141 = vector.extract_strided_slice %134 {offsets = [1, 0], sizes = [24, 32], strides = [1, 1]} : vector<32x32xf32> to vector<24x32xf32>
      %142 = arith.truncf %141 : vector<24x32xf32> to vector<24x32xbf16>
      %c16 = arith.constant 16 : index
      %c0_87 = arith.constant 0 : index
      %c0_88 = arith.constant 0 : index
      %143 = vector.load %arg4[%c16, %c0_87, %c0_88] : memref<25x32x64xbf16, #tpu.memory_space<vmem>>, vector<1x32x64xbf16>
      %144 = vector.shape_cast %143 : vector<1x32x64xbf16> to vector<32x64xbf16>
      %cst_89 = arith.constant dense<0.000000e+00> : vector<24x64xf32>
      %145 = tpu.matmul %142, %144, %cst_89 {dimension_numbers = #tpu.dot_dimension_numbers<[1], [0], [0], [1], [0, 0, 1, 1], [], []>} : vector<24x32xbf16>, vector<32x64xbf16>, vector<24x64xf32> -> vector<24x64xf32>
      %146 = arith.addf %140, %145 : vector<24x64xf32>
      %147 = vector.extract_strided_slice %134 {offsets = [2, 0], sizes = [24, 32], strides = [1, 1]} : vector<32x32xf32> to vector<24x32xf32>
      %148 = arith.truncf %147 : vector<24x32xf32> to vector<24x32xbf16>
      %c17 = arith.constant 17 : index
      %c0_90 = arith.constant 0 : index
      %c0_91 = arith.constant 0 : index
      %149 = vector.load %arg4[%c17, %c0_90, %c0_91] : memref<25x32x64xbf16, #tpu.memory_space<vmem>>, vector<1x32x64xbf16>
      %150 = vector.shape_cast %149 : vector<1x32x64xbf16> to vector<32x64xbf16>
      %cst_92 = arith.constant dense<0.000000e+00> : vector<24x64xf32>
      %151 = tpu.matmul %148, %150, %cst_92 {dimension_numbers = #tpu.dot_dimension_numbers<[1], [0], [0], [1], [0, 0, 1, 1], [], []>} : vector<24x32xbf16>, vector<32x64xbf16>, vector<24x64xf32> -> vector<24x64xf32>
      %152 = arith.addf %146, %151 : vector<24x64xf32>
      %153 = vector.extract_strided_slice %134 {offsets = [3, 0], sizes = [24, 32], strides = [1, 1]} : vector<32x32xf32> to vector<24x32xf32>
      %154 = arith.truncf %153 : vector<24x32xf32> to vector<24x32xbf16>
      %c18 = arith.constant 18 : index
      %c0_93 = arith.constant 0 : index
      %c0_94 = arith.constant 0 : index
      %155 = vector.load %arg4[%c18, %c0_93, %c0_94] : memref<25x32x64xbf16, #tpu.memory_space<vmem>>, vector<1x32x64xbf16>
      %156 = vector.shape_cast %155 : vector<1x32x64xbf16> to vector<32x64xbf16>
      %cst_95 = arith.constant dense<0.000000e+00> : vector<24x64xf32>
      %157 = tpu.matmul %154, %156, %cst_95 {dimension_numbers = #tpu.dot_dimension_numbers<[1], [0], [0], [1], [0, 0, 1, 1], [], []>} : vector<24x32xbf16>, vector<32x64xbf16>, vector<24x64xf32> -> vector<24x64xf32>
      %158 = arith.addf %152, %157 : vector<24x64xf32>
      %159 = vector.extract_strided_slice %134 {offsets = [4, 0], sizes = [24, 32], strides = [1, 1]} : vector<32x32xf32> to vector<24x32xf32>
      %160 = arith.truncf %159 : vector<24x32xf32> to vector<24x32xbf16>
      %c19 = arith.constant 19 : index
      %c0_96 = arith.constant 0 : index
      %c0_97 = arith.constant 0 : index
      %161 = vector.load %arg4[%c19, %c0_96, %c0_97] : memref<25x32x64xbf16, #tpu.memory_space<vmem>>, vector<1x32x64xbf16>
      %162 = vector.shape_cast %161 : vector<1x32x64xbf16> to vector<32x64xbf16>
      %cst_98 = arith.constant dense<0.000000e+00> : vector<24x64xf32>
      %163 = tpu.matmul %160, %162, %cst_98 {dimension_numbers = #tpu.dot_dimension_numbers<[1], [0], [0], [1], [0, 0, 1, 1], [], []>} : vector<24x32xbf16>, vector<32x64xbf16>, vector<24x64xf32> -> vector<24x64xf32>
      %164 = arith.addf %158, %163 : vector<24x64xf32>
      %c4_i32 = arith.constant 4 : i32
      %165 = arith.addi %27, %c4_i32 : i32
      %c24_i32_99 = arith.constant 24 : i32
      %166 = arith.muli %165, %c24_i32_99 : i32
      %167 = arith.index_cast %166 : i32 to index
      %c0_100 = arith.constant 0 : index
      %168 = vector.load %arg11[%167, %c0_100] : memref<440x32xf32, #tpu.memory_space<vmem>>, vector<32x32xf32>
      %169 = vector.extract_strided_slice %168 {offsets = [0, 0], sizes = [24, 32], strides = [1, 1]} : vector<32x32xf32> to vector<24x32xf32>
      %170 = arith.truncf %169 : vector<24x32xf32> to vector<24x32xbf16>
      %c20 = arith.constant 20 : index
      %c0_101 = arith.constant 0 : index
      %c0_102 = arith.constant 0 : index
      %171 = vector.load %arg4[%c20, %c0_101, %c0_102] : memref<25x32x64xbf16, #tpu.memory_space<vmem>>, vector<1x32x64xbf16>
      %172 = vector.shape_cast %171 : vector<1x32x64xbf16> to vector<32x64xbf16>
      %cst_103 = arith.constant dense<0.000000e+00> : vector<24x64xf32>
      %173 = tpu.matmul %170, %172, %cst_103 {dimension_numbers = #tpu.dot_dimension_numbers<[1], [0], [0], [1], [0, 0, 1, 1], [], []>} : vector<24x32xbf16>, vector<32x64xbf16>, vector<24x64xf32> -> vector<24x64xf32>
      %174 = arith.addf %164, %173 : vector<24x64xf32>
      %175 = vector.extract_strided_slice %168 {offsets = [1, 0], sizes = [24, 32], strides = [1, 1]} : vector<32x32xf32> to vector<24x32xf32>
      %176 = arith.truncf %175 : vector<24x32xf32> to vector<24x32xbf16>
      %c21 = arith.constant 21 : index
      %c0_104 = arith.constant 0 : index
      %c0_105 = arith.constant 0 : index
      %177 = vector.load %arg4[%c21, %c0_104, %c0_105] : memref<25x32x64xbf16, #tpu.memory_space<vmem>>, vector<1x32x64xbf16>
      %178 = vector.shape_cast %177 : vector<1x32x64xbf16> to vector<32x64xbf16>
      %cst_106 = arith.constant dense<0.000000e+00> : vector<24x64xf32>
      %179 = tpu.matmul %176, %178, %cst_106 {dimension_numbers = #tpu.dot_dimension_numbers<[1], [0], [0], [1], [0, 0, 1, 1], [], []>} : vector<24x32xbf16>, vector<32x64xbf16>, vector<24x64xf32> -> vector<24x64xf32>
      %180 = arith.addf %174, %179 : vector<24x64xf32>
      %181 = vector.extract_strided_slice %168 {offsets = [2, 0], sizes = [24, 32], strides = [1, 1]} : vector<32x32xf32> to vector<24x32xf32>
      %182 = arith.truncf %181 : vector<24x32xf32> to vector<24x32xbf16>
      %c22 = arith.constant 22 : index
      %c0_107 = arith.constant 0 : index
      %c0_108 = arith.constant 0 : index
      %183 = vector.load %arg4[%c22, %c0_107, %c0_108] : memref<25x32x64xbf16, #tpu.memory_space<vmem>>, vector<1x32x64xbf16>
      %184 = vector.shape_cast %183 : vector<1x32x64xbf16> to vector<32x64xbf16>
      %cst_109 = arith.constant dense<0.000000e+00> : vector<24x64xf32>
      %185 = tpu.matmul %182, %184, %cst_109 {dimension_numbers = #tpu.dot_dimension_numbers<[1], [0], [0], [1], [0, 0, 1, 1], [], []>} : vector<24x32xbf16>, vector<32x64xbf16>, vector<24x64xf32> -> vector<24x64xf32>
      %186 = arith.addf %180, %185 : vector<24x64xf32>
      %187 = vector.extract_strided_slice %168 {offsets = [3, 0], sizes = [24, 32], strides = [1, 1]} : vector<32x32xf32> to vector<24x32xf32>
      %188 = arith.truncf %187 : vector<24x32xf32> to vector<24x32xbf16>
      %c23 = arith.constant 23 : index
      %c0_110 = arith.constant 0 : index
      %c0_111 = arith.constant 0 : index
      %189 = vector.load %arg4[%c23, %c0_110, %c0_111] : memref<25x32x64xbf16, #tpu.memory_space<vmem>>, vector<1x32x64xbf16>
      %190 = vector.shape_cast %189 : vector<1x32x64xbf16> to vector<32x64xbf16>
      %cst_112 = arith.constant dense<0.000000e+00> : vector<24x64xf32>
      %191 = tpu.matmul %188, %190, %cst_112 {dimension_numbers = #tpu.dot_dimension_numbers<[1], [0], [0], [1], [0, 0, 1, 1], [], []>} : vector<24x32xbf16>, vector<32x64xbf16>, vector<24x64xf32> -> vector<24x64xf32>
      %192 = arith.addf %186, %191 : vector<24x64xf32>
      %193 = vector.extract_strided_slice %168 {offsets = [4, 0], sizes = [24, 32], strides = [1, 1]} : vector<32x32xf32> to vector<24x32xf32>
      %194 = arith.truncf %193 : vector<24x32xf32> to vector<24x32xbf16>
      %c24 = arith.constant 24 : index
      %c0_113 = arith.constant 0 : index
      %c0_114 = arith.constant 0 : index
      %195 = vector.load %arg4[%c24, %c0_113, %c0_114] : memref<25x32x64xbf16, #tpu.memory_space<vmem>>, vector<1x32x64xbf16>
      %196 = vector.shape_cast %195 : vector<1x32x64xbf16> to vector<32x64xbf16>
      %cst_115 = arith.constant dense<0.000000e+00> : vector<24x64xf32>
      %197 = tpu.matmul %194, %196, %cst_115 {dimension_numbers = #tpu.dot_dimension_numbers<[1], [0], [0], [1], [0, 0, 1, 1], [], []>} : vector<24x32xbf16>, vector<32x64xbf16>, vector<24x64xf32> -> vector<24x64xf32>
      %198 = arith.addf %192, %197 : vector<24x64xf32>
      %199 = vector.broadcast %5 : vector<1x64xf32> to vector<24x64xf32>
      %200 = arith.addf %198, %199 : vector<24x64xf32>
      %cst_116 = arith.constant 0.000000e+00 : f32
      %201 = vector.broadcast %cst_116 : f32 to vector<24x64xf32>
      %202 = arith.maximumf %200, %201 : vector<24x64xf32>
      %c2_i32_117 = arith.constant 2 : i32
      %203 = arith.muli %c2_i32_117, %26 : i32
      %c1_i32_118 = arith.constant 1 : i32
      %204 = arith.addi %203, %c1_i32_118 : i32
      %cst_119 = arith.constant 0.000000e+00 : f32
      %205 = vector.broadcast %cst_119 : f32 to vector<24x64xf32>
      %c0_i32_120 = arith.constant 0 : i32
      %206 = arith.addi %204, %c0_i32_120 : i32
      %c24_i32_121 = arith.constant 24 : i32
      %207 = arith.muli %206, %c24_i32_121 : i32
      %208 = arith.index_cast %207 : i32 to index
      %c0_122 = arith.constant 0 : index
      %209 = vector.load %arg11[%208, %c0_122] : memref<440x32xf32, #tpu.memory_space<vmem>>, vector<32x32xf32>
      %210 = vector.extract_strided_slice %209 {offsets = [0, 0], sizes = [24, 32], strides = [1, 1]} : vector<32x32xf32> to vector<24x32xf32>
      %211 = arith.truncf %210 : vector<24x32xf32> to vector<24x32xbf16>
      %c0_123 = arith.constant 0 : index
      %c0_124 = arith.constant 0 : index
      %c0_125 = arith.constant 0 : index
      %212 = vector.load %arg4[%c0_123, %c0_124, %c0_125] : memref<25x32x64xbf16, #tpu.memory_space<vmem>>, vector<1x32x64xbf16>
      %213 = vector.shape_cast %212 : vector<1x32x64xbf16> to vector<32x64xbf16>
      %cst_126 = arith.constant dense<0.000000e+00> : vector<24x64xf32>
      %214 = tpu.matmul %211, %213, %cst_126 {dimension_numbers = #tpu.dot_dimension_numbers<[1], [0], [0], [1], [0, 0, 1, 1], [], []>} : vector<24x32xbf16>, vector<32x64xbf16>, vector<24x64xf32> -> vector<24x64xf32>
      %215 = arith.addf %205, %214 : vector<24x64xf32>
      %216 = vector.extract_strided_slice %209 {offsets = [1, 0], sizes = [24, 32], strides = [1, 1]} : vector<32x32xf32> to vector<24x32xf32>
      %217 = arith.truncf %216 : vector<24x32xf32> to vector<24x32xbf16>
      %c1_127 = arith.constant 1 : index
      %c0_128 = arith.constant 0 : index
      %c0_129 = arith.constant 0 : index
      %218 = vector.load %arg4[%c1_127, %c0_128, %c0_129] : memref<25x32x64xbf16, #tpu.memory_space<vmem>>, vector<1x32x64xbf16>
      %219 = vector.shape_cast %218 : vector<1x32x64xbf16> to vector<32x64xbf16>
      %cst_130 = arith.constant dense<0.000000e+00> : vector<24x64xf32>
      %220 = tpu.matmul %217, %219, %cst_130 {dimension_numbers = #tpu.dot_dimension_numbers<[1], [0], [0], [1], [0, 0, 1, 1], [], []>} : vector<24x32xbf16>, vector<32x64xbf16>, vector<24x64xf32> -> vector<24x64xf32>
      %221 = arith.addf %215, %220 : vector<24x64xf32>
      %222 = vector.extract_strided_slice %209 {offsets = [2, 0], sizes = [24, 32], strides = [1, 1]} : vector<32x32xf32> to vector<24x32xf32>
      %223 = arith.truncf %222 : vector<24x32xf32> to vector<24x32xbf16>
      %c2_131 = arith.constant 2 : index
      %c0_132 = arith.constant 0 : index
      %c0_133 = arith.constant 0 : index
      %224 = vector.load %arg4[%c2_131, %c0_132, %c0_133] : memref<25x32x64xbf16, #tpu.memory_space<vmem>>, vector<1x32x64xbf16>
      %225 = vector.shape_cast %224 : vector<1x32x64xbf16> to vector<32x64xbf16>
      %cst_134 = arith.constant dense<0.000000e+00> : vector<24x64xf32>
      %226 = tpu.matmul %223, %225, %cst_134 {dimension_numbers = #tpu.dot_dimension_numbers<[1], [0], [0], [1], [0, 0, 1, 1], [], []>} : vector<24x32xbf16>, vector<32x64xbf16>, vector<24x64xf32> -> vector<24x64xf32>
      %227 = arith.addf %221, %226 : vector<24x64xf32>
      %228 = vector.extract_strided_slice %209 {offsets = [3, 0], sizes = [24, 32], strides = [1, 1]} : vector<32x32xf32> to vector<24x32xf32>
      %229 = arith.truncf %228 : vector<24x32xf32> to vector<24x32xbf16>
      %c3_135 = arith.constant 3 : index
      %c0_136 = arith.constant 0 : index
      %c0_137 = arith.constant 0 : index
      %230 = vector.load %arg4[%c3_135, %c0_136, %c0_137] : memref<25x32x64xbf16, #tpu.memory_space<vmem>>, vector<1x32x64xbf16>
      %231 = vector.shape_cast %230 : vector<1x32x64xbf16> to vector<32x64xbf16>
      %cst_138 = arith.constant dense<0.000000e+00> : vector<24x64xf32>
      %232 = tpu.matmul %229, %231, %cst_138 {dimension_numbers = #tpu.dot_dimension_numbers<[1], [0], [0], [1], [0, 0, 1, 1], [], []>} : vector<24x32xbf16>, vector<32x64xbf16>, vector<24x64xf32> -> vector<24x64xf32>
      %233 = arith.addf %227, %232 : vector<24x64xf32>
      %234 = vector.extract_strided_slice %209 {offsets = [4, 0], sizes = [24, 32], strides = [1, 1]} : vector<32x32xf32> to vector<24x32xf32>
      %235 = arith.truncf %234 : vector<24x32xf32> to vector<24x32xbf16>
      %c4_139 = arith.constant 4 : index
      %c0_140 = arith.constant 0 : index
      %c0_141 = arith.constant 0 : index
      %236 = vector.load %arg4[%c4_139, %c0_140, %c0_141] : memref<25x32x64xbf16, #tpu.memory_space<vmem>>, vector<1x32x64xbf16>
      %237 = vector.shape_cast %236 : vector<1x32x64xbf16> to vector<32x64xbf16>
      %cst_142 = arith.constant dense<0.000000e+00> : vector<24x64xf32>
      %238 = tpu.matmul %235, %237, %cst_142 {dimension_numbers = #tpu.dot_dimension_numbers<[1], [0], [0], [1], [0, 0, 1, 1], [], []>} : vector<24x32xbf16>, vector<32x64xbf16>, vector<24x64xf32> -> vector<24x64xf32>
      %239 = arith.addf %233, %238 : vector<24x64xf32>
      %c1_i32_143 = arith.constant 1 : i32
      %240 = arith.addi %204, %c1_i32_143 : i32
      %c24_i32_144 = arith.constant 24 : i32
      %241 = arith.muli %240, %c24_i32_144 : i32
      %242 = arith.index_cast %241 : i32 to index
      %c0_145 = arith.constant 0 : index
      %243 = vector.load %arg11[%242, %c0_145] : memref<440x32xf32, #tpu.memory_space<vmem>>, vector<32x32xf32>
      %244 = vector.extract_strided_slice %243 {offsets = [0, 0], sizes = [24, 32], strides = [1, 1]} : vector<32x32xf32> to vector<24x32xf32>
      %245 = arith.truncf %244 : vector<24x32xf32> to vector<24x32xbf16>
      %c5_146 = arith.constant 5 : index
      %c0_147 = arith.constant 0 : index
      %c0_148 = arith.constant 0 : index
      %246 = vector.load %arg4[%c5_146, %c0_147, %c0_148] : memref<25x32x64xbf16, #tpu.memory_space<vmem>>, vector<1x32x64xbf16>
      %247 = vector.shape_cast %246 : vector<1x32x64xbf16> to vector<32x64xbf16>
      %cst_149 = arith.constant dense<0.000000e+00> : vector<24x64xf32>
      %248 = tpu.matmul %245, %247, %cst_149 {dimension_numbers = #tpu.dot_dimension_numbers<[1], [0], [0], [1], [0, 0, 1, 1], [], []>} : vector<24x32xbf16>, vector<32x64xbf16>, vector<24x64xf32> -> vector<24x64xf32>
      %249 = arith.addf %239, %248 : vector<24x64xf32>
      %250 = vector.extract_strided_slice %243 {offsets = [1, 0], sizes = [24, 32], strides = [1, 1]} : vector<32x32xf32> to vector<24x32xf32>
      %251 = arith.truncf %250 : vector<24x32xf32> to vector<24x32xbf16>
      %c6_150 = arith.constant 6 : index
      %c0_151 = arith.constant 0 : index
      %c0_152 = arith.constant 0 : index
      %252 = vector.load %arg4[%c6_150, %c0_151, %c0_152] : memref<25x32x64xbf16, #tpu.memory_space<vmem>>, vector<1x32x64xbf16>
      %253 = vector.shape_cast %252 : vector<1x32x64xbf16> to vector<32x64xbf16>
      %cst_153 = arith.constant dense<0.000000e+00> : vector<24x64xf32>
      %254 = tpu.matmul %251, %253, %cst_153 {dimension_numbers = #tpu.dot_dimension_numbers<[1], [0], [0], [1], [0, 0, 1, 1], [], []>} : vector<24x32xbf16>, vector<32x64xbf16>, vector<24x64xf32> -> vector<24x64xf32>
      %255 = arith.addf %249, %254 : vector<24x64xf32>
      %256 = vector.extract_strided_slice %243 {offsets = [2, 0], sizes = [24, 32], strides = [1, 1]} : vector<32x32xf32> to vector<24x32xf32>
      %257 = arith.truncf %256 : vector<24x32xf32> to vector<24x32xbf16>
      %c7_154 = arith.constant 7 : index
      %c0_155 = arith.constant 0 : index
      %c0_156 = arith.constant 0 : index
      %258 = vector.load %arg4[%c7_154, %c0_155, %c0_156] : memref<25x32x64xbf16, #tpu.memory_space<vmem>>, vector<1x32x64xbf16>
      %259 = vector.shape_cast %258 : vector<1x32x64xbf16> to vector<32x64xbf16>
      %cst_157 = arith.constant dense<0.000000e+00> : vector<24x64xf32>
      %260 = tpu.matmul %257, %259, %cst_157 {dimension_numbers = #tpu.dot_dimension_numbers<[1], [0], [0], [1], [0, 0, 1, 1], [], []>} : vector<24x32xbf16>, vector<32x64xbf16>, vector<24x64xf32> -> vector<24x64xf32>
      %261 = arith.addf %255, %260 : vector<24x64xf32>
      %262 = vector.extract_strided_slice %243 {offsets = [3, 0], sizes = [24, 32], strides = [1, 1]} : vector<32x32xf32> to vector<24x32xf32>
      %263 = arith.truncf %262 : vector<24x32xf32> to vector<24x32xbf16>
      %c8_158 = arith.constant 8 : index
      %c0_159 = arith.constant 0 : index
      %c0_160 = arith.constant 0 : index
      %264 = vector.load %arg4[%c8_158, %c0_159, %c0_160] : memref<25x32x64xbf16, #tpu.memory_space<vmem>>, vector<1x32x64xbf16>
      %265 = vector.shape_cast %264 : vector<1x32x64xbf16> to vector<32x64xbf16>
      %cst_161 = arith.constant dense<0.000000e+00> : vector<24x64xf32>
      %266 = tpu.matmul %263, %265, %cst_161 {dimension_numbers = #tpu.dot_dimension_numbers<[1], [0], [0], [1], [0, 0, 1, 1], [], []>} : vector<24x32xbf16>, vector<32x64xbf16>, vector<24x64xf32> -> vector<24x64xf32>
      %267 = arith.addf %261, %266 : vector<24x64xf32>
      %268 = vector.extract_strided_slice %243 {offsets = [4, 0], sizes = [24, 32], strides = [1, 1]} : vector<32x32xf32> to vector<24x32xf32>
      %269 = arith.truncf %268 : vector<24x32xf32> to vector<24x32xbf16>
      %c9_162 = arith.constant 9 : index
      %c0_163 = arith.constant 0 : index
      %c0_164 = arith.constant 0 : index
      %270 = vector.load %arg4[%c9_162, %c0_163, %c0_164] : memref<25x32x64xbf16, #tpu.memory_space<vmem>>, vector<1x32x64xbf16>
      %271 = vector.shape_cast %270 : vector<1x32x64xbf16> to vector<32x64xbf16>
      %cst_165 = arith.constant dense<0.000000e+00> : vector<24x64xf32>
      %272 = tpu.matmul %269, %271, %cst_165 {dimension_numbers = #tpu.dot_dimension_numbers<[1], [0], [0], [1], [0, 0, 1, 1], [], []>} : vector<24x32xbf16>, vector<32x64xbf16>, vector<24x64xf32> -> vector<24x64xf32>
      %273 = arith.addf %267, %272 : vector<24x64xf32>
      %c2_i32_166 = arith.constant 2 : i32
      %274 = arith.addi %204, %c2_i32_166 : i32
      %c24_i32_167 = arith.constant 24 : i32
      %275 = arith.muli %274, %c24_i32_167 : i32
      %276 = arith.index_cast %275 : i32 to index
      %c0_168 = arith.constant 0 : index
      %277 = vector.load %arg11[%276, %c0_168] : memref<440x32xf32, #tpu.memory_space<vmem>>, vector<32x32xf32>
      %278 = vector.extract_strided_slice %277 {offsets = [0, 0], sizes = [24, 32], strides = [1, 1]} : vector<32x32xf32> to vector<24x32xf32>
      %279 = arith.truncf %278 : vector<24x32xf32> to vector<24x32xbf16>
      %c10_169 = arith.constant 10 : index
      %c0_170 = arith.constant 0 : index
      %c0_171 = arith.constant 0 : index
      %280 = vector.load %arg4[%c10_169, %c0_170, %c0_171] : memref<25x32x64xbf16, #tpu.memory_space<vmem>>, vector<1x32x64xbf16>
      %281 = vector.shape_cast %280 : vector<1x32x64xbf16> to vector<32x64xbf16>
      %cst_172 = arith.constant dense<0.000000e+00> : vector<24x64xf32>
      %282 = tpu.matmul %279, %281, %cst_172 {dimension_numbers = #tpu.dot_dimension_numbers<[1], [0], [0], [1], [0, 0, 1, 1], [], []>} : vector<24x32xbf16>, vector<32x64xbf16>, vector<24x64xf32> -> vector<24x64xf32>
      %283 = arith.addf %273, %282 : vector<24x64xf32>
      %284 = vector.extract_strided_slice %277 {offsets = [1, 0], sizes = [24, 32], strides = [1, 1]} : vector<32x32xf32> to vector<24x32xf32>
      %285 = arith.truncf %284 : vector<24x32xf32> to vector<24x32xbf16>
      %c11_173 = arith.constant 11 : index
      %c0_174 = arith.constant 0 : index
      %c0_175 = arith.constant 0 : index
      %286 = vector.load %arg4[%c11_173, %c0_174, %c0_175] : memref<25x32x64xbf16, #tpu.memory_space<vmem>>, vector<1x32x64xbf16>
      %287 = vector.shape_cast %286 : vector<1x32x64xbf16> to vector<32x64xbf16>
      %cst_176 = arith.constant dense<0.000000e+00> : vector<24x64xf32>
      %288 = tpu.matmul %285, %287, %cst_176 {dimension_numbers = #tpu.dot_dimension_numbers<[1], [0], [0], [1], [0, 0, 1, 1], [], []>} : vector<24x32xbf16>, vector<32x64xbf16>, vector<24x64xf32> -> vector<24x64xf32>
      %289 = arith.addf %283, %288 : vector<24x64xf32>
      %290 = vector.extract_strided_slice %277 {offsets = [2, 0], sizes = [24, 32], strides = [1, 1]} : vector<32x32xf32> to vector<24x32xf32>
      %291 = arith.truncf %290 : vector<24x32xf32> to vector<24x32xbf16>
      %c12_177 = arith.constant 12 : index
      %c0_178 = arith.constant 0 : index
      %c0_179 = arith.constant 0 : index
      %292 = vector.load %arg4[%c12_177, %c0_178, %c0_179] : memref<25x32x64xbf16, #tpu.memory_space<vmem>>, vector<1x32x64xbf16>
      %293 = vector.shape_cast %292 : vector<1x32x64xbf16> to vector<32x64xbf16>
      %cst_180 = arith.constant dense<0.000000e+00> : vector<24x64xf32>
      %294 = tpu.matmul %291, %293, %cst_180 {dimension_numbers = #tpu.dot_dimension_numbers<[1], [0], [0], [1], [0, 0, 1, 1], [], []>} : vector<24x32xbf16>, vector<32x64xbf16>, vector<24x64xf32> -> vector<24x64xf32>
      %295 = arith.addf %289, %294 : vector<24x64xf32>
      %296 = vector.extract_strided_slice %277 {offsets = [3, 0], sizes = [24, 32], strides = [1, 1]} : vector<32x32xf32> to vector<24x32xf32>
      %297 = arith.truncf %296 : vector<24x32xf32> to vector<24x32xbf16>
      %c13_181 = arith.constant 13 : index
      %c0_182 = arith.constant 0 : index
      %c0_183 = arith.constant 0 : index
      %298 = vector.load %arg4[%c13_181, %c0_182, %c0_183] : memref<25x32x64xbf16, #tpu.memory_space<vmem>>, vector<1x32x64xbf16>
      %299 = vector.shape_cast %298 : vector<1x32x64xbf16> to vector<32x64xbf16>
      %cst_184 = arith.constant dense<0.000000e+00> : vector<24x64xf32>
      %300 = tpu.matmul %297, %299, %cst_184 {dimension_numbers = #tpu.dot_dimension_numbers<[1], [0], [0], [1], [0, 0, 1, 1], [], []>} : vector<24x32xbf16>, vector<32x64xbf16>, vector<24x64xf32> -> vector<24x64xf32>
      %301 = arith.addf %295, %300 : vector<24x64xf32>
      %302 = vector.extract_strided_slice %277 {offsets = [4, 0], sizes = [24, 32], strides = [1, 1]} : vector<32x32xf32> to vector<24x32xf32>
      %303 = arith.truncf %302 : vector<24x32xf32> to vector<24x32xbf16>
      %c14_185 = arith.constant 14 : index
      %c0_186 = arith.constant 0 : index
      %c0_187 = arith.constant 0 : index
      %304 = vector.load %arg4[%c14_185, %c0_186, %c0_187] : memref<25x32x64xbf16, #tpu.memory_space<vmem>>, vector<1x32x64xbf16>
      %305 = vector.shape_cast %304 : vector<1x32x64xbf16> to vector<32x64xbf16>
      %cst_188 = arith.constant dense<0.000000e+00> : vector<24x64xf32>
      %306 = tpu.matmul %303, %305, %cst_188 {dimension_numbers = #tpu.dot_dimension_numbers<[1], [0], [0], [1], [0, 0, 1, 1], [], []>} : vector<24x32xbf16>, vector<32x64xbf16>, vector<24x64xf32> -> vector<24x64xf32>
      %307 = arith.addf %301, %306 : vector<24x64xf32>
      %c3_i32_189 = arith.constant 3 : i32
      %308 = arith.addi %204, %c3_i32_189 : i32
      %c24_i32_190 = arith.constant 24 : i32
      %309 = arith.muli %308, %c24_i32_190 : i32
      %310 = arith.index_cast %309 : i32 to index
      %c0_191 = arith.constant 0 : index
      %311 = vector.load %arg11[%310, %c0_191] : memref<440x32xf32, #tpu.memory_space<vmem>>, vector<32x32xf32>
      %312 = vector.extract_strided_slice %311 {offsets = [0, 0], sizes = [24, 32], strides = [1, 1]} : vector<32x32xf32> to vector<24x32xf32>
      %313 = arith.truncf %312 : vector<24x32xf32> to vector<24x32xbf16>
      %c15_192 = arith.constant 15 : index
      %c0_193 = arith.constant 0 : index
      %c0_194 = arith.constant 0 : index
      %314 = vector.load %arg4[%c15_192, %c0_193, %c0_194] : memref<25x32x64xbf16, #tpu.memory_space<vmem>>, vector<1x32x64xbf16>
      %315 = vector.shape_cast %314 : vector<1x32x64xbf16> to vector<32x64xbf16>
      %cst_195 = arith.constant dense<0.000000e+00> : vector<24x64xf32>
      %316 = tpu.matmul %313, %315, %cst_195 {dimension_numbers = #tpu.dot_dimension_numbers<[1], [0], [0], [1], [0, 0, 1, 1], [], []>} : vector<24x32xbf16>, vector<32x64xbf16>, vector<24x64xf32> -> vector<24x64xf32>
      %317 = arith.addf %307, %316 : vector<24x64xf32>
      %318 = vector.extract_strided_slice %311 {offsets = [1, 0], sizes = [24, 32], strides = [1, 1]} : vector<32x32xf32> to vector<24x32xf32>
      %319 = arith.truncf %318 : vector<24x32xf32> to vector<24x32xbf16>
      %c16_196 = arith.constant 16 : index
      %c0_197 = arith.constant 0 : index
      %c0_198 = arith.constant 0 : index
      %320 = vector.load %arg4[%c16_196, %c0_197, %c0_198] : memref<25x32x64xbf16, #tpu.memory_space<vmem>>, vector<1x32x64xbf16>
      %321 = vector.shape_cast %320 : vector<1x32x64xbf16> to vector<32x64xbf16>
      %cst_199 = arith.constant dense<0.000000e+00> : vector<24x64xf32>
      %322 = tpu.matmul %319, %321, %cst_199 {dimension_numbers = #tpu.dot_dimension_numbers<[1], [0], [0], [1], [0, 0, 1, 1], [], []>} : vector<24x32xbf16>, vector<32x64xbf16>, vector<24x64xf32> -> vector<24x64xf32>
      %323 = arith.addf %317, %322 : vector<24x64xf32>
      %324 = vector.extract_strided_slice %311 {offsets = [2, 0], sizes = [24, 32], strides = [1, 1]} : vector<32x32xf32> to vector<24x32xf32>
      %325 = arith.truncf %324 : vector<24x32xf32> to vector<24x32xbf16>
      %c17_200 = arith.constant 17 : index
      %c0_201 = arith.constant 0 : index
      %c0_202 = arith.constant 0 : index
      %326 = vector.load %arg4[%c17_200, %c0_201, %c0_202] : memref<25x32x64xbf16, #tpu.memory_space<vmem>>, vector<1x32x64xbf16>
      %327 = vector.shape_cast %326 : vector<1x32x64xbf16> to vector<32x64xbf16>
      %cst_203 = arith.constant dense<0.000000e+00> : vector<24x64xf32>
      %328 = tpu.matmul %325, %327, %cst_203 {dimension_numbers = #tpu.dot_dimension_numbers<[1], [0], [0], [1], [0, 0, 1, 1], [], []>} : vector<24x32xbf16>, vector<32x64xbf16>, vector<24x64xf32> -> vector<24x64xf32>
      %329 = arith.addf %323, %328 : vector<24x64xf32>
      %330 = vector.extract_strided_slice %311 {offsets = [3, 0], sizes = [24, 32], strides = [1, 1]} : vector<32x32xf32> to vector<24x32xf32>
      %331 = arith.truncf %330 : vector<24x32xf32> to vector<24x32xbf16>
      %c18_204 = arith.constant 18 : index
      %c0_205 = arith.constant 0 : index
      %c0_206 = arith.constant 0 : index
      %332 = vector.load %arg4[%c18_204, %c0_205, %c0_206] : memref<25x32x64xbf16, #tpu.memory_space<vmem>>, vector<1x32x64xbf16>
      %333 = vector.shape_cast %332 : vector<1x32x64xbf16> to vector<32x64xbf16>
      %cst_207 = arith.constant dense<0.000000e+00> : vector<24x64xf32>
      %334 = tpu.matmul %331, %333, %cst_207 {dimension_numbers = #tpu.dot_dimension_numbers<[1], [0], [0], [1], [0, 0, 1, 1], [], []>} : vector<24x32xbf16>, vector<32x64xbf16>, vector<24x64xf32> -> vector<24x64xf32>
      %335 = arith.addf %329, %334 : vector<24x64xf32>
      %336 = vector.extract_strided_slice %311 {offsets = [4, 0], sizes = [24, 32], strides = [1, 1]} : vector<32x32xf32> to vector<24x32xf32>
      %337 = arith.truncf %336 : vector<24x32xf32> to vector<24x32xbf16>
      %c19_208 = arith.constant 19 : index
      %c0_209 = arith.constant 0 : index
      %c0_210 = arith.constant 0 : index
      %338 = vector.load %arg4[%c19_208, %c0_209, %c0_210] : memref<25x32x64xbf16, #tpu.memory_space<vmem>>, vector<1x32x64xbf16>
      %339 = vector.shape_cast %338 : vector<1x32x64xbf16> to vector<32x64xbf16>
      %cst_211 = arith.constant dense<0.000000e+00> : vector<24x64xf32>
      %340 = tpu.matmul %337, %339, %cst_211 {dimension_numbers = #tpu.dot_dimension_numbers<[1], [0], [0], [1], [0, 0, 1, 1], [], []>} : vector<24x32xbf16>, vector<32x64xbf16>, vector<24x64xf32> -> vector<24x64xf32>
      %341 = arith.addf %335, %340 : vector<24x64xf32>
      %c4_i32_212 = arith.constant 4 : i32
      %342 = arith.addi %204, %c4_i32_212 : i32
      %c24_i32_213 = arith.constant 24 : i32
      %343 = arith.muli %342, %c24_i32_213 : i32
      %344 = arith.index_cast %343 : i32 to index
      %c0_214 = arith.constant 0 : index
      %345 = vector.load %arg11[%344, %c0_214] : memref<440x32xf32, #tpu.memory_space<vmem>>, vector<32x32xf32>
      %346 = vector.extract_strided_slice %345 {offsets = [0, 0], sizes = [24, 32], strides = [1, 1]} : vector<32x32xf32> to vector<24x32xf32>
      %347 = arith.truncf %346 : vector<24x32xf32> to vector<24x32xbf16>
      %c20_215 = arith.constant 20 : index
      %c0_216 = arith.constant 0 : index
      %c0_217 = arith.constant 0 : index
      %348 = vector.load %arg4[%c20_215, %c0_216, %c0_217] : memref<25x32x64xbf16, #tpu.memory_space<vmem>>, vector<1x32x64xbf16>
      %349 = vector.shape_cast %348 : vector<1x32x64xbf16> to vector<32x64xbf16>
      %cst_218 = arith.constant dense<0.000000e+00> : vector<24x64xf32>
      %350 = tpu.matmul %347, %349, %cst_218 {dimension_numbers = #tpu.dot_dimension_numbers<[1], [0], [0], [1], [0, 0, 1, 1], [], []>} : vector<24x32xbf16>, vector<32x64xbf16>, vector<24x64xf32> -> vector<24x64xf32>
      %351 = arith.addf %341, %350 : vector<24x64xf32>
      %352 = vector.extract_strided_slice %345 {offsets = [1, 0], sizes = [24, 32], strides = [1, 1]} : vector<32x32xf32> to vector<24x32xf32>
      %353 = arith.truncf %352 : vector<24x32xf32> to vector<24x32xbf16>
      %c21_219 = arith.constant 21 : index
      %c0_220 = arith.constant 0 : index
      %c0_221 = arith.constant 0 : index
      %354 = vector.load %arg4[%c21_219, %c0_220, %c0_221] : memref<25x32x64xbf16, #tpu.memory_space<vmem>>, vector<1x32x64xbf16>
      %355 = vector.shape_cast %354 : vector<1x32x64xbf16> to vector<32x64xbf16>
      %cst_222 = arith.constant dense<0.000000e+00> : vector<24x64xf32>
      %356 = tpu.matmul %353, %355, %cst_222 {dimension_numbers = #tpu.dot_dimension_numbers<[1], [0], [0], [1], [0, 0, 1, 1], [], []>} : vector<24x32xbf16>, vector<32x64xbf16>, vector<24x64xf32> -> vector<24x64xf32>
      %357 = arith.addf %351, %356 : vector<24x64xf32>
      %358 = vector.extract_strided_slice %345 {offsets = [2, 0], sizes = [24, 32], strides = [1, 1]} : vector<32x32xf32> to vector<24x32xf32>
      %359 = arith.truncf %358 : vector<24x32xf32> to vector<24x32xbf16>
      %c22_223 = arith.constant 22 : index
      %c0_224 = arith.constant 0 : index
      %c0_225 = arith.constant 0 : index
      %360 = vector.load %arg4[%c22_223, %c0_224, %c0_225] : memref<25x32x64xbf16, #tpu.memory_space<vmem>>, vector<1x32x64xbf16>
      %361 = vector.shape_cast %360 : vector<1x32x64xbf16> to vector<32x64xbf16>
      %cst_226 = arith.constant dense<0.000000e+00> : vector<24x64xf32>
      %362 = tpu.matmul %359, %361, %cst_226 {dimension_numbers = #tpu.dot_dimension_numbers<[1], [0], [0], [1], [0, 0, 1, 1], [], []>} : vector<24x32xbf16>, vector<32x64xbf16>, vector<24x64xf32> -> vector<24x64xf32>
      %363 = arith.addf %357, %362 : vector<24x64xf32>
      %364 = vector.extract_strided_slice %345 {offsets = [3, 0], sizes = [24, 32], strides = [1, 1]} : vector<32x32xf32> to vector<24x32xf32>
      %365 = arith.truncf %364 : vector<24x32xf32> to vector<24x32xbf16>
      %c23_227 = arith.constant 23 : index
      %c0_228 = arith.constant 0 : index
      %c0_229 = arith.constant 0 : index
      %366 = vector.load %arg4[%c23_227, %c0_228, %c0_229] : memref<25x32x64xbf16, #tpu.memory_space<vmem>>, vector<1x32x64xbf16>
      %367 = vector.shape_cast %366 : vector<1x32x64xbf16> to vector<32x64xbf16>
      %cst_230 = arith.constant dense<0.000000e+00> : vector<24x64xf32>
      %368 = tpu.matmul %365, %367, %cst_230 {dimension_numbers = #tpu.dot_dimension_numbers<[1], [0], [0], [1], [0, 0, 1, 1], [], []>} : vector<24x32xbf16>, vector<32x64xbf16>, vector<24x64xf32> -> vector<24x64xf32>
      %369 = arith.addf %363, %368 : vector<24x64xf32>
      %370 = vector.extract_strided_slice %345 {offsets = [4, 0], sizes = [24, 32], strides = [1, 1]} : vector<32x32xf32> to vector<24x32xf32>
      %371 = arith.truncf %370 : vector<24x32xf32> to vector<24x32xbf16>
      %c24_231 = arith.constant 24 : index
      %c0_232 = arith.constant 0 : index
      %c0_233 = arith.constant 0 : index
      %372 = vector.load %arg4[%c24_231, %c0_232, %c0_233] : memref<25x32x64xbf16, #tpu.memory_space<vmem>>, vector<1x32x64xbf16>
      %373 = vector.shape_cast %372 : vector<1x32x64xbf16> to vector<32x64xbf16>
      %cst_234 = arith.constant dense<0.000000e+00> : vector<24x64xf32>
      %374 = tpu.matmul %371, %373, %cst_234 {dimension_numbers = #tpu.dot_dimension_numbers<[1], [0], [0], [1], [0, 0, 1, 1], [], []>} : vector<24x32xbf16>, vector<32x64xbf16>, vector<24x64xf32> -> vector<24x64xf32>
      %375 = arith.addf %369, %374 : vector<24x64xf32>
      %376 = vector.broadcast %5 : vector<1x64xf32> to vector<24x64xf32>
      %377 = arith.addf %375, %376 : vector<24x64xf32>
      %cst_235 = arith.constant 0.000000e+00 : f32
      %378 = vector.broadcast %cst_235 : f32 to vector<24x64xf32>
      %379 = arith.maximumf %377, %378 : vector<24x64xf32>
      %380 = arith.maximumf %202, %379 : vector<24x64xf32>
      %c0_236 = arith.constant 0 : index
      %c0_237 = arith.constant 0 : index
      %381 = vector.load %arg13[%c0_236, %c0_237] : memref<24x64xf32, #tpu.memory_space<vmem>>, vector<24x64xf32>
      tpu.vector_store %arg13[%c0_236, %c0_237], %380 {strides = array<i32>} : memref<24x64xf32, #tpu.memory_space<vmem>>, vector<24x64xf32>,
      %c0_238 = arith.constant 0 : index
      %c0_239 = arith.constant 0 : index
      %382 = tpu.strided_load %arg13[%c0_238, %c0_239] {strides = array<i32: 2, 1>} : memref<24x64xf32, #tpu.memory_space<vmem>>, vector<12x64xf32>
      %c1_240 = arith.constant 1 : index
      %c0_241 = arith.constant 0 : index
      %383 = tpu.strided_load %arg13[%c1_240, %c0_241] {strides = array<i32: 2, 1>} : memref<24x64xf32, #tpu.memory_space<vmem>>, vector<12x64xf32>
      %384 = arith.maximumf %382, %383 : vector<12x64xf32>
      %385 = vector.extract_strided_slice %384 {offsets = [0, 0], sizes = [1, 64], strides = [1, 1]} : vector<12x64xf32> to vector<1x64xf32>
      %386 = arith.truncf %385 : vector<1x64xf32> to vector<1x64xbf16>
      %c0_242 = arith.constant 0 : index
      %c0_243 = arith.constant 0 : index
      %387 = vector.load %arg14[%c0_242, %c0_243] : memref<1x128xf32, #tpu.memory_space<vmem>>, vector<1x128xf32>
      %c7_i32_244 = arith.constant 7 : i32
      %388 = arith.muli %26, %c7_i32_244 : i32
      %c0_i32_245 = arith.constant 0 : i32
      %389 = arith.addi %388, %c0_i32_245 : i32
      %390 = arith.index_cast %389 : i32 to index
      %c0_246 = arith.constant 0 : index
      %c0_247 = arith.constant 0 : index
      %391 = vector.load %arg6[%390, %c0_246, %c0_247] : memref<49x64x128xbf16, #tpu.memory_space<vmem>>, vector<1x64x128xbf16>
      %392 = vector.shape_cast %391 : vector<1x64x128xbf16> to vector<64x128xbf16>
      %cst_248 = arith.constant dense<0.000000e+00> : vector<1x128xf32>
      %393 = tpu.matmul %386, %392, %cst_248 {dimension_numbers = #tpu.dot_dimension_numbers<[1], [0], [0], [1], [0, 0, 1, 1], [], []>} : vector<1x64xbf16>, vector<64x128xbf16>, vector<1x128xf32> -> vector<1x128xf32>
      %394 = arith.addf %387, %393 : vector<1x128xf32>
      %c0_249 = arith.constant 0 : index
      %c0_250 = arith.constant 0 : index
      %395 = vector.load %arg14[%c0_249, %c0_250] : memref<1x128xf32, #tpu.memory_space<vmem>>, vector<1x128xf32>
      tpu.vector_store %arg14[%c0_249, %c0_250], %394 {strides = array<i32>} : memref<1x128xf32, #tpu.memory_space<vmem>>, vector<1x128xf32>,
      %396 = vector.extract_strided_slice %384 {offsets = [1, 0], sizes = [1, 64], strides = [1, 1]} : vector<12x64xf32> to vector<1x64xf32>
      %397 = arith.truncf %396 : vector<1x64xf32> to vector<1x64xbf16>
      %c0_251 = arith.constant 0 : index
      %c0_252 = arith.constant 0 : index
      %398 = vector.load %arg14[%c0_251, %c0_252] : memref<1x128xf32, #tpu.memory_space<vmem>>, vector<1x128xf32>
      %c7_i32_253 = arith.constant 7 : i32
      %399 = arith.muli %26, %c7_i32_253 : i32
      %c1_i32_254 = arith.constant 1 : i32
      %400 = arith.addi %399, %c1_i32_254 : i32
      %401 = arith.index_cast %400 : i32 to index
      %c0_255 = arith.constant 0 : index
      %c0_256 = arith.constant 0 : index
      %402 = vector.load %arg6[%401, %c0_255, %c0_256] : memref<49x64x128xbf16, #tpu.memory_space<vmem>>, vector<1x64x128xbf16>
      %403 = vector.shape_cast %402 : vector<1x64x128xbf16> to vector<64x128xbf16>
      %cst_257 = arith.constant dense<0.000000e+00> : vector<1x128xf32>
      %404 = tpu.matmul %397, %403, %cst_257 {dimension_numbers = #tpu.dot_dimension_numbers<[1], [0], [0], [1], [0, 0, 1, 1], [], []>} : vector<1x64xbf16>, vector<64x128xbf16>, vector<1x128xf32> -> vector<1x128xf32>
      %405 = arith.addf %398, %404 : vector<1x128xf32>
      %c0_258 = arith.constant 0 : index
      %c0_259 = arith.constant 0 : index
      %406 = vector.load %arg14[%c0_258, %c0_259] : memref<1x128xf32, #tpu.memory_space<vmem>>, vector<1x128xf32>
      tpu.vector_store %arg14[%c0_258, %c0_259], %405 {strides = array<i32>} : memref<1x128xf32, #tpu.memory_space<vmem>>, vector<1x128xf32>,
      %407 = vector.extract_strided_slice %384 {offsets = [2, 0], sizes = [1, 64], strides = [1, 1]} : vector<12x64xf32> to vector<1x64xf32>
      %408 = arith.truncf %407 : vector<1x64xf32> to vector<1x64xbf16>
      %c0_260 = arith.constant 0 : index
      %c0_261 = arith.constant 0 : index
      %409 = vector.load %arg14[%c0_260, %c0_261] : memref<1x128xf32, #tpu.memory_space<vmem>>, vector<1x128xf32>
      %c7_i32_262 = arith.constant 7 : i32
      %410 = arith.muli %26, %c7_i32_262 : i32
      %c2_i32_263 = arith.constant 2 : i32
      %411 = arith.addi %410, %c2_i32_263 : i32
      %412 = arith.index_cast %411 : i32 to index
      %c0_264 = arith.constant 0 : index
      %c0_265 = arith.constant 0 : index
      %413 = vector.load %arg6[%412, %c0_264, %c0_265] : memref<49x64x128xbf16, #tpu.memory_space<vmem>>, vector<1x64x128xbf16>
      %414 = vector.shape_cast %413 : vector<1x64x128xbf16> to vector<64x128xbf16>
      %cst_266 = arith.constant dense<0.000000e+00> : vector<1x128xf32>
      %415 = tpu.matmul %408, %414, %cst_266 {dimension_numbers = #tpu.dot_dimension_numbers<[1], [0], [0], [1], [0, 0, 1, 1], [], []>} : vector<1x64xbf16>, vector<64x128xbf16>, vector<1x128xf32> -> vector<1x128xf32>
      %416 = arith.addf %409, %415 : vector<1x128xf32>
      %c0_267 = arith.constant 0 : index
      %c0_268 = arith.constant 0 : index
      %417 = vector.load %arg14[%c0_267, %c0_268] : memref<1x128xf32, #tpu.memory_space<vmem>>, vector<1x128xf32>
      tpu.vector_store %arg14[%c0_267, %c0_268], %416 {strides = array<i32>} : memref<1x128xf32, #tpu.memory_space<vmem>>, vector<1x128xf32>,
      %418 = vector.extract_strided_slice %384 {offsets = [3, 0], sizes = [1, 64], strides = [1, 1]} : vector<12x64xf32> to vector<1x64xf32>
      %419 = arith.truncf %418 : vector<1x64xf32> to vector<1x64xbf16>
      %c0_269 = arith.constant 0 : index
      %c0_270 = arith.constant 0 : index
      %420 = vector.load %arg14[%c0_269, %c0_270] : memref<1x128xf32, #tpu.memory_space<vmem>>, vector<1x128xf32>
      %c7_i32_271 = arith.constant 7 : i32
      %421 = arith.muli %26, %c7_i32_271 : i32
      %c3_i32_272 = arith.constant 3 : i32
      %422 = arith.addi %421, %c3_i32_272 : i32
      %423 = arith.index_cast %422 : i32 to index
      %c0_273 = arith.constant 0 : index
      %c0_274 = arith.constant 0 : index
      %424 = vector.load %arg6[%423, %c0_273, %c0_274] : memref<49x64x128xbf16, #tpu.memory_space<vmem>>, vector<1x64x128xbf16>
      %425 = vector.shape_cast %424 : vector<1x64x128xbf16> to vector<64x128xbf16>
      %cst_275 = arith.constant dense<0.000000e+00> : vector<1x128xf32>
      %426 = tpu.matmul %419, %425, %cst_275 {dimension_numbers = #tpu.dot_dimension_numbers<[1], [0], [0], [1], [0, 0, 1, 1], [], []>} : vector<1x64xbf16>, vector<64x128xbf16>, vector<1x128xf32> -> vector<1x128xf32>
      %427 = arith.addf %420, %426 : vector<1x128xf32>
      %c0_276 = arith.constant 0 : index
      %c0_277 = arith.constant 0 : index
      %428 = vector.load %arg14[%c0_276, %c0_277] : memref<1x128xf32, #tpu.memory_space<vmem>>, vector<1x128xf32>
      tpu.vector_store %arg14[%c0_276, %c0_277], %427 {strides = array<i32>} : memref<1x128xf32, #tpu.memory_space<vmem>>, vector<1x128xf32>,
      %429 = vector.extract_strided_slice %384 {offsets = [4, 0], sizes = [1, 64], strides = [1, 1]} : vector<12x64xf32> to vector<1x64xf32>
      %430 = arith.truncf %429 : vector<1x64xf32> to vector<1x64xbf16>
      %c0_278 = arith.constant 0 : index
      %c0_279 = arith.constant 0 : index
      %431 = vector.load %arg14[%c0_278, %c0_279] : memref<1x128xf32, #tpu.memory_space<vmem>>, vector<1x128xf32>
      %c7_i32_280 = arith.constant 7 : i32
      %432 = arith.muli %26, %c7_i32_280 : i32
      %c4_i32_281 = arith.constant 4 : i32
      %433 = arith.addi %432, %c4_i32_281 : i32
      %434 = arith.index_cast %433 : i32 to index
      %c0_282 = arith.constant 0 : index
      %c0_283 = arith.constant 0 : index
      %435 = vector.load %arg6[%434, %c0_282, %c0_283] : memref<49x64x128xbf16, #tpu.memory_space<vmem>>, vector<1x64x128xbf16>
      %436 = vector.shape_cast %435 : vector<1x64x128xbf16> to vector<64x128xbf16>
      %cst_284 = arith.constant dense<0.000000e+00> : vector<1x128xf32>
      %437 = tpu.matmul %430, %436, %cst_284 {dimension_numbers = #tpu.dot_dimension_numbers<[1], [0], [0], [1], [0, 0, 1, 1], [], []>} : vector<1x64xbf16>, vector<64x128xbf16>, vector<1x128xf32> -> vector<1x128xf32>
      %438 = arith.addf %431, %437 : vector<1x128xf32>
      %c0_285 = arith.constant 0 : index
      %c0_286 = arith.constant 0 : index
      %439 = vector.load %arg14[%c0_285, %c0_286] : memref<1x128xf32, #tpu.memory_space<vmem>>, vector<1x128xf32>
      tpu.vector_store %arg14[%c0_285, %c0_286], %438 {strides = array<i32>} : memref<1x128xf32, #tpu.memory_space<vmem>>, vector<1x128xf32>,
      %440 = vector.extract_strided_slice %384 {offsets = [5, 0], sizes = [1, 64], strides = [1, 1]} : vector<12x64xf32> to vector<1x64xf32>
      %441 = arith.truncf %440 : vector<1x64xf32> to vector<1x64xbf16>
      %c0_287 = arith.constant 0 : index
      %c0_288 = arith.constant 0 : index
      %442 = vector.load %arg14[%c0_287, %c0_288] : memref<1x128xf32, #tpu.memory_space<vmem>>, vector<1x128xf32>
      %c7_i32_289 = arith.constant 7 : i32
      %443 = arith.muli %26, %c7_i32_289 : i32
      %c5_i32 = arith.constant 5 : i32
      %444 = arith.addi %443, %c5_i32 : i32
      %445 = arith.index_cast %444 : i32 to index
      %c0_290 = arith.constant 0 : index
      %c0_291 = arith.constant 0 : index
      %446 = vector.load %arg6[%445, %c0_290, %c0_291] : memref<49x64x128xbf16, #tpu.memory_space<vmem>>, vector<1x64x128xbf16>
      %447 = vector.shape_cast %446 : vector<1x64x128xbf16> to vector<64x128xbf16>
      %cst_292 = arith.constant dense<0.000000e+00> : vector<1x128xf32>
      %448 = tpu.matmul %441, %447, %cst_292 {dimension_numbers = #tpu.dot_dimension_numbers<[1], [0], [0], [1], [0, 0, 1, 1], [], []>} : vector<1x64xbf16>, vector<64x128xbf16>, vector<1x128xf32> -> vector<1x128xf32>
      %449 = arith.addf %442, %448 : vector<1x128xf32>
      %c0_293 = arith.constant 0 : index
      %c0_294 = arith.constant 0 : index
      %450 = vector.load %arg14[%c0_293, %c0_294] : memref<1x128xf32, #tpu.memory_space<vmem>>, vector<1x128xf32>
      tpu.vector_store %arg14[%c0_293, %c0_294], %449 {strides = array<i32>} : memref<1x128xf32, #tpu.memory_space<vmem>>, vector<1x128xf32>,
      %451 = vector.extract_strided_slice %384 {offsets = [6, 0], sizes = [1, 64], strides = [1, 1]} : vector<12x64xf32> to vector<1x64xf32>
      %452 = arith.truncf %451 : vector<1x64xf32> to vector<1x64xbf16>
      %c0_295 = arith.constant 0 : index
      %c0_296 = arith.constant 0 : index
      %453 = vector.load %arg14[%c0_295, %c0_296] : memref<1x128xf32, #tpu.memory_space<vmem>>, vector<1x128xf32>
      %c7_i32_297 = arith.constant 7 : i32
      %454 = arith.muli %26, %c7_i32_297 : i32
      %c6_i32 = arith.constant 6 : i32
      %455 = arith.addi %454, %c6_i32 : i32
      %456 = arith.index_cast %455 : i32 to index
      %c0_298 = arith.constant 0 : index
      %c0_299 = arith.constant 0 : index
      %457 = vector.load %arg6[%456, %c0_298, %c0_299] : memref<49x64x128xbf16, #tpu.memory_space<vmem>>, vector<1x64x128xbf16>
      %458 = vector.shape_cast %457 : vector<1x64x128xbf16> to vector<64x128xbf16>
      %cst_300 = arith.constant dense<0.000000e+00> : vector<1x128xf32>
      %459 = tpu.matmul %452, %458, %cst_300 {dimension_numbers = #tpu.dot_dimension_numbers<[1], [0], [0], [1], [0, 0, 1, 1], [], []>} : vector<1x64xbf16>, vector<64x128xbf16>, vector<1x128xf32> -> vector<1x128xf32>
      %460 = arith.addf %453, %459 : vector<1x128xf32>
      %c0_301 = arith.constant 0 : index
      %c0_302 = arith.constant 0 : index
      %461 = vector.load %arg14[%c0_301, %c0_302] : memref<1x128xf32, #tpu.memory_space<vmem>>, vector<1x128xf32>
      tpu.vector_store %arg14[%c0_301, %c0_302], %460 {strides = array<i32>} : memref<1x128xf32, #tpu.memory_space<vmem>>, vector<1x128xf32>,
    }
    %c7_i32_11 = arith.constant 7 : i32
    %c0_12 = arith.constant 0 : index
    %c0_13 = arith.constant 0 : index
    %14 = vector.load %arg14[%c0_12, %c0_13] : memref<1x128xf32, #tpu.memory_space<vmem>>, vector<1x128xf32>
    %c0_14 = arith.constant 0 : index
    %c0_15 = arith.constant 0 : index
    %15 = vector.load %arg7[%c0_14, %c0_15] : memref<1x128xf32, #tpu.memory_space<vmem>>, vector<1x128xf32>
    %16 = arith.addf %14, %15 : vector<1x128xf32>
    %17 = arith.truncf %16 : vector<1x128xf32> to vector<1x128xbf16>
    %c0_16 = arith.constant 0 : index
    %c0_17 = arith.constant 0 : index
    %18 = vector.load %arg8[%c0_16, %c0_17] : memref<128x10xbf16, #tpu.memory_space<vmem>>, vector<128x10xbf16>
    %cst_18 = arith.constant dense<0.000000e+00> : vector<1x10xf32>
    %19 = tpu.matmul %17, %18, %cst_18 {dimension_numbers = #tpu.dot_dimension_numbers<[1], [0], [0], [1], [0, 0, 1, 1], [], []>} : vector<1x128xbf16>, vector<128x10xbf16>, vector<1x10xf32> -> vector<1x10xf32>
    %c0_19 = arith.constant 0 : index
    %c0_20 = arith.constant 0 : index
    %20 = vector.load %arg9[%c0_19, %c0_20] : memref<1x10xf32, #tpu.memory_space<vmem>>, vector<1x10xf32>
    %21 = arith.addf %19, %20 : vector<1x10xf32>
    %c0_21 = arith.constant 0 : index
    %c0_22 = arith.constant 0 : index
    %c0_23 = arith.constant 0 : index
    %22 = vector.load %arg10[%c0_21, %c0_22, %c0_23] : memref<1x1x10xf32, #tpu.memory_space<vmem>>, vector<1x1x10xf32>
    %23 = vector.shape_cast %22 : vector<1x1x10xf32> to vector<1x10xf32>
    %24 = vector.shape_cast %21 : vector<1x10xf32> to vector<1x1x10xf32>
    tpu.vector_store %arg10[%c0_21, %c0_22, %c0_23], %24 {strides = array<i32>} : memref<1x1x10xf32, #tpu.memory_space<vmem>>, vector<1x1x10xf32>,
    return
  }
  func.func @transform_0(%arg0: i32) -> (i32, i32, i32) {
    %c0_i32 = arith.constant 0 : i32
    %c0_i32_0 = arith.constant 0 : i32
    %c0_i32_1 = arith.constant 0 : i32
    return %arg0, %c0_i32, %c0_i32_0 : i32, i32, i32
  }
  func.func @transform_1(%arg0: i32) -> (i32, i32) {
    %c0_i32 = arith.constant 0 : i32
    %c0_i32_0 = arith.constant 0 : i32
    %c0_i32_1 = arith.constant 0 : i32
    return %c0_i32, %c0_i32_0 : i32, i32
  }
  func.func @transform_2(%arg0: i32) -> (i32, i32) {
    %c0_i32 = arith.constant 0 : i32
    %c0_i32_0 = arith.constant 0 : i32
    %c0_i32_1 = arith.constant 0 : i32
    return %c0_i32, %c0_i32_0 : i32, i32
  }
  func.func @transform_3(%arg0: i32) -> (i32, i32, i32) {
    %c0_i32 = arith.constant 0 : i32
    %c0_i32_0 = arith.constant 0 : i32
    %c0_i32_1 = arith.constant 0 : i32
    %c0_i32_2 = arith.constant 0 : i32
    return %c0_i32, %c0_i32_0, %c0_i32_1 : i32, i32, i32
  }
  func.func @transform_4(%arg0: i32) -> (i32, i32) {
    %c0_i32 = arith.constant 0 : i32
    %c0_i32_0 = arith.constant 0 : i32
    %c0_i32_1 = arith.constant 0 : i32
    return %c0_i32, %c0_i32_0 : i32, i32
  }
  func.func @transform_5(%arg0: i32) -> (i32, i32, i32) {
    %c0_i32 = arith.constant 0 : i32
    %c0_i32_0 = arith.constant 0 : i32
    %c0_i32_1 = arith.constant 0 : i32
    %c0_i32_2 = arith.constant 0 : i32
    return %c0_i32, %c0_i32_0, %c0_i32_1 : i32, i32, i32
  }
  func.func @transform_6(%arg0: i32) -> (i32, i32) {
    %c0_i32 = arith.constant 0 : i32
    %c0_i32_0 = arith.constant 0 : i32
    %c0_i32_1 = arith.constant 0 : i32
    return %c0_i32, %c0_i32_0 : i32, i32
  }
  func.func @transform_7(%arg0: i32) -> (i32, i32) {
    %c0_i32 = arith.constant 0 : i32
    %c0_i32_0 = arith.constant 0 : i32
    %c0_i32_1 = arith.constant 0 : i32
    return %c0_i32, %c0_i32_0 : i32, i32
  }
  func.func @transform_8(%arg0: i32) -> (i32, i32) {
    %c0_i32 = arith.constant 0 : i32
    %c0_i32_0 = arith.constant 0 : i32
    %c0_i32_1 = arith.constant 0 : i32
    return %c0_i32, %c0_i32_0 : i32, i32
  }
  func.func @transform_9(%arg0: i32) -> (i32, i32, i32) {
    %c0_i32 = arith.constant 0 : i32
    %c0_i32_0 = arith.constant 0 : i32
    %c0_i32_1 = arith.constant 0 : i32
    return %arg0, %c0_i32, %c0_i32_0 : i32, i32, i32
  }
}

</mosaic_0001>

<llo_original>
// kernel: mnist500k_forward.1
$region0: #{mnist500k_forward.1}
  #allocation0 [shape = 'u32[]', space=smem, size = 0x4, offset = 0x4, fixed_abs, tag = 'smem constant byte address 0x4 - core index']
  #allocation1 [shape = 'u32[144,128]{1,0:T(1,128)}', space=vmem, size = 0x12000, scoped, tag = 'internal scratch']
  #allocation2 [shape = 'f32[440,32]{1,0:T(8,128)}', space=vmem, size = 0x37000, scoped, tag = 'scratch operand']
  #allocation3 [shape = 'f32[48,32]{1,0:T(8,128)}', space=vmem, size = 0x6000, scoped, tag = 'scratch operand']
  #allocation4 [shape = 'f32[24,64]{1,0:T(8,128)}', space=vmem, size = 0x3000, scoped, tag = 'scratch operand']
  #allocation5 [shape = 'f32[1,128]{1,0:T(1,128)}', space=vmem, size = 0x200, scoped, tag = 'scratch operand']
  %s0 = inlined_call_operand.vmem [shape: f32[2,1736,1], index: 0, kind: input, shape index: {}]
  %s1 = inlined_call_operand.vmem [shape: f32[25,32], index: 1, kind: input, shape index: {}]
  %s2 = inlined_call_operand.vmem [shape: f32[1,32], index: 2, kind: input, shape index: {}]
  %s3 = inlined_call_operand.vmem [shape: bf16[25,32,64], index: 3, kind: input, shape index: {}]
  %s4 = inlined_call_operand.vmem [shape: f32[1,64], index: 4, kind: input, shape index: {}]
  %s5 = inlined_call_operand.vmem [shape: bf16[49,64,128], index: 5, kind: input, shape index: {}]
  %s6 = inlined_call_operand.vmem [shape: f32[1,128], index: 6, kind: input, shape index: {}]
  %s7 = inlined_call_operand.vmem [shape: bf16[128,10], index: 7, kind: input, shape index: {}]
  %s8 = inlined_call_operand.vmem [shape: f32[1,10], index: 8, kind: input, shape index: {}]
  %s9 = inlined_call_operand.vmem [shape: f32[2,1,10], index: 9, kind: output, shape index: {}]
  %s10 = sld [smem:[#allocation0]]
  $region83: #{mnist500k_forward.1} parent=0
    _
  %s12 = ssub.s32 1, %s10
  %s13 = scalar_select 0, %s12, %s10
  loop: start=0, step=1, limit=4
  $region2: #{mnist500k_forward.1} parent=0 // loop_pre_header
    _
  $region3: #{mnist500k_forward.1} parent=0 // loop_header
    %s15 = sphi 0, %s19
    %p16 = scmp.ge.s32.totalorder %s15, 4
    %s25 = sphi 0, %s27
    %s28 = sphi 0, %s25
    %s29 = sphi 0, %s28
    %s45 = sphi 0, %s29
    %s49 = sphi 0, %s49
    %s51 = sphi 0, %s49
    %s52 = sphi 0, %s51
    %s66 = sphi 0, %s52
    %s70 = sphi 0, %s70
    %s72 = sphi 0, %s70
    %s73 = sphi 0, %s72
    %s87 = sphi 0, %s73
    %s91 = sphi 0, %s91
    %s93 = sphi 0, %s91
    %s94 = sphi 0, %s93
    %s108 = sphi 0, %s94
    %s112 = sphi 0, %s112
    %s114 = sphi 0, %s112
    %s115 = sphi 0, %s114
    %s129 = sphi 0, %s115
    %s133 = sphi 0, %s133
    %s135 = sphi 0, %s133
    %s136 = sphi 0, %s135
    %s150 = sphi 0, %s136
    %s154 = sphi 0, %s154
    %s156 = sphi 0, %s154
    %s157 = sphi 0, %s156
    %s171 = sphi 0, %s157
    %s175 = sphi 0, %s175
    %s177 = sphi 0, %s175
    %s178 = sphi 0, %s177
    %s192 = sphi 0, %s178
    %s196 = sphi 0, %s196
    %s198 = sphi 0, %s196
    %s199 = sphi 0, %s198
    %s213 = sphi 0, %s199
    %s219 = sphi 0, %s221
    %s222 = sphi 0, %s219
    %s223 = sphi 0, %s222
    %s239 = sphi 0, %s223
  $region4: #{mnist500k_forward.1} parent=0 // loop_header_branch
    %18 = sbr.rel (%p16) target = $region8
  $region5: #{mnist500k_forward.1} parent=0 // loop_body
    %s20 = ssub.s32 %s15, 1
    %s21 = ssub.s32 %s15, 2
    %s22 = sadd.s32 %s15, 1
    %s23 = ssub.s32 %s15, %s22
    %p24 = scmp.eq.s32.totalorder %s23, 0
    %s26 = sadd.s32 %s25, 1
    %s27 = scalar_select %p24, %s25, %s26
    %p30 = pneg %p24
    %p31 = scmp.eq.s32.totalorder %s15, 1
    %p32 = por %p30, %p31
    %p33 = scmp.ne.s32.totalorder %s25, %s28
    %p34 = scmp.eq.s32.totalorder %s15, 0
    %p35 = por %p33, %p34
    %p36 = scmp.ne.s32.totalorder %s25, %s28
    %p37 = scmp.eq.s32.totalorder %s20, 1
    %p38 = por %p36, %p37
    %p39 = scmp.ne.s32.totalorder %s28, %s29
    %p40 = scmp.eq.s32.totalorder %s20, 0
    %p41 = por %p39, %p40
    %p42 = scmp.ne.s32.totalorder %s28, %s29
    %p43 = scmp.eq.s32.totalorder %s21, 1
    %p44 = por %p42, %p43
    %p46 = scmp.ne.s32.totalorder %s29, %s45
    %p47 = scmp.eq.s32.totalorder %s21, 0
    %p48 = por %p46, %p47
    %s50 = sadd.s32 %s49, 1
    %p53 = scmp.eq.s32.totalorder %s15, 1
    %p54 = scmp.ne.s32.totalorder %s49, %s51
    %p55 = scmp.eq.s32.totalorder %s15, 0
    %p56 = por %p54, %p55
    %p57 = scmp.ne.s32.totalorder %s49, %s51
    %p58 = scmp.eq.s32.totalorder %s20, 1
    %p59 = por %p57, %p58
    %p60 = scmp.ne.s32.totalorder %s51, %s52
    %p61 = scmp.eq.s32.totalorder %s20, 0
    %p62 = por %p60, %p61
    %p63 = scmp.ne.s32.totalorder %s51, %s52
    %p64 = scmp.eq.s32.totalorder %s21, 1
    %p65 = por %p63, %p64
    %p67 = scmp.ne.s32.totalorder %s52, %s66
    %p68 = scmp.eq.s32.totalorder %s21, 0
    %p69 = por %p67, %p68
    %s71 = sadd.s32 %s70, 1
    %p74 = scmp.eq.s32.totalorder %s15, 1
    %p75 = scmp.ne.s32.totalorder %s70, %s72
    %p76 = scmp.eq.s32.totalorder %s15, 0
    %p77 = por %p75, %p76
    %p78 = scmp.ne.s32.totalorder %s70, %s72
    %p79 = scmp.eq.s32.totalorder %s20, 1
    %p80 = por %p78, %p79
    %p81 = scmp.ne.s32.totalorder %s72, %s73
    %p82 = scmp.eq.s32.totalorder %s20, 0
    %p83 = por %p81, %p82
    %p84 = scmp.ne.s32.totalorder %s72, %s73
    %p85 = scmp.eq.s32.totalorder %s21, 1
    %p86 = por %p84, %p85
    %p88 = scmp.ne.s32.totalorder %s73, %s87
    %p89 = scmp.eq.s32.totalorder %s21, 0
    %p90 = por %p88, %p89
    %s92 = sadd.s32 %s91, 1
    %p95 = scmp.eq.s32.totalorder %s15, 1
    %p96 = scmp.ne.s32.totalorder %s91, %s93
    %p97 = scmp.eq.s32.totalorder %s15, 0
    %p98 = por %p96, %p97
    %p99 = scmp.ne.s32.totalorder %s91, %s93
    %p100 = scmp.eq.s32.totalorder %s20, 1
    %p101 = por %p99, %p100
    %p102 = scmp.ne.s32.totalorder %s93, %s94
    %p103 = scmp.eq.s32.totalorder %s20, 0
    %p104 = por %p102, %p103
    %p105 = scmp.ne.s32.totalorder %s93, %s94
    %p106 = scmp.eq.s32.totalorder %s21, 1
    %p107 = por %p105, %p106
    %p109 = scmp.ne.s32.totalorder %s94, %s108
    %p110 = scmp.eq.s32.totalorder %s21, 0
    %p111 = por %p109, %p110
    %s113 = sadd.s32 %s112, 1
    %p116 = scmp.eq.s32.totalorder %s15, 1
    %p117 = scmp.ne.s32.totalorder %s112, %s114
    %p118 = scmp.eq.s32.totalorder %s15, 0
    %p119 = por %p117, %p118
    %p120 = scmp.ne.s32.totalorder %s112, %s114
    %p121 = scmp.eq.s32.totalorder %s20, 1
    %p122 = por %p120, %p121
    %p123 = scmp.ne.s32.totalorder %s114, %s115
    %p124 = scmp.eq.s32.totalorder %s20, 0
    %p125 = por %p123, %p124
    %p126 = scmp.ne.s32.totalorder %s114, %s115
    %p127 = scmp.eq.s32.totalorder %s21, 1
    %p128 = por %p126, %p127
    %p130 = scmp.ne.s32.totalorder %s115, %s129
    %p131 = scmp.eq.s32.totalorder %s21, 0
    %p132 = por %p130, %p131
    %s134 = sadd.s32 %s133, 1
    %p137 = scmp.eq.s32.totalorder %s15, 1
    %p138 = scmp.ne.s32.totalorder %s133, %s135
    %p139 = scmp.eq.s32.totalorder %s15, 0
    %p140 = por %p138, %p139
    %p141 = scmp.ne.s32.totalorder %s133, %s135
    %p142 = scmp.eq.s32.totalorder %s20, 1
    %p143 = por %p141, %p142
    %p144 = scmp.ne.s32.totalorder %s135, %s136
    %p145 = scmp.eq.s32.totalorder %s20, 0
    %p146 = por %p144, %p145
    %p147 = scmp.ne.s32.totalorder %s135, %s136
    %p148 = scmp.eq.s32.totalorder %s21, 1
    %p149 = por %p147, %p148
    %p151 = scmp.ne.s32.totalorder %s136, %s150
    %p152 = scmp.eq.s32.totalorder %s21, 0
    %p153 = por %p151, %p152
    %s155 = sadd.s32 %s154, 1
    %p158 = scmp.eq.s32.totalorder %s15, 1
    %p159 = scmp.ne.s32.totalorder %s154, %s156
    %p160 = scmp.eq.s32.totalorder %s15, 0
    %p161 = por %p159, %p160
    %p162 = scmp.ne.s32.totalorder %s154, %s156
    %p163 = scmp.eq.s32.totalorder %s20, 1
    %p164 = por %p162, %p163
    %p165 = scmp.ne.s32.totalorder %s156, %s157
    %p166 = scmp.eq.s32.totalorder %s20, 0
    %p167 = por %p165, %p166
    %p168 = scmp.ne.s32.totalorder %s156, %s157
    %p169 = scmp.eq.s32.totalorder %s21, 1
    %p170 = por %p168, %p169
    %p172 = scmp.ne.s32.totalorder %s157, %s171
    %p173 = scmp.eq.s32.totalorder %s21, 0
    %p174 = por %p172, %p173
    %s176 = sadd.s32 %s175, 1
    %p179 = scmp.eq.s32.totalorder %s15, 1
    %p180 = scmp.ne.s32.totalorder %s175, %s177
    %p181 = scmp.eq.s32.totalorder %s15, 0
    %p182 = por %p180, %p181
    %p183 = scmp.ne.s32.totalorder %s175, %s177
    %p184 = scmp.eq.s32.totalorder %s20, 1
    %p185 = por %p183, %p184
    %p186 = scmp.ne.s32.totalorder %s177, %s178
    %p187 = scmp.eq.s32.totalorder %s20, 0
    %p188 = por %p186, %p187
    %p189 = scmp.ne.s32.totalorder %s177, %s178
    %p190 = scmp.eq.s32.totalorder %s21, 1
    %p191 = por %p189, %p190
    %p193 = scmp.ne.s32.totalorder %s178, %s192
    %p194 = scmp.eq.s32.totalorder %s21, 0
    %p195 = por %p193, %p194
    %s197 = sadd.s32 %s196, 1
    %p200 = scmp.eq.s32.totalorder %s15, 1
    %p201 = scmp.ne.s32.totalorder %s196, %s198
    %p202 = scmp.eq.s32.totalorder %s15, 0
    %p203 = por %p201, %p202
    %p204 = scmp.ne.s32.totalorder %s196, %s198
    %p205 = scmp.eq.s32.totalorder %s20, 1
    %p206 = por %p204, %p205
    %p207 = scmp.ne.s32.totalorder %s198, %s199
    %p208 = scmp.eq.s32.totalorder %s20, 0
    %p209 = por %p207, %p208
    %p210 = scmp.ne.s32.totalorder %s198, %s199
    %p211 = scmp.eq.s32.totalorder %s21, 1
    %p212 = por %p210, %p211
    %p214 = scmp.ne.s32.totalorder %s199, %s213
    %p215 = scmp.eq.s32.totalorder %s21, 0
    %p216 = por %p214, %p215
    %s217 = ssub.s32 %s15, %s22
    %p218 = scmp.eq.s32.totalorder %s217, 0
    %s220 = sadd.s32 %s219, 1
    %s221 = scalar_select %p218, %s219, %s220
    %p224 = pneg %p218
    %p225 = scmp.eq.s32.totalorder %s15, 1
    %p226 = por %p224, %p225
    %p227 = scmp.ne.s32.totalorder %s219, %s222
    %p228 = scmp.eq.s32.totalorder %s15, 0
    %p229 = por %p227, %p228
    %p230 = scmp.ne.s32.totalorder %s219, %s222
    %p231 = scmp.eq.s32.totalorder %s20, 1
    %p232 = por %p230, %p231
    %p233 = scmp.ne.s32.totalorder %s222, %s223
    %p234 = scmp.eq.s32.totalorder %s20, 0
    %p235 = por %p233, %p234
    %p236 = scmp.ne.s32.totalorder %s222, %s223
    %p237 = scmp.eq.s32.totalorder %s21, 1
    %p238 = por %p236, %p237
    %p240 = scmp.ne.s32.totalorder %s223, %s239
    %p241 = scmp.eq.s32.totalorder %s21, 0
    %p242 = por %p240, %p241
    %p243 = scmp.le.s32.totalorder 1, %s15
    %p244 = scmp.lt.s32.totalorder %s15, 3
    %p245 = pnand %p243, %p244
    %p246 = pneg %p245
    // Predicated region
    $region9: #{mnist500k_forward.1} parent=5 // pred_check
      _
    $region10: #{mnist500k_forward.1} parent=5 // pred_check_branch
      %248 = sbr.rel (%p245) target = $region12
    $region11: #{mnist500k_forward.1} parent=5 // pred_region
      %s249 = ssub.s32 %s15, 1
      // Predicated region
      $region13: #{mnist500k_forward.1} parent=11 // pred_check
        %p250 = pneg %p62
      $region14: #{mnist500k_forward.1} parent=11 // pred_check_branch
        %252 = sbr.rel (%p250) target = $region16
      $region15: #{mnist500k_forward.1} parent=11 // pred_region
        _
      $region16: #{mnist500k_forward.1} parent=11 // pred_fallthru
        _
      // Predicated region
      $region17: #{mnist500k_forward.1} parent=11 // pred_check
        %p253 = pneg %p83
      $region18: #{mnist500k_forward.1} parent=11 // pred_check_branch
        %255 = sbr.rel (%p253) target = $region20
      $region19: #{mnist500k_forward.1} parent=11 // pred_region
        _
      $region20: #{mnist500k_forward.1} parent=11 // pred_fallthru
        _
      // Predicated region
      $region21: #{mnist500k_forward.1} parent=11 // pred_check
        %p256 = pneg %p104
      $region22: #{mnist500k_forward.1} parent=11 // pred_check_branch
        %258 = sbr.rel (%p256) target = $region24
      $region23: #{mnist500k_forward.1} parent=11 // pred_region
        _
      $region24: #{mnist500k_forward.1} parent=11 // pred_fallthru
        _
      // Predicated region
      $region25: #{mnist500k_forward.1} parent=11 // pred_check
        %p259 = pneg %p125
      $region26: #{mnist500k_forward.1} parent=11 // pred_check_branch
        %261 = sbr.rel (%p259) target = $region28
      $region27: #{mnist500k_forward.1} parent=11 // pred_region
        _
      $region28: #{mnist500k_forward.1} parent=11 // pred_fallthru
        _
      // Predicated region
      $region29: #{mnist500k_forward.1} parent=11 // pred_check
        %p262 = pneg %p146
      $region30: #{mnist500k_forward.1} parent=11 // pred_check_branch
        %264 = sbr.rel (%p262) target = $region32
      $region31: #{mnist500k_forward.1} parent=11 // pred_region
        _
      $region32: #{mnist500k_forward.1} parent=11 // pred_fallthru
        _
      // Predicated region
      $region33: #{mnist500k_forward.1} parent=11 // pred_check
        %p265 = pneg %p167
      $region34: #{mnist500k_forward.1} parent=11 // pred_check_branch
        %267 = sbr.rel (%p265) target = $region36
      $region35: #{mnist500k_forward.1} parent=11 // pred_region
        _
      $region36: #{mnist500k_forward.1} parent=11 // pred_fallthru
        _
      // Predicated region
      $region37: #{mnist500k_forward.1} parent=11 // pred_check
        %p268 = pneg %p188
      $region38: #{mnist500k_forward.1} parent=11 // pred_check_branch
        %270 = sbr.rel (%p268) target = $region40
      $region39: #{mnist500k_forward.1} parent=11 // pred_region
        _
      $region40: #{mnist500k_forward.1} parent=11 // pred_fallthru
        _
      // Predicated region
      $region41: #{mnist500k_forward.1} parent=11 // pred_check
        %p271 = pneg %p209
      $region42: #{mnist500k_forward.1} parent=11 // pred_check_branch
        %273 = sbr.rel (%p271) target = $region44
      $region43: #{mnist500k_forward.1} parent=11 // pred_region
        _
      $region44: #{mnist500k_forward.1} parent=11 // pred_fallthru
        _
    $region12: #{mnist500k_forward.1} parent=5 // pred_fallthru
      _
    %p274 = scmp.lt.s32.totalorder %s15, 2
    // Predicated region
    $region45: #{mnist500k_forward.1} parent=5 // pred_check
      %p275 = pneg %p274
    $region46: #{mnist500k_forward.1} parent=5 // pred_check_branch
      %277 = sbr.rel (%p275) target = $region48
    $region47: #{mnist500k_forward.1} parent=5 // pred_region
      // Predicated region
      $region49: #{mnist500k_forward.1} parent=47 // pred_check
        %p278 = pneg %p35
      $region50: #{mnist500k_forward.1} parent=47 // pred_check_branch
        %280 = sbr.rel (%p278) target = $region52
      $region51: #{mnist500k_forward.1} parent=47 // pred_region
        %p281 = scmp.lt.s32.totalorder %s15, 1
        %s282 = scalar_select %p281, %s15, 1
        %s283 = smul.addr %s282, 217
        %s284 = smul.addr %s283, 8
        %s285 = scalar_lea.vmem %s0, %s284
      $region52: #{mnist500k_forward.1} parent=47 // pred_fallthru
        _
    $region48: #{mnist500k_forward.1} parent=5 // pred_fallthru
      _
    %p286 = scmp.le.s32.totalorder 1, %s15
    %p287 = scmp.lt.s32.totalorder %s15, 3
    %p288 = pnand %p286, %p287
    %p289 = pneg %p288
    // Predicated region
    $region53: #{mnist500k_forward.1} parent=5 // pred_check
      _
    $region54: #{mnist500k_forward.1} parent=5 // pred_check_branch
      %291 = sbr.rel (%p288) target = $region56
    $region55: #{mnist500k_forward.1} parent=5 // pred_region
      %s292 = ssub.s32 %s15, 1
      %p293 = scmp.lt.s32.totalorder %s20, 1
      %s294 = scalar_select %p293, %s20, 1
      %s295 = smul.addr %s294, 217
      %s296 = smul.addr %s295, 8
      %s297 = scalar_lea.vmem %s0, %s296
      %p298 = pneg %p41
      %p299 = pneg %p38
      %p300 = pneg %p62
      %p301 = pneg %p59
      %p302 = pneg %p83
      %p303 = pneg %p80
      %p304 = pneg %p104
      %p305 = pneg %p101
      %p306 = pneg %p125
      %p307 = pneg %p122
      %p308 = pneg %p146
      %p309 = pneg %p143
      %p310 = pneg %p167
      %p311 = pneg %p164
      %p312 = pneg %p188
      %p313 = pneg %p185
      %p314 = pneg %p209
      %p315 = pneg %p206
      %p316 = pneg %p235
      %p317 = pneg %p232
      %p318 = scmp.lt.s32.totalorder %s20, 1
      %s319 = scalar_select %p318, %s20, 1
      %s320 = scalar_lea.vmem %s9, %s319
      %p321 = scmp.lt.s32.totalorder %s20, 1
      %s322 = scalar_select %p321, %s20, 1
      %s323 = smul.addr %s322, 217
      %s324 = smul.addr %s323, 8
      %s325 = scalar_lea.vmem %s0, %s324
      %p326 = scmp.lt.s32.totalorder %s20, 1
      %s327 = scalar_select %p326, %s20, 1
      %s328 = scalar_lea.vmem %s9, %s327
      %vm330 = vcmask 261120
      %331 = vst.msk [vmem:[#allocation2] sm:$0xff] %vm330, 0.0
      %332 = vst.msk [vmem:[#allocation2 + $0x8] sm:$0xff] %vm330, 0.0
      %333 = vst.msk [vmem:[#allocation2 + $0x10] sm:$0xff] %vm330, 0.0
      %334 = vst.msk [vmem:[#allocation2 + $0x18] sm:$0xff] %vm330, 0.0
      %335 = vst.msk [vmem:[#allocation2 + $0x20] sm:$0xff] %vm330, 0.0
      %336 = vst.msk [vmem:[#allocation2 + $0x28] sm:$0xff] %vm330, 0.0
      %337 = vst.msk [vmem:[#allocation2 + $0x30] sm:$0xff] %vm330, 0.0
      %338 = vst.msk [vmem:[#allocation2 + $0x38] sm:$0xff] %vm330, 0.0
      %339 = vst.msk [vmem:[#allocation2 + $0x40] sm:$0xff] %vm330, 0.0
      %340 = vst.msk [vmem:[#allocation2 + $0x48] sm:$0xff] %vm330, 0.0
      %341 = vst.msk [vmem:[#allocation2 + $0x50] sm:$0xff] %vm330, 0.0
      %342 = vst.msk [vmem:[#allocation2 + $0x58] sm:$0xff] %vm330, 0.0
      %343 = vst.msk [vmem:[#allocation2 + $0x60] sm:$0xff] %vm330, 0.0
      %344 = vst.msk [vmem:[#allocation2 + $0x68] sm:$0xff] %vm330, 0.0
      %345 = vst.msk [vmem:[#allocation2 + $0x70] sm:$0xff] %vm330, 0.0
      %346 = vst.msk [vmem:[#allocation2 + $0x78] sm:$0xff] %vm330, 0.0
      %347 = vst.msk [vmem:[#allocation2 + $0x80] sm:$0xff] %vm330, 0.0
      %348 = vst.msk [vmem:[#allocation2 + $0x88] sm:$0xff] %vm330, 0.0
      %349 = vst.msk [vmem:[#allocation2 + $0x90] sm:$0xff] %vm330, 0.0
      %350 = vst.msk [vmem:[#allocation2 + $0x98] sm:$0xff] %vm330, 0.0
      %351 = vst.msk [vmem:[#allocation2 + $0xa0] sm:$0xff] %vm330, 0.0
      %352 = vst.msk [vmem:[#allocation2 + $0xa8] sm:$0xff] %vm330, 0.0
      %353 = vst.msk [vmem:[#allocation2 + $0xb0] sm:$0xff] %vm330, 0.0
      %354 = vst.msk [vmem:[#allocation2 + $0xb8] sm:$0xff] %vm330, 0.0
      %355 = vst.msk [vmem:[#allocation2 + $0xc0] sm:$0xff] %vm330, 0.0
      %356 = vst.msk [vmem:[#allocation2 + $0xc8] sm:$0xff] %vm330, 0.0
      %357 = vst.msk [vmem:[#allocation2 + $0xd0] sm:$0xff] %vm330, 0.0
      %358 = vst.msk [vmem:[#allocation2 + $0xd8] sm:$0xff] %vm330, 0.0
      %359 = vst.msk [vmem:[#allocation2 + $0xe0] sm:$0xff] %vm330, 0.0
      %360 = vst.msk [vmem:[#allocation2 + $0xe8] sm:$0xff] %vm330, 0.0
      %361 = vst.msk [vmem:[#allocation2 + $0xf0] sm:$0xff] %vm330, 0.0
      %362 = vst.msk [vmem:[#allocation2 + $0xf8] sm:$0xff] %vm330, 0.0
      %363 = vst.msk [vmem:[#allocation2 + $0x100] sm:$0xff] %vm330, 0.0
      %364 = vst.msk [vmem:[#allocation2 + $0x108] sm:$0xff] %vm330, 0.0
      %365 = vst.msk [vmem:[#allocation2 + $0x110] sm:$0xff] %vm330, 0.0
      %366 = vst.msk [vmem:[#allocation2 + $0x118] sm:$0xff] %vm330, 0.0
      %367 = vst.msk [vmem:[#allocation2 + $0x120] sm:$0xff] %vm330, 0.0
      %368 = vst.msk [vmem:[#allocation2 + $0x128] sm:$0xff] %vm330, 0.0
      %369 = vst.msk [vmem:[#allocation2 + $0x130] sm:$0xff] %vm330, 0.0
      %370 = vst.msk [vmem:[#allocation2 + $0x138] sm:$0xff] %vm330, 0.0
      %371 = vst.msk [vmem:[#allocation2 + $0x140] sm:$0xff] %vm330, 0.0
      %372 = vst.msk [vmem:[#allocation2 + $0x148] sm:$0xff] %vm330, 0.0
      %373 = vst.msk [vmem:[#allocation2 + $0x150] sm:$0xff] %vm330, 0.0
      %374 = vst.msk [vmem:[#allocation2 + $0x158] sm:$0xff] %vm330, 0.0
      %375 = vst.msk [vmem:[#allocation2 + $0x160] sm:$0xff] %vm330, 0.0
      %376 = vst.msk [vmem:[#allocation2 + $0x168] sm:$0xff] %vm330, 0.0
      %377 = vst.msk [vmem:[#allocation2 + $0x170] sm:$0xff] %vm330, 0.0
      %378 = vst.msk [vmem:[#allocation2 + $0x178] sm:$0xff] %vm330, 0.0
      %379 = vst.msk [vmem:[#allocation2 + $0x180] sm:$0xff] %vm330, 0.0
      %380 = vst.msk [vmem:[#allocation2 + $0x188] sm:$0xff] %vm330, 0.0
      %381 = vst.msk [vmem:[#allocation2 + $0x190] sm:$0xff] %vm330, 0.0
      %382 = vst.msk [vmem:[#allocation2 + $0x198] sm:$0xff] %vm330, 0.0
      %383 = vst.msk [vmem:[#allocation2 + $0x1a0] sm:$0xff] %vm330, 0.0
      %384 = vst.msk [vmem:[#allocation2 + $0x1a8] sm:$0xff] %vm330, 0.0
      %385 = vst.msk [vmem:[#allocation2 + $0x1b0] sm:$0xff] %vm330, 0.0
      %386 = vst [vmem:[#allocation5] sm:$0x1] 0.0
      %v387 = vld [vmem:[%s2] sm:$0x1]
      %v388 = vld [vmem:[%s4] sm:$0x1]
      %v389 = vlaneseq
      %v390 = vshrl.u32 %v389, 7
      %v391 = vadd.s32 %v390, 8
      %v392 = vadd.s32 %v390, 16
      %vm393 = vcmp.ge.s32.totalorder %v390, 2
      %vm394 = vcmp.ge.s32.totalorder %v391, 2
      %vm395 = vcmp.ge.s32.totalorder %v392, 2
      %vm396 = vcmp.lt.s32.totalorder %v390, 16
      %vm397 = vcmp.lt.s32.totalorder %v391, 16
      %vm398 = vcmp.lt.s32.totalorder %v392, 16
      %vm399 = vmand %vm393, %vm396
      %vm400 = vmand %vm394, %vm397
      %vm401 = vmand %vm395, %vm398
      loop: start=0, step=1, limit=14
      $region57: #{mnist500k_forward.1} parent=55 // loop_pre_header
        _
      $region58: #{mnist500k_forward.1} parent=55 // loop_header
        %s403 = sphi 0, %s407
        %p404 = scmp.ge.s32.totalorder %s403, 14
      $region59: #{mnist500k_forward.1} parent=55 // loop_header_branch
        %406 = sbr.rel (%p404) target = $region63
      $region60: #{mnist500k_forward.1} parent=55 // loop_body
        %s408 = sadd.s32 %s403, 2
        %s409 = smul.u32 %s408, 2
        %s410 = smul.u32 %s408, 96
        %s411 = scalar_lea.vmem %s325, %s410
        %v412 = vld [vmem:[%s411] sm:$0xff]
        %v413 = vld [vmem:[%s411 + $0x8] sm:$0xff]
        %v414 = vld [vmem:[%s411 + $0x10] sm:$0xff]
        %v415 = vld [vmem:[%s411 + $0x18] sm:$0xff]
        %v416 = vld [vmem:[%s411 + $0x20] sm:$0xff]
        %v417 = vld [vmem:[%s411 + $0x28] sm:$0xff]
        %v418 = vld [vmem:[%s411 + $0x30] sm:$0xff]
        %v419 = vld [vmem:[%s1] sm:$0x1]
        %421 = vset.pattern.permute.xlu0 0
        %422 = vperm.xlu0 %421, %v412
        %v423 = vpop.permute.xlu0 %422
        %426 = vset.pattern.permute.xlu0 0
        %427 = vperm.xlu0 %426, %v413
        %v428 = vpop.permute.xlu0 %427
        %431 = vset.pattern.permute.xlu0 0
        %432 = vperm.xlu0 %431, %v414
        %v433 = vpop.permute.xlu0 %432
        %436 = vset.pattern.permute.xlu0 0
        %437 = vperm.xlu0 %436, %v415
        %v438 = vpop.permute.xlu0 %437
        %441 = vset.pattern.permute.xlu0 0
        %442 = vperm.xlu0 %441, %v416
        %v443 = vpop.permute.xlu0 %442
        %446 = vset.pattern.permute.xlu0 0
        %447 = vperm.xlu0 %446, %v417
        %v448 = vpop.permute.xlu0 %447
        %v450 = vlaneseq
        %v451 = vshrl.u32 %v450, 7
        %v452 = vsub.s32 0, %v451
        %v453 = vrot.slane %v419, %v452
        %v454 = vmul.f32 %v423, %v453
        %v455 = vmul.f32 %v428, %v453
        %v456 = vmul.f32 %v433, %v453
        %v457 = vmul.f32 %v438, %v453
        %v458 = vmul.f32 %v443, %v453
        %v459 = vmul.f32 %v448, %v453
        %v460 = vadd.f32 %v454, 0.0
        %v461 = vadd.f32 %v455, 0.0
        %v462 = vadd.f32 %v456, 0.0
        %v463 = vadd.f32 %v457, 0.0
        %v464 = vadd.f32 %v458, 0.0
        %v465 = vadd.f32 %v459, 0.0
        %v466 = vld [vmem:[%s1 + $0x1] sm:$0x1]
        %468 = vset.pattern.permute.xlu0 0
        %469 = vperm.xlu0 %468, %v418
        %v470 = vpop.permute.xlu0 %469
        %v472 = vlaneseq
        %v473 = vshrl.u32 %v472, 7
        %v474 = vsub.s32 0, %v473
        %v475 = vrot.slane %v466, %v474
        %v476 = vmul.f32 %v423, %v475
        %v477 = vmul.f32 %v428, %v475
        %v478 = vmul.f32 %v433, %v475
        %v479 = vmul.f32 %v438, %v475
        %v480 = vmul.f32 %v443, %v475
        %v481 = vmul.f32 %v448, %v475
        %v482 = vmul.f32 %v470, %v475
        %vm490 = vcmask 1046528
        %v491 = vrot.slane %v476, 1
        %v492 = vrot.slane %v477, 1
        %v493 = vsel %vm490, %v491, %v492
        %v494 = vrot.slane %v478, 1
        %v495 = vsel %vm490, %v492, %v494
        %v496 = vrot.slane %v479, 1
        %v497 = vsel %vm490, %v494, %v496
        %v498 = vrot.slane %v480, 1
        %v499 = vsel %vm490, %v496, %v498
        %v500 = vrot.slane %v481, 1
        %v501 = vsel %vm490, %v498, %v500
        %v502 = vrot.slane %v482, 1
        %v503 = vsel %vm490, %v500, %v502
        %v510 = vadd.f32 %v460, %v493
        %v511 = vadd.f32 %v461, %v495
        %v512 = vadd.f32 %v462, %v497
        %v513 = vadd.f32 %v463, %v499
        %v514 = vadd.f32 %v464, %v501
        %v515 = vadd.f32 %v465, %v503
        %v516 = vld [vmem:[%s1 + $0x2] sm:$0x1]
        %v517 = vlaneseq
        %v518 = vshrl.u32 %v517, 7
        %v519 = vsub.s32 0, %v518
        %v520 = vrot.slane %v516, %v519
        %v521 = vmul.f32 %v423, %v520
        %v522 = vmul.f32 %v428, %v520
        %v523 = vmul.f32 %v433, %v520
        %v524 = vmul.f32 %v438, %v520
        %v525 = vmul.f32 %v443, %v520
        %v526 = vmul.f32 %v448, %v520
        %v527 = vmul.f32 %v470, %v520
        %vm535 = vcmask 1045504
        %v536 = vrot.slane %v521, 2
        %v537 = vrot.slane %v522, 2
        %v538 = vsel %vm535, %v536, %v537
        %v539 = vrot.slane %v523, 2
        %v540 = vsel %vm535, %v537, %v539
        %v541 = vrot.slane %v524, 2
        %v542 = vsel %vm535, %v539, %v541
        %v543 = vrot.slane %v525, 2
        %v544 = vsel %vm535, %v541, %v543
        %v545 = vrot.slane %v526, 2
        %v546 = vsel %vm535, %v543, %v545
        %v547 = vrot.slane %v527, 2
        %v548 = vsel %vm535, %v545, %v547
        %v555 = vadd.f32 %v510, %v538
        %v556 = vadd.f32 %v511, %v540
        %v557 = vadd.f32 %v512, %v542
        %v558 = vadd.f32 %v513, %v544
        %v559 = vadd.f32 %v514, %v546
        %v560 = vadd.f32 %v515, %v548
        %v561 = vld [vmem:[%s1 + $0x3] sm:$0x1]
        %v562 = vlaneseq
        %v563 = vshrl.u32 %v562, 7
        %v564 = vsub.s32 0, %v563
        %v565 = vrot.slane %v561, %v564
        %v566 = vmul.f32 %v423, %v565
        %v567 = vmul.f32 %v428, %v565
        %v568 = vmul.f32 %v433, %v565
        %v569 = vmul.f32 %v438, %v565
        %v570 = vmul.f32 %v443, %v565
        %v571 = vmul.f32 %v448, %v565
        %v572 = vmul.f32 %v470, %v565
        %vm580 = vcmask 1044480
        %v581 = vrot.slane %v566, 3
        %v582 = vrot.slane %v567, 3
        %v583 = vsel %vm580, %v581, %v582
        %v584 = vrot.slane %v568, 3
        %v585 = vsel %vm580, %v582, %v584
        %v586 = vrot.slane %v569, 3
        %v587 = vsel %vm580, %v584, %v586
        %v588 = vrot.slane %v570, 3
        %v589 = vsel %vm580, %v586, %v588
        %v590 = vrot.slane %v571, 3
        %v591 = vsel %vm580, %v588, %v590
        %v592 = vrot.slane %v572, 3
        %v593 = vsel %vm580, %v590, %v592
        %v600 = vadd.f32 %v555, %v583
        %v601 = vadd.f32 %v556, %v585
        %v602 = vadd.f32 %v557, %v587
        %v603 = vadd.f32 %v558, %v589
        %v604 = vadd.f32 %v559, %v591
        %v605 = vadd.f32 %v560, %v593
        %v606 = vld [vmem:[%s1 + $0x4] sm:$0x1]
        %v607 = vlaneseq
        %v608 = vshrl.u32 %v607, 7
        %v609 = vsub.s32 0, %v608
        %v610 = vrot.slane %v606, %v609
        %v611 = vmul.f32 %v423, %v610
        %v612 = vmul.f32 %v428, %v610
        %v613 = vmul.f32 %v433, %v610
        %v614 = vmul.f32 %v438, %v610
        %v615 = vmul.f32 %v443, %v610
        %v616 = vmul.f32 %v448, %v610
        %v617 = vmul.f32 %v470, %v610
        %vm625 = vcmask 1043456
        %v626 = vrot.slane %v611, 4
        %v627 = vrot.slane %v612, 4
        %v628 = vsel %vm625, %v626, %v627
        %v629 = vrot.slane %v613, 4
        %v630 = vsel %vm625, %v627, %v629
        %v631 = vrot.slane %v614, 4
        %v632 = vsel %vm625, %v629, %v631
        %v633 = vrot.slane %v615, 4
        %v634 = vsel %vm625, %v631, %v633
        %v635 = vrot.slane %v616, 4
        %v636 = vsel %vm625, %v633, %v635
        %v637 = vrot.slane %v617, 4
        %v638 = vsel %vm625, %v635, %v637
        %v645 = vadd.f32 %v600, %v628
        %v646 = vadd.f32 %v601, %v630
        %v647 = vadd.f32 %v602, %v632
        %v648 = vadd.f32 %v603, %v634
        %v649 = vadd.f32 %v604, %v636
        %v650 = vadd.f32 %v605, %v638
        %s651 = sadd.s32 %s409, 1
        %s652 = smul.u32 %s651, 48
        %s653 = scalar_lea.vmem %s325, %s652
        %v654 = vld [vmem:[%s653] sm:$0xff]
        %v655 = vld [vmem:[%s653 + $0x8] sm:$0xff]
        %v656 = vld [vmem:[%s653 + $0x10] sm:$0xff]
        %v657 = vld [vmem:[%s653 + $0x18] sm:$0xff]
        %v658 = vld [vmem:[%s653 + $0x20] sm:$0xff]
        %v659 = vld [vmem:[%s653 + $0x28] sm:$0xff]
        %v660 = vld [vmem:[%s653 + $0x30] sm:$0xff]
        %v661 = vld [vmem:[%s1 + $0x5] sm:$0x1]
        %663 = vset.pattern.permute.xlu0 0
        %664 = vperm.xlu0 %663, %v654
        %v665 = vpop.permute.xlu0 %664
        %668 = vset.pattern.permute.xlu0 0
        %669 = vperm.xlu0 %668, %v655
        %v670 = vpop.permute.xlu0 %669
        %673 = vset.pattern.permute.xlu0 0
        %674 = vperm.xlu0 %673, %v656
        %v675 = vpop.permute.xlu0 %674
        %678 = vset.pattern.permute.xlu0 0
        %679 = vperm.xlu0 %678, %v657
        %v680 = vpop.permute.xlu0 %679
        %683 = vset.pattern.permute.xlu0 0
        %684 = vperm.xlu0 %683, %v658
        %v685 = vpop.permute.xlu0 %684
        %688 = vset.pattern.permute.xlu0 0
        %689 = vperm.xlu0 %688, %v659
        %v690 = vpop.permute.xlu0 %689
        %v692 = vlaneseq
        %v693 = vshrl.u32 %v692, 7
        %v694 = vsub.s32 0, %v693
        %v695 = vrot.slane %v661, %v694
        %v696 = vmul.f32 %v665, %v695
        %v697 = vmul.f32 %v670, %v695
        %v698 = vmul.f32 %v675, %v695
        %v699 = vmul.f32 %v680, %v695
        %v700 = vmul.f32 %v685, %v695
        %v701 = vmul.f32 %v690, %v695
        %v702 = vadd.f32 %v645, %v696
        %v703 = vadd.f32 %v646, %v697
        %v704 = vadd.f32 %v647, %v698
        %v705 = vadd.f32 %v648, %v699
        %v706 = vadd.f32 %v649, %v700
        %v707 = vadd.f32 %v650, %v701
        %v708 = vld [vmem:[%s1 + $0x6] sm:$0x1]
        %710 = vset.pattern.permute.xlu0 0
        %711 = vperm.xlu0 %710, %v660
        %v712 = vpop.permute.xlu0 %711
        %v714 = vlaneseq
        %v715 = vshrl.u32 %v714, 7
        %v716 = vsub.s32 0, %v715
        %v717 = vrot.slane %v708, %v716
        %v718 = vmul.f32 %v665, %v717
        %v719 = vmul.f32 %v670, %v717
        %v720 = vmul.f32 %v675, %v717
        %v721 = vmul.f32 %v680, %v717
        %v722 = vmul.f32 %v685, %v717
        %v723 = vmul.f32 %v690, %v717
        %v724 = vmul.f32 %v712, %v717
        %v732 = vrot.slane %v718, 1
        %v733 = vrot.slane %v719, 1
        %v734 = vsel %vm490, %v732, %v733
        %v735 = vrot.slane %v720, 1
        %v736 = vsel %vm490, %v733, %v735
        %v737 = vrot.slane %v721, 1
        %v738 = vsel %vm490, %v735, %v737
        %v739 = vrot.slane %v722, 1
        %v740 = vsel %vm490, %v737, %v739
        %v741 = vrot.slane %v723, 1
        %v742 = vsel %vm490, %v739, %v741
        %v743 = vrot.slane %v724, 1
        %v744 = vsel %vm490, %v741, %v743
        %v751 = vadd.f32 %v702, %v734
        %v752 = vadd.f32 %v703, %v736
        %v753 = vadd.f32 %v704, %v738
        %v754 = vadd.f32 %v705, %v740
        %v755 = vadd.f32 %v706, %v742
        %v756 = vadd.f32 %v707, %v744
        %v757 = vld [vmem:[%s1 + $0x7] sm:$0x1]
        %v758 = vlaneseq
        %v759 = vshrl.u32 %v758, 7
        %v760 = vsub.s32 0, %v759
        %v761 = vrot.slane %v757, %v760
        %v762 = vmul.f32 %v665, %v761
        %v763 = vmul.f32 %v670, %v761
        %v764 = vmul.f32 %v675, %v761
        %v765 = vmul.f32 %v680, %v761
        %v766 = vmul.f32 %v685, %v761
        %v767 = vmul.f32 %v690, %v761
        %v768 = vmul.f32 %v712, %v761
        %v776 = vrot.slane %v762, 2
        %v777 = vrot.slane %v763, 2
        %v778 = vsel %vm535, %v776, %v777
        %v779 = vrot.slane %v764, 2
        %v780 = vsel %vm535, %v777, %v779
        %v781 = vrot.slane %v765, 2
        %v782 = vsel %vm535, %v779, %v781
        %v783 = vrot.slane %v766, 2
        %v784 = vsel %vm535, %v781, %v783
        %v785 = vrot.slane %v767, 2
        %v786 = vsel %vm535, %v783, %v785
        %v787 = vrot.slane %v768, 2
        %v788 = vsel %vm535, %v785, %v787
        %v795 = vadd.f32 %v751, %v778
        %v796 = vadd.f32 %v752, %v780
        %v797 = vadd.f32 %v753, %v782
        %v798 = vadd.f32 %v754, %v784
        %v799 = vadd.f32 %v755, %v786
        %v800 = vadd.f32 %v756, %v788
        %v801 = vld [vmem:[%s1 + $0x8] sm:$0x1]
        %v802 = vlaneseq
        %v803 = vshrl.u32 %v802, 7
        %v804 = vsub.s32 0, %v803
        %v805 = vrot.slane %v801, %v804
        %v806 = vmul.f32 %v665, %v805
        %v807 = vmul.f32 %v670, %v805
        %v808 = vmul.f32 %v675, %v805
        %v809 = vmul.f32 %v680, %v805
        %v810 = vmul.f32 %v685, %v805
        %v811 = vmul.f32 %v690, %v805
        %v812 = vmul.f32 %v712, %v805
        %v820 = vrot.slane %v806, 3
        %v821 = vrot.slane %v807, 3
        %v822 = vsel %vm580, %v820, %v821
        %v823 = vrot.slane %v808, 3
        %v824 = vsel %vm580, %v821, %v823
        %v825 = vrot.slane %v809, 3
        %v826 = vsel %vm580, %v823, %v825
        %v827 = vrot.slane %v810, 3
        %v828 = vsel %vm580, %v825, %v827
        %v829 = vrot.slane %v811, 3
        %v830 = vsel %vm580, %v827, %v829
        %v831 = vrot.slane %v812, 3
        %v832 = vsel %vm580, %v829, %v831
        %v839 = vadd.f32 %v795, %v822
        %v840 = vadd.f32 %v796, %v824
        %v841 = vadd.f32 %v797, %v826
        %v842 = vadd.f32 %v798, %v828
        %v843 = vadd.f32 %v799, %v830
        %v844 = vadd.f32 %v800, %v832
        %v845 = vld [vmem:[%s1 + $0x9] sm:$0x1]
        %v846 = vlaneseq
        %v847 = vshrl.u32 %v846, 7
        %v848 = vsub.s32 0, %v847
        %v849 = vrot.slane %v845, %v848
        %v850 = vmul.f32 %v665, %v849
        %v851 = vmul.f32 %v670, %v849
        %v852 = vmul.f32 %v675, %v849
        %v853 = vmul.f32 %v680, %v849
        %v854 = vmul.f32 %v685, %v849
        %v855 = vmul.f32 %v690, %v849
        %v856 = vmul.f32 %v712, %v849
        %v864 = vrot.slane %v850, 4
        %v865 = vrot.slane %v851, 4
        %v866 = vsel %vm625, %v864, %v865
        %v867 = vrot.slane %v852, 4
        %v868 = vsel %vm625, %v865, %v867
        %v869 = vrot.slane %v853, 4
        %v870 = vsel %vm625, %v867, %v869
        %v871 = vrot.slane %v854, 4
        %v872 = vsel %vm625, %v869, %v871
        %v873 = vrot.slane %v855, 4
        %v874 = vsel %vm625, %v871, %v873
        %v875 = vrot.slane %v856, 4
        %v876 = vsel %vm625, %v873, %v875
        %v883 = vadd.f32 %v839, %v866
        %v884 = vadd.f32 %v840, %v868
        %v885 = vadd.f32 %v841, %v870
        %v886 = vadd.f32 %v842, %v872
        %v887 = vadd.f32 %v843, %v874
        %v888 = vadd.f32 %v844, %v876
        %s889 = sadd.s32 %s409, 2
        %s890 = smul.u32 %s889, 48
        %s891 = scalar_lea.vmem %s325, %s890
        %v892 = vld [vmem:[%s891] sm:$0xff]
        %v893 = vld [vmem:[%s891 + $0x8] sm:$0xff]
        %v894 = vld [vmem:[%s891 + $0x10] sm:$0xff]
        %v895 = vld [vmem:[%s891 + $0x18] sm:$0xff]
        %v896 = vld [vmem:[%s891 + $0x20] sm:$0xff]
        %v897 = vld [vmem:[%s891 + $0x28] sm:$0xff]
        %v898 = vld [vmem:[%s891 + $0x30] sm:$0xff]
        %v899 = vld [vmem:[%s1 + $0xa] sm:$0x1]
        %901 = vset.pattern.permute.xlu0 0
        %902 = vperm.xlu0 %901, %v892
        %v903 = vpop.permute.xlu0 %902
        %906 = vset.pattern.permute.xlu0 0
        %907 = vperm.xlu0 %906, %v893
        %v908 = vpop.permute.xlu0 %907
        %911 = vset.pattern.permute.xlu0 0
        %912 = vperm.xlu0 %911, %v894
        %v913 = vpop.permute.xlu0 %912
        %916 = vset.pattern.permute.xlu0 0
        %917 = vperm.xlu0 %916, %v895
        %v918 = vpop.permute.xlu0 %917
        %921 = vset.pattern.permute.xlu0 0
        %922 = vperm.xlu0 %921, %v896
        %v923 = vpop.permute.xlu0 %922
        %926 = vset.pattern.permute.xlu0 0
        %927 = vperm.xlu0 %926, %v897
        %v928 = vpop.permute.xlu0 %927
        %v930 = vlaneseq
        %v931 = vshrl.u32 %v930, 7
        %v932 = vsub.s32 0, %v931
        %v933 = vrot.slane %v899, %v932
        %v934 = vmul.f32 %v903, %v933
        %v935 = vmul.f32 %v908, %v933
        %v936 = vmul.f32 %v913, %v933
        %v937 = vmul.f32 %v918, %v933
        %v938 = vmul.f32 %v923, %v933
        %v939 = vmul.f32 %v928, %v933
        %v940 = vadd.f32 %v883, %v934
        %v941 = vadd.f32 %v884, %v935
        %v942 = vadd.f32 %v885, %v936
        %v943 = vadd.f32 %v886, %v937
        %v944 = vadd.f32 %v887, %v938
        %v945 = vadd.f32 %v888, %v939
        %v946 = vld [vmem:[%s1 + $0xb] sm:$0x1]
        %948 = vset.pattern.permute.xlu0 0
        %949 = vperm.xlu0 %948, %v898
        %v950 = vpop.permute.xlu0 %949
        %v952 = vlaneseq
        %v953 = vshrl.u32 %v952, 7
        %v954 = vsub.s32 0, %v953
        %v955 = vrot.slane %v946, %v954
        %v956 = vmul.f32 %v903, %v955
        %v957 = vmul.f32 %v908, %v955
        %v958 = vmul.f32 %v913, %v955
        %v959 = vmul.f32 %v918, %v955
        %v960 = vmul.f32 %v923, %v955
        %v961 = vmul.f32 %v928, %v955
        %v962 = vmul.f32 %v950, %v955
        %v970 = vrot.slane %v956, 1
        %v971 = vrot.slane %v957, 1
        %v972 = vsel %vm490, %v970, %v971
        %v973 = vrot.slane %v958, 1
        %v974 = vsel %vm490, %v971, %v973
        %v975 = vrot.slane %v959, 1
        %v976 = vsel %vm490, %v973, %v975
        %v977 = vrot.slane %v960, 1
        %v978 = vsel %vm490, %v975, %v977
        %v979 = vrot.slane %v961, 1
        %v980 = vsel %vm490, %v977, %v979
        %v981 = vrot.slane %v962, 1
        %v982 = vsel %vm490, %v979, %v981
        %v989 = vadd.f32 %v940, %v972
        %v990 = vadd.f32 %v941, %v974
        %v991 = vadd.f32 %v942, %v976
        %v992 = vadd.f32 %v943, %v978
        %v993 = vadd.f32 %v944, %v980
        %v994 = vadd.f32 %v945, %v982
        %v995 = vld [vmem:[%s1 + $0xc] sm:$0x1]
        %v996 = vlaneseq
        %v997 = vshrl.u32 %v996, 7
        %v998 = vsub.s32 0, %v997
        %v999 = vrot.slane %v995, %v998
        %v1000 = vmul.f32 %v903, %v999
        %v1001 = vmul.f32 %v908, %v999
        %v1002 = vmul.f32 %v913, %v999
        %v1003 = vmul.f32 %v918, %v999
        %v1004 = vmul.f32 %v923, %v999
        %v1005 = vmul.f32 %v928, %v999
        %v1006 = vmul.f32 %v950, %v999
        %v1014 = vrot.slane %v1000, 2
        %v1015 = vrot.slane %v1001, 2
        %v1016 = vsel %vm535, %v1014, %v1015
        %v1017 = vrot.slane %v1002, 2
        %v1018 = vsel %vm535, %v1015, %v1017
        %v1019 = vrot.slane %v1003, 2
        %v1020 = vsel %vm535, %v1017, %v1019
        %v1021 = vrot.slane %v1004, 2
        %v1022 = vsel %vm535, %v1019, %v1021
        %v1023 = vrot.slane %v1005, 2
        %v1024 = vsel %vm535, %v1021, %v1023
        %v1025 = vrot.slane %v1006, 2
        %v1026 = vsel %vm535, %v1023, %v1025
        %v1033 = vadd.f32 %v989, %v1016
        %v1034 = vadd.f32 %v990, %v1018
        %v1035 = vadd.f32 %v991, %v1020
        %v1036 = vadd.f32 %v992, %v1022
        %v1037 = vadd.f32 %v993, %v1024
        %v1038 = vadd.f32 %v994, %v1026
        %v1039 = vld [vmem:[%s1 + $0xd] sm:$0x1]
        %v1040 = vlaneseq
        %v1041 = vshrl.u32 %v1040, 7
        %v1042 = vsub.s32 0, %v1041
        %v1043 = vrot.slane %v1039, %v1042
        %v1044 = vmul.f32 %v903, %v1043
        %v1045 = vmul.f32 %v908, %v1043
        %v1046 = vmul.f32 %v913, %v1043
        %v1047 = vmul.f32 %v918, %v1043
        %v1048 = vmul.f32 %v923, %v1043
        %v1049 = vmul.f32 %v928, %v1043
        %v1050 = vmul.f32 %v950, %v1043
        %v1058 = vrot.slane %v1044, 3
        %v1059 = vrot.slane %v1045, 3
        %v1060 = vsel %vm580, %v1058, %v1059
        %v1061 = vrot.slane %v1046, 3
        %v1062 = vsel %vm580, %v1059, %v1061
        %v1063 = vrot.slane %v1047, 3
        %v1064 = vsel %vm580, %v1061, %v1063
        %v1065 = vrot.slane %v1048, 3
        %v1066 = vsel %vm580, %v1063, %v1065
        %v1067 = vrot.slane %v1049, 3
        %v1068 = vsel %vm580, %v1065, %v1067
        %v1069 = vrot.slane %v1050, 3
        %v1070 = vsel %vm580, %v1067, %v1069
        %v1077 = vadd.f32 %v1033, %v1060
        %v1078 = vadd.f32 %v1034, %v1062
        %v1079 = vadd.f32 %v1035, %v1064
        %v1080 = vadd.f32 %v1036, %v1066
        %v1081 = vadd.f32 %v1037, %v1068
        %v1082 = vadd.f32 %v1038, %v1070
        %v1083 = vld [vmem:[%s1 + $0xe] sm:$0x1]
        %v1084 = vlaneseq
        %v1085 = vshrl.u32 %v1084, 7
        %v1086 = vsub.s32 0, %v1085
        %v1087 = vrot.slane %v1083, %v1086
        %v1088 = vmul.f32 %v903, %v1087
        %v1089 = vmul.f32 %v908, %v1087
        %v1090 = vmul.f32 %v913, %v1087
        %v1091 = vmul.f32 %v918, %v1087
        %v1092 = vmul.f32 %v923, %v1087
        %v1093 = vmul.f32 %v928, %v1087
        %v1094 = vmul.f32 %v950, %v1087
        %v1102 = vrot.slane %v1088, 4
        %v1103 = vrot.slane %v1089, 4
        %v1104 = vsel %vm625, %v1102, %v1103
        %v1105 = vrot.slane %v1090, 4
        %v1106 = vsel %vm625, %v1103, %v1105
        %v1107 = vrot.slane %v1091, 4
        %v1108 = vsel %vm625, %v1105, %v1107
        %v1109 = vrot.slane %v1092, 4
        %v1110 = vsel %vm625, %v1107, %v1109
        %v1111 = vrot.slane %v1093, 4
        %v1112 = vsel %vm625, %v1109, %v1111
        %v1113 = vrot.slane %v1094, 4
        %v1114 = vsel %vm625, %v1111, %v1113
        %v1121 = vadd.f32 %v1077, %v1104
        %v1122 = vadd.f32 %v1078, %v1106
        %v1123 = vadd.f32 %v1079, %v1108
        %v1124 = vadd.f32 %v1080, %v1110
        %v1125 = vadd.f32 %v1081, %v1112
        %v1126 = vadd.f32 %v1082, %v1114
        %s1127 = sadd.s32 %s409, 3
        %s1128 = smul.u32 %s1127, 48
        %s1129 = scalar_lea.vmem %s325, %s1128
        %v1130 = vld [vmem:[%s1129] sm:$0xff]
        %v1131 = vld [vmem:[%s1129 + $0x8] sm:$0xff]
        %v1132 = vld [vmem:[%s1129 + $0x10] sm:$0xff]
        %v1133 = vld [vmem:[%s1129 + $0x18] sm:$0xff]
        %v1134 = vld [vmem:[%s1129 + $0x20] sm:$0xff]
        %v1135 = vld [vmem:[%s1129 + $0x28] sm:$0xff]
        %v1136 = vld [vmem:[%s1129 + $0x30] sm:$0xff]
        %v1137 = vld [vmem:[%s1 + $0xf] sm:$0x1]
        %1139 = vset.pattern.permute.xlu0 0
        %1140 = vperm.xlu0 %1139, %v1130
        %v1141 = vpop.permute.xlu0 %1140
        %1144 = vset.pattern.permute.xlu0 0
        %1145 = vperm.xlu0 %1144, %v1131
        %v1146 = vpop.permute.xlu0 %1145
        %1149 = vset.pattern.permute.xlu0 0
        %1150 = vperm.xlu0 %1149, %v1132
        %v1151 = vpop.permute.xlu0 %1150
        %1154 = vset.pattern.permute.xlu0 0
        %1155 = vperm.xlu0 %1154, %v1133
        %v1156 = vpop.permute.xlu0 %1155
        %1159 = vset.pattern.permute.xlu0 0
        %1160 = vperm.xlu0 %1159, %v1134
        %v1161 = vpop.permute.xlu0 %1160
        %1164 = vset.pattern.permute.xlu0 0
        %1165 = vperm.xlu0 %1164, %v1135
        %v1166 = vpop.permute.xlu0 %1165
        %v1168 = vlaneseq
        %v1169 = vshrl.u32 %v1168, 7
        %v1170 = vsub.s32 0, %v1169
        %v1171 = vrot.slane %v1137, %v1170
        %v1172 = vmul.f32 %v1141, %v1171
        %v1173 = vmul.f32 %v1146, %v1171
        %v1174 = vmul.f32 %v1151, %v1171
        %v1175 = vmul.f32 %v1156, %v1171
        %v1176 = vmul.f32 %v1161, %v1171
        %v1177 = vmul.f32 %v1166, %v1171
        %v1178 = vadd.f32 %v1121, %v1172
        %v1179 = vadd.f32 %v1122, %v1173
        %v1180 = vadd.f32 %v1123, %v1174
        %v1181 = vadd.f32 %v1124, %v1175
        %v1182 = vadd.f32 %v1125, %v1176
        %v1183 = vadd.f32 %v1126, %v1177
        %v1184 = vld [vmem:[%s1 + $0x10] sm:$0x1]
        %1186 = vset.pattern.permute.xlu0 0
        %1187 = vperm.xlu0 %1186, %v1136
        %v1188 = vpop.permute.xlu0 %1187
        %v1190 = vlaneseq
        %v1191 = vshrl.u32 %v1190, 7
        %v1192 = vsub.s32 0, %v1191
        %v1193 = vrot.slane %v1184, %v1192
        %v1194 = vmul.f32 %v1141, %v1193
        %v1195 = vmul.f32 %v1146, %v1193
        %v1196 = vmul.f32 %v1151, %v1193
        %v1197 = vmul.f32 %v1156, %v1193
        %v1198 = vmul.f32 %v1161, %v1193
        %v1199 = vmul.f32 %v1166, %v1193
        %v1200 = vmul.f32 %v1188, %v1193
        %v1208 = vrot.slane %v1194, 1
        %v1209 = vrot.slane %v1195, 1
        %v1210 = vsel %vm490, %v1208, %v1209
        %v1211 = vrot.slane %v1196, 1
        %v1212 = vsel %vm490, %v1209, %v1211
        %v1213 = vrot.slane %v1197, 1
        %v1214 = vsel %vm490, %v1211, %v1213
        %v1215 = vrot.slane %v1198, 1
        %v1216 = vsel %vm490, %v1213, %v1215
        %v1217 = vrot.slane %v1199, 1
        %v1218 = vsel %vm490, %v1215, %v1217
        %v1219 = vrot.slane %v1200, 1
        %v1220 = vsel %vm490, %v1217, %v1219
        %v1227 = vadd.f32 %v1178, %v1210
        %v1228 = vadd.f32 %v1179, %v1212
        %v1229 = vadd.f32 %v1180, %v1214
        %v1230 = vadd.f32 %v1181, %v1216
        %v1231 = vadd.f32 %v1182, %v1218
        %v1232 = vadd.f32 %v1183, %v1220
        %v1233 = vld [vmem:[%s1 + $0x11] sm:$0x1]
        %v1234 = vlaneseq
        %v1235 = vshrl.u32 %v1234, 7
        %v1236 = vsub.s32 0, %v1235
        %v1237 = vrot.slane %v1233, %v1236
        %v1238 = vmul.f32 %v1141, %v1237
        %v1239 = vmul.f32 %v1146, %v1237
        %v1240 = vmul.f32 %v1151, %v1237
        %v1241 = vmul.f32 %v1156, %v1237
        %v1242 = vmul.f32 %v1161, %v1237
        %v1243 = vmul.f32 %v1166, %v1237
        %v1244 = vmul.f32 %v1188, %v1237
        %v1252 = vrot.slane %v1238, 2
        %v1253 = vrot.slane %v1239, 2
        %v1254 = vsel %vm535, %v1252, %v1253
        %v1255 = vrot.slane %v1240, 2
        %v1256 = vsel %vm535, %v1253, %v1255
        %v1257 = vrot.slane %v1241, 2
        %v1258 = vsel %vm535, %v1255, %v1257
        %v1259 = vrot.slane %v1242, 2
        %v1260 = vsel %vm535, %v1257, %v1259
        %v1261 = vrot.slane %v1243, 2
        %v1262 = vsel %vm535, %v1259, %v1261
        %v1263 = vrot.slane %v1244, 2
        %v1264 = vsel %vm535, %v1261, %v1263
        %v1271 = vadd.f32 %v1227, %v1254
        %v1272 = vadd.f32 %v1228, %v1256
        %v1273 = vadd.f32 %v1229, %v1258
        %v1274 = vadd.f32 %v1230, %v1260
        %v1275 = vadd.f32 %v1231, %v1262
        %v1276 = vadd.f32 %v1232, %v1264
        %v1277 = vld [vmem:[%s1 + $0x12] sm:$0x1]
        %v1278 = vlaneseq
        %v1279 = vshrl.u32 %v1278, 7
        %v1280 = vsub.s32 0, %v1279
        %v1281 = vrot.slane %v1277, %v1280
        %v1282 = vmul.f32 %v1141, %v1281
        %v1283 = vmul.f32 %v1146, %v1281
        %v1284 = vmul.f32 %v1151, %v1281
        %v1285 = vmul.f32 %v1156, %v1281
        %v1286 = vmul.f32 %v1161, %v1281
        %v1287 = vmul.f32 %v1166, %v1281
        %v1288 = vmul.f32 %v1188, %v1281
        %v1296 = vrot.slane %v1282, 3
        %v1297 = vrot.slane %v1283, 3
        %v1298 = vsel %vm580, %v1296, %v1297
        %v1299 = vrot.slane %v1284, 3
        %v1300 = vsel %vm580, %v1297, %v1299
        %v1301 = vrot.slane %v1285, 3
        %v1302 = vsel %vm580, %v1299, %v1301
        %v1303 = vrot.slane %v1286, 3
        %v1304 = vsel %vm580, %v1301, %v1303
        %v1305 = vrot.slane %v1287, 3
        %v1306 = vsel %vm580, %v1303, %v1305
        %v1307 = vrot.slane %v1288, 3
        %v1308 = vsel %vm580, %v1305, %v1307
        %v1315 = vadd.f32 %v1271, %v1298
        %v1316 = vadd.f32 %v1272, %v1300
        %v1317 = vadd.f32 %v1273, %v1302
        %v1318 = vadd.f32 %v1274, %v1304
        %v1319 = vadd.f32 %v1275, %v1306
        %v1320 = vadd.f32 %v1276, %v1308
        %v1321 = vld [vmem:[%s1 + $0x13] sm:$0x1]
        %v1322 = vlaneseq
        %v1323 = vshrl.u32 %v1322, 7
        %v1324 = vsub.s32 0, %v1323
        %v1325 = vrot.slane %v1321, %v1324
        %v1326 = vmul.f32 %v1141, %v1325
        %v1327 = vmul.f32 %v1146, %v1325
        %v1328 = vmul.f32 %v1151, %v1325
        %v1329 = vmul.f32 %v1156, %v1325
        %v1330 = vmul.f32 %v1161, %v1325
        %v1331 = vmul.f32 %v1166, %v1325
        %v1332 = vmul.f32 %v1188, %v1325
        %v1340 = vrot.slane %v1326, 4
        %v1341 = vrot.slane %v1327, 4
        %v1342 = vsel %vm625, %v1340, %v1341
        %v1343 = vrot.slane %v1328, 4
        %v1344 = vsel %vm625, %v1341, %v1343
        %v1345 = vrot.slane %v1329, 4
        %v1346 = vsel %vm625, %v1343, %v1345
        %v1347 = vrot.slane %v1330, 4
        %v1348 = vsel %vm625, %v1345, %v1347
        %v1349 = vrot.slane %v1331, 4
        %v1350 = vsel %vm625, %v1347, %v1349
        %v1351 = vrot.slane %v1332, 4
        %v1352 = vsel %vm625, %v1349, %v1351
        %v1359 = vadd.f32 %v1315, %v1342
        %v1360 = vadd.f32 %v1316, %v1344
        %v1361 = vadd.f32 %v1317, %v1346
        %v1362 = vadd.f32 %v1318, %v1348
        %v1363 = vadd.f32 %v1319, %v1350
        %v1364 = vadd.f32 %v1320, %v1352
        %s1365 = sadd.s32 %s409, 4
        %s1366 = smul.u32 %s1365, 48
        %s1367 = scalar_lea.vmem %s325, %s1366
        %v1368 = vld [vmem:[%s1367] sm:$0xff]
        %v1369 = vld [vmem:[%s1367 + $0x8] sm:$0xff]
        %v1370 = vld [vmem:[%s1367 + $0x10] sm:$0xff]
        %v1371 = vld [vmem:[%s1367 + $0x18] sm:$0xff]
        %v1372 = vld [vmem:[%s1367 + $0x20] sm:$0xff]
        %v1373 = vld [vmem:[%s1367 + $0x28] sm:$0xff]
        %v1374 = vld [vmem:[%s1367 + $0x30] sm:$0xff]
        %v1375 = vld [vmem:[%s1 + $0x14] sm:$0x1]
        %1377 = vset.pattern.permute.xlu0 0
        %1378 = vperm.xlu0 %1377, %v1368
        %v1379 = vpop.permute.xlu0 %1378
        %1382 = vset.pattern.permute.xlu0 0
        %1383 = vperm.xlu0 %1382, %v1369
        %v1384 = vpop.permute.xlu0 %1383
        %1387 = vset.pattern.permute.xlu0 0
        %1388 = vperm.xlu0 %1387, %v1370
        %v1389 = vpop.permute.xlu0 %1388
        %1392 = vset.pattern.permute.xlu0 0
        %1393 = vperm.xlu0 %1392, %v1371
        %v1394 = vpop.permute.xlu0 %1393
        %1397 = vset.pattern.permute.xlu0 0
        %1398 = vperm.xlu0 %1397, %v1372
        %v1399 = vpop.permute.xlu0 %1398
        %1402 = vset.pattern.permute.xlu0 0
        %1403 = vperm.xlu0 %1402, %v1373
        %v1404 = vpop.permute.xlu0 %1403
        %v1406 = vlaneseq
        %v1407 = vshrl.u32 %v1406, 7
        %v1408 = vsub.s32 0, %v1407
        %v1409 = vrot.slane %v1375, %v1408
        %v1410 = vmul.f32 %v1379, %v1409
        %v1411 = vmul.f32 %v1384, %v1409
        %v1412 = vmul.f32 %v1389, %v1409
        %v1413 = vmul.f32 %v1394, %v1409
        %v1414 = vmul.f32 %v1399, %v1409
        %v1415 = vmul.f32 %v1404, %v1409
        %v1416 = vadd.f32 %v1359, %v1410
        %v1417 = vadd.f32 %v1360, %v1411
        %v1418 = vadd.f32 %v1361, %v1412
        %v1419 = vadd.f32 %v1362, %v1413
        %v1420 = vadd.f32 %v1363, %v1414
        %v1421 = vadd.f32 %v1364, %v1415
        %v1422 = vld [vmem:[%s1 + $0x15] sm:$0x1]
        %1424 = vset.pattern.permute.xlu0 0
        %1425 = vperm.xlu0 %1424, %v1374
        %v1426 = vpop.permute.xlu0 %1425
        %v1428 = vlaneseq
        %v1429 = vshrl.u32 %v1428, 7
        %v1430 = vsub.s32 0, %v1429
        %v1431 = vrot.slane %v1422, %v1430
        %v1432 = vmul.f32 %v1379, %v1431
        %v1433 = vmul.f32 %v1384, %v1431
        %v1434 = vmul.f32 %v1389, %v1431
        %v1435 = vmul.f32 %v1394, %v1431
        %v1436 = vmul.f32 %v1399, %v1431
        %v1437 = vmul.f32 %v1404, %v1431
        %v1438 = vmul.f32 %v1426, %v1431
        %v1446 = vrot.slane %v1432, 1
        %v1447 = vrot.slane %v1433, 1
        %v1448 = vsel %vm490, %v1446, %v1447
        %v1449 = vrot.slane %v1434, 1
        %v1450 = vsel %vm490, %v1447, %v1449
        %v1451 = vrot.slane %v1435, 1
        %v1452 = vsel %vm490, %v1449, %v1451
        %v1453 = vrot.slane %v1436, 1
        %v1454 = vsel %vm490, %v1451, %v1453
        %v1455 = vrot.slane %v1437, 1
        %v1456 = vsel %vm490, %v1453, %v1455
        %v1457 = vrot.slane %v1438, 1
        %v1458 = vsel %vm490, %v1455, %v1457
        %v1465 = vadd.f32 %v1416, %v1448
        %v1466 = vadd.f32 %v1417, %v1450
        %v1467 = vadd.f32 %v1418, %v1452
        %v1468 = vadd.f32 %v1419, %v1454
        %v1469 = vadd.f32 %v1420, %v1456
        %v1470 = vadd.f32 %v1421, %v1458
        %v1471 = vld [vmem:[%s1 + $0x16] sm:$0x1]
        %v1472 = vlaneseq
        %v1473 = vshrl.u32 %v1472, 7
        %v1474 = vsub.s32 0, %v1473
        %v1475 = vrot.slane %v1471, %v1474
        %v1476 = vmul.f32 %v1379, %v1475
        %v1477 = vmul.f32 %v1384, %v1475
        %v1478 = vmul.f32 %v1389, %v1475
        %v1479 = vmul.f32 %v1394, %v1475
        %v1480 = vmul.f32 %v1399, %v1475
        %v1481 = vmul.f32 %v1404, %v1475
        %v1482 = vmul.f32 %v1426, %v1475
        %v1490 = vrot.slane %v1476, 2
        %v1491 = vrot.slane %v1477, 2
        %v1492 = vsel %vm535, %v1490, %v1491
        %v1493 = vrot.slane %v1478, 2
        %v1494 = vsel %vm535, %v1491, %v1493
        %v1495 = vrot.slane %v1479, 2
        %v1496 = vsel %vm535, %v1493, %v1495
        %v1497 = vrot.slane %v1480, 2
        %v1498 = vsel %vm535, %v1495, %v1497
        %v1499 = vrot.slane %v1481, 2
        %v1500 = vsel %vm535, %v1497, %v1499
        %v1501 = vrot.slane %v1482, 2
        %v1502 = vsel %vm535, %v1499, %v1501
        %v1509 = vadd.f32 %v1465, %v1492
        %v1510 = vadd.f32 %v1466, %v1494
        %v1511 = vadd.f32 %v1467, %v1496
        %v1512 = vadd.f32 %v1468, %v1498
        %v1513 = vadd.f32 %v1469, %v1500
        %v1514 = vadd.f32 %v1470, %v1502
        %v1515 = vld [vmem:[%s1 + $0x17] sm:$0x1]
        %v1516 = vlaneseq
        %v1517 = vshrl.u32 %v1516, 7
        %v1518 = vsub.s32 0, %v1517
        %v1519 = vrot.slane %v1515, %v1518
        %v1520 = vmul.f32 %v1379, %v1519
        %v1521 = vmul.f32 %v1384, %v1519
        %v1522 = vmul.f32 %v1389, %v1519
        %v1523 = vmul.f32 %v1394, %v1519
        %v1524 = vmul.f32 %v1399, %v1519
        %v1525 = vmul.f32 %v1404, %v1519
        %v1526 = vmul.f32 %v1426, %v1519
        %v1534 = vrot.slane %v1520, 3
        %v1535 = vrot.slane %v1521, 3
        %v1536 = vsel %vm580, %v1534, %v1535
        %v1537 = vrot.slane %v1522, 3
        %v1538 = vsel %vm580, %v1535, %v1537
        %v1539 = vrot.slane %v1523, 3
        %v1540 = vsel %vm580, %v1537, %v1539
        %v1541 = vrot.slane %v1524, 3
        %v1542 = vsel %vm580, %v1539, %v1541
        %v1543 = vrot.slane %v1525, 3
        %v1544 = vsel %vm580, %v1541, %v1543
        %v1545 = vrot.slane %v1526, 3
        %v1546 = vsel %vm580, %v1543, %v1545
        %v1553 = vadd.f32 %v1509, %v1536
        %v1554 = vadd.f32 %v1510, %v1538
        %v1555 = vadd.f32 %v1511, %v1540
        %v1556 = vadd.f32 %v1512, %v1542
        %v1557 = vadd.f32 %v1513, %v1544
        %v1558 = vadd.f32 %v1514, %v1546
        %v1559 = vld [vmem:[%s1 + $0x18] sm:$0x1]
        %v1560 = vlaneseq
        %v1561 = vshrl.u32 %v1560, 7
        %v1562 = vsub.s32 0, %v1561
        %v1563 = vrot.slane %v1559, %v1562
        %v1564 = vmul.f32 %v1379, %v1563
        %v1565 = vmul.f32 %v1384, %v1563
        %v1566 = vmul.f32 %v1389, %v1563
        %v1567 = vmul.f32 %v1394, %v1563
        %v1568 = vmul.f32 %v1399, %v1563
        %v1569 = vmul.f32 %v1404, %v1563
        %v1570 = vmul.f32 %v1426, %v1563
        %v1578 = vrot.slane %v1564, 4
        %v1579 = vrot.slane %v1565, 4
        %v1580 = vsel %vm625, %v1578, %v1579
        %v1581 = vrot.slane %v1566, 4
        %v1582 = vsel %vm625, %v1579, %v1581
        %v1583 = vrot.slane %v1567, 4
        %v1584 = vsel %vm625, %v1581, %v1583
        %v1585 = vrot.slane %v1568, 4
        %v1586 = vsel %vm625, %v1583, %v1585
        %v1587 = vrot.slane %v1569, 4
        %v1588 = vsel %vm625, %v1585, %v1587
        %v1589 = vrot.slane %v1570, 4
        %v1590 = vsel %vm625, %v1587, %v1589
        %v1597 = vadd.f32 %v1553, %v1580
        %v1598 = vadd.f32 %v1554, %v1582
        %v1599 = vadd.f32 %v1555, %v1584
        %v1600 = vadd.f32 %v1556, %v1586
        %v1601 = vadd.f32 %v1557, %v1588
        %v1602 = vadd.f32 %v1558, %v1590
        %v1604 = vlaneseq
        %v1605 = vshrl.u32 %v1604, 7
        %v1606 = vsub.s32 0, %v1605
        %v1607 = vrot.slane %v387, %v1606
        %v1609 = vadd.f32 %v1597, %v1607
        %v1610 = vadd.f32 %v1598, %v1607
        %v1611 = vadd.f32 %v1599, %v1607
        %v1612 = vadd.f32 %v1600, %v1607
        %v1613 = vadd.f32 %v1601, %v1607
        %v1614 = vadd.f32 %v1602, %v1607
        %v1615 = vmax.f32 %v1609, 0.0
        %v1616 = vmax.f32 %v1610, 0.0
        %v1617 = vmax.f32 %v1611, 0.0
        %v1618 = vmax.f32 %v1612, 0.0
        %v1619 = vmax.f32 %v1613, 0.0
        %v1620 = vmax.f32 %v1614, 0.0
        %v1621 = vmul.f32 %v665, %v453
        %v1622 = vmul.f32 %v670, %v453
        %v1623 = vmul.f32 %v675, %v453
        %v1624 = vmul.f32 %v680, %v453
        %v1625 = vmul.f32 %v685, %v453
        %v1626 = vmul.f32 %v690, %v453
        %v1627 = vadd.f32 %v1621, 0.0
        %v1628 = vadd.f32 %v1622, 0.0
        %v1629 = vadd.f32 %v1623, 0.0
        %v1630 = vadd.f32 %v1624, 0.0
        %v1631 = vadd.f32 %v1625, 0.0
        %v1632 = vadd.f32 %v1626, 0.0
        %v1633 = vmul.f32 %v665, %v475
        %v1634 = vmul.f32 %v670, %v475
        %v1635 = vmul.f32 %v675, %v475
        %v1636 = vmul.f32 %v680, %v475
        %v1637 = vmul.f32 %v685, %v475
        %v1638 = vmul.f32 %v690, %v475
        %v1639 = vmul.f32 %v712, %v475
        %v1647 = vrot.slane %v1633, 1
        %v1648 = vrot.slane %v1634, 1
        %v1649 = vsel %vm490, %v1647, %v1648
        %v1650 = vrot.slane %v1635, 1
        %v1651 = vsel %vm490, %v1648, %v1650
        %v1652 = vrot.slane %v1636, 1
        %v1653 = vsel %vm490, %v1650, %v1652
        %v1654 = vrot.slane %v1637, 1
        %v1655 = vsel %vm490, %v1652, %v1654
        %v1656 = vrot.slane %v1638, 1
        %v1657 = vsel %vm490, %v1654, %v1656
        %v1658 = vrot.slane %v1639, 1
        %v1659 = vsel %vm490, %v1656, %v1658
        %v1666 = vadd.f32 %v1627, %v1649
        %v1667 = vadd.f32 %v1628, %v1651
        %v1668 = vadd.f32 %v1629, %v1653
        %v1669 = vadd.f32 %v1630, %v1655
        %v1670 = vadd.f32 %v1631, %v1657
        %v1671 = vadd.f32 %v1632, %v1659
        %v1672 = vmul.f32 %v665, %v520
        %v1673 = vmul.f32 %v670, %v520
        %v1674 = vmul.f32 %v675, %v520
        %v1675 = vmul.f32 %v680, %v520
        %v1676 = vmul.f32 %v685, %v520
        %v1677 = vmul.f32 %v690, %v520
        %v1678 = vmul.f32 %v712, %v520
        %v1686 = vrot.slane %v1672, 2
        %v1687 = vrot.slane %v1673, 2
        %v1688 = vsel %vm535, %v1686, %v1687
        %v1689 = vrot.slane %v1674, 2
        %v1690 = vsel %vm535, %v1687, %v1689
        %v1691 = vrot.slane %v1675, 2
        %v1692 = vsel %vm535, %v1689, %v1691
        %v1693 = vrot.slane %v1676, 2
        %v1694 = vsel %vm535, %v1691, %v1693
        %v1695 = vrot.slane %v1677, 2
        %v1696 = vsel %vm535, %v1693, %v1695
        %v1697 = vrot.slane %v1678, 2
        %v1698 = vsel %vm535, %v1695, %v1697
        %v1705 = vadd.f32 %v1666, %v1688
        %v1706 = vadd.f32 %v1667, %v1690
        %v1707 = vadd.f32 %v1668, %v1692
        %v1708 = vadd.f32 %v1669, %v1694
        %v1709 = vadd.f32 %v1670, %v1696
        %v1710 = vadd.f32 %v1671, %v1698
        %v1711 = vmul.f32 %v665, %v565
        %v1712 = vmul.f32 %v670, %v565
        %v1713 = vmul.f32 %v675, %v565
        %v1714 = vmul.f32 %v680, %v565
        %v1715 = vmul.f32 %v685, %v565
        %v1716 = vmul.f32 %v690, %v565
        %v1717 = vmul.f32 %v712, %v565
        %v1725 = vrot.slane %v1711, 3
        %v1726 = vrot.slane %v1712, 3
        %v1727 = vsel %vm580, %v1725, %v1726
        %v1728 = vrot.slane %v1713, 3
        %v1729 = vsel %vm580, %v1726, %v1728
        %v1730 = vrot.slane %v1714, 3
        %v1731 = vsel %vm580, %v1728, %v1730
        %v1732 = vrot.slane %v1715, 3
        %v1733 = vsel %vm580, %v1730, %v1732
        %v1734 = vrot.slane %v1716, 3
        %v1735 = vsel %vm580, %v1732, %v1734
        %v1736 = vrot.slane %v1717, 3
        %v1737 = vsel %vm580, %v1734, %v1736
        %v1744 = vadd.f32 %v1705, %v1727
        %v1745 = vadd.f32 %v1706, %v1729
        %v1746 = vadd.f32 %v1707, %v1731
        %v1747 = vadd.f32 %v1708, %v1733
        %v1748 = vadd.f32 %v1709, %v1735
        %v1749 = vadd.f32 %v1710, %v1737
        %v1750 = vmul.f32 %v665, %v610
        %v1751 = vmul.f32 %v670, %v610
        %v1752 = vmul.f32 %v675, %v610
        %v1753 = vmul.f32 %v680, %v610
        %v1754 = vmul.f32 %v685, %v610
        %v1755 = vmul.f32 %v690, %v610
        %v1756 = vmul.f32 %v712, %v610
        %v1764 = vrot.slane %v1750, 4
        %v1765 = vrot.slane %v1751, 4
        %v1766 = vsel %vm625, %v1764, %v1765
        %v1767 = vrot.slane %v1752, 4
        %v1768 = vsel %vm625, %v1765, %v1767
        %v1769 = vrot.slane %v1753, 4
        %v1770 = vsel %vm625, %v1767, %v1769
        %v1771 = vrot.slane %v1754, 4
        %v1772 = vsel %vm625, %v1769, %v1771
        %v1773 = vrot.slane %v1755, 4
        %v1774 = vsel %vm625, %v1771, %v1773
        %v1775 = vrot.slane %v1756, 4
        %v1776 = vsel %vm625, %v1773, %v1775
        %v1783 = vadd.f32 %v1744, %v1766
        %v1784 = vadd.f32 %v1745, %v1768
        %v1785 = vadd.f32 %v1746, %v1770
        %v1786 = vadd.f32 %v1747, %v1772
        %v1787 = vadd.f32 %v1748, %v1774
        %v1788 = vadd.f32 %v1749, %v1776
        %v1789 = vmul.f32 %v903, %v695
        %v1790 = vmul.f32 %v908, %v695
        %v1791 = vmul.f32 %v913, %v695
        %v1792 = vmul.f32 %v918, %v695
        %v1793 = vmul.f32 %v923, %v695
        %v1794 = vmul.f32 %v928, %v695
        %v1795 = vadd.f32 %v1783, %v1789
        %v1796 = vadd.f32 %v1784, %v1790
        %v1797 = vadd.f32 %v1785, %v1791
        %v1798 = vadd.f32 %v1786, %v1792
        %v1799 = vadd.f32 %v1787, %v1793
        %v1800 = vadd.f32 %v1788, %v1794
        %v1801 = vmul.f32 %v903, %v717
        %v1802 = vmul.f32 %v908, %v717
        %v1803 = vmul.f32 %v913, %v717
        %v1804 = vmul.f32 %v918, %v717
        %v1805 = vmul.f32 %v923, %v717
        %v1806 = vmul.f32 %v928, %v717
        %v1807 = vmul.f32 %v950, %v717
        %v1815 = vrot.slane %v1801, 1
        %v1816 = vrot.slane %v1802, 1
        %v1817 = vsel %vm490, %v1815, %v1816
        %v1818 = vrot.slane %v1803, 1
        %v1819 = vsel %vm490, %v1816, %v1818
        %v1820 = vrot.slane %v1804, 1
        %v1821 = vsel %vm490, %v1818, %v1820
        %v1822 = vrot.slane %v1805, 1
        %v1823 = vsel %vm490, %v1820, %v1822
        %v1824 = vrot.slane %v1806, 1
        %v1825 = vsel %vm490, %v1822, %v1824
        %v1826 = vrot.slane %v1807, 1
        %v1827 = vsel %vm490, %v1824, %v1826
        %v1834 = vadd.f32 %v1795, %v1817
        %v1835 = vadd.f32 %v1796, %v1819
        %v1836 = vadd.f32 %v1797, %v1821
        %v1837 = vadd.f32 %v1798, %v1823
        %v1838 = vadd.f32 %v1799, %v1825
        %v1839 = vadd.f32 %v1800, %v1827
        %v1840 = vmul.f32 %v903, %v761
        %v1841 = vmul.f32 %v908, %v761
        %v1842 = vmul.f32 %v913, %v761
        %v1843 = vmul.f32 %v918, %v761
        %v1844 = vmul.f32 %v923, %v761
        %v1845 = vmul.f32 %v928, %v761
        %v1846 = vmul.f32 %v950, %v761
        %v1854 = vrot.slane %v1840, 2
        %v1855 = vrot.slane %v1841, 2
        %v1856 = vsel %vm535, %v1854, %v1855
        %v1857 = vrot.slane %v1842, 2
        %v1858 = vsel %vm535, %v1855, %v1857
        %v1859 = vrot.slane %v1843, 2
        %v1860 = vsel %vm535, %v1857, %v1859
        %v1861 = vrot.slane %v1844, 2
        %v1862 = vsel %vm535, %v1859, %v1861
        %v1863 = vrot.slane %v1845, 2
        %v1864 = vsel %vm535, %v1861, %v1863
        %v1865 = vrot.slane %v1846, 2
        %v1866 = vsel %vm535, %v1863, %v1865
        %v1873 = vadd.f32 %v1834, %v1856
        %v1874 = vadd.f32 %v1835, %v1858
        %v1875 = vadd.f32 %v1836, %v1860
        %v1876 = vadd.f32 %v1837, %v1862
        %v1877 = vadd.f32 %v1838, %v1864
        %v1878 = vadd.f32 %v1839, %v1866
        %v1879 = vmul.f32 %v903, %v805
        %v1880 = vmul.f32 %v908, %v805
        %v1881 = vmul.f32 %v913, %v805
        %v1882 = vmul.f32 %v918, %v805
        %v1883 = vmul.f32 %v923, %v805
        %v1884 = vmul.f32 %v928, %v805
        %v1885 = vmul.f32 %v950, %v805
        %v1893 = vrot.slane %v1879, 3
        %v1894 = vrot.slane %v1880, 3
        %v1895 = vsel %vm580, %v1893, %v1894
        %v1896 = vrot.slane %v1881, 3
        %v1897 = vsel %vm580, %v1894, %v1896
        %v1898 = vrot.slane %v1882, 3
        %v1899 = vsel %vm580, %v1896, %v1898
        %v1900 = vrot.slane %v1883, 3
        %v1901 = vsel %vm580, %v1898, %v1900
        %v1902 = vrot.slane %v1884, 3
        %v1903 = vsel %vm580, %v1900, %v1902
        %v1904 = vrot.slane %v1885, 3
        %v1905 = vsel %vm580, %v1902, %v1904
        %v1912 = vadd.f32 %v1873, %v1895
        %v1913 = vadd.f32 %v1874, %v1897
        %v1914 = vadd.f32 %v1875, %v1899
        %v1915 = vadd.f32 %v1876, %v1901
        %v1916 = vadd.f32 %v1877, %v1903
        %v1917 = vadd.f32 %v1878, %v1905
        %v1918 = vmul.f32 %v903, %v849
        %v1919 = vmul.f32 %v908, %v849
        %v1920 = vmul.f32 %v913, %v849
        %v1921 = vmul.f32 %v918, %v849
        %v1922 = vmul.f32 %v923, %v849
        %v1923 = vmul.f32 %v928, %v849
        %v1924 = vmul.f32 %v950, %v849
        %v1932 = vrot.slane %v1918, 4
        %v1933 = vrot.slane %v1919, 4
        %v1934 = vsel %vm625, %v1932, %v1933
        %v1935 = vrot.slane %v1920, 4
        %v1936 = vsel %vm625, %v1933, %v1935
        %v1937 = vrot.slane %v1921, 4
        %v1938 = vsel %vm625, %v1935, %v1937
        %v1939 = vrot.slane %v1922, 4
        %v1940 = vsel %vm625, %v1937, %v1939
        %v1941 = vrot.slane %v1923, 4
        %v1942 = vsel %vm625, %v1939, %v1941
        %v1943 = vrot.slane %v1924, 4
        %v1944 = vsel %vm625, %v1941, %v1943
        %v1951 = vadd.f32 %v1912, %v1934
        %v1952 = vadd.f32 %v1913, %v1936
        %v1953 = vadd.f32 %v1914, %v1938
        %v1954 = vadd.f32 %v1915, %v1940
        %v1955 = vadd.f32 %v1916, %v1942
        %v1956 = vadd.f32 %v1917, %v1944
        %v1957 = vmul.f32 %v1141, %v933
        %v1958 = vmul.f32 %v1146, %v933
        %v1959 = vmul.f32 %v1151, %v933
        %v1960 = vmul.f32 %v1156, %v933
        %v1961 = vmul.f32 %v1161, %v933
        %v1962 = vmul.f32 %v1166, %v933
        %v1963 = vadd.f32 %v1951, %v1957
        %v1964 = vadd.f32 %v1952, %v1958
        %v1965 = vadd.f32 %v1953, %v1959
        %v1966 = vadd.f32 %v1954, %v1960
        %v1967 = vadd.f32 %v1955, %v1961
        %v1968 = vadd.f32 %v1956, %v1962
        %v1969 = vmul.f32 %v1141, %v955
        %v1970 = vmul.f32 %v1146, %v955
        %v1971 = vmul.f32 %v1151, %v955
        %v1972 = vmul.f32 %v1156, %v955
        %v1973 = vmul.f32 %v1161, %v955
        %v1974 = vmul.f32 %v1166, %v955
        %v1975 = vmul.f32 %v1188, %v955
        %v1983 = vrot.slane %v1969, 1
        %v1984 = vrot.slane %v1970, 1
        %v1985 = vsel %vm490, %v1983, %v1984
        %v1986 = vrot.slane %v1971, 1
        %v1987 = vsel %vm490, %v1984, %v1986
        %v1988 = vrot.slane %v1972, 1
        %v1989 = vsel %vm490, %v1986, %v1988
        %v1990 = vrot.slane %v1973, 1
        %v1991 = vsel %vm490, %v1988, %v1990
        %v1992 = vrot.slane %v1974, 1
        %v1993 = vsel %vm490, %v1990, %v1992
        %v1994 = vrot.slane %v1975, 1
        %v1995 = vsel %vm490, %v1992, %v1994
        %v2002 = vadd.f32 %v1963, %v1985
        %v2003 = vadd.f32 %v1964, %v1987
        %v2004 = vadd.f32 %v1965, %v1989
        %v2005 = vadd.f32 %v1966, %v1991
        %v2006 = vadd.f32 %v1967, %v1993
        %v2007 = vadd.f32 %v1968, %v1995
        %v2008 = vmul.f32 %v1141, %v999
        %v2009 = vmul.f32 %v1146, %v999
        %v2010 = vmul.f32 %v1151, %v999
        %v2011 = vmul.f32 %v1156, %v999
        %v2012 = vmul.f32 %v1161, %v999
        %v2013 = vmul.f32 %v1166, %v999
        %v2014 = vmul.f32 %v1188, %v999
        %v2022 = vrot.slane %v2008, 2
        %v2023 = vrot.slane %v2009, 2
        %v2024 = vsel %vm535, %v2022, %v2023
        %v2025 = vrot.slane %v2010, 2
        %v2026 = vsel %vm535, %v2023, %v2025
        %v2027 = vrot.slane %v2011, 2
        %v2028 = vsel %vm535, %v2025, %v2027
        %v2029 = vrot.slane %v2012, 2
        %v2030 = vsel %vm535, %v2027, %v2029
        %v2031 = vrot.slane %v2013, 2
        %v2032 = vsel %vm535, %v2029, %v2031
        %v2033 = vrot.slane %v2014, 2
        %v2034 = vsel %vm535, %v2031, %v2033
        %v2041 = vadd.f32 %v2002, %v2024
        %v2042 = vadd.f32 %v2003, %v2026
        %v2043 = vadd.f32 %v2004, %v2028
        %v2044 = vadd.f32 %v2005, %v2030
        %v2045 = vadd.f32 %v2006, %v2032
        %v2046 = vadd.f32 %v2007, %v2034
        %v2047 = vmul.f32 %v1141, %v1043
        %v2048 = vmul.f32 %v1146, %v1043
        %v2049 = vmul.f32 %v1151, %v1043
        %v2050 = vmul.f32 %v1156, %v1043
        %v2051 = vmul.f32 %v1161, %v1043
        %v2052 = vmul.f32 %v1166, %v1043
        %v2053 = vmul.f32 %v1188, %v1043
        %v2061 = vrot.slane %v2047, 3
        %v2062 = vrot.slane %v2048, 3
        %v2063 = vsel %vm580, %v2061, %v2062
        %v2064 = vrot.slane %v2049, 3
        %v2065 = vsel %vm580, %v2062, %v2064
        %v2066 = vrot.slane %v2050, 3
        %v2067 = vsel %vm580, %v2064, %v2066
        %v2068 = vrot.slane %v2051, 3
        %v2069 = vsel %vm580, %v2066, %v2068
        %v2070 = vrot.slane %v2052, 3
        %v2071 = vsel %vm580, %v2068, %v2070
        %v2072 = vrot.slane %v2053, 3
        %v2073 = vsel %vm580, %v2070, %v2072
        %v2080 = vadd.f32 %v2041, %v2063
        %v2081 = vadd.f32 %v2042, %v2065
        %v2082 = vadd.f32 %v2043, %v2067
        %v2083 = vadd.f32 %v2044, %v2069
        %v2084 = vadd.f32 %v2045, %v2071
        %v2085 = vadd.f32 %v2046, %v2073
        %v2086 = vmul.f32 %v1141, %v1087
        %v2087 = vmul.f32 %v1146, %v1087
        %v2088 = vmul.f32 %v1151, %v1087
        %v2089 = vmul.f32 %v1156, %v1087
        %v2090 = vmul.f32 %v1161, %v1087
        %v2091 = vmul.f32 %v1166, %v1087
        %v2092 = vmul.f32 %v1188, %v1087
        %v2100 = vrot.slane %v2086, 4
        %v2101 = vrot.slane %v2087, 4
        %v2102 = vsel %vm625, %v2100, %v2101
        %v2103 = vrot.slane %v2088, 4
        %v2104 = vsel %vm625, %v2101, %v2103
        %v2105 = vrot.slane %v2089, 4
        %v2106 = vsel %vm625, %v2103, %v2105
        %v2107 = vrot.slane %v2090, 4
        %v2108 = vsel %vm625, %v2105, %v2107
        %v2109 = vrot.slane %v2091, 4
        %v2110 = vsel %vm625, %v2107, %v2109
        %v2111 = vrot.slane %v2092, 4
        %v2112 = vsel %vm625, %v2109, %v2111
        %v2119 = vadd.f32 %v2080, %v2102
        %v2120 = vadd.f32 %v2081, %v2104
        %v2121 = vadd.f32 %v2082, %v2106
        %v2122 = vadd.f32 %v2083, %v2108
        %v2123 = vadd.f32 %v2084, %v2110
        %v2124 = vadd.f32 %v2085, %v2112
        %v2125 = vmul.f32 %v1379, %v1171
        %v2126 = vmul.f32 %v1384, %v1171
        %v2127 = vmul.f32 %v1389, %v1171
        %v2128 = vmul.f32 %v1394, %v1171
        %v2129 = vmul.f32 %v1399, %v1171
        %v2130 = vmul.f32 %v1404, %v1171
        %v2131 = vadd.f32 %v2119, %v2125
        %v2132 = vadd.f32 %v2120, %v2126
        %v2133 = vadd.f32 %v2121, %v2127
        %v2134 = vadd.f32 %v2122, %v2128
        %v2135 = vadd.f32 %v2123, %v2129
        %v2136 = vadd.f32 %v2124, %v2130
        %v2137 = vmul.f32 %v1379, %v1193
        %v2138 = vmul.f32 %v1384, %v1193
        %v2139 = vmul.f32 %v1389, %v1193
        %v2140 = vmul.f32 %v1394, %v1193
        %v2141 = vmul.f32 %v1399, %v1193
        %v2142 = vmul.f32 %v1404, %v1193
        %v2143 = vmul.f32 %v1426, %v1193
        %v2151 = vrot.slane %v2137, 1
        %v2152 = vrot.slane %v2138, 1
        %v2153 = vsel %vm490, %v2151, %v2152
        %v2154 = vrot.slane %v2139, 1
        %v2155 = vsel %vm490, %v2152, %v2154
        %v2156 = vrot.slane %v2140, 1
        %v2157 = vsel %vm490, %v2154, %v2156
        %v2158 = vrot.slane %v2141, 1
        %v2159 = vsel %vm490, %v2156, %v2158
        %v2160 = vrot.slane %v2142, 1
        %v2161 = vsel %vm490, %v2158, %v2160
        %v2162 = vrot.slane %v2143, 1
        %v2163 = vsel %vm490, %v2160, %v2162
        %v2170 = vadd.f32 %v2131, %v2153
        %v2171 = vadd.f32 %v2132, %v2155
        %v2172 = vadd.f32 %v2133, %v2157
        %v2173 = vadd.f32 %v2134, %v2159
        %v2174 = vadd.f32 %v2135, %v2161
        %v2175 = vadd.f32 %v2136, %v2163
        %v2176 = vmul.f32 %v1379, %v1237
        %v2177 = vmul.f32 %v1384, %v1237
        %v2178 = vmul.f32 %v1389, %v1237
        %v2179 = vmul.f32 %v1394, %v1237
        %v2180 = vmul.f32 %v1399, %v1237
        %v2181 = vmul.f32 %v1404, %v1237
        %v2182 = vmul.f32 %v1426, %v1237
        %v2190 = vrot.slane %v2176, 2
        %v2191 = vrot.slane %v2177, 2
        %v2192 = vsel %vm535, %v2190, %v2191
        %v2193 = vrot.slane %v2178, 2
        %v2194 = vsel %vm535, %v2191, %v2193
        %v2195 = vrot.slane %v2179, 2
        %v2196 = vsel %vm535, %v2193, %v2195
        %v2197 = vrot.slane %v2180, 2
        %v2198 = vsel %vm535, %v2195, %v2197
        %v2199 = vrot.slane %v2181, 2
        %v2200 = vsel %vm535, %v2197, %v2199
        %v2201 = vrot.slane %v2182, 2
        %v2202 = vsel %vm535, %v2199, %v2201
        %v2209 = vadd.f32 %v2170, %v2192
        %v2210 = vadd.f32 %v2171, %v2194
        %v2211 = vadd.f32 %v2172, %v2196
        %v2212 = vadd.f32 %v2173, %v2198
        %v2213 = vadd.f32 %v2174, %v2200
        %v2214 = vadd.f32 %v2175, %v2202
        %v2215 = vmul.f32 %v1379, %v1281
        %v2216 = vmul.f32 %v1384, %v1281
        %v2217 = vmul.f32 %v1389, %v1281
        %v2218 = vmul.f32 %v1394, %v1281
        %v2219 = vmul.f32 %v1399, %v1281
        %v2220 = vmul.f32 %v1404, %v1281
        %v2221 = vmul.f32 %v1426, %v1281
        %v2229 = vrot.slane %v2215, 3
        %v2230 = vrot.slane %v2216, 3
        %v2231 = vsel %vm580, %v2229, %v2230
        %v2232 = vrot.slane %v2217, 3
        %v2233 = vsel %vm580, %v2230, %v2232
        %v2234 = vrot.slane %v2218, 3
        %v2235 = vsel %vm580, %v2232, %v2234
        %v2236 = vrot.slane %v2219, 3
        %v2237 = vsel %vm580, %v2234, %v2236
        %v2238 = vrot.slane %v2220, 3
        %v2239 = vsel %vm580, %v2236, %v2238
        %v2240 = vrot.slane %v2221, 3
        %v2241 = vsel %vm580, %v2238, %v2240
        %v2248 = vadd.f32 %v2209, %v2231
        %v2249 = vadd.f32 %v2210, %v2233
        %v2250 = vadd.f32 %v2211, %v2235
        %v2251 = vadd.f32 %v2212, %v2237
        %v2252 = vadd.f32 %v2213, %v2239
        %v2253 = vadd.f32 %v2214, %v2241
        %v2254 = vmul.f32 %v1379, %v1325
        %v2255 = vmul.f32 %v1384, %v1325
        %v2256 = vmul.f32 %v1389, %v1325
        %v2257 = vmul.f32 %v1394, %v1325
        %v2258 = vmul.f32 %v1399, %v1325
        %v2259 = vmul.f32 %v1404, %v1325
        %v2260 = vmul.f32 %v1426, %v1325
        %v2268 = vrot.slane %v2254, 4
        %v2269 = vrot.slane %v2255, 4
        %v2270 = vsel %vm625, %v2268, %v2269
        %v2271 = vrot.slane %v2256, 4
        %v2272 = vsel %vm625, %v2269, %v2271
        %v2273 = vrot.slane %v2257, 4
        %v2274 = vsel %vm625, %v2271, %v2273
        %v2275 = vrot.slane %v2258, 4
        %v2276 = vsel %vm625, %v2273, %v2275
        %v2277 = vrot.slane %v2259, 4
        %v2278 = vsel %vm625, %v2275, %v2277
        %v2279 = vrot.slane %v2260, 4
        %v2280 = vsel %vm625, %v2277, %v2279
        %v2287 = vadd.f32 %v2248, %v2270
        %v2288 = vadd.f32 %v2249, %v2272
        %v2289 = vadd.f32 %v2250, %v2274
        %v2290 = vadd.f32 %v2251, %v2276
        %v2291 = vadd.f32 %v2252, %v2278
        %v2292 = vadd.f32 %v2253, %v2280
        %s2293 = sadd.s32 %s409, 5
        %s2294 = smul.u32 %s2293, 48
        %s2295 = scalar_lea.vmem %s325, %s2294
        %v2296 = vld [vmem:[%s2295] sm:$0xff]
        %v2297 = vld [vmem:[%s2295 + $0x8] sm:$0xff]
        %v2298 = vld [vmem:[%s2295 + $0x10] sm:$0xff]
        %v2299 = vld [vmem:[%s2295 + $0x18] sm:$0xff]
        %v2300 = vld [vmem:[%s2295 + $0x20] sm:$0xff]
        %v2301 = vld [vmem:[%s2295 + $0x28] sm:$0xff]
        %v2302 = vld [vmem:[%s2295 + $0x30] sm:$0xff]
        %2304 = vset.pattern.permute.xlu0 0
        %2305 = vperm.xlu0 %2304, %v2296
        %v2306 = vpop.permute.xlu0 %2305
        %2309 = vset.pattern.permute.xlu0 0
        %2310 = vperm.xlu0 %2309, %v2297
        %v2311 = vpop.permute.xlu0 %2310
        %2314 = vset.pattern.permute.xlu0 0
        %2315 = vperm.xlu0 %2314, %v2298
        %v2316 = vpop.permute.xlu0 %2315
        %2319 = vset.pattern.permute.xlu0 0
        %2320 = vperm.xlu0 %2319, %v2299
        %v2321 = vpop.permute.xlu0 %2320
        %2324 = vset.pattern.permute.xlu0 0
        %2325 = vperm.xlu0 %2324, %v2300
        %v2326 = vpop.permute.xlu0 %2325
        %2329 = vset.pattern.permute.xlu0 0
        %2330 = vperm.xlu0 %2329, %v2301
        %v2331 = vpop.permute.xlu0 %2330
        %v2333 = vmul.f32 %v2306, %v1409
        %v2334 = vmul.f32 %v2311, %v1409
        %v2335 = vmul.f32 %v2316, %v1409
        %v2336 = vmul.f32 %v2321, %v1409
        %v2337 = vmul.f32 %v2326, %v1409
        %v2338 = vmul.f32 %v2331, %v1409
        %v2339 = vadd.f32 %v2287, %v2333
        %v2340 = vadd.f32 %v2288, %v2334
        %v2341 = vadd.f32 %v2289, %v2335
        %v2342 = vadd.f32 %v2290, %v2336
        %v2343 = vadd.f32 %v2291, %v2337
        %v2344 = vadd.f32 %v2292, %v2338
        %2346 = vset.pattern.permute.xlu0 0
        %2347 = vperm.xlu0 %2346, %v2302
        %v2348 = vpop.permute.xlu0 %2347
        %v2350 = vmul.f32 %v2306, %v1431
        %v2351 = vmul.f32 %v2311, %v1431
        %v2352 = vmul.f32 %v2316, %v1431
        %v2353 = vmul.f32 %v2321, %v1431
        %v2354 = vmul.f32 %v2326, %v1431
        %v2355 = vmul.f32 %v2331, %v1431
        %v2356 = vmul.f32 %v2348, %v1431
        %v2364 = vrot.slane %v2350, 1
        %v2365 = vrot.slane %v2351, 1
        %v2366 = vsel %vm490, %v2364, %v2365
        %v2367 = vrot.slane %v2352, 1
        %v2368 = vsel %vm490, %v2365, %v2367
        %v2369 = vrot.slane %v2353, 1
        %v2370 = vsel %vm490, %v2367, %v2369
        %v2371 = vrot.slane %v2354, 1
        %v2372 = vsel %vm490, %v2369, %v2371
        %v2373 = vrot.slane %v2355, 1
        %v2374 = vsel %vm490, %v2371, %v2373
        %v2375 = vrot.slane %v2356, 1
        %v2376 = vsel %vm490, %v2373, %v2375
        %v2383 = vadd.f32 %v2339, %v2366
        %v2384 = vadd.f32 %v2340, %v2368
        %v2385 = vadd.f32 %v2341, %v2370
        %v2386 = vadd.f32 %v2342, %v2372
        %v2387 = vadd.f32 %v2343, %v2374
        %v2388 = vadd.f32 %v2344, %v2376
        %v2389 = vmul.f32 %v2306, %v1475
        %v2390 = vmul.f32 %v2311, %v1475
        %v2391 = vmul.f32 %v2316, %v1475
        %v2392 = vmul.f32 %v2321, %v1475
        %v2393 = vmul.f32 %v2326, %v1475
        %v2394 = vmul.f32 %v2331, %v1475
        %v2395 = vmul.f32 %v2348, %v1475
        %v2403 = vrot.slane %v2389, 2
        %v2404 = vrot.slane %v2390, 2
        %v2405 = vsel %vm535, %v2403, %v2404
        %v2406 = vrot.slane %v2391, 2
        %v2407 = vsel %vm535, %v2404, %v2406
        %v2408 = vrot.slane %v2392, 2
        %v2409 = vsel %vm535, %v2406, %v2408
        %v2410 = vrot.slane %v2393, 2
        %v2411 = vsel %vm535, %v2408, %v2410
        %v2412 = vrot.slane %v2394, 2
        %v2413 = vsel %vm535, %v2410, %v2412
        %v2414 = vrot.slane %v2395, 2
        %v2415 = vsel %vm535, %v2412, %v2414
        %v2422 = vadd.f32 %v2383, %v2405
        %v2423 = vadd.f32 %v2384, %v2407
        %v2424 = vadd.f32 %v2385, %v2409
        %v2425 = vadd.f32 %v2386, %v2411
        %v2426 = vadd.f32 %v2387, %v2413
        %v2427 = vadd.f32 %v2388, %v2415
        %v2428 = vmul.f32 %v2306, %v1519
        %v2429 = vmul.f32 %v2311, %v1519
        %v2430 = vmul.f32 %v2316, %v1519
        %v2431 = vmul.f32 %v2321, %v1519
        %v2432 = vmul.f32 %v2326, %v1519
        %v2433 = vmul.f32 %v2331, %v1519
        %v2434 = vmul.f32 %v2348, %v1519
        %v2442 = vrot.slane %v2428, 3
        %v2443 = vrot.slane %v2429, 3
        %v2444 = vsel %vm580, %v2442, %v2443
        %v2445 = vrot.slane %v2430, 3
        %v2446 = vsel %vm580, %v2443, %v2445
        %v2447 = vrot.slane %v2431, 3
        %v2448 = vsel %vm580, %v2445, %v2447
        %v2449 = vrot.slane %v2432, 3
        %v2450 = vsel %vm580, %v2447, %v2449
        %v2451 = vrot.slane %v2433, 3
        %v2452 = vsel %vm580, %v2449, %v2451
        %v2453 = vrot.slane %v2434, 3
        %v2454 = vsel %vm580, %v2451, %v2453
        %v2461 = vadd.f32 %v2422, %v2444
        %v2462 = vadd.f32 %v2423, %v2446
        %v2463 = vadd.f32 %v2424, %v2448
        %v2464 = vadd.f32 %v2425, %v2450
        %v2465 = vadd.f32 %v2426, %v2452
        %v2466 = vadd.f32 %v2427, %v2454
        %v2467 = vmul.f32 %v2306, %v1563
        %v2468 = vmul.f32 %v2311, %v1563
        %v2469 = vmul.f32 %v2316, %v1563
        %v2470 = vmul.f32 %v2321, %v1563
        %v2471 = vmul.f32 %v2326, %v1563
        %v2472 = vmul.f32 %v2331, %v1563
        %v2473 = vmul.f32 %v2348, %v1563
        %v2481 = vrot.slane %v2467, 4
        %v2482 = vrot.slane %v2468, 4
        %v2483 = vsel %vm625, %v2481, %v2482
        %v2484 = vrot.slane %v2469, 4
        %v2485 = vsel %vm625, %v2482, %v2484
        %v2486 = vrot.slane %v2470, 4
        %v2487 = vsel %vm625, %v2484, %v2486
        %v2488 = vrot.slane %v2471, 4
        %v2489 = vsel %vm625, %v2486, %v2488
        %v2490 = vrot.slane %v2472, 4
        %v2491 = vsel %vm625, %v2488, %v2490
        %v2492 = vrot.slane %v2473, 4
        %v2493 = vsel %vm625, %v2490, %v2492
        %v2500 = vadd.f32 %v2461, %v2483
        %v2501 = vadd.f32 %v2462, %v2485
        %v2502 = vadd.f32 %v2463, %v2487
        %v2503 = vadd.f32 %v2464, %v2489
        %v2504 = vadd.f32 %v2465, %v2491
        %v2505 = vadd.f32 %v2466, %v2493
        %v2506 = vadd.f32 %v2500, %v1607
        %v2507 = vadd.f32 %v2501, %v1607
        %v2508 = vadd.f32 %v2502, %v1607
        %v2509 = vadd.f32 %v2503, %v1607
        %v2510 = vadd.f32 %v2504, %v1607
        %v2511 = vadd.f32 %v2505, %v1607
        %v2512 = vmax.f32 %v2506, 0.0
        %v2513 = vmax.f32 %v2507, 0.0
        %v2514 = vmax.f32 %v2508, 0.0
        %v2515 = vmax.f32 %v2509, 0.0
        %v2516 = vmax.f32 %v2510, 0.0
        %v2517 = vmax.f32 %v2511, 0.0
        %v2518 = vmax.f32 %v1615, %v2512
        %v2519 = vmax.f32 %v1616, %v2513
        %v2520 = vmax.f32 %v1617, %v2514
        %v2521 = vmax.f32 %v1618, %v2515
        %v2522 = vmax.f32 %v1619, %v2516
        %v2523 = vmax.f32 %v1620, %v2517
        %2524 = vst.msk [vmem:[#allocation3] sm:$0xff] %vm330, %v2518
        %2525 = vst.msk [vmem:[#allocation3 + $0x8] sm:$0xff] %vm330, %v2519
        %2526 = vst.msk [vmem:[#allocation3 + $0x10] sm:$0xff] %vm330, %v2520
        %2527 = vst.msk [vmem:[#allocation3 + $0x18] sm:$0xff] %vm330, %v2521
        %2528 = vst.msk [vmem:[#allocation3 + $0x20] sm:$0xff] %vm330, %v2522
        %2529 = vst.msk [vmem:[#allocation3 + $0x28] sm:$0xff] %vm330, %v2523
        %v2530 = vld [vmem:[#allocation3] ss:$2 sm:$0xff]
        %s2531 = scalar_lea.vmem [#allocation3], 16
        %v2532 = vld [vmem:[%s2531] ss:$2 sm:$0xff]
        %s2533 = scalar_lea.vmem [#allocation3], 32
        %v2534 = vld [vmem:[%s2533] ss:$2 sm:$0xff]
        %s2535 = scalar_lea.vmem [#allocation3], 1
        %v2536 = vld [vmem:[%s2535] ss:$2 sm:$0xff]
        %s2537 = scalar_lea.vmem [#allocation3], 17
        %v2538 = vld [vmem:[%s2537] ss:$2 sm:$0xff]
        %s2539 = scalar_lea.vmem [#allocation3], 33
        %v2540 = vld [vmem:[%s2539] ss:$2 sm:$0xff]
        %v2541 = vmax.f32 %v2530, %v2536
        %v2542 = vmax.f32 %v2532, %v2538
        %v2543 = vmax.f32 %v2534, %v2540
        %v2544 = vsel %vm399, %v2541, 0.0
        %v2545 = vsel %vm400, %v2542, 0.0
        %v2546 = vsel %vm401, %v2543, 0.0
        %s2547 = smul.u32 %s408, 24
        %s2548 = scalar_lea.vmem [#allocation2], %s2547
        %2549 = vst.msk [vmem:[%s2548] sm:$0xff] %vm330, %v2544
        %2550 = vst.msk [vmem:[%s2548 + $0x8] sm:$0xff] %vm330, %v2545
        %2551 = vst.msk [vmem:[%s2548 + $0x10] sm:$0xff] %vm330, %v2546
      $region61: #{mnist500k_forward.1} parent=55 // loop_footer
        %s407 = sadd.s32 1, %s403
      $region62: #{mnist500k_forward.1} parent=55 // loop_footer_branch
        %402 = sbr.rel target = $region58
      $region63: #{mnist500k_forward.1} parent=55 // loop_exit
        _
      loop: start=0, step=1, limit=7
      $region64: #{mnist500k_forward.1} parent=55 // loop_pre_header
        _
      $region65: #{mnist500k_forward.1} parent=55 // loop_header
        %s2553 = sphi 0, %s2557
        %p2554 = scmp.ge.s32.totalorder %s2553, 7
      $region66: #{mnist500k_forward.1} parent=55 // loop_header_branch
        %2556 = sbr.rel (%p2554) target = $region70
      $region67: #{mnist500k_forward.1} parent=55 // loop_body
        %s2558 = smul.u32 %s2553, 2
        %s2559 = smul.u32 %s2553, 48
        %s2560 = scalar_lea.vmem [#allocation2], %s2559
        %v2561 = vld [vmem:[%s2560] sm:$0xff]
        %v2562 = vld [vmem:[%s2560 + $0x8] sm:$0xff]
        %v2563 = vld [vmem:[%s2560 + $0x10] sm:$0xff]
        %v2564 = vld [vmem:[%s2560 + $0x18] sm:$0xff]
        %v2565 = vpack.c.bf16 %v2562, %v2561
        %v2566 = vpack.c.bf16 %v2563, %v2563
        %v2567 = vld [vmem:[%s3] sm:$0xf]
        %v2568 = vld [vmem:[%s3 + $0x4] sm:$0xf]
        %v2569 = vld [vmem:[%s3 + $0x8] sm:$0xf]
        %v2570 = vld [vmem:[%s3 + $0xc] sm:$0xf]
        %v2571 = vpack.c.bf16 %v2564, %v2563
        %s2572 = scalar_lea.vmem %s3, 16
        %v2573 = vld [vmem:[%s2572] sm:$0xf]
        %v2574 = vld [vmem:[%s2572 + $0x4] sm:$0xf]
        %v2575 = vld [vmem:[%s2572 + $0x8] sm:$0xf]
        %v2576 = vld [vmem:[%s2572 + $0xc] sm:$0xf]
        %vm2577 = vsmask.f32 7424
        %v2579 = vshrl.u32 %v2565, 16
        %v2581 = vshll.u32 %v2565, 16
        %v2583 = vrot.slane %v2581, 1
        %v2584 = vor.u32 %v2579, %v2583
        %v2586 = vshll.u32 %v2571, 16
        %v2588 = vrot.slane %v2586, 1
        %v2589 = vsel %vm2577, %v2584, %v2588
        %v2590 = vshrl.u32 %v2571, 16
        %v2592 = vor.u32 %v2590, %v2588
        %v2597 = vunpack.c.l.b16 %v2573
        %v2598 = vunpack.c.l.b16 %v2574
        %v2599 = vunpack.c.l.b16 %v2575
        %v2600 = vunpack.c.l.b16 %v2576
        %v2601 = vpack.c.b16 %v2598, %v2597
        %v2602 = vpack.c.b16 %v2600, %v2599
        %v2606 = vsel %vm330, %v2589, 0
        %v2609 = vsel %vm330, %v2592, 0
        %2611 = vmatprep.subr.bf16.mxu0 0
        %2612 = vmatpush1.bf16.msra.mxu0 0
        %2613 = vmatprep.subr.bf16.mxu0 0
        %2614 = vmatpush1.bf16.msra.mxu0 0
        %2615 = vmatprep.subr.bf16.mxu0 0
        %2616 = vmatpush1.bf16.msra.mxu0 0
        %2617 = vmatprep.subr.bf16.mxu0 0
        %2618 = vmatpush1.bf16.msra.mxu0 0
        %2619 = vmatprep.subr.bf16.mxu0 0
        %2620 = vmatpush1.bf16.msra.mxu0 0
        %2621 = vmatprep.subr.bf16.mxu0 0
        %2622 = vmatpush1.bf16.msra.mxu0 0
        %2623 = vmatprep.subr.bf16.mxu0 0
        %2624 = vmatpush1.bf16.msra.mxu0 %v2602
        %2625 = vmatprep.subr.bf16.mxu0 0
        %2626 = vmatpush1.bf16.msra.mxu0 %v2601
        %2627 = vmatprep.subr.bf16.mxu0 0
        %2628 = vmatpush2.bf16.msra.mxu0 0
        %2629 = vmatprep.subr.bf16.mxu0 0
        %2630 = vmatpush2.bf16.msra.mxu0 0
        %2631 = vmatprep.subr.bf16.mxu0 0
        %2632 = vmatpush2.bf16.msra.mxu0 0
        %2633 = vmatprep.subr.bf16.mxu0 0
        %2634 = vmatpush2.bf16.msra.mxu0 0
        %2635 = vmatprep.subr.bf16.mxu0 0
        %2636 = vmatpush2.bf16.msra.mxu0 0
        %2637 = vmatprep.subr.bf16.mxu0 0
        %2638 = vmatpush2.bf16.msra.mxu0 0
        %2639 = vmatprep.subr.bf16.mxu0 0
        %2640 = vmatpush2.bf16.msra.mxu0 0
        %2641 = vmatprep.subr.bf16.mxu0 0
        %2642 = vmatpush2.bf16.msra.mxu0 0
        %2643 = vmatprep.mubr.bf16.mxu0 0
        %2644 = vmatmul.mubr.bf16.gmra.mxu0 %v2606
        %v2645 = vpop.f32.mrf.mxu0
        %v2646 = vadd.f32 0.0, %v2645
        %v2647 = vpop.f32.mrf.mxu0
        %v2648 = vpop.f32.mrf.mxu0
        %v2649 = vadd.f32 0.0, %v2648
        %v2650 = vpop.f32.mrf.mxu0
        %2651 = vmatprep.mubr.bf16.mxu0 0
        %2652 = vmatmul.mubr.bf16.gmra.mxu0 %v2609
        %v2653 = vpop.f32.mrf.mxu0
        %v2654 = vadd.f32 0.0, %v2653
        %v2655 = vpop.f32.mrf.mxu0
        %v2656 = vpop.f32.mrf.mxu0
        %v2657 = vpop.f32.mrf.mxu0
        %2658 = vdwg.mxu0
        %v2663 = vunpack.c.l.b16 %v2567
        %v2664 = vunpack.c.l.b16 %v2568
        %v2665 = vunpack.c.l.b16 %v2569
        %v2666 = vunpack.c.l.b16 %v2570
        %v2667 = vpack.c.b16 %v2664, %v2663
        %v2668 = vpack.c.b16 %v2666, %v2665
        %v2671 = vsel %vm330, %v2565, 0
        %v2674 = vsel %vm330, %v2566, 0
        %2676 = vmatprep.subr.bf16.mxu0 0
        %2677 = vmatpush1.bf16.msra.mxu0 0
        %2678 = vmatprep.subr.bf16.mxu0 0
        %2679 = vmatpush1.bf16.msra.mxu0 0
        %2680 = vmatprep.subr.bf16.mxu0 0
        %2681 = vmatpush1.bf16.msra.mxu0 0
        %2682 = vmatprep.subr.bf16.mxu0 0
        %2683 = vmatpush1.bf16.msra.mxu0 0
        %2684 = vmatprep.subr.bf16.mxu0 0
        %2685 = vmatpush1.bf16.msra.mxu0 0
        %2686 = vmatprep.subr.bf16.mxu0 0
        %2687 = vmatpush1.bf16.msra.mxu0 0
        %2688 = vmatprep.subr.bf16.mxu0 0
        %2689 = vmatpush1.bf16.msra.mxu0 %v2668
        %2690 = vmatprep.subr.bf16.mxu0 0
        %2691 = vmatpush1.bf16.msra.mxu0 %v2667
        %2692 = vmatprep.subr.bf16.mxu0 0
        %2693 = vmatpush2.bf16.msra.mxu0 0
        %2694 = vmatprep.subr.bf16.mxu0 0
        %2695 = vmatpush2.bf16.msra.mxu0 0
        %2696 = vmatprep.subr.bf16.mxu0 0
        %2697 = vmatpush2.bf16.msra.mxu0 0
        %2698 = vmatprep.subr.bf16.mxu0 0
        %2699 = vmatpush2.bf16.msra.mxu0 0
        %2700 = vmatprep.subr.bf16.mxu0 0
        %2701 = vmatpush2.bf16.msra.mxu0 0
        %2702 = vmatprep.subr.bf16.mxu0 0
        %2703 = vmatpush2.bf16.msra.mxu0 0
        %2704 = vmatprep.subr.bf16.mxu0 0
        %2705 = vmatpush2.bf16.msra.mxu0 0
        %2706 = vmatprep.subr.bf16.mxu0 0
        %2707 = vmatpush2.bf16.msra.mxu0 0
        %2708 = vmatprep.mubr.bf16.mxu0 0
        %2709 = vmatmul.mubr.bf16.gmra.mxu0 %v2671
        %v2710 = vpop.f32.mrf.mxu0
        %v2711 = vadd.f32 %v2646, %v2710
        %v2712 = vpop.f32.mrf.mxu0
        %v2713 = vpop.f32.mrf.mxu0
        %v2714 = vadd.f32 %v2649, %v2713
        %v2715 = vpop.f32.mrf.mxu0
        %2716 = vmatprep.mubr.bf16.mxu0 0
        %2717 = vmatmul.mubr.bf16.gmra.mxu0 %v2674
        %v2718 = vpop.f32.mrf.mxu0
        %v2719 = vadd.f32 %v2654, %v2718
        %v2720 = vpop.f32.mrf.mxu0
        %v2721 = vpop.f32.mrf.mxu0
        %v2722 = vpop.f32.mrf.mxu0
        %2723 = vdwg.mxu0
        %s2724 = scalar_lea.vmem %s3, 32
        %v2725 = vld [vmem:[%s2724] sm:$0xf]
        %v2726 = vld [vmem:[%s2724 + $0x4] sm:$0xf]
        %v2727 = vld [vmem:[%s2724 + $0x8] sm:$0xf]
        %v2728 = vld [vmem:[%s2724 + $0xc] sm:$0xf]
        %vm2731 = vcmask 1046528
        %v2732 = vrot.slane %v2565, 1
        %v2733 = vrot.slane %v2571, 1
        %v2734 = vsel %vm2731, %v2732, %v2733
        %v2739 = vunpack.c.l.b16 %v2725
        %v2740 = vunpack.c.l.b16 %v2726
        %v2741 = vunpack.c.l.b16 %v2727
        %v2742 = vunpack.c.l.b16 %v2728
        %v2743 = vpack.c.b16 %v2740, %v2739
        %v2744 = vpack.c.b16 %v2742, %v2741
        %v2748 = vsel %vm330, %v2734, 0
        %v2751 = vsel %vm330, %v2733, 0
        %2753 = vmatprep.subr.bf16.mxu0 0
        %2754 = vmatpush1.bf16.msra.mxu0 0
        %2755 = vmatprep.subr.bf16.mxu0 0
        %2756 = vmatpush1.bf16.msra.mxu0 0
        %2757 = vmatprep.subr.bf16.mxu0 0
        %2758 = vmatpush1.bf16.msra.mxu0 0
        %2759 = vmatprep.subr.bf16.mxu0 0
        %2760 = vmatpush1.bf16.msra.mxu0 0
        %2761 = vmatprep.subr.bf16.mxu0 0
        %2762 = vmatpush1.bf16.msra.mxu0 0
        %2763 = vmatprep.subr.bf16.mxu0 0
        %2764 = vmatpush1.bf16.msra.mxu0 0
        %2765 = vmatprep.subr.bf16.mxu0 0
        %2766 = vmatpush1.bf16.msra.mxu0 %v2744
        %2767 = vmatprep.subr.bf16.mxu0 0
        %2768 = vmatpush1.bf16.msra.mxu0 %v2743
        %2769 = vmatprep.subr.bf16.mxu0 0
        %2770 = vmatpush2.bf16.msra.mxu0 0
        %2771 = vmatprep.subr.bf16.mxu0 0
        %2772 = vmatpush2.bf16.msra.mxu0 0
        %2773 = vmatprep.subr.bf16.mxu0 0
        %2774 = vmatpush2.bf16.msra.mxu0 0
        %2775 = vmatprep.subr.bf16.mxu0 0
        %2776 = vmatpush2.bf16.msra.mxu0 0
        %2777 = vmatprep.subr.bf16.mxu0 0
        %2778 = vmatpush2.bf16.msra.mxu0 0
        %2779 = vmatprep.subr.bf16.mxu0 0
        %2780 = vmatpush2.bf16.msra.mxu0 0
        %2781 = vmatprep.subr.bf16.mxu0 0
        %2782 = vmatpush2.bf16.msra.mxu0 0
        %2783 = vmatprep.subr.bf16.mxu0 0
        %2784 = vmatpush2.bf16.msra.mxu0 0
        %2785 = vmatprep.mubr.bf16.mxu0 0
        %2786 = vmatmul.mubr.bf16.gmra.mxu0 %v2748
        %v2787 = vpop.f32.mrf.mxu0
        %v2788 = vadd.f32 0.0, %v2787
        %v2789 = vpop.f32.mrf.mxu0
        %v2790 = vpop.f32.mrf.mxu0
        %v2791 = vadd.f32 0.0, %v2790
        %v2792 = vpop.f32.mrf.mxu0
        %2793 = vmatprep.mubr.bf16.mxu0 0
        %2794 = vmatmul.mubr.bf16.gmra.mxu0 %v2751
        %v2795 = vpop.f32.mrf.mxu0
        %v2796 = vadd.f32 0.0, %v2795
        %v2797 = vpop.f32.mrf.mxu0
        %v2798 = vpop.f32.mrf.mxu0
        %v2799 = vpop.f32.mrf.mxu0
        %2800 = vdwg.mxu0
        %v2801 = vadd.f32 %v2711, %v2788
        %v2802 = vadd.f32 %v2714, %v2791
        %v2803 = vadd.f32 %v2719, %v2796
        %s2804 = scalar_lea.vmem %s3, 48
        %v2805 = vld [vmem:[%s2804] sm:$0xf]
        %v2806 = vld [vmem:[%s2804 + $0x4] sm:$0xf]
        %v2807 = vld [vmem:[%s2804 + $0x8] sm:$0xf]
        %v2808 = vld [vmem:[%s2804 + $0xc] sm:$0xf]
        %vm2809 = vsmask.f32 6400
        %v2810 = vrot.slane %v2579, 1
        %v2811 = vrot.slane %v2581, 2
        %v2812 = vor.u32 %v2810, %v2811
        %v2813 = vrot.slane %v2590, 1
        %v2814 = vrot.slane %v2586, 2
        %v2815 = vor.u32 %v2813, %v2814
        %v2816 = vsel %vm2809, %v2812, %v2815
        %v2821 = vunpack.c.l.b16 %v2805
        %v2822 = vunpack.c.l.b16 %v2806
        %v2823 = vunpack.c.l.b16 %v2807
        %v2824 = vunpack.c.l.b16 %v2808
        %v2825 = vpack.c.b16 %v2822, %v2821
        %v2826 = vpack.c.b16 %v2824, %v2823
        %v2830 = vsel %vm330, %v2816, 0
        %v2833 = vsel %vm330, %v2815, 0
        %2835 = vmatprep.subr.bf16.mxu0 0
        %2836 = vmatpush1.bf16.msra.mxu0 0
        %2837 = vmatprep.subr.bf16.mxu0 0
        %2838 = vmatpush1.bf16.msra.mxu0 0
        %2839 = vmatprep.subr.bf16.mxu0 0
        %2840 = vmatpush1.bf16.msra.mxu0 0
        %2841 = vmatprep.subr.bf16.mxu0 0
        %2842 = vmatpush1.bf16.msra.mxu0 0
        %2843 = vmatprep.subr.bf16.mxu0 0
        %2844 = vmatpush1.bf16.msra.mxu0 0
        %2845 = vmatprep.subr.bf16.mxu0 0
        %2846 = vmatpush1.bf16.msra.mxu0 0
        %2847 = vmatprep.subr.bf16.mxu0 0
        %2848 = vmatpush1.bf16.msra.mxu0 %v2826
        %2849 = vmatprep.subr.bf16.mxu0 0
        %2850 = vmatpush1.bf16.msra.mxu0 %v2825
        %2851 = vmatprep.subr.bf16.mxu0 0
        %2852 = vmatpush2.bf16.msra.mxu0 0
        %2853 = vmatprep.subr.bf16.mxu0 0
        %2854 = vmatpush2.bf16.msra.mxu0 0
        %2855 = vmatprep.subr.bf16.mxu0 0
        %2856 = vmatpush2.bf16.msra.mxu0 0
        %2857 = vmatprep.subr.bf16.mxu0 0
        %2858 = vmatpush2.bf16.msra.mxu0 0
        %2859 = vmatprep.subr.bf16.mxu0 0
        %2860 = vmatpush2.bf16.msra.mxu0 0
        %2861 = vmatprep.subr.bf16.mxu0 0
        %2862 = vmatpush2.bf16.msra.mxu0 0
        %2863 = vmatprep.subr.bf16.mxu0 0
        %2864 = vmatpush2.bf16.msra.mxu0 0
        %2865 = vmatprep.subr.bf16.mxu0 0
        %2866 = vmatpush2.bf16.msra.mxu0 0
        %2867 = vmatprep.mubr.bf16.mxu0 0
        %2868 = vmatmul.mubr.bf16.gmra.mxu0 %v2830
        %v2869 = vpop.f32.mrf.mxu0
        %v2870 = vadd.f32 0.0, %v2869
        %v2871 = vpop.f32.mrf.mxu0
        %v2872 = vpop.f32.mrf.mxu0
        %v2873 = vadd.f32 0.0, %v2872
        %v2874 = vpop.f32.mrf.mxu0
        %2875 = vmatprep.mubr.bf16.mxu0 0
        %2876 = vmatmul.mubr.bf16.gmra.mxu0 %v2833
        %v2877 = vpop.f32.mrf.mxu0
        %v2878 = vadd.f32 0.0, %v2877
        %v2879 = vpop.f32.mrf.mxu0
        %v2880 = vpop.f32.mrf.mxu0
        %v2881 = vpop.f32.mrf.mxu0
        %2882 = vdwg.mxu0
        %v2883 = vadd.f32 %v2801, %v2870
        %v2884 = vadd.f32 %v2802, %v2873
        %v2885 = vadd.f32 %v2803, %v2878
        %s2886 = scalar_lea.vmem %s3, 64
        %v2887 = vld [vmem:[%s2886] sm:$0xf]
        %v2888 = vld [vmem:[%s2886 + $0x4] sm:$0xf]
        %v2889 = vld [vmem:[%s2886 + $0x8] sm:$0xf]
        %v2890 = vld [vmem:[%s2886 + $0xc] sm:$0xf]
        %vm2891 = vcmask 1045504
        %v2892 = vrot.slane %v2565, 2
        %v2893 = vrot.slane %v2571, 2
        %v2894 = vsel %vm2891, %v2892, %v2893
        %v2899 = vunpack.c.l.b16 %v2887
        %v2900 = vunpack.c.l.b16 %v2888
        %v2901 = vunpack.c.l.b16 %v2889
        %v2902 = vunpack.c.l.b16 %v2890
        %v2903 = vpack.c.b16 %v2900, %v2899
        %v2904 = vpack.c.b16 %v2902, %v2901
        %v2908 = vsel %vm330, %v2894, 0
        %v2911 = vsel %vm330, %v2893, 0
        %2913 = vmatprep.subr.bf16.mxu0 0
        %2914 = vmatpush1.bf16.msra.mxu0 0
        %2915 = vmatprep.subr.bf16.mxu0 0
        %2916 = vmatpush1.bf16.msra.mxu0 0
        %2917 = vmatprep.subr.bf16.mxu0 0
        %2918 = vmatpush1.bf16.msra.mxu0 0
        %2919 = vmatprep.subr.bf16.mxu0 0
        %2920 = vmatpush1.bf16.msra.mxu0 0
        %2921 = vmatprep.subr.bf16.mxu0 0
        %2922 = vmatpush1.bf16.msra.mxu0 0
        %2923 = vmatprep.subr.bf16.mxu0 0
        %2924 = vmatpush1.bf16.msra.mxu0 0
        %2925 = vmatprep.subr.bf16.mxu0 0
        %2926 = vmatpush1.bf16.msra.mxu0 %v2904
        %2927 = vmatprep.subr.bf16.mxu0 0
        %2928 = vmatpush1.bf16.msra.mxu0 %v2903
        %2929 = vmatprep.subr.bf16.mxu0 0
        %2930 = vmatpush2.bf16.msra.mxu0 0
        %2931 = vmatprep.subr.bf16.mxu0 0
        %2932 = vmatpush2.bf16.msra.mxu0 0
        %2933 = vmatprep.subr.bf16.mxu0 0
        %2934 = vmatpush2.bf16.msra.mxu0 0
        %2935 = vmatprep.subr.bf16.mxu0 0
        %2936 = vmatpush2.bf16.msra.mxu0 0
        %2937 = vmatprep.subr.bf16.mxu0 0
        %2938 = vmatpush2.bf16.msra.mxu0 0
        %2939 = vmatprep.subr.bf16.mxu0 0
        %2940 = vmatpush2.bf16.msra.mxu0 0
        %2941 = vmatprep.subr.bf16.mxu0 0
        %2942 = vmatpush2.bf16.msra.mxu0 0
        %2943 = vmatprep.subr.bf16.mxu0 0
        %2944 = vmatpush2.bf16.msra.mxu0 0
        %2945 = vmatprep.mubr.bf16.mxu0 0
        %2946 = vmatmul.mubr.bf16.gmra.mxu0 %v2908
        %v2947 = vpop.f32.mrf.mxu0
        %v2948 = vadd.f32 0.0, %v2947
        %v2949 = vpop.f32.mrf.mxu0
        %v2950 = vpop.f32.mrf.mxu0
        %v2951 = vadd.f32 0.0, %v2950
        %v2952 = vpop.f32.mrf.mxu0
        %2953 = vmatprep.mubr.bf16.mxu0 0
        %2954 = vmatmul.mubr.bf16.gmra.mxu0 %v2911
        %v2955 = vpop.f32.mrf.mxu0
        %v2956 = vadd.f32 0.0, %v2955
        %v2957 = vpop.f32.mrf.mxu0
        %v2958 = vpop.f32.mrf.mxu0
        %v2959 = vpop.f32.mrf.mxu0
        %2960 = vdwg.mxu0
        %v2961 = vadd.f32 %v2883, %v2948
        %v2962 = vadd.f32 %v2884, %v2951
        %v2963 = vadd.f32 %v2885, %v2956
        %s2964 = sadd.s32 %s2558, 1
        %s2965 = smul.u32 %s2964, 24
        %s2966 = scalar_lea.vmem [#allocation2], %s2965
        %v2967 = vld [vmem:[%s2966] sm:$0xff]
        %v2968 = vld [vmem:[%s2966 + $0x8] sm:$0xff]
        %v2969 = vld [vmem:[%s2966 + $0x10] sm:$0xff]
        %v2970 = vld [vmem:[%s2966 + $0x18] sm:$0xff]
        %v2971 = vpack.c.bf16 %v2968, %v2967
        %v2972 = vpack.c.bf16 %v2969, %v2969
        %s2973 = scalar_lea.vmem %s3, 80
        %v2974 = vld [vmem:[%s2973] sm:$0xf]
        %v2975 = vld [vmem:[%s2973 + $0x4] sm:$0xf]
        %v2976 = vld [vmem:[%s2973 + $0x8] sm:$0xf]
        %v2977 = vld [vmem:[%s2973 + $0xc] sm:$0xf]
        %v2982 = vunpack.c.l.b16 %v2974
        %v2983 = vunpack.c.l.b16 %v2975
        %v2984 = vunpack.c.l.b16 %v2976
        %v2985 = vunpack.c.l.b16 %v2977
        %v2986 = vpack.c.b16 %v2983, %v2982
        %v2987 = vpack.c.b16 %v2985, %v2984
        %v2991 = vsel %vm330, %v2971, 0
        %v2994 = vsel %vm330, %v2972, 0
        %2996 = vmatprep.subr.bf16.mxu0 0
        %2997 = vmatpush1.bf16.msra.mxu0 0
        %2998 = vmatprep.subr.bf16.mxu0 0
        %2999 = vmatpush1.bf16.msra.mxu0 0
        %3000 = vmatprep.subr.bf16.mxu0 0
        %3001 = vmatpush1.bf16.msra.mxu0 0
        %3002 = vmatprep.subr.bf16.mxu0 0
        %3003 = vmatpush1.bf16.msra.mxu0 0
        %3004 = vmatprep.subr.bf16.mxu0 0
        %3005 = vmatpush1.bf16.msra.mxu0 0
        %3006 = vmatprep.subr.bf16.mxu0 0
        %3007 = vmatpush1.bf16.msra.mxu0 0
        %3008 = vmatprep.subr.bf16.mxu0 0
        %3009 = vmatpush1.bf16.msra.mxu0 %v2987
        %3010 = vmatprep.subr.bf16.mxu0 0
        %3011 = vmatpush1.bf16.msra.mxu0 %v2986
        %3012 = vmatprep.subr.bf16.mxu0 0
        %3013 = vmatpush2.bf16.msra.mxu0 0
        %3014 = vmatprep.subr.bf16.mxu0 0
        %3015 = vmatpush2.bf16.msra.mxu0 0
        %3016 = vmatprep.subr.bf16.mxu0 0
        %3017 = vmatpush2.bf16.msra.mxu0 0
        %3018 = vmatprep.subr.bf16.mxu0 0
        %3019 = vmatpush2.bf16.msra.mxu0 0
        %3020 = vmatprep.subr.bf16.mxu0 0
        %3021 = vmatpush2.bf16.msra.mxu0 0
        %3022 = vmatprep.subr.bf16.mxu0 0
        %3023 = vmatpush2.bf16.msra.mxu0 0
        %3024 = vmatprep.subr.bf16.mxu0 0
        %3025 = vmatpush2.bf16.msra.mxu0 0
        %3026 = vmatprep.subr.bf16.mxu0 0
        %3027 = vmatpush2.bf16.msra.mxu0 0
        %3028 = vmatprep.mubr.bf16.mxu0 0
        %3029 = vmatmul.mubr.bf16.gmra.mxu0 %v2991
        %v3030 = vpop.f32.mrf.mxu0
        %v3031 = vadd.f32 0.0, %v3030
        %v3032 = vpop.f32.mrf.mxu0
        %v3033 = vpop.f32.mrf.mxu0
        %v3034 = vadd.f32 0.0, %v3033
        %v3035 = vpop.f32.mrf.mxu0
        %3036 = vmatprep.mubr.bf16.mxu0 0
        %3037 = vmatmul.mubr.bf16.gmra.mxu0 %v2994
        %v3038 = vpop.f32.mrf.mxu0
        %v3039 = vadd.f32 0.0, %v3038
        %v3040 = vpop.f32.mrf.mxu0
        %v3041 = vpop.f32.mrf.mxu0
        %v3042 = vpop.f32.mrf.mxu0
        %3043 = vdwg.mxu0
        %v3044 = vadd.f32 %v2961, %v3031
        %v3045 = vadd.f32 %v2962, %v3034
        %v3046 = vadd.f32 %v2963, %v3039
        %v3047 = vpack.c.bf16 %v2970, %v2969
        %s3048 = scalar_lea.vmem %s3, 96
        %v3049 = vld [vmem:[%s3048] sm:$0xf]
        %v3050 = vld [vmem:[%s3048 + $0x4] sm:$0xf]
        %v3051 = vld [vmem:[%s3048 + $0x8] sm:$0xf]
        %v3052 = vld [vmem:[%s3048 + $0xc] sm:$0xf]
        %v3053 = vshrl.u32 %v2971, 16
        %v3055 = vshll.u32 %v2971, 16
        %v3057 = vrot.slane %v3055, 1
        %v3058 = vor.u32 %v3053, %v3057
        %v3060 = vshll.u32 %v3047, 16
        %v3062 = vrot.slane %v3060, 1
        %v3063 = vsel %vm2577, %v3058, %v3062
        %v3064 = vshrl.u32 %v3047, 16
        %v3066 = vor.u32 %v3064, %v3062
        %v3071 = vunpack.c.l.b16 %v3049
        %v3072 = vunpack.c.l.b16 %v3050
        %v3073 = vunpack.c.l.b16 %v3051
        %v3074 = vunpack.c.l.b16 %v3052
        %v3075 = vpack.c.b16 %v3072, %v3071
        %v3076 = vpack.c.b16 %v3074, %v3073
        %v3080 = vsel %vm330, %v3063, 0
        %v3083 = vsel %vm330, %v3066, 0
        %3085 = vmatprep.subr.bf16.mxu0 0
        %3086 = vmatpush1.bf16.msra.mxu0 0
        %3087 = vmatprep.subr.bf16.mxu0 0
        %3088 = vmatpush1.bf16.msra.mxu0 0
        %3089 = vmatprep.subr.bf16.mxu0 0
        %3090 = vmatpush1.bf16.msra.mxu0 0
        %3091 = vmatprep.subr.bf16.mxu0 0
        %3092 = vmatpush1.bf16.msra.mxu0 0
        %3093 = vmatprep.subr.bf16.mxu0 0
        %3094 = vmatpush1.bf16.msra.mxu0 0
        %3095 = vmatprep.subr.bf16.mxu0 0
        %3096 = vmatpush1.bf16.msra.mxu0 0
        %3097 = vmatprep.subr.bf16.mxu0 0
        %3098 = vmatpush1.bf16.msra.mxu0 %v3076
        %3099 = vmatprep.subr.bf16.mxu0 0
        %3100 = vmatpush1.bf16.msra.mxu0 %v3075
        %3101 = vmatprep.subr.bf16.mxu0 0
        %3102 = vmatpush2.bf16.msra.mxu0 0
        %3103 = vmatprep.subr.bf16.mxu0 0
        %3104 = vmatpush2.bf16.msra.mxu0 0
        %3105 = vmatprep.subr.bf16.mxu0 0
        %3106 = vmatpush2.bf16.msra.mxu0 0
        %3107 = vmatprep.subr.bf16.mxu0 0
        %3108 = vmatpush2.bf16.msra.mxu0 0
        %3109 = vmatprep.subr.bf16.mxu0 0
        %3110 = vmatpush2.bf16.msra.mxu0 0
        %3111 = vmatprep.subr.bf16.mxu0 0
        %3112 = vmatpush2.bf16.msra.mxu0 0
        %3113 = vmatprep.subr.bf16.mxu0 0
        %3114 = vmatpush2.bf16.msra.mxu0 0
        %3115 = vmatprep.subr.bf16.mxu0 0
        %3116 = vmatpush2.bf16.msra.mxu0 0
        %3117 = vmatprep.mubr.bf16.mxu0 0
        %3118 = vmatmul.mubr.bf16.gmra.mxu0 %v3080
        %v3119 = vpop.f32.mrf.mxu0
        %v3120 = vadd.f32 0.0, %v3119
        %v3121 = vpop.f32.mrf.mxu0
        %v3122 = vpop.f32.mrf.mxu0
        %v3123 = vadd.f32 0.0, %v3122
        %v3124 = vpop.f32.mrf.mxu0
        %3125 = vmatprep.mubr.bf16.mxu0 0
        %3126 = vmatmul.mubr.bf16.gmra.mxu0 %v3083
        %v3127 = vpop.f32.mrf.mxu0
        %v3128 = vadd.f32 0.0, %v3127
        %v3129 = vpop.f32.mrf.mxu0
        %v3130 = vpop.f32.mrf.mxu0
        %v3131 = vpop.f32.mrf.mxu0
        %3132 = vdwg.mxu0
        %v3133 = vadd.f32 %v3044, %v3120
        %v3134 = vadd.f32 %v3045, %v3123
        %v3135 = vadd.f32 %v3046, %v3128
        %s3136 = scalar_lea.vmem %s3, 112
        %v3137 = vld [vmem:[%s3136] sm:$0xf]
        %v3138 = vld [vmem:[%s3136 + $0x4] sm:$0xf]
        %v3139 = vld [vmem:[%s3136 + $0x8] sm:$0xf]
        %v3140 = vld [vmem:[%s3136 + $0xc] sm:$0xf]
        %v3143 = vrot.slane %v2971, 1
        %v3144 = vrot.slane %v3047, 1
        %v3145 = vsel %vm2731, %v3143, %v3144
        %v3150 = vunpack.c.l.b16 %v3137
        %v3151 = vunpack.c.l.b16 %v3138
        %v3152 = vunpack.c.l.b16 %v3139
        %v3153 = vunpack.c.l.b16 %v3140
        %v3154 = vpack.c.b16 %v3151, %v3150
        %v3155 = vpack.c.b16 %v3153, %v3152
        %v3159 = vsel %vm330, %v3145, 0
        %v3162 = vsel %vm330, %v3144, 0
        %3164 = vmatprep.subr.bf16.mxu0 0
        %3165 = vmatpush1.bf16.msra.mxu0 0
        %3166 = vmatprep.subr.bf16.mxu0 0
        %3167 = vmatpush1.bf16.msra.mxu0 0
        %3168 = vmatprep.subr.bf16.mxu0 0
        %3169 = vmatpush1.bf16.msra.mxu0 0
        %3170 = vmatprep.subr.bf16.mxu0 0
        %3171 = vmatpush1.bf16.msra.mxu0 0
        %3172 = vmatprep.subr.bf16.mxu0 0
        %3173 = vmatpush1.bf16.msra.mxu0 0
        %3174 = vmatprep.subr.bf16.mxu0 0
        %3175 = vmatpush1.bf16.msra.mxu0 0
        %3176 = vmatprep.subr.bf16.mxu0 0
        %3177 = vmatpush1.bf16.msra.mxu0 %v3155
        %3178 = vmatprep.subr.bf16.mxu0 0
        %3179 = vmatpush1.bf16.msra.mxu0 %v3154
        %3180 = vmatprep.subr.bf16.mxu0 0
        %3181 = vmatpush2.bf16.msra.mxu0 0
        %3182 = vmatprep.subr.bf16.mxu0 0
        %3183 = vmatpush2.bf16.msra.mxu0 0
        %3184 = vmatprep.subr.bf16.mxu0 0
        %3185 = vmatpush2.bf16.msra.mxu0 0
        %3186 = vmatprep.subr.bf16.mxu0 0
        %3187 = vmatpush2.bf16.msra.mxu0 0
        %3188 = vmatprep.subr.bf16.mxu0 0
        %3189 = vmatpush2.bf16.msra.mxu0 0
        %3190 = vmatprep.subr.bf16.mxu0 0
        %3191 = vmatpush2.bf16.msra.mxu0 0
        %3192 = vmatprep.subr.bf16.mxu0 0
        %3193 = vmatpush2.bf16.msra.mxu0 0
        %3194 = vmatprep.subr.bf16.mxu0 0
        %3195 = vmatpush2.bf16.msra.mxu0 0
        %3196 = vmatprep.mubr.bf16.mxu0 0
        %3197 = vmatmul.mubr.bf16.gmra.mxu0 %v3159
        %v3198 = vpop.f32.mrf.mxu0
        %v3199 = vadd.f32 0.0, %v3198
        %v3200 = vpop.f32.mrf.mxu0
        %v3201 = vpop.f32.mrf.mxu0
        %v3202 = vadd.f32 0.0, %v3201
        %v3203 = vpop.f32.mrf.mxu0
        %3204 = vmatprep.mubr.bf16.mxu0 0
        %3205 = vmatmul.mubr.bf16.gmra.mxu0 %v3162
        %v3206 = vpop.f32.mrf.mxu0
        %v3207 = vadd.f32 0.0, %v3206
        %v3208 = vpop.f32.mrf.mxu0
        %v3209 = vpop.f32.mrf.mxu0
        %v3210 = vpop.f32.mrf.mxu0
        %3211 = vdwg.mxu0
        %v3212 = vadd.f32 %v3133, %v3199
        %v3213 = vadd.f32 %v3134, %v3202
        %v3214 = vadd.f32 %v3135, %v3207
        %s3215 = scalar_lea.vmem %s3, 128
        %v3216 = vld [vmem:[%s3215] sm:$0xf]
        %v3217 = vld [vmem:[%s3215 + $0x4] sm:$0xf]
        %v3218 = vld [vmem:[%s3215 + $0x8] sm:$0xf]
        %v3219 = vld [vmem:[%s3215 + $0xc] sm:$0xf]
        %v3220 = vrot.slane %v3053, 1
        %v3221 = vrot.slane %v3055, 2
        %v3222 = vor.u32 %v3220, %v3221
        %v3223 = vrot.slane %v3064, 1
        %v3224 = vrot.slane %v3060, 2
        %v3225 = vor.u32 %v3223, %v3224
        %v3226 = vsel %vm2809, %v3222, %v3225
        %v3231 = vunpack.c.l.b16 %v3216
        %v3232 = vunpack.c.l.b16 %v3217
        %v3233 = vunpack.c.l.b16 %v3218
        %v3234 = vunpack.c.l.b16 %v3219
        %v3235 = vpack.c.b16 %v3232, %v3231
        %v3236 = vpack.c.b16 %v3234, %v3233
        %v3240 = vsel %vm330, %v3226, 0
        %v3243 = vsel %vm330, %v3225, 0
        %3245 = vmatprep.subr.bf16.mxu0 0
        %3246 = vmatpush1.bf16.msra.mxu0 0
        %3247 = vmatprep.subr.bf16.mxu0 0
        %3248 = vmatpush1.bf16.msra.mxu0 0
        %3249 = vmatprep.subr.bf16.mxu0 0
        %3250 = vmatpush1.bf16.msra.mxu0 0
        %3251 = vmatprep.subr.bf16.mxu0 0
        %3252 = vmatpush1.bf16.msra.mxu0 0
        %3253 = vmatprep.subr.bf16.mxu0 0
        %3254 = vmatpush1.bf16.msra.mxu0 0
        %3255 = vmatprep.subr.bf16.mxu0 0
        %3256 = vmatpush1.bf16.msra.mxu0 0
        %3257 = vmatprep.subr.bf16.mxu0 0
        %3258 = vmatpush1.bf16.msra.mxu0 %v3236
        %3259 = vmatprep.subr.bf16.mxu0 0
        %3260 = vmatpush1.bf16.msra.mxu0 %v3235
        %3261 = vmatprep.subr.bf16.mxu0 0
        %3262 = vmatpush2.bf16.msra.mxu0 0
        %3263 = vmatprep.subr.bf16.mxu0 0
        %3264 = vmatpush2.bf16.msra.mxu0 0
        %3265 = vmatprep.subr.bf16.mxu0 0
        %3266 = vmatpush2.bf16.msra.mxu0 0
        %3267 = vmatprep.subr.bf16.mxu0 0
        %3268 = vmatpush2.bf16.msra.mxu0 0
        %3269 = vmatprep.subr.bf16.mxu0 0
        %3270 = vmatpush2.bf16.msra.mxu0 0
        %3271 = vmatprep.subr.bf16.mxu0 0
        %3272 = vmatpush2.bf16.msra.mxu0 0
        %3273 = vmatprep.subr.bf16.mxu0 0
        %3274 = vmatpush2.bf16.msra.mxu0 0
        %3275 = vmatprep.subr.bf16.mxu0 0
        %3276 = vmatpush2.bf16.msra.mxu0 0
        %3277 = vmatprep.mubr.bf16.mxu0 0
        %3278 = vmatmul.mubr.bf16.gmra.mxu0 %v3240
        %v3279 = vpop.f32.mrf.mxu0
        %v3280 = vadd.f32 0.0, %v3279
        %v3281 = vpop.f32.mrf.mxu0
        %v3282 = vpop.f32.mrf.mxu0
        %v3283 = vadd.f32 0.0, %v3282
        %v3284 = vpop.f32.mrf.mxu0
        %3285 = vmatprep.mubr.bf16.mxu0 0
        %3286 = vmatmul.mubr.bf16.gmra.mxu0 %v3243
        %v3287 = vpop.f32.mrf.mxu0
        %v3288 = vadd.f32 0.0, %v3287
        %v3289 = vpop.f32.mrf.mxu0
        %v3290 = vpop.f32.mrf.mxu0
        %v3291 = vpop.f32.mrf.mxu0
        %3292 = vdwg.mxu0
        %v3293 = vadd.f32 %v3212, %v3280
        %v3294 = vadd.f32 %v3213, %v3283
        %v3295 = vadd.f32 %v3214, %v3288
        %s3296 = scalar_lea.vmem %s3, 144
        %v3297 = vld [vmem:[%s3296] sm:$0xf]
        %v3298 = vld [vmem:[%s3296 + $0x4] sm:$0xf]
        %v3299 = vld [vmem:[%s3296 + $0x8] sm:$0xf]
        %v3300 = vld [vmem:[%s3296 + $0xc] sm:$0xf]
        %v3301 = vrot.slane %v2971, 2
        %v3302 = vrot.slane %v3047, 2
        %v3303 = vsel %vm2891, %v3301, %v3302
        %v3308 = vunpack.c.l.b16 %v3297
        %v3309 = vunpack.c.l.b16 %v3298
        %v3310 = vunpack.c.l.b16 %v3299
        %v3311 = vunpack.c.l.b16 %v3300
        %v3312 = vpack.c.b16 %v3309, %v3308
        %v3313 = vpack.c.b16 %v3311, %v3310
        %v3317 = vsel %vm330, %v3303, 0
        %v3320 = vsel %vm330, %v3302, 0
        %3322 = vmatprep.subr.bf16.mxu0 0
        %3323 = vmatpush1.bf16.msra.mxu0 0
        %3324 = vmatprep.subr.bf16.mxu0 0
        %3325 = vmatpush1.bf16.msra.mxu0 0
        %3326 = vmatprep.subr.bf16.mxu0 0
        %3327 = vmatpush1.bf16.msra.mxu0 0
        %3328 = vmatprep.subr.bf16.mxu0 0
        %3329 = vmatpush1.bf16.msra.mxu0 0
        %3330 = vmatprep.subr.bf16.mxu0 0
        %3331 = vmatpush1.bf16.msra.mxu0 0
        %3332 = vmatprep.subr.bf16.mxu0 0
        %3333 = vmatpush1.bf16.msra.mxu0 0
        %3334 = vmatprep.subr.bf16.mxu0 0
        %3335 = vmatpush1.bf16.msra.mxu0 %v3313
        %3336 = vmatprep.subr.bf16.mxu0 0
        %3337 = vmatpush1.bf16.msra.mxu0 %v3312
        %3338 = vmatprep.subr.bf16.mxu0 0
        %3339 = vmatpush2.bf16.msra.mxu0 0
        %3340 = vmatprep.subr.bf16.mxu0 0
        %3341 = vmatpush2.bf16.msra.mxu0 0
        %3342 = vmatprep.subr.bf16.mxu0 0
        %3343 = vmatpush2.bf16.msra.mxu0 0
        %3344 = vmatprep.subr.bf16.mxu0 0
        %3345 = vmatpush2.bf16.msra.mxu0 0
        %3346 = vmatprep.subr.bf16.mxu0 0
        %3347 = vmatpush2.bf16.msra.mxu0 0
        %3348 = vmatprep.subr.bf16.mxu0 0
        %3349 = vmatpush2.bf16.msra.mxu0 0
        %3350 = vmatprep.subr.bf16.mxu0 0
        %3351 = vmatpush2.bf16.msra.mxu0 0
        %3352 = vmatprep.subr.bf16.mxu0 0
        %3353 = vmatpush2.bf16.msra.mxu0 0
        %3354 = vmatprep.mubr.bf16.mxu0 0
        %3355 = vmatmul.mubr.bf16.gmra.mxu0 %v3317
        %v3356 = vpop.f32.mrf.mxu0
        %v3357 = vadd.f32 0.0, %v3356
        %v3358 = vpop.f32.mrf.mxu0
        %v3359 = vpop.f32.mrf.mxu0
        %v3360 = vadd.f32 0.0, %v3359
        %v3361 = vpop.f32.mrf.mxu0
        %3362 = vmatprep.mubr.bf16.mxu0 0
        %3363 = vmatmul.mubr.bf16.gmra.mxu0 %v3320
        %v3364 = vpop.f32.mrf.mxu0
        %v3365 = vadd.f32 0.0, %v3364
        %v3366 = vpop.f32.mrf.mxu0
        %v3367 = vpop.f32.mrf.mxu0
        %v3368 = vpop.f32.mrf.mxu0
        %3369 = vdwg.mxu0
        %v3370 = vadd.f32 %v3293, %v3357
        %v3371 = vadd.f32 %v3294, %v3360
        %v3372 = vadd.f32 %v3295, %v3365
        %s3373 = sadd.s32 %s2558, 2
        %s3374 = smul.u32 %s3373, 24
        %s3375 = scalar_lea.vmem [#allocation2], %s3374
        %v3376 = vld [vmem:[%s3375] sm:$0xff]
        %v3377 = vld [vmem:[%s3375 + $0x8] sm:$0xff]
        %v3378 = vld [vmem:[%s3375 + $0x10] sm:$0xff]
        %v3379 = vld [vmem:[%s3375 + $0x18] sm:$0xff]
        %v3380 = vpack.c.bf16 %v3377, %v3376
        %v3381 = vpack.c.bf16 %v3378, %v3378
        %s3382 = scalar_lea.vmem %s3, 160
        %v3383 = vld [vmem:[%s3382] sm:$0xf]
        %v3384 = vld [vmem:[%s3382 + $0x4] sm:$0xf]
        %v3385 = vld [vmem:[%s3382 + $0x8] sm:$0xf]
        %v3386 = vld [vmem:[%s3382 + $0xc] sm:$0xf]
        %v3391 = vunpack.c.l.b16 %v3383
        %v3392 = vunpack.c.l.b16 %v3384
        %v3393 = vunpack.c.l.b16 %v3385
        %v3394 = vunpack.c.l.b16 %v3386
        %v3395 = vpack.c.b16 %v3392, %v3391
        %v3396 = vpack.c.b16 %v3394, %v3393
        %v3400 = vsel %vm330, %v3380, 0
        %v3403 = vsel %vm330, %v3381, 0
        %3405 = vmatprep.subr.bf16.mxu0 0
        %3406 = vmatpush1.bf16.msra.mxu0 0
        %3407 = vmatprep.subr.bf16.mxu0 0
        %3408 = vmatpush1.bf16.msra.mxu0 0
        %3409 = vmatprep.subr.bf16.mxu0 0
        %3410 = vmatpush1.bf16.msra.mxu0 0
        %3411 = vmatprep.subr.bf16.mxu0 0
        %3412 = vmatpush1.bf16.msra.mxu0 0
        %3413 = vmatprep.subr.bf16.mxu0 0
        %3414 = vmatpush1.bf16.msra.mxu0 0
        %3415 = vmatprep.subr.bf16.mxu0 0
        %3416 = vmatpush1.bf16.msra.mxu0 0
        %3417 = vmatprep.subr.bf16.mxu0 0
        %3418 = vmatpush1.bf16.msra.mxu0 %v3396
        %3419 = vmatprep.subr.bf16.mxu0 0
        %3420 = vmatpush1.bf16.msra.mxu0 %v3395
        %3421 = vmatprep.subr.bf16.mxu0 0
        %3422 = vmatpush2.bf16.msra.mxu0 0
        %3423 = vmatprep.subr.bf16.mxu0 0
        %3424 = vmatpush2.bf16.msra.mxu0 0
        %3425 = vmatprep.subr.bf16.mxu0 0
        %3426 = vmatpush2.bf16.msra.mxu0 0
        %3427 = vmatprep.subr.bf16.mxu0 0
        %3428 = vmatpush2.bf16.msra.mxu0 0
        %3429 = vmatprep.subr.bf16.mxu0 0
        %3430 = vmatpush2.bf16.msra.mxu0 0
        %3431 = vmatprep.subr.bf16.mxu0 0
        %3432 = vmatpush2.bf16.msra.mxu0 0
        %3433 = vmatprep.subr.bf16.mxu0 0
        %3434 = vmatpush2.bf16.msra.mxu0 0
        %3435 = vmatprep.subr.bf16.mxu0 0
        %3436 = vmatpush2.bf16.msra.mxu0 0
        %3437 = vmatprep.mubr.bf16.mxu0 0
        %3438 = vmatmul.mubr.bf16.gmra.mxu0 %v3400
        %v3439 = vpop.f32.mrf.mxu0
        %v3440 = vadd.f32 0.0, %v3439
        %v3441 = vpop.f32.mrf.mxu0
        %v3442 = vpop.f32.mrf.mxu0
        %v3443 = vadd.f32 0.0, %v3442
        %v3444 = vpop.f32.mrf.mxu0
        %3445 = vmatprep.mubr.bf16.mxu0 0
        %3446 = vmatmul.mubr.bf16.gmra.mxu0 %v3403
        %v3447 = vpop.f32.mrf.mxu0
        %v3448 = vadd.f32 0.0, %v3447
        %v3449 = vpop.f32.mrf.mxu0
        %v3450 = vpop.f32.mrf.mxu0
        %v3451 = vpop.f32.mrf.mxu0
        %3452 = vdwg.mxu0
        %v3453 = vadd.f32 %v3370, %v3440
        %v3454 = vadd.f32 %v3371, %v3443
        %v3455 = vadd.f32 %v3372, %v3448
        %v3456 = vpack.c.bf16 %v3379, %v3378
        %s3457 = scalar_lea.vmem %s3, 176
        %v3458 = vld [vmem:[%s3457] sm:$0xf]
        %v3459 = vld [vmem:[%s3457 + $0x4] sm:$0xf]
        %v3460 = vld [vmem:[%s3457 + $0x8] sm:$0xf]
        %v3461 = vld [vmem:[%s3457 + $0xc] sm:$0xf]
        %v3462 = vshrl.u32 %v3380, 16
        %v3464 = vshll.u32 %v3380, 16
        %v3466 = vrot.slane %v3464, 1
        %v3467 = vor.u32 %v3462, %v3466
        %v3469 = vshll.u32 %v3456, 16
        %v3471 = vrot.slane %v3469, 1
        %v3472 = vsel %vm2577, %v3467, %v3471
        %v3473 = vshrl.u32 %v3456, 16
        %v3475 = vor.u32 %v3473, %v3471
        %v3480 = vunpack.c.l.b16 %v3458
        %v3481 = vunpack.c.l.b16 %v3459
        %v3482 = vunpack.c.l.b16 %v3460
        %v3483 = vunpack.c.l.b16 %v3461
        %v3484 = vpack.c.b16 %v3481, %v3480
        %v3485 = vpack.c.b16 %v3483, %v3482
        %v3489 = vsel %vm330, %v3472, 0
        %v3492 = vsel %vm330, %v3475, 0
        %3494 = vmatprep.subr.bf16.mxu0 0
        %3495 = vmatpush1.bf16.msra.mxu0 0
        %3496 = vmatprep.subr.bf16.mxu0 0
        %3497 = vmatpush1.bf16.msra.mxu0 0
        %3498 = vmatprep.subr.bf16.mxu0 0
        %3499 = vmatpush1.bf16.msra.mxu0 0
        %3500 = vmatprep.subr.bf16.mxu0 0
        %3501 = vmatpush1.bf16.msra.mxu0 0
        %3502 = vmatprep.subr.bf16.mxu0 0
        %3503 = vmatpush1.bf16.msra.mxu0 0
        %3504 = vmatprep.subr.bf16.mxu0 0
        %3505 = vmatpush1.bf16.msra.mxu0 0
        %3506 = vmatprep.subr.bf16.mxu0 0
        %3507 = vmatpush1.bf16.msra.mxu0 %v3485
        %3508 = vmatprep.subr.bf16.mxu0 0
        %3509 = vmatpush1.bf16.msra.mxu0 %v3484
        %3510 = vmatprep.subr.bf16.mxu0 0
        %3511 = vmatpush2.bf16.msra.mxu0 0
        %3512 = vmatprep.subr.bf16.mxu0 0
        %3513 = vmatpush2.bf16.msra.mxu0 0
        %3514 = vmatprep.subr.bf16.mxu0 0
        %3515 = vmatpush2.bf16.msra.mxu0 0
        %3516 = vmatprep.subr.bf16.mxu0 0
        %3517 = vmatpush2.bf16.msra.mxu0 0
        %3518 = vmatprep.subr.bf16.mxu0 0
        %3519 = vmatpush2.bf16.msra.mxu0 0
        %3520 = vmatprep.subr.bf16.mxu0 0
        %3521 = vmatpush2.bf16.msra.mxu0 0
        %3522 = vmatprep.subr.bf16.mxu0 0
        %3523 = vmatpush2.bf16.msra.mxu0 0
        %3524 = vmatprep.subr.bf16.mxu0 0
        %3525 = vmatpush2.bf16.msra.mxu0 0
        %3526 = vmatprep.mubr.bf16.mxu0 0
        %3527 = vmatmul.mubr.bf16.gmra.mxu0 %v3489
        %v3528 = vpop.f32.mrf.mxu0
        %v3529 = vadd.f32 0.0, %v3528
        %v3530 = vpop.f32.mrf.mxu0
        %v3531 = vpop.f32.mrf.mxu0
        %v3532 = vadd.f32 0.0, %v3531
        %v3533 = vpop.f32.mrf.mxu0
        %3534 = vmatprep.mubr.bf16.mxu0 0
        %3535 = vmatmul.mubr.bf16.gmra.mxu0 %v3492
        %v3536 = vpop.f32.mrf.mxu0
        %v3537 = vadd.f32 0.0, %v3536
        %v3538 = vpop.f32.mrf.mxu0
        %v3539 = vpop.f32.mrf.mxu0
        %v3540 = vpop.f32.mrf.mxu0
        %3541 = vdwg.mxu0
        %v3542 = vadd.f32 %v3453, %v3529
        %v3543 = vadd.f32 %v3454, %v3532
        %v3544 = vadd.f32 %v3455, %v3537
        %s3545 = scalar_lea.vmem %s3, 192
        %v3546 = vld [vmem:[%s3545] sm:$0xf]
        %v3547 = vld [vmem:[%s3545 + $0x4] sm:$0xf]
        %v3548 = vld [vmem:[%s3545 + $0x8] sm:$0xf]
        %v3549 = vld [vmem:[%s3545 + $0xc] sm:$0xf]
        %v3552 = vrot.slane %v3380, 1
        %v3553 = vrot.slane %v3456, 1
        %v3554 = vsel %vm2731, %v3552, %v3553
        %v3559 = vunpack.c.l.b16 %v3546
        %v3560 = vunpack.c.l.b16 %v3547
        %v3561 = vunpack.c.l.b16 %v3548
        %v3562 = vunpack.c.l.b16 %v3549
        %v3563 = vpack.c.b16 %v3560, %v3559
        %v3564 = vpack.c.b16 %v3562, %v3561
        %v3568 = vsel %vm330, %v3554, 0
        %v3571 = vsel %vm330, %v3553, 0
        %3573 = vmatprep.subr.bf16.mxu0 0
        %3574 = vmatpush1.bf16.msra.mxu0 0
        %3575 = vmatprep.subr.bf16.mxu0 0
        %3576 = vmatpush1.bf16.msra.mxu0 0
        %3577 = vmatprep.subr.bf16.mxu0 0
        %3578 = vmatpush1.bf16.msra.mxu0 0
        %3579 = vmatprep.subr.bf16.mxu0 0
        %3580 = vmatpush1.bf16.msra.mxu0 0
        %3581 = vmatprep.subr.bf16.mxu0 0
        %3582 = vmatpush1.bf16.msra.mxu0 0
        %3583 = vmatprep.subr.bf16.mxu0 0
        %3584 = vmatpush1.bf16.msra.mxu0 0
        %3585 = vmatprep.subr.bf16.mxu0 0
        %3586 = vmatpush1.bf16.msra.mxu0 %v3564
        %3587 = vmatprep.subr.bf16.mxu0 0
        %3588 = vmatpush1.bf16.msra.mxu0 %v3563
        %3589 = vmatprep.subr.bf16.mxu0 0
        %3590 = vmatpush2.bf16.msra.mxu0 0
        %3591 = vmatprep.subr.bf16.mxu0 0
        %3592 = vmatpush2.bf16.msra.mxu0 0
        %3593 = vmatprep.subr.bf16.mxu0 0
        %3594 = vmatpush2.bf16.msra.mxu0 0
        %3595 = vmatprep.subr.bf16.mxu0 0
        %3596 = vmatpush2.bf16.msra.mxu0 0
        %3597 = vmatprep.subr.bf16.mxu0 0
        %3598 = vmatpush2.bf16.msra.mxu0 0
        %3599 = vmatprep.subr.bf16.mxu0 0
        %3600 = vmatpush2.bf16.msra.mxu0 0
        %3601 = vmatprep.subr.bf16.mxu0 0
        %3602 = vmatpush2.bf16.msra.mxu0 0
        %3603 = vmatprep.subr.bf16.mxu0 0
        %3604 = vmatpush2.bf16.msra.mxu0 0
        %3605 = vmatprep.mubr.bf16.mxu0 0
        %3606 = vmatmul.mubr.bf16.gmra.mxu0 %v3568
        %v3607 = vpop.f32.mrf.mxu0
        %v3608 = vadd.f32 0.0, %v3607
        %v3609 = vpop.f32.mrf.mxu0
        %v3610 = vpop.f32.mrf.mxu0
        %v3611 = vadd.f32 0.0, %v3610
        %v3612 = vpop.f32.mrf.mxu0
        %3613 = vmatprep.mubr.bf16.mxu0 0
        %3614 = vmatmul.mubr.bf16.gmra.mxu0 %v3571
        %v3615 = vpop.f32.mrf.mxu0
        %v3616 = vadd.f32 0.0, %v3615
        %v3617 = vpop.f32.mrf.mxu0
        %v3618 = vpop.f32.mrf.mxu0
        %v3619 = vpop.f32.mrf.mxu0
        %3620 = vdwg.mxu0
        %v3621 = vadd.f32 %v3542, %v3608
        %v3622 = vadd.f32 %v3543, %v3611
        %v3623 = vadd.f32 %v3544, %v3616
        %s3624 = scalar_lea.vmem %s3, 208
        %v3625 = vld [vmem:[%s3624] sm:$0xf]
        %v3626 = vld [vmem:[%s3624 + $0x4] sm:$0xf]
        %v3627 = vld [vmem:[%s3624 + $0x8] sm:$0xf]
        %v3628 = vld [vmem:[%s3624 + $0xc] sm:$0xf]
        %v3629 = vrot.slane %v3462, 1
        %v3630 = vrot.slane %v3464, 2
        %v3631 = vor.u32 %v3629, %v3630
        %v3632 = vrot.slane %v3473, 1
        %v3633 = vrot.slane %v3469, 2
        %v3634 = vor.u32 %v3632, %v3633
        %v3635 = vsel %vm2809, %v3631, %v3634
        %v3640 = vunpack.c.l.b16 %v3625
        %v3641 = vunpack.c.l.b16 %v3626
        %v3642 = vunpack.c.l.b16 %v3627
        %v3643 = vunpack.c.l.b16 %v3628
        %v3644 = vpack.c.b16 %v3641, %v3640
        %v3645 = vpack.c.b16 %v3643, %v3642
        %v3649 = vsel %vm330, %v3635, 0
        %v3652 = vsel %vm330, %v3634, 0
        %3654 = vmatprep.subr.bf16.mxu0 0
        %3655 = vmatpush1.bf16.msra.mxu0 0
        %3656 = vmatprep.subr.bf16.mxu0 0
        %3657 = vmatpush1.bf16.msra.mxu0 0
        %3658 = vmatprep.subr.bf16.mxu0 0
        %3659 = vmatpush1.bf16.msra.mxu0 0
        %3660 = vmatprep.subr.bf16.mxu0 0
        %3661 = vmatpush1.bf16.msra.mxu0 0
        %3662 = vmatprep.subr.bf16.mxu0 0
        %3663 = vmatpush1.bf16.msra.mxu0 0
        %3664 = vmatprep.subr.bf16.mxu0 0
        %3665 = vmatpush1.bf16.msra.mxu0 0
        %3666 = vmatprep.subr.bf16.mxu0 0
        %3667 = vmatpush1.bf16.msra.mxu0 %v3645
        %3668 = vmatprep.subr.bf16.mxu0 0
        %3669 = vmatpush1.bf16.msra.mxu0 %v3644
        %3670 = vmatprep.subr.bf16.mxu0 0
        %3671 = vmatpush2.bf16.msra.mxu0 0
        %3672 = vmatprep.subr.bf16.mxu0 0
        %3673 = vmatpush2.bf16.msra.mxu0 0
        %3674 = vmatprep.subr.bf16.mxu0 0
        %3675 = vmatpush2.bf16.msra.mxu0 0
        %3676 = vmatprep.subr.bf16.mxu0 0
        %3677 = vmatpush2.bf16.msra.mxu0 0
        %3678 = vmatprep.subr.bf16.mxu0 0
        %3679 = vmatpush2.bf16.msra.mxu0 0
        %3680 = vmatprep.subr.bf16.mxu0 0
        %3681 = vmatpush2.bf16.msra.mxu0 0
        %3682 = vmatprep.subr.bf16.mxu0 0
        %3683 = vmatpush2.bf16.msra.mxu0 0
        %3684 = vmatprep.subr.bf16.mxu0 0
        %3685 = vmatpush2.bf16.msra.mxu0 0
        %3686 = vmatprep.mubr.bf16.mxu0 0
        %3687 = vmatmul.mubr.bf16.gmra.mxu0 %v3649
        %v3688 = vpop.f32.mrf.mxu0
        %v3689 = vadd.f32 0.0, %v3688
        %v3690 = vpop.f32.mrf.mxu0
        %v3691 = vpop.f32.mrf.mxu0
        %v3692 = vadd.f32 0.0, %v3691
        %v3693 = vpop.f32.mrf.mxu0
        %3694 = vmatprep.mubr.bf16.mxu0 0
        %3695 = vmatmul.mubr.bf16.gmra.mxu0 %v3652
        %v3696 = vpop.f32.mrf.mxu0
        %v3697 = vadd.f32 0.0, %v3696
        %v3698 = vpop.f32.mrf.mxu0
        %v3699 = vpop.f32.mrf.mxu0
        %v3700 = vpop.f32.mrf.mxu0
        %3701 = vdwg.mxu0
        %v3702 = vadd.f32 %v3621, %v3689
        %v3703 = vadd.f32 %v3622, %v3692
        %v3704 = vadd.f32 %v3623, %v3697
        %s3705 = scalar_lea.vmem %s3, 224
        %v3706 = vld [vmem:[%s3705] sm:$0xf]
        %v3707 = vld [vmem:[%s3705 + $0x4] sm:$0xf]
        %v3708 = vld [vmem:[%s3705 + $0x8] sm:$0xf]
        %v3709 = vld [vmem:[%s3705 + $0xc] sm:$0xf]
        %v3710 = vrot.slane %v3380, 2
        %v3711 = vrot.slane %v3456, 2
        %v3712 = vsel %vm2891, %v3710, %v3711
        %v3717 = vunpack.c.l.b16 %v3706
        %v3718 = vunpack.c.l.b16 %v3707
        %v3719 = vunpack.c.l.b16 %v3708
        %v3720 = vunpack.c.l.b16 %v3709
        %v3721 = vpack.c.b16 %v3718, %v3717
        %v3722 = vpack.c.b16 %v3720, %v3719
        %v3726 = vsel %vm330, %v3712, 0
        %v3729 = vsel %vm330, %v3711, 0
        %3731 = vmatprep.subr.bf16.mxu0 0
        %3732 = vmatpush1.bf16.msra.mxu0 0
        %3733 = vmatprep.subr.bf16.mxu0 0
        %3734 = vmatpush1.bf16.msra.mxu0 0
        %3735 = vmatprep.subr.bf16.mxu0 0
        %3736 = vmatpush1.bf16.msra.mxu0 0
        %3737 = vmatprep.subr.bf16.mxu0 0
        %3738 = vmatpush1.bf16.msra.mxu0 0
        %3739 = vmatprep.subr.bf16.mxu0 0
        %3740 = vmatpush1.bf16.msra.mxu0 0
        %3741 = vmatprep.subr.bf16.mxu0 0
        %3742 = vmatpush1.bf16.msra.mxu0 0
        %3743 = vmatprep.subr.bf16.mxu0 0
        %3744 = vmatpush1.bf16.msra.mxu0 %v3722
        %3745 = vmatprep.subr.bf16.mxu0 0
        %3746 = vmatpush1.bf16.msra.mxu0 %v3721
        %3747 = vmatprep.subr.bf16.mxu0 0
        %3748 = vmatpush2.bf16.msra.mxu0 0
        %3749 = vmatprep.subr.bf16.mxu0 0
        %3750 = vmatpush2.bf16.msra.mxu0 0
        %3751 = vmatprep.subr.bf16.mxu0 0
        %3752 = vmatpush2.bf16.msra.mxu0 0
        %3753 = vmatprep.subr.bf16.mxu0 0
        %3754 = vmatpush2.bf16.msra.mxu0 0
        %3755 = vmatprep.subr.bf16.mxu0 0
        %3756 = vmatpush2.bf16.msra.mxu0 0
        %3757 = vmatprep.subr.bf16.mxu0 0
        %3758 = vmatpush2.bf16.msra.mxu0 0
        %3759 = vmatprep.subr.bf16.mxu0 0
        %3760 = vmatpush2.bf16.msra.mxu0 0
        %3761 = vmatprep.subr.bf16.mxu0 0
        %3762 = vmatpush2.bf16.msra.mxu0 0
        %3763 = vmatprep.mubr.bf16.mxu0 0
        %3764 = vmatmul.mubr.bf16.gmra.mxu0 %v3726
        %v3765 = vpop.f32.mrf.mxu0
        %v3766 = vadd.f32 0.0, %v3765
        %v3767 = vpop.f32.mrf.mxu0
        %v3768 = vpop.f32.mrf.mxu0
        %v3769 = vadd.f32 0.0, %v3768
        %v3770 = vpop.f32.mrf.mxu0
        %3771 = vmatprep.mubr.bf16.mxu0 0
        %3772 = vmatmul.mubr.bf16.gmra.mxu0 %v3729
        %v3773 = vpop.f32.mrf.mxu0
        %v3774 = vadd.f32 0.0, %v3773
        %v3775 = vpop.f32.mrf.mxu0
        %v3776 = vpop.f32.mrf.mxu0
        %v3777 = vpop.f32.mrf.mxu0
        %3778 = vdwg.mxu0
        %v3779 = vadd.f32 %v3702, %v3766
        %v3780 = vadd.f32 %v3703, %v3769
        %v3781 = vadd.f32 %v3704, %v3774
        %s3782 = sadd.s32 %s2558, 3
        %s3783 = smul.u32 %s3782, 24
        %s3784 = scalar_lea.vmem [#allocation2], %s3783
        %v3785 = vld [vmem:[%s3784] sm:$0xff]
        %v3786 = vld [vmem:[%s3784 + $0x8] sm:$0xff]
        %v3787 = vld [vmem:[%s3784 + $0x10] sm:$0xff]
        %v3788 = vld [vmem:[%s3784 + $0x18] sm:$0xff]
        %v3789 = vpack.c.bf16 %v3786, %v3785
        %v3790 = vpack.c.bf16 %v3787, %v3787
        %s3791 = scalar_lea.vmem %s3, 240
        %v3792 = vld [vmem:[%s3791] sm:$0xf]
        %v3793 = vld [vmem:[%s3791 + $0x4] sm:$0xf]
        %v3794 = vld [vmem:[%s3791 + $0x8] sm:$0xf]
        %v3795 = vld [vmem:[%s3791 + $0xc] sm:$0xf]
        %v3800 = vunpack.c.l.b16 %v3792
        %v3801 = vunpack.c.l.b16 %v3793
        %v3802 = vunpack.c.l.b16 %v3794
        %v3803 = vunpack.c.l.b16 %v3795
        %v3804 = vpack.c.b16 %v3801, %v3800
        %v3805 = vpack.c.b16 %v3803, %v3802
        %v3809 = vsel %vm330, %v3789, 0
        %v3812 = vsel %vm330, %v3790, 0
        %3814 = vmatprep.subr.bf16.mxu0 0
        %3815 = vmatpush1.bf16.msra.mxu0 0
        %3816 = vmatprep.subr.bf16.mxu0 0
        %3817 = vmatpush1.bf16.msra.mxu0 0
        %3818 = vmatprep.subr.bf16.mxu0 0
        %3819 = vmatpush1.bf16.msra.mxu0 0
        %3820 = vmatprep.subr.bf16.mxu0 0
        %3821 = vmatpush1.bf16.msra.mxu0 0
        %3822 = vmatprep.subr.bf16.mxu0 0
        %3823 = vmatpush1.bf16.msra.mxu0 0
        %3824 = vmatprep.subr.bf16.mxu0 0
        %3825 = vmatpush1.bf16.msra.mxu0 0
        %3826 = vmatprep.subr.bf16.mxu0 0
        %3827 = vmatpush1.bf16.msra.mxu0 %v3805
        %3828 = vmatprep.subr.bf16.mxu0 0
        %3829 = vmatpush1.bf16.msra.mxu0 %v3804
        %3830 = vmatprep.subr.bf16.mxu0 0
        %3831 = vmatpush2.bf16.msra.mxu0 0
        %3832 = vmatprep.subr.bf16.mxu0 0
        %3833 = vmatpush2.bf16.msra.mxu0 0
        %3834 = vmatprep.subr.bf16.mxu0 0
        %3835 = vmatpush2.bf16.msra.mxu0 0
        %3836 = vmatprep.subr.bf16.mxu0 0
        %3837 = vmatpush2.bf16.msra.mxu0 0
        %3838 = vmatprep.subr.bf16.mxu0 0
        %3839 = vmatpush2.bf16.msra.mxu0 0
        %3840 = vmatprep.subr.bf16.mxu0 0
        %3841 = vmatpush2.bf16.msra.mxu0 0
        %3842 = vmatprep.subr.bf16.mxu0 0
        %3843 = vmatpush2.bf16.msra.mxu0 0
        %3844 = vmatprep.subr.bf16.mxu0 0
        %3845 = vmatpush2.bf16.msra.mxu0 0
        %3846 = vmatprep.mubr.bf16.mxu0 0
        %3847 = vmatmul.mubr.bf16.gmra.mxu0 %v3809
        %v3848 = vpop.f32.mrf.mxu0
        %v3849 = vadd.f32 0.0, %v3848
        %v3850 = vpop.f32.mrf.mxu0
        %v3851 = vpop.f32.mrf.mxu0
        %v3852 = vadd.f32 0.0, %v3851
        %v3853 = vpop.f32.mrf.mxu0
        %3854 = vmatprep.mubr.bf16.mxu0 0
        %3855 = vmatmul.mubr.bf16.gmra.mxu0 %v3812
        %v3856 = vpop.f32.mrf.mxu0
        %v3857 = vadd.f32 0.0, %v3856
        %v3858 = vpop.f32.mrf.mxu0
        %v3859 = vpop.f32.mrf.mxu0
        %v3860 = vpop.f32.mrf.mxu0
        %3861 = vdwg.mxu0
        %v3862 = vadd.f32 %v3779, %v3849
        %v3863 = vadd.f32 %v3780, %v3852
        %v3864 = vadd.f32 %v3781, %v3857
        %v3865 = vpack.c.bf16 %v3788, %v3787
        %s3866 = scalar_lea.vmem %s3, 256
        %v3867 = vld [vmem:[%s3866] sm:$0xf]
        %v3868 = vld [vmem:[%s3866 + $0x4] sm:$0xf]
        %v3869 = vld [vmem:[%s3866 + $0x8] sm:$0xf]
        %v3870 = vld [vmem:[%s3866 + $0xc] sm:$0xf]
        %v3871 = vshrl.u32 %v3789, 16
        %v3873 = vshll.u32 %v3789, 16
        %v3875 = vrot.slane %v3873, 1
        %v3876 = vor.u32 %v3871, %v3875
        %v3878 = vshll.u32 %v3865, 16
        %v3880 = vrot.slane %v3878, 1
        %v3881 = vsel %vm2577, %v3876, %v3880
        %v3882 = vshrl.u32 %v3865, 16
        %v3884 = vor.u32 %v3882, %v3880
        %v3889 = vunpack.c.l.b16 %v3867
        %v3890 = vunpack.c.l.b16 %v3868
        %v3891 = vunpack.c.l.b16 %v3869
        %v3892 = vunpack.c.l.b16 %v3870
        %v3893 = vpack.c.b16 %v3890, %v3889
        %v3894 = vpack.c.b16 %v3892, %v3891
        %v3898 = vsel %vm330, %v3881, 0
        %v3901 = vsel %vm330, %v3884, 0
        %3903 = vmatprep.subr.bf16.mxu0 0
        %3904 = vmatpush1.bf16.msra.mxu0 0
        %3905 = vmatprep.subr.bf16.mxu0 0
        %3906 = vmatpush1.bf16.msra.mxu0 0
        %3907 = vmatprep.subr.bf16.mxu0 0
        %3908 = vmatpush1.bf16.msra.mxu0 0
        %3909 = vmatprep.subr.bf16.mxu0 0
        %3910 = vmatpush1.bf16.msra.mxu0 0
        %3911 = vmatprep.subr.bf16.mxu0 0
        %3912 = vmatpush1.bf16.msra.mxu0 0
        %3913 = vmatprep.subr.bf16.mxu0 0
        %3914 = vmatpush1.bf16.msra.mxu0 0
        %3915 = vmatprep.subr.bf16.mxu0 0
        %3916 = vmatpush1.bf16.msra.mxu0 %v3894
        %3917 = vmatprep.subr.bf16.mxu0 0
        %3918 = vmatpush1.bf16.msra.mxu0 %v3893
        %3919 = vmatprep.subr.bf16.mxu0 0
        %3920 = vmatpush2.bf16.msra.mxu0 0
        %3921 = vmatprep.subr.bf16.mxu0 0
        %3922 = vmatpush2.bf16.msra.mxu0 0
        %3923 = vmatprep.subr.bf16.mxu0 0
        %3924 = vmatpush2.bf16.msra.mxu0 0
        %3925 = vmatprep.subr.bf16.mxu0 0
        %3926 = vmatpush2.bf16.msra.mxu0 0
        %3927 = vmatprep.subr.bf16.mxu0 0
        %3928 = vmatpush2.bf16.msra.mxu0 0
        %3929 = vmatprep.subr.bf16.mxu0 0
        %3930 = vmatpush2.bf16.msra.mxu0 0
        %3931 = vmatprep.subr.bf16.mxu0 0
        %3932 = vmatpush2.bf16.msra.mxu0 0
        %3933 = vmatprep.subr.bf16.mxu0 0
        %3934 = vmatpush2.bf16.msra.mxu0 0
        %3935 = vmatprep.mubr.bf16.mxu0 0
        %3936 = vmatmul.mubr.bf16.gmra.mxu0 %v3898
        %v3937 = vpop.f32.mrf.mxu0
        %v3938 = vadd.f32 0.0, %v3937
        %v3939 = vpop.f32.mrf.mxu0
        %v3940 = vpop.f32.mrf.mxu0
        %v3941 = vadd.f32 0.0, %v3940
        %v3942 = vpop.f32.mrf.mxu0
        %3943 = vmatprep.mubr.bf16.mxu0 0
        %3944 = vmatmul.mubr.bf16.gmra.mxu0 %v3901
        %v3945 = vpop.f32.mrf.mxu0
        %v3946 = vadd.f32 0.0, %v3945
        %v3947 = vpop.f32.mrf.mxu0
        %v3948 = vpop.f32.mrf.mxu0
        %v3949 = vpop.f32.mrf.mxu0
        %3950 = vdwg.mxu0
        %v3951 = vadd.f32 %v3862, %v3938
        %v3952 = vadd.f32 %v3863, %v3941
        %v3953 = vadd.f32 %v3864, %v3946
        %s3954 = scalar_lea.vmem %s3, 272
        %v3955 = vld [vmem:[%s3954] sm:$0xf]
        %v3956 = vld [vmem:[%s3954 + $0x4] sm:$0xf]
        %v3957 = vld [vmem:[%s3954 + $0x8] sm:$0xf]
        %v3958 = vld [vmem:[%s3954 + $0xc] sm:$0xf]
        %v3961 = vrot.slane %v3789, 1
        %v3962 = vrot.slane %v3865, 1
        %v3963 = vsel %vm2731, %v3961, %v3962
        %v3968 = vunpack.c.l.b16 %v3955
        %v3969 = vunpack.c.l.b16 %v3956
        %v3970 = vunpack.c.l.b16 %v3957
        %v3971 = vunpack.c.l.b16 %v3958
        %v3972 = vpack.c.b16 %v3969, %v3968
        %v3973 = vpack.c.b16 %v3971, %v3970
        %v3977 = vsel %vm330, %v3963, 0
        %v3980 = vsel %vm330, %v3962, 0
        %3982 = vmatprep.subr.bf16.mxu0 0
        %3983 = vmatpush1.bf16.msra.mxu0 0
        %3984 = vmatprep.subr.bf16.mxu0 0
        %3985 = vmatpush1.bf16.msra.mxu0 0
        %3986 = vmatprep.subr.bf16.mxu0 0
        %3987 = vmatpush1.bf16.msra.mxu0 0
        %3988 = vmatprep.subr.bf16.mxu0 0
        %3989 = vmatpush1.bf16.msra.mxu0 0
        %3990 = vmatprep.subr.bf16.mxu0 0
        %3991 = vmatpush1.bf16.msra.mxu0 0
        %3992 = vmatprep.subr.bf16.mxu0 0
        %3993 = vmatpush1.bf16.msra.mxu0 0
        %3994 = vmatprep.subr.bf16.mxu0 0
        %3995 = vmatpush1.bf16.msra.mxu0 %v3973
        %3996 = vmatprep.subr.bf16.mxu0 0
        %3997 = vmatpush1.bf16.msra.mxu0 %v3972
        %3998 = vmatprep.subr.bf16.mxu0 0
        %3999 = vmatpush2.bf16.msra.mxu0 0
        %4000 = vmatprep.subr.bf16.mxu0 0
        %4001 = vmatpush2.bf16.msra.mxu0 0
        %4002 = vmatprep.subr.bf16.mxu0 0
        %4003 = vmatpush2.bf16.msra.mxu0 0
        %4004 = vmatprep.subr.bf16.mxu0 0
        %4005 = vmatpush2.bf16.msra.mxu0 0
        %4006 = vmatprep.subr.bf16.mxu0 0
        %4007 = vmatpush2.bf16.msra.mxu0 0
        %4008 = vmatprep.subr.bf16.mxu0 0
        %4009 = vmatpush2.bf16.msra.mxu0 0
        %4010 = vmatprep.subr.bf16.mxu0 0
        %4011 = vmatpush2.bf16.msra.mxu0 0
        %4012 = vmatprep.subr.bf16.mxu0 0
        %4013 = vmatpush2.bf16.msra.mxu0 0
        %4014 = vmatprep.mubr.bf16.mxu0 0
        %4015 = vmatmul.mubr.bf16.gmra.mxu0 %v3977
        %v4016 = vpop.f32.mrf.mxu0
        %v4017 = vadd.f32 0.0, %v4016
        %v4018 = vpop.f32.mrf.mxu0
        %v4019 = vpop.f32.mrf.mxu0
        %v4020 = vadd.f32 0.0, %v4019
        %v4021 = vpop.f32.mrf.mxu0
        %4022 = vmatprep.mubr.bf16.mxu0 0
        %4023 = vmatmul.mubr.bf16.gmra.mxu0 %v3980
        %v4024 = vpop.f32.mrf.mxu0
        %v4025 = vadd.f32 0.0, %v4024
        %v4026 = vpop.f32.mrf.mxu0
        %v4027 = vpop.f32.mrf.mxu0
        %v4028 = vpop.f32.mrf.mxu0
        %4029 = vdwg.mxu0
        %v4030 = vadd.f32 %v3951, %v4017
        %v4031 = vadd.f32 %v3952, %v4020
        %v4032 = vadd.f32 %v3953, %v4025
        %s4033 = scalar_lea.vmem %s3, 288
        %v4034 = vld [vmem:[%s4033] sm:$0xf]
        %v4035 = vld [vmem:[%s4033 + $0x4] sm:$0xf]
        %v4036 = vld [vmem:[%s4033 + $0x8] sm:$0xf]
        %v4037 = vld [vmem:[%s4033 + $0xc] sm:$0xf]
        %v4038 = vrot.slane %v3871, 1
        %v4039 = vrot.slane %v3873, 2
        %v4040 = vor.u32 %v4038, %v4039
        %v4041 = vrot.slane %v3882, 1
        %v4042 = vrot.slane %v3878, 2
        %v4043 = vor.u32 %v4041, %v4042
        %v4044 = vsel %vm2809, %v4040, %v4043
        %v4049 = vunpack.c.l.b16 %v4034
        %v4050 = vunpack.c.l.b16 %v4035
        %v4051 = vunpack.c.l.b16 %v4036
        %v4052 = vunpack.c.l.b16 %v4037
        %v4053 = vpack.c.b16 %v4050, %v4049
        %v4054 = vpack.c.b16 %v4052, %v4051
        %v4058 = vsel %vm330, %v4044, 0
        %v4061 = vsel %vm330, %v4043, 0
        %4063 = vmatprep.subr.bf16.mxu0 0
        %4064 = vmatpush1.bf16.msra.mxu0 0
        %4065 = vmatprep.subr.bf16.mxu0 0
        %4066 = vmatpush1.bf16.msra.mxu0 0
        %4067 = vmatprep.subr.bf16.mxu0 0
        %4068 = vmatpush1.bf16.msra.mxu0 0
        %4069 = vmatprep.subr.bf16.mxu0 0
        %4070 = vmatpush1.bf16.msra.mxu0 0
        %4071 = vmatprep.subr.bf16.mxu0 0
        %4072 = vmatpush1.bf16.msra.mxu0 0
        %4073 = vmatprep.subr.bf16.mxu0 0
        %4074 = vmatpush1.bf16.msra.mxu0 0
        %4075 = vmatprep.subr.bf16.mxu0 0
        %4076 = vmatpush1.bf16.msra.mxu0 %v4054
        %4077 = vmatprep.subr.bf16.mxu0 0
        %4078 = vmatpush1.bf16.msra.mxu0 %v4053
        %4079 = vmatprep.subr.bf16.mxu0 0
        %4080 = vmatpush2.bf16.msra.mxu0 0
        %4081 = vmatprep.subr.bf16.mxu0 0
        %4082 = vmatpush2.bf16.msra.mxu0 0
        %4083 = vmatprep.subr.bf16.mxu0 0
        %4084 = vmatpush2.bf16.msra.mxu0 0
        %4085 = vmatprep.subr.bf16.mxu0 0
        %4086 = vmatpush2.bf16.msra.mxu0 0
        %4087 = vmatprep.subr.bf16.mxu0 0
        %4088 = vmatpush2.bf16.msra.mxu0 0
        %4089 = vmatprep.subr.bf16.mxu0 0
        %4090 = vmatpush2.bf16.msra.mxu0 0
        %4091 = vmatprep.subr.bf16.mxu0 0
        %4092 = vmatpush2.bf16.msra.mxu0 0
        %4093 = vmatprep.subr.bf16.mxu0 0
        %4094 = vmatpush2.bf16.msra.mxu0 0
        %4095 = vmatprep.mubr.bf16.mxu0 0
        %4096 = vmatmul.mubr.bf16.gmra.mxu0 %v4058
        %v4097 = vpop.f32.mrf.mxu0
        %v4098 = vadd.f32 0.0, %v4097
        %v4099 = vpop.f32.mrf.mxu0
        %v4100 = vpop.f32.mrf.mxu0
        %v4101 = vadd.f32 0.0, %v4100
        %v4102 = vpop.f32.mrf.mxu0
        %4103 = vmatprep.mubr.bf16.mxu0 0
        %4104 = vmatmul.mubr.bf16.gmra.mxu0 %v4061
        %v4105 = vpop.f32.mrf.mxu0
        %v4106 = vadd.f32 0.0, %v4105
        %v4107 = vpop.f32.mrf.mxu0
        %v4108 = vpop.f32.mrf.mxu0
        %v4109 = vpop.f32.mrf.mxu0
        %4110 = vdwg.mxu0
        %v4111 = vadd.f32 %v4030, %v4098
        %v4112 = vadd.f32 %v4031, %v4101
        %v4113 = vadd.f32 %v4032, %v4106
        %s4114 = scalar_lea.vmem %s3, 304
        %v4115 = vld [vmem:[%s4114] sm:$0xf]
        %v4116 = vld [vmem:[%s4114 + $0x4] sm:$0xf]
        %v4117 = vld [vmem:[%s4114 + $0x8] sm:$0xf]
        %v4118 = vld [vmem:[%s4114 + $0xc] sm:$0xf]
        %v4119 = vrot.slane %v3789, 2
        %v4120 = vrot.slane %v3865, 2
        %v4121 = vsel %vm2891, %v4119, %v4120
        %v4126 = vunpack.c.l.b16 %v4115
        %v4127 = vunpack.c.l.b16 %v4116
        %v4128 = vunpack.c.l.b16 %v4117
        %v4129 = vunpack.c.l.b16 %v4118
        %v4130 = vpack.c.b16 %v4127, %v4126
        %v4131 = vpack.c.b16 %v4129, %v4128
        %v4135 = vsel %vm330, %v4121, 0
        %v4138 = vsel %vm330, %v4120, 0
        %4140 = vmatprep.subr.bf16.mxu0 0
        %4141 = vmatpush1.bf16.msra.mxu0 0
        %4142 = vmatprep.subr.bf16.mxu0 0
        %4143 = vmatpush1.bf16.msra.mxu0 0
        %4144 = vmatprep.subr.bf16.mxu0 0
        %4145 = vmatpush1.bf16.msra.mxu0 0
        %4146 = vmatprep.subr.bf16.mxu0 0
        %4147 = vmatpush1.bf16.msra.mxu0 0
        %4148 = vmatprep.subr.bf16.mxu0 0
        %4149 = vmatpush1.bf16.msra.mxu0 0
        %4150 = vmatprep.subr.bf16.mxu0 0
        %4151 = vmatpush1.bf16.msra.mxu0 0
        %4152 = vmatprep.subr.bf16.mxu0 0
        %4153 = vmatpush1.bf16.msra.mxu0 %v4131
        %4154 = vmatprep.subr.bf16.mxu0 0
        %4155 = vmatpush1.bf16.msra.mxu0 %v4130
        %4156 = vmatprep.subr.bf16.mxu0 0
        %4157 = vmatpush2.bf16.msra.mxu0 0
        %4158 = vmatprep.subr.bf16.mxu0 0
        %4159 = vmatpush2.bf16.msra.mxu0 0
        %4160 = vmatprep.subr.bf16.mxu0 0
        %4161 = vmatpush2.bf16.msra.mxu0 0
        %4162 = vmatprep.subr.bf16.mxu0 0
        %4163 = vmatpush2.bf16.msra.mxu0 0
        %4164 = vmatprep.subr.bf16.mxu0 0
        %4165 = vmatpush2.bf16.msra.mxu0 0
        %4166 = vmatprep.subr.bf16.mxu0 0
        %4167 = vmatpush2.bf16.msra.mxu0 0
        %4168 = vmatprep.subr.bf16.mxu0 0
        %4169 = vmatpush2.bf16.msra.mxu0 0
        %4170 = vmatprep.subr.bf16.mxu0 0
        %4171 = vmatpush2.bf16.msra.mxu0 0
        %4172 = vmatprep.mubr.bf16.mxu0 0
        %4173 = vmatmul.mubr.bf16.gmra.mxu0 %v4135
        %v4174 = vpop.f32.mrf.mxu0
        %v4175 = vadd.f32 0.0, %v4174
        %v4176 = vpop.f32.mrf.mxu0
        %v4177 = vpop.f32.mrf.mxu0
        %v4178 = vadd.f32 0.0, %v4177
        %v4179 = vpop.f32.mrf.mxu0
        %4180 = vmatprep.mubr.bf16.mxu0 0
        %4181 = vmatmul.mubr.bf16.gmra.mxu0 %v4138
        %v4182 = vpop.f32.mrf.mxu0
        %v4183 = vadd.f32 0.0, %v4182
        %v4184 = vpop.f32.mrf.mxu0
        %v4185 = vpop.f32.mrf.mxu0
        %v4186 = vpop.f32.mrf.mxu0
        %4187 = vdwg.mxu0
        %v4188 = vadd.f32 %v4111, %v4175
        %v4189 = vadd.f32 %v4112, %v4178
        %v4190 = vadd.f32 %v4113, %v4183
        %s4191 = sadd.s32 %s2558, 4
        %s4192 = smul.u32 %s4191, 24
        %s4193 = scalar_lea.vmem [#allocation2], %s4192
        %v4194 = vld [vmem:[%s4193] sm:$0xff]
        %v4195 = vld [vmem:[%s4193 + $0x8] sm:$0xff]
        %v4196 = vld [vmem:[%s4193 + $0x10] sm:$0xff]
        %v4197 = vld [vmem:[%s4193 + $0x18] sm:$0xff]
        %v4198 = vpack.c.bf16 %v4195, %v4194
        %v4199 = vpack.c.bf16 %v4196, %v4196
        %s4200 = scalar_lea.vmem %s3, 320
        %v4201 = vld [vmem:[%s4200] sm:$0xf]
        %v4202 = vld [vmem:[%s4200 + $0x4] sm:$0xf]
        %v4203 = vld [vmem:[%s4200 + $0x8] sm:$0xf]
        %v4204 = vld [vmem:[%s4200 + $0xc] sm:$0xf]
        %v4209 = vunpack.c.l.b16 %v4201
        %v4210 = vunpack.c.l.b16 %v4202
        %v4211 = vunpack.c.l.b16 %v4203
        %v4212 = vunpack.c.l.b16 %v4204
        %v4213 = vpack.c.b16 %v4210, %v4209
        %v4214 = vpack.c.b16 %v4212, %v4211
        %v4218 = vsel %vm330, %v4198, 0
        %v4221 = vsel %vm330, %v4199, 0
        %4223 = vmatprep.subr.bf16.mxu0 0
        %4224 = vmatpush1.bf16.msra.mxu0 0
        %4225 = vmatprep.subr.bf16.mxu0 0
        %4226 = vmatpush1.bf16.msra.mxu0 0
        %4227 = vmatprep.subr.bf16.mxu0 0
        %4228 = vmatpush1.bf16.msra.mxu0 0
        %4229 = vmatprep.subr.bf16.mxu0 0
        %4230 = vmatpush1.bf16.msra.mxu0 0
        %4231 = vmatprep.subr.bf16.mxu0 0
        %4232 = vmatpush1.bf16.msra.mxu0 0
        %4233 = vmatprep.subr.bf16.mxu0 0
        %4234 = vmatpush1.bf16.msra.mxu0 0
        %4235 = vmatprep.subr.bf16.mxu0 0
        %4236 = vmatpush1.bf16.msra.mxu0 %v4214
        %4237 = vmatprep.subr.bf16.mxu0 0
        %4238 = vmatpush1.bf16.msra.mxu0 %v4213
        %4239 = vmatprep.subr.bf16.mxu0 0
        %4240 = vmatpush2.bf16.msra.mxu0 0
        %4241 = vmatprep.subr.bf16.mxu0 0
        %4242 = vmatpush2.bf16.msra.mxu0 0
        %4243 = vmatprep.subr.bf16.mxu0 0
        %4244 = vmatpush2.bf16.msra.mxu0 0
        %4245 = vmatprep.subr.bf16.mxu0 0
        %4246 = vmatpush2.bf16.msra.mxu0 0
        %4247 = vmatprep.subr.bf16.mxu0 0
        %4248 = vmatpush2.bf16.msra.mxu0 0
        %4249 = vmatprep.subr.bf16.mxu0 0
        %4250 = vmatpush2.bf16.msra.mxu0 0
        %4251 = vmatprep.subr.bf16.mxu0 0
        %4252 = vmatpush2.bf16.msra.mxu0 0
        %4253 = vmatprep.subr.bf16.mxu0 0
        %4254 = vmatpush2.bf16.msra.mxu0 0
        %4255 = vmatprep.mubr.bf16.mxu0 0
        %4256 = vmatmul.mubr.bf16.gmra.mxu0 %v4218
        %v4257 = vpop.f32.mrf.mxu0
        %v4258 = vadd.f32 0.0, %v4257
        %v4259 = vpop.f32.mrf.mxu0
        %v4260 = vpop.f32.mrf.mxu0
        %v4261 = vadd.f32 0.0, %v4260
        %v4262 = vpop.f32.mrf.mxu0
        %4263 = vmatprep.mubr.bf16.mxu0 0
        %4264 = vmatmul.mubr.bf16.gmra.mxu0 %v4221
        %v4265 = vpop.f32.mrf.mxu0
        %v4266 = vadd.f32 0.0, %v4265
        %v4267 = vpop.f32.mrf.mxu0
        %v4268 = vpop.f32.mrf.mxu0
        %v4269 = vpop.f32.mrf.mxu0
        %4270 = vdwg.mxu0
        %v4271 = vadd.f32 %v4188, %v4258
        %v4272 = vadd.f32 %v4189, %v4261
        %v4273 = vadd.f32 %v4190, %v4266
        %v4274 = vpack.c.bf16 %v4197, %v4196
        %s4275 = scalar_lea.vmem %s3, 336
        %v4276 = vld [vmem:[%s4275] sm:$0xf]
        %v4277 = vld [vmem:[%s4275 + $0x4] sm:$0xf]
        %v4278 = vld [vmem:[%s4275 + $0x8] sm:$0xf]
        %v4279 = vld [vmem:[%s4275 + $0xc] sm:$0xf]
        %v4280 = vshrl.u32 %v4198, 16
        %v4282 = vshll.u32 %v4198, 16
        %v4284 = vrot.slane %v4282, 1
        %v4285 = vor.u32 %v4280, %v4284
        %v4287 = vshll.u32 %v4274, 16
        %v4289 = vrot.slane %v4287, 1
        %v4290 = vsel %vm2577, %v4285, %v4289
        %v4291 = vshrl.u32 %v4274, 16
        %v4293 = vor.u32 %v4291, %v4289
        %v4298 = vunpack.c.l.b16 %v4276
        %v4299 = vunpack.c.l.b16 %v4277
        %v4300 = vunpack.c.l.b16 %v4278
        %v4301 = vunpack.c.l.b16 %v4279
        %v4302 = vpack.c.b16 %v4299, %v4298
        %v4303 = vpack.c.b16 %v4301, %v4300
        %v4307 = vsel %vm330, %v4290, 0
        %v4310 = vsel %vm330, %v4293, 0
        %4312 = vmatprep.subr.bf16.mxu0 0
        %4313 = vmatpush1.bf16.msra.mxu0 0
        %4314 = vmatprep.subr.bf16.mxu0 0
        %4315 = vmatpush1.bf16.msra.mxu0 0
        %4316 = vmatprep.subr.bf16.mxu0 0
        %4317 = vmatpush1.bf16.msra.mxu0 0
        %4318 = vmatprep.subr.bf16.mxu0 0
        %4319 = vmatpush1.bf16.msra.mxu0 0
        %4320 = vmatprep.subr.bf16.mxu0 0
        %4321 = vmatpush1.bf16.msra.mxu0 0
        %4322 = vmatprep.subr.bf16.mxu0 0
        %4323 = vmatpush1.bf16.msra.mxu0 0
        %4324 = vmatprep.subr.bf16.mxu0 0
        %4325 = vmatpush1.bf16.msra.mxu0 %v4303
        %4326 = vmatprep.subr.bf16.mxu0 0
        %4327 = vmatpush1.bf16.msra.mxu0 %v4302
        %4328 = vmatprep.subr.bf16.mxu0 0
        %4329 = vmatpush2.bf16.msra.mxu0 0
        %4330 = vmatprep.subr.bf16.mxu0 0
        %4331 = vmatpush2.bf16.msra.mxu0 0
        %4332 = vmatprep.subr.bf16.mxu0 0
        %4333 = vmatpush2.bf16.msra.mxu0 0
        %4334 = vmatprep.subr.bf16.mxu0 0
        %4335 = vmatpush2.bf16.msra.mxu0 0
        %4336 = vmatprep.subr.bf16.mxu0 0
        %4337 = vmatpush2.bf16.msra.mxu0 0
        %4338 = vmatprep.subr.bf16.mxu0 0
        %4339 = vmatpush2.bf16.msra.mxu0 0
        %4340 = vmatprep.subr.bf16.mxu0 0
        %4341 = vmatpush2.bf16.msra.mxu0 0
        %4342 = vmatprep.subr.bf16.mxu0 0
        %4343 = vmatpush2.bf16.msra.mxu0 0
        %4344 = vmatprep.mubr.bf16.mxu0 0
        %4345 = vmatmul.mubr.bf16.gmra.mxu0 %v4307
        %v4346 = vpop.f32.mrf.mxu0
        %v4347 = vadd.f32 0.0, %v4346
        %v4348 = vpop.f32.mrf.mxu0
        %v4349 = vpop.f32.mrf.mxu0
        %v4350 = vadd.f32 0.0, %v4349
        %v4351 = vpop.f32.mrf.mxu0
        %4352 = vmatprep.mubr.bf16.mxu0 0
        %4353 = vmatmul.mubr.bf16.gmra.mxu0 %v4310
        %v4354 = vpop.f32.mrf.mxu0
        %v4355 = vadd.f32 0.0, %v4354
        %v4356 = vpop.f32.mrf.mxu0
        %v4357 = vpop.f32.mrf.mxu0
        %v4358 = vpop.f32.mrf.mxu0
        %4359 = vdwg.mxu0
        %v4360 = vadd.f32 %v4271, %v4347
        %v4361 = vadd.f32 %v4272, %v4350
        %v4362 = vadd.f32 %v4273, %v4355
        %s4363 = scalar_lea.vmem %s3, 352
        %v4364 = vld [vmem:[%s4363] sm:$0xf]
        %v4365 = vld [vmem:[%s4363 + $0x4] sm:$0xf]
        %v4366 = vld [vmem:[%s4363 + $0x8] sm:$0xf]
        %v4367 = vld [vmem:[%s4363 + $0xc] sm:$0xf]
        %v4370 = vrot.slane %v4198, 1
        %v4371 = vrot.slane %v4274, 1
        %v4372 = vsel %vm2731, %v4370, %v4371
        %v4377 = vunpack.c.l.b16 %v4364
        %v4378 = vunpack.c.l.b16 %v4365
        %v4379 = vunpack.c.l.b16 %v4366
        %v4380 = vunpack.c.l.b16 %v4367
        %v4381 = vpack.c.b16 %v4378, %v4377
        %v4382 = vpack.c.b16 %v4380, %v4379
        %v4386 = vsel %vm330, %v4372, 0
        %v4389 = vsel %vm330, %v4371, 0
        %4391 = vmatprep.subr.bf16.mxu0 0
        %4392 = vmatpush1.bf16.msra.mxu0 0
        %4393 = vmatprep.subr.bf16.mxu0 0
        %4394 = vmatpush1.bf16.msra.mxu0 0
        %4395 = vmatprep.subr.bf16.mxu0 0
        %4396 = vmatpush1.bf16.msra.mxu0 0
        %4397 = vmatprep.subr.bf16.mxu0 0
        %4398 = vmatpush1.bf16.msra.mxu0 0
        %4399 = vmatprep.subr.bf16.mxu0 0
        %4400 = vmatpush1.bf16.msra.mxu0 0
        %4401 = vmatprep.subr.bf16.mxu0 0
        %4402 = vmatpush1.bf16.msra.mxu0 0
        %4403 = vmatprep.subr.bf16.mxu0 0
        %4404 = vmatpush1.bf16.msra.mxu0 %v4382
        %4405 = vmatprep.subr.bf16.mxu0 0
        %4406 = vmatpush1.bf16.msra.mxu0 %v4381
        %4407 = vmatprep.subr.bf16.mxu0 0
        %4408 = vmatpush2.bf16.msra.mxu0 0
        %4409 = vmatprep.subr.bf16.mxu0 0
        %4410 = vmatpush2.bf16.msra.mxu0 0
        %4411 = vmatprep.subr.bf16.mxu0 0
        %4412 = vmatpush2.bf16.msra.mxu0 0
        %4413 = vmatprep.subr.bf16.mxu0 0
        %4414 = vmatpush2.bf16.msra.mxu0 0
        %4415 = vmatprep.subr.bf16.mxu0 0
        %4416 = vmatpush2.bf16.msra.mxu0 0
        %4417 = vmatprep.subr.bf16.mxu0 0
        %4418 = vmatpush2.bf16.msra.mxu0 0
        %4419 = vmatprep.subr.bf16.mxu0 0
        %4420 = vmatpush2.bf16.msra.mxu0 0
        %4421 = vmatprep.subr.bf16.mxu0 0
        %4422 = vmatpush2.bf16.msra.mxu0 0
        %4423 = vmatprep.mubr.bf16.mxu0 0
        %4424 = vmatmul.mubr.bf16.gmra.mxu0 %v4386
        %v4425 = vpop.f32.mrf.mxu0
        %v4426 = vadd.f32 0.0, %v4425
        %v4427 = vpop.f32.mrf.mxu0
        %v4428 = vpop.f32.mrf.mxu0
        %v4429 = vadd.f32 0.0, %v4428
        %v4430 = vpop.f32.mrf.mxu0
        %4431 = vmatprep.mubr.bf16.mxu0 0
        %4432 = vmatmul.mubr.bf16.gmra.mxu0 %v4389
        %v4433 = vpop.f32.mrf.mxu0
        %v4434 = vadd.f32 0.0, %v4433
        %v4435 = vpop.f32.mrf.mxu0
        %v4436 = vpop.f32.mrf.mxu0
        %v4437 = vpop.f32.mrf.mxu0
        %4438 = vdwg.mxu0
        %v4439 = vadd.f32 %v4360, %v4426
        %v4440 = vadd.f32 %v4361, %v4429
        %v4441 = vadd.f32 %v4362, %v4434
        %s4442 = scalar_lea.vmem %s3, 368
        %v4443 = vld [vmem:[%s4442] sm:$0xf]
        %v4444 = vld [vmem:[%s4442 + $0x4] sm:$0xf]
        %v4445 = vld [vmem:[%s4442 + $0x8] sm:$0xf]
        %v4446 = vld [vmem:[%s4442 + $0xc] sm:$0xf]
        %v4447 = vrot.slane %v4280, 1
        %v4448 = vrot.slane %v4282, 2
        %v4449 = vor.u32 %v4447, %v4448
        %v4450 = vrot.slane %v4291, 1
        %v4451 = vrot.slane %v4287, 2
        %v4452 = vor.u32 %v4450, %v4451
        %v4453 = vsel %vm2809, %v4449, %v4452
        %v4458 = vunpack.c.l.b16 %v4443
        %v4459 = vunpack.c.l.b16 %v4444
        %v4460 = vunpack.c.l.b16 %v4445
        %v4461 = vunpack.c.l.b16 %v4446
        %v4462 = vpack.c.b16 %v4459, %v4458
        %v4463 = vpack.c.b16 %v4461, %v4460
        %v4467 = vsel %vm330, %v4453, 0
        %v4470 = vsel %vm330, %v4452, 0
        %4472 = vmatprep.subr.bf16.mxu0 0
        %4473 = vmatpush1.bf16.msra.mxu0 0
        %4474 = vmatprep.subr.bf16.mxu0 0
        %4475 = vmatpush1.bf16.msra.mxu0 0
        %4476 = vmatprep.subr.bf16.mxu0 0
        %4477 = vmatpush1.bf16.msra.mxu0 0
        %4478 = vmatprep.subr.bf16.mxu0 0
        %4479 = vmatpush1.bf16.msra.mxu0 0
        %4480 = vmatprep.subr.bf16.mxu0 0
        %4481 = vmatpush1.bf16.msra.mxu0 0
        %4482 = vmatprep.subr.bf16.mxu0 0
        %4483 = vmatpush1.bf16.msra.mxu0 0
        %4484 = vmatprep.subr.bf16.mxu0 0
        %4485 = vmatpush1.bf16.msra.mxu0 %v4463
        %4486 = vmatprep.subr.bf16.mxu0 0
        %4487 = vmatpush1.bf16.msra.mxu0 %v4462
        %4488 = vmatprep.subr.bf16.mxu0 0
        %4489 = vmatpush2.bf16.msra.mxu0 0
        %4490 = vmatprep.subr.bf16.mxu0 0
        %4491 = vmatpush2.bf16.msra.mxu0 0
        %4492 = vmatprep.subr.bf16.mxu0 0
        %4493 = vmatpush2.bf16.msra.mxu0 0
        %4494 = vmatprep.subr.bf16.mxu0 0
        %4495 = vmatpush2.bf16.msra.mxu0 0
        %4496 = vmatprep.subr.bf16.mxu0 0
        %4497 = vmatpush2.bf16.msra.mxu0 0
        %4498 = vmatprep.subr.bf16.mxu0 0
        %4499 = vmatpush2.bf16.msra.mxu0 0
        %4500 = vmatprep.subr.bf16.mxu0 0
        %4501 = vmatpush2.bf16.msra.mxu0 0
        %4502 = vmatprep.subr.bf16.mxu0 0
        %4503 = vmatpush2.bf16.msra.mxu0 0
        %4504 = vmatprep.mubr.bf16.mxu0 0
        %4505 = vmatmul.mubr.bf16.gmra.mxu0 %v4467
        %v4506 = vpop.f32.mrf.mxu0
        %v4507 = vadd.f32 0.0, %v4506
        %v4508 = vpop.f32.mrf.mxu0
        %v4509 = vpop.f32.mrf.mxu0
        %v4510 = vadd.f32 0.0, %v4509
        %v4511 = vpop.f32.mrf.mxu0
        %4512 = vmatprep.mubr.bf16.mxu0 0
        %4513 = vmatmul.mubr.bf16.gmra.mxu0 %v4470
        %v4514 = vpop.f32.mrf.mxu0
        %v4515 = vadd.f32 0.0, %v4514
        %v4516 = vpop.f32.mrf.mxu0
        %v4517 = vpop.f32.mrf.mxu0
        %v4518 = vpop.f32.mrf.mxu0
        %4519 = vdwg.mxu0
        %v4520 = vadd.f32 %v4439, %v4507
        %v4521 = vadd.f32 %v4440, %v4510
        %v4522 = vadd.f32 %v4441, %v4515
        %s4523 = scalar_lea.vmem %s3, 384
        %v4524 = vld [vmem:[%s4523] sm:$0xf]
        %v4525 = vld [vmem:[%s4523 + $0x4] sm:$0xf]
        %v4526 = vld [vmem:[%s4523 + $0x8] sm:$0xf]
        %v4527 = vld [vmem:[%s4523 + $0xc] sm:$0xf]
        %v4528 = vrot.slane %v4198, 2
        %v4529 = vrot.slane %v4274, 2
        %v4530 = vsel %vm2891, %v4528, %v4529
        %v4535 = vunpack.c.l.b16 %v4524
        %v4536 = vunpack.c.l.b16 %v4525
        %v4537 = vunpack.c.l.b16 %v4526
        %v4538 = vunpack.c.l.b16 %v4527
        %v4539 = vpack.c.b16 %v4536, %v4535
        %v4540 = vpack.c.b16 %v4538, %v4537
        %v4544 = vsel %vm330, %v4530, 0
        %v4547 = vsel %vm330, %v4529, 0
        %4549 = vmatprep.subr.bf16.mxu0 0
        %4550 = vmatpush1.bf16.msra.mxu0 0
        %4551 = vmatprep.subr.bf16.mxu0 0
        %4552 = vmatpush1.bf16.msra.mxu0 0
        %4553 = vmatprep.subr.bf16.mxu0 0
        %4554 = vmatpush1.bf16.msra.mxu0 0
        %4555 = vmatprep.subr.bf16.mxu0 0
        %4556 = vmatpush1.bf16.msra.mxu0 0
        %4557 = vmatprep.subr.bf16.mxu0 0
        %4558 = vmatpush1.bf16.msra.mxu0 0
        %4559 = vmatprep.subr.bf16.mxu0 0
        %4560 = vmatpush1.bf16.msra.mxu0 0
        %4561 = vmatprep.subr.bf16.mxu0 0
        %4562 = vmatpush1.bf16.msra.mxu0 %v4540
        %4563 = vmatprep.subr.bf16.mxu0 0
        %4564 = vmatpush1.bf16.msra.mxu0 %v4539
        %4565 = vmatprep.subr.bf16.mxu0 0
        %4566 = vmatpush2.bf16.msra.mxu0 0
        %4567 = vmatprep.subr.bf16.mxu0 0
        %4568 = vmatpush2.bf16.msra.mxu0 0
        %4569 = vmatprep.subr.bf16.mxu0 0
        %4570 = vmatpush2.bf16.msra.mxu0 0
        %4571 = vmatprep.subr.bf16.mxu0 0
        %4572 = vmatpush2.bf16.msra.mxu0 0
        %4573 = vmatprep.subr.bf16.mxu0 0
        %4574 = vmatpush2.bf16.msra.mxu0 0
        %4575 = vmatprep.subr.bf16.mxu0 0
        %4576 = vmatpush2.bf16.msra.mxu0 0
        %4577 = vmatprep.subr.bf16.mxu0 0
        %4578 = vmatpush2.bf16.msra.mxu0 0
        %4579 = vmatprep.subr.bf16.mxu0 0
        %4580 = vmatpush2.bf16.msra.mxu0 0
        %4581 = vmatprep.mubr.bf16.mxu0 0
        %4582 = vmatmul.mubr.bf16.gmra.mxu0 %v4544
        %v4583 = vpop.f32.mrf.mxu0
        %v4584 = vadd.f32 0.0, %v4583
        %v4585 = vpop.f32.mrf.mxu0
        %v4586 = vpop.f32.mrf.mxu0
        %v4587 = vadd.f32 0.0, %v4586
        %v4588 = vpop.f32.mrf.mxu0
        %4589 = vmatprep.mubr.bf16.mxu0 0
        %4590 = vmatmul.mubr.bf16.gmra.mxu0 %v4547
        %v4591 = vpop.f32.mrf.mxu0
        %v4592 = vadd.f32 0.0, %v4591
        %v4593 = vpop.f32.mrf.mxu0
        %v4594 = vpop.f32.mrf.mxu0
        %v4595 = vpop.f32.mrf.mxu0
        %4596 = vdwg.mxu0
        %v4597 = vadd.f32 %v4520, %v4584
        %v4598 = vadd.f32 %v4521, %v4587
        %v4599 = vadd.f32 %v4522, %v4592
        %v4601 = vlaneseq
        %v4602 = vshrl.u32 %v4601, 7
        %v4603 = vsub.s32 0, %v4602
        %v4604 = vrot.slane %v388, %v4603
        %v4606 = vadd.f32 %v4597, %v4604
        %v4607 = vadd.f32 %v4598, %v4604
        %v4608 = vadd.f32 %v4599, %v4604
        %v4609 = vmax.f32 %v4606, 0.0
        %v4610 = vmax.f32 %v4607, 0.0
        %v4611 = vmax.f32 %v4608, 0.0
        %4612 = vmatprep.subr.bf16.mxu0 0
        %4613 = vmatpush1.bf16.msra.mxu0 0
        %4614 = vmatprep.subr.bf16.mxu0 0
        %4615 = vmatpush1.bf16.msra.mxu0 0
        %4616 = vmatprep.subr.bf16.mxu0 0
        %4617 = vmatpush1.bf16.msra.mxu0 0
        %4618 = vmatprep.subr.bf16.mxu0 0
        %4619 = vmatpush1.bf16.msra.mxu0 0
        %4620 = vmatprep.subr.bf16.mxu0 0
        %4621 = vmatpush1.bf16.msra.mxu0 0
        %4622 = vmatprep.subr.bf16.mxu0 0
        %4623 = vmatpush1.bf16.msra.mxu0 0
        %4624 = vmatprep.subr.bf16.mxu0 0
        %4625 = vmatpush1.bf16.msra.mxu0 %v2602
        %4626 = vmatprep.subr.bf16.mxu0 0
        %4627 = vmatpush1.bf16.msra.mxu0 %v2601
        %4628 = vmatprep.subr.bf16.mxu0 0
        %4629 = vmatpush2.bf16.msra.mxu0 0
        %4630 = vmatprep.subr.bf16.mxu0 0
        %4631 = vmatpush2.bf16.msra.mxu0 0
        %4632 = vmatprep.subr.bf16.mxu0 0
        %4633 = vmatpush2.bf16.msra.mxu0 0
        %4634 = vmatprep.subr.bf16.mxu0 0
        %4635 = vmatpush2.bf16.msra.mxu0 0
        %4636 = vmatprep.subr.bf16.mxu0 0
        %4637 = vmatpush2.bf16.msra.mxu0 0
        %4638 = vmatprep.subr.bf16.mxu0 0
        %4639 = vmatpush2.bf16.msra.mxu0 0
        %4640 = vmatprep.subr.bf16.mxu0 0
        %4641 = vmatpush2.bf16.msra.mxu0 0
        %4642 = vmatprep.subr.bf16.mxu0 0
        %4643 = vmatpush2.bf16.msra.mxu0 0
        %4644 = vmatprep.mubr.bf16.mxu0 0
        %4645 = vmatmul.mubr.bf16.gmra.mxu0 %v3080
        %v4646 = vpop.f32.mrf.mxu0
        %v4647 = vadd.f32 0.0, %v4646
        %v4648 = vpop.f32.mrf.mxu0
        %v4649 = vpop.f32.mrf.mxu0
        %v4650 = vadd.f32 0.0, %v4649
        %v4651 = vpop.f32.mrf.mxu0
        %4652 = vmatprep.mubr.bf16.mxu0 0
        %4653 = vmatmul.mubr.bf16.gmra.mxu0 %v3083
        %v4654 = vpop.f32.mrf.mxu0
        %v4655 = vadd.f32 0.0, %v4654
        %v4656 = vpop.f32.mrf.mxu0
        %v4657 = vpop.f32.mrf.mxu0
        %v4658 = vpop.f32.mrf.mxu0
        %4659 = vdwg.mxu0
        %4660 = vmatprep.subr.bf16.mxu0 0
        %4661 = vmatpush1.bf16.msra.mxu0 0
        %4662 = vmatprep.subr.bf16.mxu0 0
        %4663 = vmatpush1.bf16.msra.mxu0 0
        %4664 = vmatprep.subr.bf16.mxu0 0
        %4665 = vmatpush1.bf16.msra.mxu0 0
        %4666 = vmatprep.subr.bf16.mxu0 0
        %4667 = vmatpush1.bf16.msra.mxu0 0
        %4668 = vmatprep.subr.bf16.mxu0 0
        %4669 = vmatpush1.bf16.msra.mxu0 0
        %4670 = vmatprep.subr.bf16.mxu0 0
        %4671 = vmatpush1.bf16.msra.mxu0 0
        %4672 = vmatprep.subr.bf16.mxu0 0
        %4673 = vmatpush1.bf16.msra.mxu0 %v2668
        %4674 = vmatprep.subr.bf16.mxu0 0
        %4675 = vmatpush1.bf16.msra.mxu0 %v2667
        %4676 = vmatprep.subr.bf16.mxu0 0
        %4677 = vmatpush2.bf16.msra.mxu0 0
        %4678 = vmatprep.subr.bf16.mxu0 0
        %4679 = vmatpush2.bf16.msra.mxu0 0
        %4680 = vmatprep.subr.bf16.mxu0 0
        %4681 = vmatpush2.bf16.msra.mxu0 0
        %4682 = vmatprep.subr.bf16.mxu0 0
        %4683 = vmatpush2.bf16.msra.mxu0 0
        %4684 = vmatprep.subr.bf16.mxu0 0
        %4685 = vmatpush2.bf16.msra.mxu0 0
        %4686 = vmatprep.subr.bf16.mxu0 0
        %4687 = vmatpush2.bf16.msra.mxu0 0
        %4688 = vmatprep.subr.bf16.mxu0 0
        %4689 = vmatpush2.bf16.msra.mxu0 0
        %4690 = vmatprep.subr.bf16.mxu0 0
        %4691 = vmatpush2.bf16.msra.mxu0 0
        %4692 = vmatprep.mubr.bf16.mxu0 0
        %4693 = vmatmul.mubr.bf16.gmra.mxu0 %v2991
        %v4694 = vpop.f32.mrf.mxu0
        %v4695 = vadd.f32 %v4647, %v4694
        %v4696 = vpop.f32.mrf.mxu0
        %v4697 = vpop.f32.mrf.mxu0
        %v4698 = vadd.f32 %v4650, %v4697
        %v4699 = vpop.f32.mrf.mxu0
        %4700 = vmatprep.mubr.bf16.mxu0 0
        %4701 = vmatmul.mubr.bf16.gmra.mxu0 %v2994
        %v4702 = vpop.f32.mrf.mxu0
        %v4703 = vadd.f32 %v4655, %v4702
        %v4704 = vpop.f32.mrf.mxu0
        %v4705 = vpop.f32.mrf.mxu0
        %v4706 = vpop.f32.mrf.mxu0
        %4707 = vdwg.mxu0
        %4708 = vmatprep.subr.bf16.mxu0 0
        %4709 = vmatpush1.bf16.msra.mxu0 0
        %4710 = vmatprep.subr.bf16.mxu0 0
        %4711 = vmatpush1.bf16.msra.mxu0 0
        %4712 = vmatprep.subr.bf16.mxu0 0
        %4713 = vmatpush1.bf16.msra.mxu0 0
        %4714 = vmatprep.subr.bf16.mxu0 0
        %4715 = vmatpush1.bf16.msra.mxu0 0
        %4716 = vmatprep.subr.bf16.mxu0 0
        %4717 = vmatpush1.bf16.msra.mxu0 0
        %4718 = vmatprep.subr.bf16.mxu0 0
        %4719 = vmatpush1.bf16.msra.mxu0 0
        %4720 = vmatprep.subr.bf16.mxu0 0
        %4721 = vmatpush1.bf16.msra.mxu0 %v2744
        %4722 = vmatprep.subr.bf16.mxu0 0
        %4723 = vmatpush1.bf16.msra.mxu0 %v2743
        %4724 = vmatprep.subr.bf16.mxu0 0
        %4725 = vmatpush2.bf16.msra.mxu0 0
        %4726 = vmatprep.subr.bf16.mxu0 0
        %4727 = vmatpush2.bf16.msra.mxu0 0
        %4728 = vmatprep.subr.bf16.mxu0 0
        %4729 = vmatpush2.bf16.msra.mxu0 0
        %4730 = vmatprep.subr.bf16.mxu0 0
        %4731 = vmatpush2.bf16.msra.mxu0 0
        %4732 = vmatprep.subr.bf16.mxu0 0
        %4733 = vmatpush2.bf16.msra.mxu0 0
        %4734 = vmatprep.subr.bf16.mxu0 0
        %4735 = vmatpush2.bf16.msra.mxu0 0
        %4736 = vmatprep.subr.bf16.mxu0 0
        %4737 = vmatpush2.bf16.msra.mxu0 0
        %4738 = vmatprep.subr.bf16.mxu0 0
        %4739 = vmatpush2.bf16.msra.mxu0 0
        %4740 = vmatprep.mubr.bf16.mxu0 0
        %4741 = vmatmul.mubr.bf16.gmra.mxu0 %v3159
        %v4742 = vpop.f32.mrf.mxu0
        %v4743 = vadd.f32 0.0, %v4742
        %v4744 = vpop.f32.mrf.mxu0
        %v4745 = vpop.f32.mrf.mxu0
        %v4746 = vadd.f32 0.0, %v4745
        %v4747 = vpop.f32.mrf.mxu0
        %4748 = vmatprep.mubr.bf16.mxu0 0
        %4749 = vmatmul.mubr.bf16.gmra.mxu0 %v3162
        %v4750 = vpop.f32.mrf.mxu0
        %v4751 = vadd.f32 0.0, %v4750
        %v4752 = vpop.f32.mrf.mxu0
        %v4753 = vpop.f32.mrf.mxu0
        %v4754 = vpop.f32.mrf.mxu0
        %4755 = vdwg.mxu0
        %v4756 = vadd.f32 %v4695, %v4743
        %v4757 = vadd.f32 %v4698, %v4746
        %v4758 = vadd.f32 %v4703, %v4751
        %4759 = vmatprep.subr.bf16.mxu0 0
        %4760 = vmatpush1.bf16.msra.mxu0 0
        %4761 = vmatprep.subr.bf16.mxu0 0
        %4762 = vmatpush1.bf16.msra.mxu0 0
        %4763 = vmatprep.subr.bf16.mxu0 0
        %4764 = vmatpush1.bf16.msra.mxu0 0
        %4765 = vmatprep.subr.bf16.mxu0 0
        %4766 = vmatpush1.bf16.msra.mxu0 0
        %4767 = vmatprep.subr.bf16.mxu0 0
        %4768 = vmatpush1.bf16.msra.mxu0 0
        %4769 = vmatprep.subr.bf16.mxu0 0
        %4770 = vmatpush1.bf16.msra.mxu0 0
        %4771 = vmatprep.subr.bf16.mxu0 0
        %4772 = vmatpush1.bf16.msra.mxu0 %v2826
        %4773 = vmatprep.subr.bf16.mxu0 0
        %4774 = vmatpush1.bf16.msra.mxu0 %v2825
        %4775 = vmatprep.subr.bf16.mxu0 0
        %4776 = vmatpush2.bf16.msra.mxu0 0
        %4777 = vmatprep.subr.bf16.mxu0 0
        %4778 = vmatpush2.bf16.msra.mxu0 0
        %4779 = vmatprep.subr.bf16.mxu0 0
        %4780 = vmatpush2.bf16.msra.mxu0 0
        %4781 = vmatprep.subr.bf16.mxu0 0
        %4782 = vmatpush2.bf16.msra.mxu0 0
        %4783 = vmatprep.subr.bf16.mxu0 0
        %4784 = vmatpush2.bf16.msra.mxu0 0
        %4785 = vmatprep.subr.bf16.mxu0 0
        %4786 = vmatpush2.bf16.msra.mxu0 0
        %4787 = vmatprep.subr.bf16.mxu0 0
        %4788 = vmatpush2.bf16.msra.mxu0 0
        %4789 = vmatprep.subr.bf16.mxu0 0
        %4790 = vmatpush2.bf16.msra.mxu0 0
        %4791 = vmatprep.mubr.bf16.mxu0 0
        %4792 = vmatmul.mubr.bf16.gmra.mxu0 %v3240
        %v4793 = vpop.f32.mrf.mxu0
        %v4794 = vadd.f32 0.0, %v4793
        %v4795 = vpop.f32.mrf.mxu0
        %v4796 = vpop.f32.mrf.mxu0
        %v4797 = vadd.f32 0.0, %v4796
        %v4798 = vpop.f32.mrf.mxu0
        %4799 = vmatprep.mubr.bf16.mxu0 0
        %4800 = vmatmul.mubr.bf16.gmra.mxu0 %v3243
        %v4801 = vpop.f32.mrf.mxu0
        %v4802 = vadd.f32 0.0, %v4801
        %v4803 = vpop.f32.mrf.mxu0
        %v4804 = vpop.f32.mrf.mxu0
        %v4805 = vpop.f32.mrf.mxu0
        %4806 = vdwg.mxu0
        %v4807 = vadd.f32 %v4756, %v4794
        %v4808 = vadd.f32 %v4757, %v4797
        %v4809 = vadd.f32 %v4758, %v4802
        %4810 = vmatprep.subr.bf16.mxu0 0
        %4811 = vmatpush1.bf16.msra.mxu0 0
        %4812 = vmatprep.subr.bf16.mxu0 0
        %4813 = vmatpush1.bf16.msra.mxu0 0
        %4814 = vmatprep.subr.bf16.mxu0 0
        %4815 = vmatpush1.bf16.msra.mxu0 0
        %4816 = vmatprep.subr.bf16.mxu0 0
        %4817 = vmatpush1.bf16.msra.mxu0 0
        %4818 = vmatprep.subr.bf16.mxu0 0
        %4819 = vmatpush1.bf16.msra.mxu0 0
        %4820 = vmatprep.subr.bf16.mxu0 0
        %4821 = vmatpush1.bf16.msra.mxu0 0
        %4822 = vmatprep.subr.bf16.mxu0 0
        %4823 = vmatpush1.bf16.msra.mxu0 %v2904
        %4824 = vmatprep.subr.bf16.mxu0 0
        %4825 = vmatpush1.bf16.msra.mxu0 %v2903
        %4826 = vmatprep.subr.bf16.mxu0 0
        %4827 = vmatpush2.bf16.msra.mxu0 0
        %4828 = vmatprep.subr.bf16.mxu0 0
        %4829 = vmatpush2.bf16.msra.mxu0 0
        %4830 = vmatprep.subr.bf16.mxu0 0
        %4831 = vmatpush2.bf16.msra.mxu0 0
        %4832 = vmatprep.subr.bf16.mxu0 0
        %4833 = vmatpush2.bf16.msra.mxu0 0
        %4834 = vmatprep.subr.bf16.mxu0 0
        %4835 = vmatpush2.bf16.msra.mxu0 0
        %4836 = vmatprep.subr.bf16.mxu0 0
        %4837 = vmatpush2.bf16.msra.mxu0 0
        %4838 = vmatprep.subr.bf16.mxu0 0
        %4839 = vmatpush2.bf16.msra.mxu0 0
        %4840 = vmatprep.subr.bf16.mxu0 0
        %4841 = vmatpush2.bf16.msra.mxu0 0
        %4842 = vmatprep.mubr.bf16.mxu0 0
        %4843 = vmatmul.mubr.bf16.gmra.mxu0 %v3317
        %v4844 = vpop.f32.mrf.mxu0
        %v4845 = vadd.f32 0.0, %v4844
        %v4846 = vpop.f32.mrf.mxu0
        %v4847 = vpop.f32.mrf.mxu0
        %v4848 = vadd.f32 0.0, %v4847
        %v4849 = vpop.f32.mrf.mxu0
        %4850 = vmatprep.mubr.bf16.mxu0 0
        %4851 = vmatmul.mubr.bf16.gmra.mxu0 %v3320
        %v4852 = vpop.f32.mrf.mxu0
        %v4853 = vadd.f32 0.0, %v4852
        %v4854 = vpop.f32.mrf.mxu0
        %v4855 = vpop.f32.mrf.mxu0
        %v4856 = vpop.f32.mrf.mxu0
        %4857 = vdwg.mxu0
        %v4858 = vadd.f32 %v4807, %v4845
        %v4859 = vadd.f32 %v4808, %v4848
        %v4860 = vadd.f32 %v4809, %v4853
        %4861 = vmatprep.subr.bf16.mxu0 0
        %4862 = vmatpush1.bf16.msra.mxu0 0
        %4863 = vmatprep.subr.bf16.mxu0 0
        %4864 = vmatpush1.bf16.msra.mxu0 0
        %4865 = vmatprep.subr.bf16.mxu0 0
        %4866 = vmatpush1.bf16.msra.mxu0 0
        %4867 = vmatprep.subr.bf16.mxu0 0
        %4868 = vmatpush1.bf16.msra.mxu0 0
        %4869 = vmatprep.subr.bf16.mxu0 0
        %4870 = vmatpush1.bf16.msra.mxu0 0
        %4871 = vmatprep.subr.bf16.mxu0 0
        %4872 = vmatpush1.bf16.msra.mxu0 0
        %4873 = vmatprep.subr.bf16.mxu0 0
        %4874 = vmatpush1.bf16.msra.mxu0 %v2987
        %4875 = vmatprep.subr.bf16.mxu0 0
        %4876 = vmatpush1.bf16.msra.mxu0 %v2986
        %4877 = vmatprep.subr.bf16.mxu0 0
        %4878 = vmatpush2.bf16.msra.mxu0 0
        %4879 = vmatprep.subr.bf16.mxu0 0
        %4880 = vmatpush2.bf16.msra.mxu0 0
        %4881 = vmatprep.subr.bf16.mxu0 0
        %4882 = vmatpush2.bf16.msra.mxu0 0
        %4883 = vmatprep.subr.bf16.mxu0 0
        %4884 = vmatpush2.bf16.msra.mxu0 0
        %4885 = vmatprep.subr.bf16.mxu0 0
        %4886 = vmatpush2.bf16.msra.mxu0 0
        %4887 = vmatprep.subr.bf16.mxu0 0
        %4888 = vmatpush2.bf16.msra.mxu0 0
        %4889 = vmatprep.subr.bf16.mxu0 0
        %4890 = vmatpush2.bf16.msra.mxu0 0
        %4891 = vmatprep.subr.bf16.mxu0 0
        %4892 = vmatpush2.bf16.msra.mxu0 0
        %4893 = vmatprep.mubr.bf16.mxu0 0
        %4894 = vmatmul.mubr.bf16.gmra.mxu0 %v3400
        %v4895 = vpop.f32.mrf.mxu0
        %v4896 = vadd.f32 0.0, %v4895
        %v4897 = vpop.f32.mrf.mxu0
        %v4898 = vpop.f32.mrf.mxu0
        %v4899 = vadd.f32 0.0, %v4898
        %v4900 = vpop.f32.mrf.mxu0
        %4901 = vmatprep.mubr.bf16.mxu0 0
        %4902 = vmatmul.mubr.bf16.gmra.mxu0 %v3403
        %v4903 = vpop.f32.mrf.mxu0
        %v4904 = vadd.f32 0.0, %v4903
        %v4905 = vpop.f32.mrf.mxu0
        %v4906 = vpop.f32.mrf.mxu0
        %v4907 = vpop.f32.mrf.mxu0
        %4908 = vdwg.mxu0
        %v4909 = vadd.f32 %v4858, %v4896
        %v4910 = vadd.f32 %v4859, %v4899
        %v4911 = vadd.f32 %v4860, %v4904
        %4912 = vmatprep.subr.bf16.mxu0 0
        %4913 = vmatpush1.bf16.msra.mxu0 0
        %4914 = vmatprep.subr.bf16.mxu0 0
        %4915 = vmatpush1.bf16.msra.mxu0 0
        %4916 = vmatprep.subr.bf16.mxu0 0
        %4917 = vmatpush1.bf16.msra.mxu0 0
        %4918 = vmatprep.subr.bf16.mxu0 0
        %4919 = vmatpush1.bf16.msra.mxu0 0
        %4920 = vmatprep.subr.bf16.mxu0 0
        %4921 = vmatpush1.bf16.msra.mxu0 0
        %4922 = vmatprep.subr.bf16.mxu0 0
        %4923 = vmatpush1.bf16.msra.mxu0 0
        %4924 = vmatprep.subr.bf16.mxu0 0
        %4925 = vmatpush1.bf16.msra.mxu0 %v3076
        %4926 = vmatprep.subr.bf16.mxu0 0
        %4927 = vmatpush1.bf16.msra.mxu0 %v3075
        %4928 = vmatprep.subr.bf16.mxu0 0
        %4929 = vmatpush2.bf16.msra.mxu0 0
        %4930 = vmatprep.subr.bf16.mxu0 0
        %4931 = vmatpush2.bf16.msra.mxu0 0
        %4932 = vmatprep.subr.bf16.mxu0 0
        %4933 = vmatpush2.bf16.msra.mxu0 0
        %4934 = vmatprep.subr.bf16.mxu0 0
        %4935 = vmatpush2.bf16.msra.mxu0 0
        %4936 = vmatprep.subr.bf16.mxu0 0
        %4937 = vmatpush2.bf16.msra.mxu0 0
        %4938 = vmatprep.subr.bf16.mxu0 0
        %4939 = vmatpush2.bf16.msra.mxu0 0
        %4940 = vmatprep.subr.bf16.mxu0 0
        %4941 = vmatpush2.bf16.msra.mxu0 0
        %4942 = vmatprep.subr.bf16.mxu0 0
        %4943 = vmatpush2.bf16.msra.mxu0 0
        %4944 = vmatprep.mubr.bf16.mxu0 0
        %4945 = vmatmul.mubr.bf16.gmra.mxu0 %v3489
        %v4946 = vpop.f32.mrf.mxu0
        %v4947 = vadd.f32 0.0, %v4946
        %v4948 = vpop.f32.mrf.mxu0
        %v4949 = vpop.f32.mrf.mxu0
        %v4950 = vadd.f32 0.0, %v4949
        %v4951 = vpop.f32.mrf.mxu0
        %4952 = vmatprep.mubr.bf16.mxu0 0
        %4953 = vmatmul.mubr.bf16.gmra.mxu0 %v3492
        %v4954 = vpop.f32.mrf.mxu0
        %v4955 = vadd.f32 0.0, %v4954
        %v4956 = vpop.f32.mrf.mxu0
        %v4957 = vpop.f32.mrf.mxu0
        %v4958 = vpop.f32.mrf.mxu0
        %4959 = vdwg.mxu0
        %v4960 = vadd.f32 %v4909, %v4947
        %v4961 = vadd.f32 %v4910, %v4950
        %v4962 = vadd.f32 %v4911, %v4955
        %4963 = vmatprep.subr.bf16.mxu0 0
        %4964 = vmatpush1.bf16.msra.mxu0 0
        %4965 = vmatprep.subr.bf16.mxu0 0
        %4966 = vmatpush1.bf16.msra.mxu0 0
        %4967 = vmatprep.subr.bf16.mxu0 0
        %4968 = vmatpush1.bf16.msra.mxu0 0
        %4969 = vmatprep.subr.bf16.mxu0 0
        %4970 = vmatpush1.bf16.msra.mxu0 0
        %4971 = vmatprep.subr.bf16.mxu0 0
        %4972 = vmatpush1.bf16.msra.mxu0 0
        %4973 = vmatprep.subr.bf16.mxu0 0
        %4974 = vmatpush1.bf16.msra.mxu0 0
        %4975 = vmatprep.subr.bf16.mxu0 0
        %4976 = vmatpush1.bf16.msra.mxu0 %v3155
        %4977 = vmatprep.subr.bf16.mxu0 0
        %4978 = vmatpush1.bf16.msra.mxu0 %v3154
        %4979 = vmatprep.subr.bf16.mxu0 0
        %4980 = vmatpush2.bf16.msra.mxu0 0
        %4981 = vmatprep.subr.bf16.mxu0 0
        %4982 = vmatpush2.bf16.msra.mxu0 0
        %4983 = vmatprep.subr.bf16.mxu0 0
        %4984 = vmatpush2.bf16.msra.mxu0 0
        %4985 = vmatprep.subr.bf16.mxu0 0
        %4986 = vmatpush2.bf16.msra.mxu0 0
        %4987 = vmatprep.subr.bf16.mxu0 0
        %4988 = vmatpush2.bf16.msra.mxu0 0
        %4989 = vmatprep.subr.bf16.mxu0 0
        %4990 = vmatpush2.bf16.msra.mxu0 0
        %4991 = vmatprep.subr.bf16.mxu0 0
        %4992 = vmatpush2.bf16.msra.mxu0 0
        %4993 = vmatprep.subr.bf16.mxu0 0
        %4994 = vmatpush2.bf16.msra.mxu0 0
        %4995 = vmatprep.mubr.bf16.mxu0 0
        %4996 = vmatmul.mubr.bf16.gmra.mxu0 %v3568
        %v4997 = vpop.f32.mrf.mxu0
        %v4998 = vadd.f32 0.0, %v4997
        %v4999 = vpop.f32.mrf.mxu0
        %v5000 = vpop.f32.mrf.mxu0
        %v5001 = vadd.f32 0.0, %v5000
        %v5002 = vpop.f32.mrf.mxu0
        %5003 = vmatprep.mubr.bf16.mxu0 0
        %5004 = vmatmul.mubr.bf16.gmra.mxu0 %v3571
        %v5005 = vpop.f32.mrf.mxu0
        %v5006 = vadd.f32 0.0, %v5005
        %v5007 = vpop.f32.mrf.mxu0
        %v5008 = vpop.f32.mrf.mxu0
        %v5009 = vpop.f32.mrf.mxu0
        %5010 = vdwg.mxu0
        %v5011 = vadd.f32 %v4960, %v4998
        %v5012 = vadd.f32 %v4961, %v5001
        %v5013 = vadd.f32 %v4962, %v5006
        %5014 = vmatprep.subr.bf16.mxu0 0
        %5015 = vmatpush1.bf16.msra.mxu0 0
        %5016 = vmatprep.subr.bf16.mxu0 0
        %5017 = vmatpush1.bf16.msra.mxu0 0
        %5018 = vmatprep.subr.bf16.mxu0 0
        %5019 = vmatpush1.bf16.msra.mxu0 0
        %5020 = vmatprep.subr.bf16.mxu0 0
        %5021 = vmatpush1.bf16.msra.mxu0 0
        %5022 = vmatprep.subr.bf16.mxu0 0
        %5023 = vmatpush1.bf16.msra.mxu0 0
        %5024 = vmatprep.subr.bf16.mxu0 0
        %5025 = vmatpush1.bf16.msra.mxu0 0
        %5026 = vmatprep.subr.bf16.mxu0 0
        %5027 = vmatpush1.bf16.msra.mxu0 %v3236
        %5028 = vmatprep.subr.bf16.mxu0 0
        %5029 = vmatpush1.bf16.msra.mxu0 %v3235
        %5030 = vmatprep.subr.bf16.mxu0 0
        %5031 = vmatpush2.bf16.msra.mxu0 0
        %5032 = vmatprep.subr.bf16.mxu0 0
        %5033 = vmatpush2.bf16.msra.mxu0 0
        %5034 = vmatprep.subr.bf16.mxu0 0
        %5035 = vmatpush2.bf16.msra.mxu0 0
        %5036 = vmatprep.subr.bf16.mxu0 0
        %5037 = vmatpush2.bf16.msra.mxu0 0
        %5038 = vmatprep.subr.bf16.mxu0 0
        %5039 = vmatpush2.bf16.msra.mxu0 0
        %5040 = vmatprep.subr.bf16.mxu0 0
        %5041 = vmatpush2.bf16.msra.mxu0 0
        %5042 = vmatprep.subr.bf16.mxu0 0
        %5043 = vmatpush2.bf16.msra.mxu0 0
        %5044 = vmatprep.subr.bf16.mxu0 0
        %5045 = vmatpush2.bf16.msra.mxu0 0
        %5046 = vmatprep.mubr.bf16.mxu0 0
        %5047 = vmatmul.mubr.bf16.gmra.mxu0 %v3649
        %v5048 = vpop.f32.mrf.mxu0
        %v5049 = vadd.f32 0.0, %v5048
        %v5050 = vpop.f32.mrf.mxu0
        %v5051 = vpop.f32.mrf.mxu0
        %v5052 = vadd.f32 0.0, %v5051
        %v5053 = vpop.f32.mrf.mxu0
        %5054 = vmatprep.mubr.bf16.mxu0 0
        %5055 = vmatmul.mubr.bf16.gmra.mxu0 %v3652
        %v5056 = vpop.f32.mrf.mxu0
        %v5057 = vadd.f32 0.0, %v5056
        %v5058 = vpop.f32.mrf.mxu0
        %v5059 = vpop.f32.mrf.mxu0
        %v5060 = vpop.f32.mrf.mxu0
        %5061 = vdwg.mxu0
        %v5062 = vadd.f32 %v5011, %v5049
        %v5063 = vadd.f32 %v5012, %v5052
        %v5064 = vadd.f32 %v5013, %v5057
        %5065 = vmatprep.subr.bf16.mxu0 0
        %5066 = vmatpush1.bf16.msra.mxu0 0
        %5067 = vmatprep.subr.bf16.mxu0 0
        %5068 = vmatpush1.bf16.msra.mxu0 0
        %5069 = vmatprep.subr.bf16.mxu0 0
        %5070 = vmatpush1.bf16.msra.mxu0 0
        %5071 = vmatprep.subr.bf16.mxu0 0
        %5072 = vmatpush1.bf16.msra.mxu0 0
        %5073 = vmatprep.subr.bf16.mxu0 0
        %5074 = vmatpush1.bf16.msra.mxu0 0
        %5075 = vmatprep.subr.bf16.mxu0 0
        %5076 = vmatpush1.bf16.msra.mxu0 0
        %5077 = vmatprep.subr.bf16.mxu0 0
        %5078 = vmatpush1.bf16.msra.mxu0 %v3313
        %5079 = vmatprep.subr.bf16.mxu0 0
        %5080 = vmatpush1.bf16.msra.mxu0 %v3312
        %5081 = vmatprep.subr.bf16.mxu0 0
        %5082 = vmatpush2.bf16.msra.mxu0 0
        %5083 = vmatprep.subr.bf16.mxu0 0
        %5084 = vmatpush2.bf16.msra.mxu0 0
        %5085 = vmatprep.subr.bf16.mxu0 0
        %5086 = vmatpush2.bf16.msra.mxu0 0
        %5087 = vmatprep.subr.bf16.mxu0 0
        %5088 = vmatpush2.bf16.msra.mxu0 0
        %5089 = vmatprep.subr.bf16.mxu0 0
        %5090 = vmatpush2.bf16.msra.mxu0 0
        %5091 = vmatprep.subr.bf16.mxu0 0
        %5092 = vmatpush2.bf16.msra.mxu0 0
        %5093 = vmatprep.subr.bf16.mxu0 0
        %5094 = vmatpush2.bf16.msra.mxu0 0
        %5095 = vmatprep.subr.bf16.mxu0 0
        %5096 = vmatpush2.bf16.msra.mxu0 0
        %5097 = vmatprep.mubr.bf16.mxu0 0
        %5098 = vmatmul.mubr.bf16.gmra.mxu0 %v3726
        %v5099 = vpop.f32.mrf.mxu0
        %v5100 = vadd.f32 0.0, %v5099
        %v5101 = vpop.f32.mrf.mxu0
        %v5102 = vpop.f32.mrf.mxu0
        %v5103 = vadd.f32 0.0, %v5102
        %v5104 = vpop.f32.mrf.mxu0
        %5105 = vmatprep.mubr.bf16.mxu0 0
        %5106 = vmatmul.mubr.bf16.gmra.mxu0 %v3729
        %v5107 = vpop.f32.mrf.mxu0
        %v5108 = vadd.f32 0.0, %v5107
        %v5109 = vpop.f32.mrf.mxu0
        %v5110 = vpop.f32.mrf.mxu0
        %v5111 = vpop.f32.mrf.mxu0
        %5112 = vdwg.mxu0
        %v5113 = vadd.f32 %v5062, %v5100
        %v5114 = vadd.f32 %v5063, %v5103
        %v5115 = vadd.f32 %v5064, %v5108
        %5116 = vmatprep.subr.bf16.mxu0 0
        %5117 = vmatpush1.bf16.msra.mxu0 0
        %5118 = vmatprep.subr.bf16.mxu0 0
        %5119 = vmatpush1.bf16.msra.mxu0 0
        %5120 = vmatprep.subr.bf16.mxu0 0
        %5121 = vmatpush1.bf16.msra.mxu0 0
        %5122 = vmatprep.subr.bf16.mxu0 0
        %5123 = vmatpush1.bf16.msra.mxu0 0
        %5124 = vmatprep.subr.bf16.mxu0 0
        %5125 = vmatpush1.bf16.msra.mxu0 0
        %5126 = vmatprep.subr.bf16.mxu0 0
        %5127 = vmatpush1.bf16.msra.mxu0 0
        %5128 = vmatprep.subr.bf16.mxu0 0
        %5129 = vmatpush1.bf16.msra.mxu0 %v3396
        %5130 = vmatprep.subr.bf16.mxu0 0
        %5131 = vmatpush1.bf16.msra.mxu0 %v3395
        %5132 = vmatprep.subr.bf16.mxu0 0
        %5133 = vmatpush2.bf16.msra.mxu0 0
        %5134 = vmatprep.subr.bf16.mxu0 0
        %5135 = vmatpush2.bf16.msra.mxu0 0
        %5136 = vmatprep.subr.bf16.mxu0 0
        %5137 = vmatpush2.bf16.msra.mxu0 0
        %5138 = vmatprep.subr.bf16.mxu0 0
        %5139 = vmatpush2.bf16.msra.mxu0 0
        %5140 = vmatprep.subr.bf16.mxu0 0
        %5141 = vmatpush2.bf16.msra.mxu0 0
        %5142 = vmatprep.subr.bf16.mxu0 0
        %5143 = vmatpush2.bf16.msra.mxu0 0
        %5144 = vmatprep.subr.bf16.mxu0 0
        %5145 = vmatpush2.bf16.msra.mxu0 0
        %5146 = vmatprep.subr.bf16.mxu0 0
        %5147 = vmatpush2.bf16.msra.mxu0 0
        %5148 = vmatprep.mubr.bf16.mxu0 0
        %5149 = vmatmul.mubr.bf16.gmra.mxu0 %v3809
        %v5150 = vpop.f32.mrf.mxu0
        %v5151 = vadd.f32 0.0, %v5150
        %v5152 = vpop.f32.mrf.mxu0
        %v5153 = vpop.f32.mrf.mxu0
        %v5154 = vadd.f32 0.0, %v5153
        %v5155 = vpop.f32.mrf.mxu0
        %5156 = vmatprep.mubr.bf16.mxu0 0
        %5157 = vmatmul.mubr.bf16.gmra.mxu0 %v3812
        %v5158 = vpop.f32.mrf.mxu0
        %v5159 = vadd.f32 0.0, %v5158
        %v5160 = vpop.f32.mrf.mxu0
        %v5161 = vpop.f32.mrf.mxu0
        %v5162 = vpop.f32.mrf.mxu0
        %5163 = vdwg.mxu0
        %v5164 = vadd.f32 %v5113, %v5151
        %v5165 = vadd.f32 %v5114, %v5154
        %v5166 = vadd.f32 %v5115, %v5159
        %5167 = vmatprep.subr.bf16.mxu0 0
        %5168 = vmatpush1.bf16.msra.mxu0 0
        %5169 = vmatprep.subr.bf16.mxu0 0
        %5170 = vmatpush1.bf16.msra.mxu0 0
        %5171 = vmatprep.subr.bf16.mxu0 0
        %5172 = vmatpush1.bf16.msra.mxu0 0
        %5173 = vmatprep.subr.bf16.mxu0 0
        %5174 = vmatpush1.bf16.msra.mxu0 0
        %5175 = vmatprep.subr.bf16.mxu0 0
        %5176 = vmatpush1.bf16.msra.mxu0 0
        %5177 = vmatprep.subr.bf16.mxu0 0
        %5178 = vmatpush1.bf16.msra.mxu0 0
        %5179 = vmatprep.subr.bf16.mxu0 0
        %5180 = vmatpush1.bf16.msra.mxu0 %v3485
        %5181 = vmatprep.subr.bf16.mxu0 0
        %5182 = vmatpush1.bf16.msra.mxu0 %v3484
        %5183 = vmatprep.subr.bf16.mxu0 0
        %5184 = vmatpush2.bf16.msra.mxu0 0
        %5185 = vmatprep.subr.bf16.mxu0 0
        %5186 = vmatpush2.bf16.msra.mxu0 0
        %5187 = vmatprep.subr.bf16.mxu0 0
        %5188 = vmatpush2.bf16.msra.mxu0 0
        %5189 = vmatprep.subr.bf16.mxu0 0
        %5190 = vmatpush2.bf16.msra.mxu0 0
        %5191 = vmatprep.subr.bf16.mxu0 0
        %5192 = vmatpush2.bf16.msra.mxu0 0
        %5193 = vmatprep.subr.bf16.mxu0 0
        %5194 = vmatpush2.bf16.msra.mxu0 0
        %5195 = vmatprep.subr.bf16.mxu0 0
        %5196 = vmatpush2.bf16.msra.mxu0 0
        %5197 = vmatprep.subr.bf16.mxu0 0
        %5198 = vmatpush2.bf16.msra.mxu0 0
        %5199 = vmatprep.mubr.bf16.mxu0 0
        %5200 = vmatmul.mubr.bf16.gmra.mxu0 %v3898
        %v5201 = vpop.f32.mrf.mxu0
        %v5202 = vadd.f32 0.0, %v5201
        %v5203 = vpop.f32.mrf.mxu0
        %v5204 = vpop.f32.mrf.mxu0
        %v5205 = vadd.f32 0.0, %v5204
        %v5206 = vpop.f32.mrf.mxu0
        %5207 = vmatprep.mubr.bf16.mxu0 0
        %5208 = vmatmul.mubr.bf16.gmra.mxu0 %v3901
        %v5209 = vpop.f32.mrf.mxu0
        %v5210 = vadd.f32 0.0, %v5209
        %v5211 = vpop.f32.mrf.mxu0
        %v5212 = vpop.f32.mrf.mxu0
        %v5213 = vpop.f32.mrf.mxu0
        %5214 = vdwg.mxu0
        %v5215 = vadd.f32 %v5164, %v5202
        %v5216 = vadd.f32 %v5165, %v5205
        %v5217 = vadd.f32 %v5166, %v5210
        %5218 = vmatprep.subr.bf16.mxu0 0
        %5219 = vmatpush1.bf16.msra.mxu0 0
        %5220 = vmatprep.subr.bf16.mxu0 0
        %5221 = vmatpush1.bf16.msra.mxu0 0
        %5222 = vmatprep.subr.bf16.mxu0 0
        %5223 = vmatpush1.bf16.msra.mxu0 0
        %5224 = vmatprep.subr.bf16.mxu0 0
        %5225 = vmatpush1.bf16.msra.mxu0 0
        %5226 = vmatprep.subr.bf16.mxu0 0
        %5227 = vmatpush1.bf16.msra.mxu0 0
        %5228 = vmatprep.subr.bf16.mxu0 0
        %5229 = vmatpush1.bf16.msra.mxu0 0
        %5230 = vmatprep.subr.bf16.mxu0 0
        %5231 = vmatpush1.bf16.msra.mxu0 %v3564
        %5232 = vmatprep.subr.bf16.mxu0 0
        %5233 = vmatpush1.bf16.msra.mxu0 %v3563
        %5234 = vmatprep.subr.bf16.mxu0 0
        %5235 = vmatpush2.bf16.msra.mxu0 0
        %5236 = vmatprep.subr.bf16.mxu0 0
        %5237 = vmatpush2.bf16.msra.mxu0 0
        %5238 = vmatprep.subr.bf16.mxu0 0
        %5239 = vmatpush2.bf16.msra.mxu0 0
        %5240 = vmatprep.subr.bf16.mxu0 0
        %5241 = vmatpush2.bf16.msra.mxu0 0
        %5242 = vmatprep.subr.bf16.mxu0 0
        %5243 = vmatpush2.bf16.msra.mxu0 0
        %5244 = vmatprep.subr.bf16.mxu0 0
        %5245 = vmatpush2.bf16.msra.mxu0 0
        %5246 = vmatprep.subr.bf16.mxu0 0
        %5247 = vmatpush2.bf16.msra.mxu0 0
        %5248 = vmatprep.subr.bf16.mxu0 0
        %5249 = vmatpush2.bf16.msra.mxu0 0
        %5250 = vmatprep.mubr.bf16.mxu0 0
        %5251 = vmatmul.mubr.bf16.gmra.mxu0 %v3977
        %v5252 = vpop.f32.mrf.mxu0
        %v5253 = vadd.f32 0.0, %v5252
        %v5254 = vpop.f32.mrf.mxu0
        %v5255 = vpop.f32.mrf.mxu0
        %v5256 = vadd.f32 0.0, %v5255
        %v5257 = vpop.f32.mrf.mxu0
        %5258 = vmatprep.mubr.bf16.mxu0 0
        %5259 = vmatmul.mubr.bf16.gmra.mxu0 %v3980
        %v5260 = vpop.f32.mrf.mxu0
        %v5261 = vadd.f32 0.0, %v5260
        %v5262 = vpop.f32.mrf.mxu0
        %v5263 = vpop.f32.mrf.mxu0
        %v5264 = vpop.f32.mrf.mxu0
        %5265 = vdwg.mxu0
        %v5266 = vadd.f32 %v5215, %v5253
        %v5267 = vadd.f32 %v5216, %v5256
        %v5268 = vadd.f32 %v5217, %v5261
        %5269 = vmatprep.subr.bf16.mxu0 0
        %5270 = vmatpush1.bf16.msra.mxu0 0
        %5271 = vmatprep.subr.bf16.mxu0 0
        %5272 = vmatpush1.bf16.msra.mxu0 0
        %5273 = vmatprep.subr.bf16.mxu0 0
        %5274 = vmatpush1.bf16.msra.mxu0 0
        %5275 = vmatprep.subr.bf16.mxu0 0
        %5276 = vmatpush1.bf16.msra.mxu0 0
        %5277 = vmatprep.subr.bf16.mxu0 0
        %5278 = vmatpush1.bf16.msra.mxu0 0
        %5279 = vmatprep.subr.bf16.mxu0 0
        %5280 = vmatpush1.bf16.msra.mxu0 0
        %5281 = vmatprep.subr.bf16.mxu0 0
        %5282 = vmatpush1.bf16.msra.mxu0 %v3645
        %5283 = vmatprep.subr.bf16.mxu0 0
        %5284 = vmatpush1.bf16.msra.mxu0 %v3644
        %5285 = vmatprep.subr.bf16.mxu0 0
        %5286 = vmatpush2.bf16.msra.mxu0 0
        %5287 = vmatprep.subr.bf16.mxu0 0
        %5288 = vmatpush2.bf16.msra.mxu0 0
        %5289 = vmatprep.subr.bf16.mxu0 0
        %5290 = vmatpush2.bf16.msra.mxu0 0
        %5291 = vmatprep.subr.bf16.mxu0 0
        %5292 = vmatpush2.bf16.msra.mxu0 0
        %5293 = vmatprep.subr.bf16.mxu0 0
        %5294 = vmatpush2.bf16.msra.mxu0 0
        %5295 = vmatprep.subr.bf16.mxu0 0
        %5296 = vmatpush2.bf16.msra.mxu0 0
        %5297 = vmatprep.subr.bf16.mxu0 0
        %5298 = vmatpush2.bf16.msra.mxu0 0
        %5299 = vmatprep.subr.bf16.mxu0 0
        %5300 = vmatpush2.bf16.msra.mxu0 0
        %5301 = vmatprep.mubr.bf16.mxu0 0
        %5302 = vmatmul.mubr.bf16.gmra.mxu0 %v4058
        %v5303 = vpop.f32.mrf.mxu0
        %v5304 = vadd.f32 0.0, %v5303
        %v5305 = vpop.f32.mrf.mxu0
        %v5306 = vpop.f32.mrf.mxu0
        %v5307 = vadd.f32 0.0, %v5306
        %v5308 = vpop.f32.mrf.mxu0
        %5309 = vmatprep.mubr.bf16.mxu0 0
        %5310 = vmatmul.mubr.bf16.gmra.mxu0 %v4061
        %v5311 = vpop.f32.mrf.mxu0
        %v5312 = vadd.f32 0.0, %v5311
        %v5313 = vpop.f32.mrf.mxu0
        %v5314 = vpop.f32.mrf.mxu0
        %v5315 = vpop.f32.mrf.mxu0
        %5316 = vdwg.mxu0
        %v5317 = vadd.f32 %v5266, %v5304
        %v5318 = vadd.f32 %v5267, %v5307
        %v5319 = vadd.f32 %v5268, %v5312
        %5320 = vmatprep.subr.bf16.mxu0 0
        %5321 = vmatpush1.bf16.msra.mxu0 0
        %5322 = vmatprep.subr.bf16.mxu0 0
        %5323 = vmatpush1.bf16.msra.mxu0 0
        %5324 = vmatprep.subr.bf16.mxu0 0
        %5325 = vmatpush1.bf16.msra.mxu0 0
        %5326 = vmatprep.subr.bf16.mxu0 0
        %5327 = vmatpush1.bf16.msra.mxu0 0
        %5328 = vmatprep.subr.bf16.mxu0 0
        %5329 = vmatpush1.bf16.msra.mxu0 0
        %5330 = vmatprep.subr.bf16.mxu0 0
        %5331 = vmatpush1.bf16.msra.mxu0 0
        %5332 = vmatprep.subr.bf16.mxu0 0
        %5333 = vmatpush1.bf16.msra.mxu0 %v3722
        %5334 = vmatprep.subr.bf16.mxu0 0
        %5335 = vmatpush1.bf16.msra.mxu0 %v3721
        %5336 = vmatprep.subr.bf16.mxu0 0
        %5337 = vmatpush2.bf16.msra.mxu0 0
        %5338 = vmatprep.subr.bf16.mxu0 0
        %5339 = vmatpush2.bf16.msra.mxu0 0
        %5340 = vmatprep.subr.bf16.mxu0 0
        %5341 = vmatpush2.bf16.msra.mxu0 0
        %5342 = vmatprep.subr.bf16.mxu0 0
        %5343 = vmatpush2.bf16.msra.mxu0 0
        %5344 = vmatprep.subr.bf16.mxu0 0
        %5345 = vmatpush2.bf16.msra.mxu0 0
        %5346 = vmatprep.subr.bf16.mxu0 0
        %5347 = vmatpush2.bf16.msra.mxu0 0
        %5348 = vmatprep.subr.bf16.mxu0 0
        %5349 = vmatpush2.bf16.msra.mxu0 0
        %5350 = vmatprep.subr.bf16.mxu0 0
        %5351 = vmatpush2.bf16.msra.mxu0 0
        %5352 = vmatprep.mubr.bf16.mxu0 0
        %5353 = vmatmul.mubr.bf16.gmra.mxu0 %v4135
        %v5354 = vpop.f32.mrf.mxu0
        %v5355 = vadd.f32 0.0, %v5354
        %v5356 = vpop.f32.mrf.mxu0
        %v5357 = vpop.f32.mrf.mxu0
        %v5358 = vadd.f32 0.0, %v5357
        %v5359 = vpop.f32.mrf.mxu0
        %5360 = vmatprep.mubr.bf16.mxu0 0
        %5361 = vmatmul.mubr.bf16.gmra.mxu0 %v4138
        %v5362 = vpop.f32.mrf.mxu0
        %v5363 = vadd.f32 0.0, %v5362
        %v5364 = vpop.f32.mrf.mxu0
        %v5365 = vpop.f32.mrf.mxu0
        %v5366 = vpop.f32.mrf.mxu0
        %5367 = vdwg.mxu0
        %v5368 = vadd.f32 %v5317, %v5355
        %v5369 = vadd.f32 %v5318, %v5358
        %v5370 = vadd.f32 %v5319, %v5363
        %5371 = vmatprep.subr.bf16.mxu0 0
        %5372 = vmatpush1.bf16.msra.mxu0 0
        %5373 = vmatprep.subr.bf16.mxu0 0
        %5374 = vmatpush1.bf16.msra.mxu0 0
        %5375 = vmatprep.subr.bf16.mxu0 0
        %5376 = vmatpush1.bf16.msra.mxu0 0
        %5377 = vmatprep.subr.bf16.mxu0 0
        %5378 = vmatpush1.bf16.msra.mxu0 0
        %5379 = vmatprep.subr.bf16.mxu0 0
        %5380 = vmatpush1.bf16.msra.mxu0 0
        %5381 = vmatprep.subr.bf16.mxu0 0
        %5382 = vmatpush1.bf16.msra.mxu0 0
        %5383 = vmatprep.subr.bf16.mxu0 0
        %5384 = vmatpush1.bf16.msra.mxu0 %v3805
        %5385 = vmatprep.subr.bf16.mxu0 0
        %5386 = vmatpush1.bf16.msra.mxu0 %v3804
        %5387 = vmatprep.subr.bf16.mxu0 0
        %5388 = vmatpush2.bf16.msra.mxu0 0
        %5389 = vmatprep.subr.bf16.mxu0 0
        %5390 = vmatpush2.bf16.msra.mxu0 0
        %5391 = vmatprep.subr.bf16.mxu0 0
        %5392 = vmatpush2.bf16.msra.mxu0 0
        %5393 = vmatprep.subr.bf16.mxu0 0
        %5394 = vmatpush2.bf16.msra.mxu0 0
        %5395 = vmatprep.subr.bf16.mxu0 0
        %5396 = vmatpush2.bf16.msra.mxu0 0
        %5397 = vmatprep.subr.bf16.mxu0 0
        %5398 = vmatpush2.bf16.msra.mxu0 0
        %5399 = vmatprep.subr.bf16.mxu0 0
        %5400 = vmatpush2.bf16.msra.mxu0 0
        %5401 = vmatprep.subr.bf16.mxu0 0
        %5402 = vmatpush2.bf16.msra.mxu0 0
        %5403 = vmatprep.mubr.bf16.mxu0 0
        %5404 = vmatmul.mubr.bf16.gmra.mxu0 %v4218
        %v5405 = vpop.f32.mrf.mxu0
        %v5406 = vadd.f32 0.0, %v5405
        %v5407 = vpop.f32.mrf.mxu0
        %v5408 = vpop.f32.mrf.mxu0
        %v5409 = vadd.f32 0.0, %v5408
        %v5410 = vpop.f32.mrf.mxu0
        %5411 = vmatprep.mubr.bf16.mxu0 0
        %5412 = vmatmul.mubr.bf16.gmra.mxu0 %v4221
        %v5413 = vpop.f32.mrf.mxu0
        %v5414 = vadd.f32 0.0, %v5413
        %v5415 = vpop.f32.mrf.mxu0
        %v5416 = vpop.f32.mrf.mxu0
        %v5417 = vpop.f32.mrf.mxu0
        %5418 = vdwg.mxu0
        %v5419 = vadd.f32 %v5368, %v5406
        %v5420 = vadd.f32 %v5369, %v5409
        %v5421 = vadd.f32 %v5370, %v5414
        %5422 = vmatprep.subr.bf16.mxu0 0
        %5423 = vmatpush1.bf16.msra.mxu0 0
        %5424 = vmatprep.subr.bf16.mxu0 0
        %5425 = vmatpush1.bf16.msra.mxu0 0
        %5426 = vmatprep.subr.bf16.mxu0 0
        %5427 = vmatpush1.bf16.msra.mxu0 0
        %5428 = vmatprep.subr.bf16.mxu0 0
        %5429 = vmatpush1.bf16.msra.mxu0 0
        %5430 = vmatprep.subr.bf16.mxu0 0
        %5431 = vmatpush1.bf16.msra.mxu0 0
        %5432 = vmatprep.subr.bf16.mxu0 0
        %5433 = vmatpush1.bf16.msra.mxu0 0
        %5434 = vmatprep.subr.bf16.mxu0 0
        %5435 = vmatpush1.bf16.msra.mxu0 %v3894
        %5436 = vmatprep.subr.bf16.mxu0 0
        %5437 = vmatpush1.bf16.msra.mxu0 %v3893
        %5438 = vmatprep.subr.bf16.mxu0 0
        %5439 = vmatpush2.bf16.msra.mxu0 0
        %5440 = vmatprep.subr.bf16.mxu0 0
        %5441 = vmatpush2.bf16.msra.mxu0 0
        %5442 = vmatprep.subr.bf16.mxu0 0
        %5443 = vmatpush2.bf16.msra.mxu0 0
        %5444 = vmatprep.subr.bf16.mxu0 0
        %5445 = vmatpush2.bf16.msra.mxu0 0
        %5446 = vmatprep.subr.bf16.mxu0 0
        %5447 = vmatpush2.bf16.msra.mxu0 0
        %5448 = vmatprep.subr.bf16.mxu0 0
        %5449 = vmatpush2.bf16.msra.mxu0 0
        %5450 = vmatprep.subr.bf16.mxu0 0
        %5451 = vmatpush2.bf16.msra.mxu0 0
        %5452 = vmatprep.subr.bf16.mxu0 0
        %5453 = vmatpush2.bf16.msra.mxu0 0
        %5454 = vmatprep.mubr.bf16.mxu0 0
        %5455 = vmatmul.mubr.bf16.gmra.mxu0 %v4307
        %v5456 = vpop.f32.mrf.mxu0
        %v5457 = vadd.f32 0.0, %v5456
        %v5458 = vpop.f32.mrf.mxu0
        %v5459 = vpop.f32.mrf.mxu0
        %v5460 = vadd.f32 0.0, %v5459
        %v5461 = vpop.f32.mrf.mxu0
        %5462 = vmatprep.mubr.bf16.mxu0 0
        %5463 = vmatmul.mubr.bf16.gmra.mxu0 %v4310
        %v5464 = vpop.f32.mrf.mxu0
        %v5465 = vadd.f32 0.0, %v5464
        %v5466 = vpop.f32.mrf.mxu0
        %v5467 = vpop.f32.mrf.mxu0
        %v5468 = vpop.f32.mrf.mxu0
        %5469 = vdwg.mxu0
        %v5470 = vadd.f32 %v5419, %v5457
        %v5471 = vadd.f32 %v5420, %v5460
        %v5472 = vadd.f32 %v5421, %v5465
        %5473 = vmatprep.subr.bf16.mxu0 0
        %5474 = vmatpush1.bf16.msra.mxu0 0
        %5475 = vmatprep.subr.bf16.mxu0 0
        %5476 = vmatpush1.bf16.msra.mxu0 0
        %5477 = vmatprep.subr.bf16.mxu0 0
        %5478 = vmatpush1.bf16.msra.mxu0 0
        %5479 = vmatprep.subr.bf16.mxu0 0
        %5480 = vmatpush1.bf16.msra.mxu0 0
        %5481 = vmatprep.subr.bf16.mxu0 0
        %5482 = vmatpush1.bf16.msra.mxu0 0
        %5483 = vmatprep.subr.bf16.mxu0 0
        %5484 = vmatpush1.bf16.msra.mxu0 0
        %5485 = vmatprep.subr.bf16.mxu0 0
        %5486 = vmatpush1.bf16.msra.mxu0 %v3973
        %5487 = vmatprep.subr.bf16.mxu0 0
        %5488 = vmatpush1.bf16.msra.mxu0 %v3972
        %5489 = vmatprep.subr.bf16.mxu0 0
        %5490 = vmatpush2.bf16.msra.mxu0 0
        %5491 = vmatprep.subr.bf16.mxu0 0
        %5492 = vmatpush2.bf16.msra.mxu0 0
        %5493 = vmatprep.subr.bf16.mxu0 0
        %5494 = vmatpush2.bf16.msra.mxu0 0
        %5495 = vmatprep.subr.bf16.mxu0 0
        %5496 = vmatpush2.bf16.msra.mxu0 0
        %5497 = vmatprep.subr.bf16.mxu0 0
        %5498 = vmatpush2.bf16.msra.mxu0 0
        %5499 = vmatprep.subr.bf16.mxu0 0
        %5500 = vmatpush2.bf16.msra.mxu0 0
        %5501 = vmatprep.subr.bf16.mxu0 0
        %5502 = vmatpush2.bf16.msra.mxu0 0
        %5503 = vmatprep.subr.bf16.mxu0 0
        %5504 = vmatpush2.bf16.msra.mxu0 0
        %5505 = vmatprep.mubr.bf16.mxu0 0
        %5506 = vmatmul.mubr.bf16.gmra.mxu0 %v4386
        %v5507 = vpop.f32.mrf.mxu0
        %v5508 = vadd.f32 0.0, %v5507
        %v5509 = vpop.f32.mrf.mxu0
        %v5510 = vpop.f32.mrf.mxu0
        %v5511 = vadd.f32 0.0, %v5510
        %v5512 = vpop.f32.mrf.mxu0
        %5513 = vmatprep.mubr.bf16.mxu0 0
        %5514 = vmatmul.mubr.bf16.gmra.mxu0 %v4389
        %v5515 = vpop.f32.mrf.mxu0
        %v5516 = vadd.f32 0.0, %v5515
        %v5517 = vpop.f32.mrf.mxu0
        %v5518 = vpop.f32.mrf.mxu0
        %v5519 = vpop.f32.mrf.mxu0
        %5520 = vdwg.mxu0
        %v5521 = vadd.f32 %v5470, %v5508
        %v5522 = vadd.f32 %v5471, %v5511
        %v5523 = vadd.f32 %v5472, %v5516
        %5524 = vmatprep.subr.bf16.mxu0 0
        %5525 = vmatpush1.bf16.msra.mxu0 0
        %5526 = vmatprep.subr.bf16.mxu0 0
        %5527 = vmatpush1.bf16.msra.mxu0 0
        %5528 = vmatprep.subr.bf16.mxu0 0
        %5529 = vmatpush1.bf16.msra.mxu0 0
        %5530 = vmatprep.subr.bf16.mxu0 0
        %5531 = vmatpush1.bf16.msra.mxu0 0
        %5532 = vmatprep.subr.bf16.mxu0 0
        %5533 = vmatpush1.bf16.msra.mxu0 0
        %5534 = vmatprep.subr.bf16.mxu0 0
        %5535 = vmatpush1.bf16.msra.mxu0 0
        %5536 = vmatprep.subr.bf16.mxu0 0
        %5537 = vmatpush1.bf16.msra.mxu0 %v4054
        %5538 = vmatprep.subr.bf16.mxu0 0
        %5539 = vmatpush1.bf16.msra.mxu0 %v4053
        %5540 = vmatprep.subr.bf16.mxu0 0
        %5541 = vmatpush2.bf16.msra.mxu0 0
        %5542 = vmatprep.subr.bf16.mxu0 0
        %5543 = vmatpush2.bf16.msra.mxu0 0
        %5544 = vmatprep.subr.bf16.mxu0 0
        %5545 = vmatpush2.bf16.msra.mxu0 0
        %5546 = vmatprep.subr.bf16.mxu0 0
        %5547 = vmatpush2.bf16.msra.mxu0 0
        %5548 = vmatprep.subr.bf16.mxu0 0
        %5549 = vmatpush2.bf16.msra.mxu0 0
        %5550 = vmatprep.subr.bf16.mxu0 0
        %5551 = vmatpush2.bf16.msra.mxu0 0
        %5552 = vmatprep.subr.bf16.mxu0 0
        %5553 = vmatpush2.bf16.msra.mxu0 0
        %5554 = vmatprep.subr.bf16.mxu0 0
        %5555 = vmatpush2.bf16.msra.mxu0 0
        %5556 = vmatprep.mubr.bf16.mxu0 0
        %5557 = vmatmul.mubr.bf16.gmra.mxu0 %v4467
        %v5558 = vpop.f32.mrf.mxu0
        %v5559 = vadd.f32 0.0, %v5558
        %v5560 = vpop.f32.mrf.mxu0
        %v5561 = vpop.f32.mrf.mxu0
        %v5562 = vadd.f32 0.0, %v5561
        %v5563 = vpop.f32.mrf.mxu0
        %5564 = vmatprep.mubr.bf16.mxu0 0
        %5565 = vmatmul.mubr.bf16.gmra.mxu0 %v4470
        %v5566 = vpop.f32.mrf.mxu0
        %v5567 = vadd.f32 0.0, %v5566
        %v5568 = vpop.f32.mrf.mxu0
        %v5569 = vpop.f32.mrf.mxu0
        %v5570 = vpop.f32.mrf.mxu0
        %5571 = vdwg.mxu0
        %v5572 = vadd.f32 %v5521, %v5559
        %v5573 = vadd.f32 %v5522, %v5562
        %v5574 = vadd.f32 %v5523, %v5567
        %5575 = vmatprep.subr.bf16.mxu0 0
        %5576 = vmatpush1.bf16.msra.mxu0 0
        %5577 = vmatprep.subr.bf16.mxu0 0
        %5578 = vmatpush1.bf16.msra.mxu0 0
        %5579 = vmatprep.subr.bf16.mxu0 0
        %5580 = vmatpush1.bf16.msra.mxu0 0
        %5581 = vmatprep.subr.bf16.mxu0 0
        %5582 = vmatpush1.bf16.msra.mxu0 0
        %5583 = vmatprep.subr.bf16.mxu0 0
        %5584 = vmatpush1.bf16.msra.mxu0 0
        %5585 = vmatprep.subr.bf16.mxu0 0
        %5586 = vmatpush1.bf16.msra.mxu0 0
        %5587 = vmatprep.subr.bf16.mxu0 0
        %5588 = vmatpush1.bf16.msra.mxu0 %v4131
        %5589 = vmatprep.subr.bf16.mxu0 0
        %5590 = vmatpush1.bf16.msra.mxu0 %v4130
        %5591 = vmatprep.subr.bf16.mxu0 0
        %5592 = vmatpush2.bf16.msra.mxu0 0
        %5593 = vmatprep.subr.bf16.mxu0 0
        %5594 = vmatpush2.bf16.msra.mxu0 0
        %5595 = vmatprep.subr.bf16.mxu0 0
        %5596 = vmatpush2.bf16.msra.mxu0 0
        %5597 = vmatprep.subr.bf16.mxu0 0
        %5598 = vmatpush2.bf16.msra.mxu0 0
        %5599 = vmatprep.subr.bf16.mxu0 0
        %5600 = vmatpush2.bf16.msra.mxu0 0
        %5601 = vmatprep.subr.bf16.mxu0 0
        %5602 = vmatpush2.bf16.msra.mxu0 0
        %5603 = vmatprep.subr.bf16.mxu0 0
        %5604 = vmatpush2.bf16.msra.mxu0 0
        %5605 = vmatprep.subr.bf16.mxu0 0
        %5606 = vmatpush2.bf16.msra.mxu0 0
        %5607 = vmatprep.mubr.bf16.mxu0 0
        %5608 = vmatmul.mubr.bf16.gmra.mxu0 %v4544
        %v5609 = vpop.f32.mrf.mxu0
        %v5610 = vadd.f32 0.0, %v5609
        %v5611 = vpop.f32.mrf.mxu0
        %v5612 = vpop.f32.mrf.mxu0
        %v5613 = vadd.f32 0.0, %v5612
        %v5614 = vpop.f32.mrf.mxu0
        %5615 = vmatprep.mubr.bf16.mxu0 0
        %5616 = vmatmul.mubr.bf16.gmra.mxu0 %v4547
        %v5617 = vpop.f32.mrf.mxu0
        %v5618 = vadd.f32 0.0, %v5617
        %v5619 = vpop.f32.mrf.mxu0
        %v5620 = vpop.f32.mrf.mxu0
        %v5621 = vpop.f32.mrf.mxu0
        %5622 = vdwg.mxu0
        %v5623 = vadd.f32 %v5572, %v5610
        %v5624 = vadd.f32 %v5573, %v5613
        %v5625 = vadd.f32 %v5574, %v5618
        %s5626 = sadd.s32 %s2558, 5
        %s5627 = smul.u32 %s5626, 24
        %s5628 = scalar_lea.vmem [#allocation2], %s5627
        %v5629 = vld [vmem:[%s5628] sm:$0xff]
        %v5630 = vld [vmem:[%s5628 + $0x8] sm:$0xff]
        %v5631 = vld [vmem:[%s5628 + $0x10] sm:$0xff]
        %v5632 = vld [vmem:[%s5628 + $0x18] sm:$0xff]
        %v5633 = vpack.c.bf16 %v5630, %v5629
        %v5634 = vpack.c.bf16 %v5631, %v5631
        %v5636 = vsel %vm330, %v5633, 0
        %v5639 = vsel %vm330, %v5634, 0
        %5641 = vmatprep.subr.bf16.mxu0 0
        %5642 = vmatpush1.bf16.msra.mxu0 0
        %5643 = vmatprep.subr.bf16.mxu0 0
        %5644 = vmatpush1.bf16.msra.mxu0 0
        %5645 = vmatprep.subr.bf16.mxu0 0
        %5646 = vmatpush1.bf16.msra.mxu0 0
        %5647 = vmatprep.subr.bf16.mxu0 0
        %5648 = vmatpush1.bf16.msra.mxu0 0
        %5649 = vmatprep.subr.bf16.mxu0 0
        %5650 = vmatpush1.bf16.msra.mxu0 0
        %5651 = vmatprep.subr.bf16.mxu0 0
        %5652 = vmatpush1.bf16.msra.mxu0 0
        %5653 = vmatprep.subr.bf16.mxu0 0
        %5654 = vmatpush1.bf16.msra.mxu0 %v4214
        %5655 = vmatprep.subr.bf16.mxu0 0
        %5656 = vmatpush1.bf16.msra.mxu0 %v4213
        %5657 = vmatprep.subr.bf16.mxu0 0
        %5658 = vmatpush2.bf16.msra.mxu0 0
        %5659 = vmatprep.subr.bf16.mxu0 0
        %5660 = vmatpush2.bf16.msra.mxu0 0
        %5661 = vmatprep.subr.bf16.mxu0 0
        %5662 = vmatpush2.bf16.msra.mxu0 0
        %5663 = vmatprep.subr.bf16.mxu0 0
        %5664 = vmatpush2.bf16.msra.mxu0 0
        %5665 = vmatprep.subr.bf16.mxu0 0
        %5666 = vmatpush2.bf16.msra.mxu0 0
        %5667 = vmatprep.subr.bf16.mxu0 0
        %5668 = vmatpush2.bf16.msra.mxu0 0
        %5669 = vmatprep.subr.bf16.mxu0 0
        %5670 = vmatpush2.bf16.msra.mxu0 0
        %5671 = vmatprep.subr.bf16.mxu0 0
        %5672 = vmatpush2.bf16.msra.mxu0 0
        %5673 = vmatprep.mubr.bf16.mxu0 0
        %5674 = vmatmul.mubr.bf16.gmra.mxu0 %v5636
        %v5675 = vpop.f32.mrf.mxu0
        %v5676 = vadd.f32 0.0, %v5675
        %v5677 = vpop.f32.mrf.mxu0
        %v5678 = vpop.f32.mrf.mxu0
        %v5679 = vadd.f32 0.0, %v5678
        %v5680 = vpop.f32.mrf.mxu0
        %5681 = vmatprep.mubr.bf16.mxu0 0
        %5682 = vmatmul.mubr.bf16.gmra.mxu0 %v5639
        %v5683 = vpop.f32.mrf.mxu0
        %v5684 = vadd.f32 0.0, %v5683
        %v5685 = vpop.f32.mrf.mxu0
        %v5686 = vpop.f32.mrf.mxu0
        %v5687 = vpop.f32.mrf.mxu0
        %5688 = vdwg.mxu0
        %v5689 = vadd.f32 %v5623, %v5676
        %v5690 = vadd.f32 %v5624, %v5679
        %v5691 = vadd.f32 %v5625, %v5684
        %v5692 = vpack.c.bf16 %v5632, %v5631
        %v5693 = vshrl.u32 %v5633, 16
        %v5695 = vshll.u32 %v5633, 16
        %v5697 = vrot.slane %v5695, 1
        %v5698 = vor.u32 %v5693, %v5697
        %v5700 = vshll.u32 %v5692, 16
        %v5702 = vrot.slane %v5700, 1
        %v5703 = vsel %vm2577, %v5698, %v5702
        %v5704 = vshrl.u32 %v5692, 16
        %v5706 = vor.u32 %v5704, %v5702
        %v5708 = vsel %vm330, %v5703, 0
        %v5711 = vsel %vm330, %v5706, 0
        %5713 = vmatprep.subr.bf16.mxu0 0
        %5714 = vmatpush1.bf16.msra.mxu0 0
        %5715 = vmatprep.subr.bf16.mxu0 0
        %5716 = vmatpush1.bf16.msra.mxu0 0
        %5717 = vmatprep.subr.bf16.mxu0 0
        %5718 = vmatpush1.bf16.msra.mxu0 0
        %5719 = vmatprep.subr.bf16.mxu0 0
        %5720 = vmatpush1.bf16.msra.mxu0 0
        %5721 = vmatprep.subr.bf16.mxu0 0
        %5722 = vmatpush1.bf16.msra.mxu0 0
        %5723 = vmatprep.subr.bf16.mxu0 0
        %5724 = vmatpush1.bf16.msra.mxu0 0
        %5725 = vmatprep.subr.bf16.mxu0 0
        %5726 = vmatpush1.bf16.msra.mxu0 %v4303
        %5727 = vmatprep.subr.bf16.mxu0 0
        %5728 = vmatpush1.bf16.msra.mxu0 %v4302
        %5729 = vmatprep.subr.bf16.mxu0 0
        %5730 = vmatpush2.bf16.msra.mxu0 0
        %5731 = vmatprep.subr.bf16.mxu0 0
        %5732 = vmatpush2.bf16.msra.mxu0 0
        %5733 = vmatprep.subr.bf16.mxu0 0
        %5734 = vmatpush2.bf16.msra.mxu0 0
        %5735 = vmatprep.subr.bf16.mxu0 0
        %5736 = vmatpush2.bf16.msra.mxu0 0
        %5737 = vmatprep.subr.bf16.mxu0 0
        %5738 = vmatpush2.bf16.msra.mxu0 0
        %5739 = vmatprep.subr.bf16.mxu0 0
        %5740 = vmatpush2.bf16.msra.mxu0 0
        %5741 = vmatprep.subr.bf16.mxu0 0
        %5742 = vmatpush2.bf16.msra.mxu0 0
        %5743 = vmatprep.subr.bf16.mxu0 0
        %5744 = vmatpush2.bf16.msra.mxu0 0
        %5745 = vmatprep.mubr.bf16.mxu0 0
        %5746 = vmatmul.mubr.bf16.gmra.mxu0 %v5708
        %v5747 = vpop.f32.mrf.mxu0
        %v5748 = vadd.f32 0.0, %v5747
        %v5749 = vpop.f32.mrf.mxu0
        %v5750 = vpop.f32.mrf.mxu0
        %v5751 = vadd.f32 0.0, %v5750
        %v5752 = vpop.f32.mrf.mxu0
        %5753 = vmatprep.mubr.bf16.mxu0 0
        %5754 = vmatmul.mubr.bf16.gmra.mxu0 %v5711
        %v5755 = vpop.f32.mrf.mxu0
        %v5756 = vadd.f32 0.0, %v5755
        %v5757 = vpop.f32.mrf.mxu0
        %v5758 = vpop.f32.mrf.mxu0
        %v5759 = vpop.f32.mrf.mxu0
        %5760 = vdwg.mxu0
        %v5761 = vadd.f32 %v5689, %v5748
        %v5762 = vadd.f32 %v5690, %v5751
        %v5763 = vadd.f32 %v5691, %v5756
        %v5766 = vrot.slane %v5633, 1
        %v5767 = vrot.slane %v5692, 1
        %v5768 = vsel %vm2731, %v5766, %v5767
        %v5770 = vsel %vm330, %v5768, 0
        %v5773 = vsel %vm330, %v5767, 0
        %5775 = vmatprep.subr.bf16.mxu0 0
        %5776 = vmatpush1.bf16.msra.mxu0 0
        %5777 = vmatprep.subr.bf16.mxu0 0
        %5778 = vmatpush1.bf16.msra.mxu0 0
        %5779 = vmatprep.subr.bf16.mxu0 0
        %5780 = vmatpush1.bf16.msra.mxu0 0
        %5781 = vmatprep.subr.bf16.mxu0 0
        %5782 = vmatpush1.bf16.msra.mxu0 0
        %5783 = vmatprep.subr.bf16.mxu0 0
        %5784 = vmatpush1.bf16.msra.mxu0 0
        %5785 = vmatprep.subr.bf16.mxu0 0
        %5786 = vmatpush1.bf16.msra.mxu0 0
        %5787 = vmatprep.subr.bf16.mxu0 0
        %5788 = vmatpush1.bf16.msra.mxu0 %v4382
        %5789 = vmatprep.subr.bf16.mxu0 0
        %5790 = vmatpush1.bf16.msra.mxu0 %v4381
        %5791 = vmatprep.subr.bf16.mxu0 0
        %5792 = vmatpush2.bf16.msra.mxu0 0
        %5793 = vmatprep.subr.bf16.mxu0 0
        %5794 = vmatpush2.bf16.msra.mxu0 0
        %5795 = vmatprep.subr.bf16.mxu0 0
        %5796 = vmatpush2.bf16.msra.mxu0 0
        %5797 = vmatprep.subr.bf16.mxu0 0
        %5798 = vmatpush2.bf16.msra.mxu0 0
        %5799 = vmatprep.subr.bf16.mxu0 0
        %5800 = vmatpush2.bf16.msra.mxu0 0
        %5801 = vmatprep.subr.bf16.mxu0 0
        %5802 = vmatpush2.bf16.msra.mxu0 0
        %5803 = vmatprep.subr.bf16.mxu0 0
        %5804 = vmatpush2.bf16.msra.mxu0 0
        %5805 = vmatprep.subr.bf16.mxu0 0
        %5806 = vmatpush2.bf16.msra.mxu0 0
        %5807 = vmatprep.mubr.bf16.mxu0 0
        %5808 = vmatmul.mubr.bf16.gmra.mxu0 %v5770
        %v5809 = vpop.f32.mrf.mxu0
        %v5810 = vadd.f32 0.0, %v5809
        %v5811 = vpop.f32.mrf.mxu0
        %v5812 = vpop.f32.mrf.mxu0
        %v5813 = vadd.f32 0.0, %v5812
        %v5814 = vpop.f32.mrf.mxu0
        %5815 = vmatprep.mubr.bf16.mxu0 0
        %5816 = vmatmul.mubr.bf16.gmra.mxu0 %v5773
        %v5817 = vpop.f32.mrf.mxu0
        %v5818 = vadd.f32 0.0, %v5817
        %v5819 = vpop.f32.mrf.mxu0
        %v5820 = vpop.f32.mrf.mxu0
        %v5821 = vpop.f32.mrf.mxu0
        %5822 = vdwg.mxu0
        %v5823 = vadd.f32 %v5761, %v5810
        %v5824 = vadd.f32 %v5762, %v5813
        %v5825 = vadd.f32 %v5763, %v5818
        %v5826 = vrot.slane %v5693, 1
        %v5827 = vrot.slane %v5695, 2
        %v5828 = vor.u32 %v5826, %v5827
        %v5829 = vrot.slane %v5704, 1
        %v5830 = vrot.slane %v5700, 2
        %v5831 = vor.u32 %v5829, %v5830
        %v5832 = vsel %vm2809, %v5828, %v5831
        %v5834 = vsel %vm330, %v5832, 0
        %v5837 = vsel %vm330, %v5831, 0
        %5839 = vmatprep.subr.bf16.mxu0 0
        %5840 = vmatpush1.bf16.msra.mxu0 0
        %5841 = vmatprep.subr.bf16.mxu0 0
        %5842 = vmatpush1.bf16.msra.mxu0 0
        %5843 = vmatprep.subr.bf16.mxu0 0
        %5844 = vmatpush1.bf16.msra.mxu0 0
        %5845 = vmatprep.subr.bf16.mxu0 0
        %5846 = vmatpush1.bf16.msra.mxu0 0
        %5847 = vmatprep.subr.bf16.mxu0 0
        %5848 = vmatpush1.bf16.msra.mxu0 0
        %5849 = vmatprep.subr.bf16.mxu0 0
        %5850 = vmatpush1.bf16.msra.mxu0 0
        %5851 = vmatprep.subr.bf16.mxu0 0
        %5852 = vmatpush1.bf16.msra.mxu0 %v4463
        %5853 = vmatprep.subr.bf16.mxu0 0
        %5854 = vmatpush1.bf16.msra.mxu0 %v4462
        %5855 = vmatprep.subr.bf16.mxu0 0
        %5856 = vmatpush2.bf16.msra.mxu0 0
        %5857 = vmatprep.subr.bf16.mxu0 0
        %5858 = vmatpush2.bf16.msra.mxu0 0
        %5859 = vmatprep.subr.bf16.mxu0 0
        %5860 = vmatpush2.bf16.msra.mxu0 0
        %5861 = vmatprep.subr.bf16.mxu0 0
        %5862 = vmatpush2.bf16.msra.mxu0 0
        %5863 = vmatprep.subr.bf16.mxu0 0
        %5864 = vmatpush2.bf16.msra.mxu0 0
        %5865 = vmatprep.subr.bf16.mxu0 0
        %5866 = vmatpush2.bf16.msra.mxu0 0
        %5867 = vmatprep.subr.bf16.mxu0 0
        %5868 = vmatpush2.bf16.msra.mxu0 0
        %5869 = vmatprep.subr.bf16.mxu0 0
        %5870 = vmatpush2.bf16.msra.mxu0 0
        %5871 = vmatprep.mubr.bf16.mxu0 0
        %5872 = vmatmul.mubr.bf16.gmra.mxu0 %v5834
        %v5873 = vpop.f32.mrf.mxu0
        %v5874 = vadd.f32 0.0, %v5873
        %v5875 = vpop.f32.mrf.mxu0
        %v5876 = vpop.f32.mrf.mxu0
        %v5877 = vadd.f32 0.0, %v5876
        %v5878 = vpop.f32.mrf.mxu0
        %5879 = vmatprep.mubr.bf16.mxu0 0
        %5880 = vmatmul.mubr.bf16.gmra.mxu0 %v5837
        %v5881 = vpop.f32.mrf.mxu0
        %v5882 = vadd.f32 0.0, %v5881
        %v5883 = vpop.f32.mrf.mxu0
        %v5884 = vpop.f32.mrf.mxu0
        %v5885 = vpop.f32.mrf.mxu0
        %5886 = vdwg.mxu0
        %v5887 = vadd.f32 %v5823, %v5874
        %v5888 = vadd.f32 %v5824, %v5877
        %v5889 = vadd.f32 %v5825, %v5882
        %v5890 = vrot.slane %v5633, 2
        %v5891 = vrot.slane %v5692, 2
        %v5892 = vsel %vm2891, %v5890, %v5891
        %v5894 = vsel %vm330, %v5892, 0
        %v5897 = vsel %vm330, %v5891, 0
        %5899 = vmatprep.subr.bf16.mxu0 0
        %5900 = vmatpush1.bf16.msra.mxu0 0
        %5901 = vmatprep.subr.bf16.mxu0 0
        %5902 = vmatpush1.bf16.msra.mxu0 0
        %5903 = vmatprep.subr.bf16.mxu0 0
        %5904 = vmatpush1.bf16.msra.mxu0 0
        %5905 = vmatprep.subr.bf16.mxu0 0
        %5906 = vmatpush1.bf16.msra.mxu0 0
        %5907 = vmatprep.subr.bf16.mxu0 0
        %5908 = vmatpush1.bf16.msra.mxu0 0
        %5909 = vmatprep.subr.bf16.mxu0 0
        %5910 = vmatpush1.bf16.msra.mxu0 0
        %5911 = vmatprep.subr.bf16.mxu0 0
        %5912 = vmatpush1.bf16.msra.mxu0 %v4540
        %5913 = vmatprep.subr.bf16.mxu0 0
        %5914 = vmatpush1.bf16.msra.mxu0 %v4539
        %5915 = vmatprep.subr.bf16.mxu0 0
        %5916 = vmatpush2.bf16.msra.mxu0 0
        %5917 = vmatprep.subr.bf16.mxu0 0
        %5918 = vmatpush2.bf16.msra.mxu0 0
        %5919 = vmatprep.subr.bf16.mxu0 0
        %5920 = vmatpush2.bf16.msra.mxu0 0
        %5921 = vmatprep.subr.bf16.mxu0 0
        %5922 = vmatpush2.bf16.msra.mxu0 0
        %5923 = vmatprep.subr.bf16.mxu0 0
        %5924 = vmatpush2.bf16.msra.mxu0 0
        %5925 = vmatprep.subr.bf16.mxu0 0
        %5926 = vmatpush2.bf16.msra.mxu0 0
        %5927 = vmatprep.subr.bf16.mxu0 0
        %5928 = vmatpush2.bf16.msra.mxu0 0
        %5929 = vmatprep.subr.bf16.mxu0 0
        %5930 = vmatpush2.bf16.msra.mxu0 0
        %5931 = vmatprep.mubr.bf16.mxu0 0
        %5932 = vmatmul.mubr.bf16.gmra.mxu0 %v5894
        %v5933 = vpop.f32.mrf.mxu0
        %v5934 = vadd.f32 0.0, %v5933
        %v5935 = vpop.f32.mrf.mxu0
        %v5936 = vpop.f32.mrf.mxu0
        %v5937 = vadd.f32 0.0, %v5936
        %v5938 = vpop.f32.mrf.mxu0
        %5939 = vmatprep.mubr.bf16.mxu0 0
        %5940 = vmatmul.mubr.bf16.gmra.mxu0 %v5897
        %v5941 = vpop.f32.mrf.mxu0
        %v5942 = vadd.f32 0.0, %v5941
        %v5943 = vpop.f32.mrf.mxu0
        %v5944 = vpop.f32.mrf.mxu0
        %v5945 = vpop.f32.mrf.mxu0
        %5946 = vdwg.mxu0
        %v5947 = vadd.f32 %v5887, %v5934
        %v5948 = vadd.f32 %v5888, %v5937
        %v5949 = vadd.f32 %v5889, %v5942
        %v5950 = vadd.f32 %v5947, %v4604
        %v5951 = vadd.f32 %v5948, %v4604
        %v5952 = vadd.f32 %v5949, %v4604
        %v5953 = vmax.f32 %v5950, 0.0
        %v5954 = vmax.f32 %v5951, 0.0
        %v5955 = vmax.f32 %v5952, 0.0
        %v5956 = vmax.f32 %v4609, %v5953
        %v5957 = vmax.f32 %v4610, %v5954
        %v5958 = vmax.f32 %v4611, %v5955
        %vm5959 = vcmask 523264
        %5960 = vst.msk [vmem:[#allocation4] sm:$0xff] %vm5959, %v5956
        %5961 = vst.msk [vmem:[#allocation4 + $0x8] sm:$0xff] %vm5959, %v5957
        %5962 = vst.msk [vmem:[#allocation4 + $0x10] sm:$0xff] %vm5959, %v5958
        %v5963 = vld [vmem:[#allocation4] ss:$2 sm:$0xff]
        %s5964 = scalar_lea.vmem [#allocation4], 1
        %v5965 = vld [vmem:[%s5964] ss:$2 sm:$0xff]
        %v5966 = vmax.f32 %v5963, %v5965
        %v5967 = vpack.c.bf16 %v5966, %v5966
        %v5968 = vld [vmem:[#allocation5] sm:$0x1]
        %s5969 = smul.u32 %s2553, 7
        %s5970 = smul.u32 %s5969, 8
        %s5971 = smul.addr %s5970, 4
        %s5972 = scalar_lea.vmem %s5, %s5971
        %v5973 = vld [vmem:[%s5972] sm:$0xf]
        %v5974 = vld [vmem:[%s5972 + $0x4] sm:$0xf]
        %v5975 = vld [vmem:[%s5972 + $0x8] sm:$0xf]
        %v5976 = vld [vmem:[%s5972 + $0xc] sm:$0xf]
        %v5977 = vld [vmem:[%s5972 + $0x10] sm:$0xf]
        %v5978 = vld [vmem:[%s5972 + $0x14] sm:$0xf]
        %v5979 = vld [vmem:[%s5972 + $0x18] sm:$0xf]
        %v5980 = vld [vmem:[%s5972 + $0x1c] sm:$0xf]
        %v5989 = vunpack.c.l.b16 %v5973
        %v5990 = vunpack.c.l.b16 %v5974
        %v5991 = vunpack.c.l.b16 %v5975
        %v5992 = vunpack.c.l.b16 %v5976
        %v5993 = vunpack.c.l.b16 %v5977
        %v5994 = vunpack.c.l.b16 %v5978
        %v5995 = vunpack.c.l.b16 %v5979
        %v5996 = vunpack.c.l.b16 %v5980
        %v5997 = vpack.c.b16 %v5990, %v5989
        %v5998 = vpack.c.b16 %v5992, %v5991
        %v5999 = vpack.c.b16 %v5994, %v5993
        %v6000 = vpack.c.b16 %v5996, %v5995
        %v6006 = vsel %vm5959, %v5967, 0
        %6008 = vmatprep.subr.bf16.mxu0 0
        %6009 = vmatpush1.bf16.msra.mxu0 0
        %6010 = vmatprep.subr.bf16.mxu0 0
        %6011 = vmatpush1.bf16.msra.mxu0 0
        %6012 = vmatprep.subr.bf16.mxu0 0
        %6013 = vmatpush1.bf16.msra.mxu0 0
        %6014 = vmatprep.subr.bf16.mxu0 0
        %6015 = vmatpush1.bf16.msra.mxu0 0
        %6016 = vmatprep.subr.bf16.mxu0 0
        %6017 = vmatpush1.bf16.msra.mxu0 %v6000
        %6018 = vmatprep.subr.bf16.mxu0 0
        %6019 = vmatpush1.bf16.msra.mxu0 %v5999
        %6020 = vmatprep.subr.bf16.mxu0 0
        %6021 = vmatpush1.bf16.msra.mxu0 %v5998
        %6022 = vmatprep.subr.bf16.mxu0 0
        %6023 = vmatpush1.bf16.msra.mxu0 %v5997
        %6024 = vmatprep.subr.bf16.mxu0 0
        %6025 = vmatpush2.bf16.msra.mxu0 0
        %6026 = vmatprep.subr.bf16.mxu0 0
        %6027 = vmatpush2.bf16.msra.mxu0 0
        %6028 = vmatprep.subr.bf16.mxu0 0
        %6029 = vmatpush2.bf16.msra.mxu0 0
        %6030 = vmatprep.subr.bf16.mxu0 0
        %6031 = vmatpush2.bf16.msra.mxu0 0
        %6032 = vmatprep.subr.bf16.mxu0 0
        %6033 = vmatpush2.bf16.msra.mxu0 0
        %6034 = vmatprep.subr.bf16.mxu0 0
        %6035 = vmatpush2.bf16.msra.mxu0 0
        %6036 = vmatprep.subr.bf16.mxu0 0
        %6037 = vmatpush2.bf16.msra.mxu0 0
        %6038 = vmatprep.subr.bf16.mxu0 0
        %6039 = vmatpush2.bf16.msra.mxu0 0
        %6040 = vmatprep.mubr.bf16.mxu0 0
        %6041 = vmatmul.mubr.bf16.gmra.mxu0 %v6006
        %v6042 = vpop.f32.mrf.mxu0
        %v6043 = vadd.f32 0.0, %v6042
        %v6044 = vpop.f32.mrf.mxu0
        %v6045 = vpop.f32.mrf.mxu0
        %v6046 = vpop.f32.mrf.mxu0
        %6047 = vdwg.mxu0
        %v6048 = vadd.f32 %v5968, %v6043
        %6049 = vst [vmem:[#allocation5] sm:$0x1] %v6048
        %v6050 = vld [vmem:[#allocation5] sm:$0x1]
        %s6051 = sadd.s32 %s5969, 1
        %s6052 = smul.u32 %s6051, 8
        %s6053 = smul.addr %s6052, 4
        %s6054 = scalar_lea.vmem %s5, %s6053
        %v6055 = vld [vmem:[%s6054] sm:$0xf]
        %v6056 = vld [vmem:[%s6054 + $0x4] sm:$0xf]
        %v6057 = vld [vmem:[%s6054 + $0x8] sm:$0xf]
        %v6058 = vld [vmem:[%s6054 + $0xc] sm:$0xf]
        %v6059 = vld [vmem:[%s6054 + $0x10] sm:$0xf]
        %v6060 = vld [vmem:[%s6054 + $0x14] sm:$0xf]
        %v6061 = vld [vmem:[%s6054 + $0x18] sm:$0xf]
        %v6062 = vld [vmem:[%s6054 + $0x1c] sm:$0xf]
        %v6063 = vshrl.u32 %v5967, 16
        %v6073 = vunpack.c.l.b16 %v6055
        %v6074 = vunpack.c.l.b16 %v6056
        %v6075 = vunpack.c.l.b16 %v6057
        %v6076 = vunpack.c.l.b16 %v6058
        %v6077 = vunpack.c.l.b16 %v6059
        %v6078 = vunpack.c.l.b16 %v6060
        %v6079 = vunpack.c.l.b16 %v6061
        %v6080 = vunpack.c.l.b16 %v6062
        %v6081 = vpack.c.b16 %v6074, %v6073
        %v6082 = vpack.c.b16 %v6076, %v6075
        %v6083 = vpack.c.b16 %v6078, %v6077
        %v6084 = vpack.c.b16 %v6080, %v6079
        %v6090 = vsel %vm5959, %v6063, 0
        %6092 = vmatprep.subr.bf16.mxu0 0
        %6093 = vmatpush1.bf16.msra.mxu0 0
        %6094 = vmatprep.subr.bf16.mxu0 0
        %6095 = vmatpush1.bf16.msra.mxu0 0
        %6096 = vmatprep.subr.bf16.mxu0 0
        %6097 = vmatpush1.bf16.msra.mxu0 0
        %6098 = vmatprep.subr.bf16.mxu0 0
        %6099 = vmatpush1.bf16.msra.mxu0 0
        %6100 = vmatprep.subr.bf16.mxu0 0
        %6101 = vmatpush1.bf16.msra.mxu0 %v6084
        %6102 = vmatprep.subr.bf16.mxu0 0
        %6103 = vmatpush1.bf16.msra.mxu0 %v6083
        %6104 = vmatprep.subr.bf16.mxu0 0
        %6105 = vmatpush1.bf16.msra.mxu0 %v6082
        %6106 = vmatprep.subr.bf16.mxu0 0
        %6107 = vmatpush1.bf16.msra.mxu0 %v6081
        %6108 = vmatprep.subr.bf16.mxu0 0
        %6109 = vmatpush2.bf16.msra.mxu0 0
        %6110 = vmatprep.subr.bf16.mxu0 0
        %6111 = vmatpush2.bf16.msra.mxu0 0
        %6112 = vmatprep.subr.bf16.mxu0 0
        %6113 = vmatpush2.bf16.msra.mxu0 0
        %6114 = vmatprep.subr.bf16.mxu0 0
        %6115 = vmatpush2.bf16.msra.mxu0 0
        %6116 = vmatprep.subr.bf16.mxu0 0
        %6117 = vmatpush2.bf16.msra.mxu0 0
        %6118 = vmatprep.subr.bf16.mxu0 0
        %6119 = vmatpush2.bf16.msra.mxu0 0
        %6120 = vmatprep.subr.bf16.mxu0 0
        %6121 = vmatpush2.bf16.msra.mxu0 0
        %6122 = vmatprep.subr.bf16.mxu0 0
        %6123 = vmatpush2.bf16.msra.mxu0 0
        %6124 = vmatprep.mubr.bf16.mxu0 0
        %6125 = vmatmul.mubr.bf16.gmra.mxu0 %v6090
        %v6126 = vpop.f32.mrf.mxu0
        %v6127 = vadd.f32 0.0, %v6126
        %v6128 = vpop.f32.mrf.mxu0
        %v6129 = vpop.f32.mrf.mxu0
        %v6130 = vpop.f32.mrf.mxu0
        %6131 = vdwg.mxu0
        %v6132 = vadd.f32 %v6050, %v6127
        %6133 = vst [vmem:[#allocation5] sm:$0x1] %v6132
        %v6134 = vld [vmem:[#allocation5] sm:$0x1]
        %s6135 = sadd.s32 %s5969, 2
        %s6136 = smul.u32 %s6135, 8
        %s6137 = smul.addr %s6136, 4
        %s6138 = scalar_lea.vmem %s5, %s6137
        %v6139 = vld [vmem:[%s6138] sm:$0xf]
        %v6140 = vld [vmem:[%s6138 + $0x4] sm:$0xf]
        %v6141 = vld [vmem:[%s6138 + $0x8] sm:$0xf]
        %v6142 = vld [vmem:[%s6138 + $0xc] sm:$0xf]
        %v6143 = vld [vmem:[%s6138 + $0x10] sm:$0xf]
        %v6144 = vld [vmem:[%s6138 + $0x14] sm:$0xf]
        %v6145 = vld [vmem:[%s6138 + $0x18] sm:$0xf]
        %v6146 = vld [vmem:[%s6138 + $0x1c] sm:$0xf]
        %v6148 = vrot.slane %v5967, 1
        %v6157 = vunpack.c.l.b16 %v6139
        %v6158 = vunpack.c.l.b16 %v6140
        %v6159 = vunpack.c.l.b16 %v6141
        %v6160 = vunpack.c.l.b16 %v6142
        %v6161 = vunpack.c.l.b16 %v6143
        %v6162 = vunpack.c.l.b16 %v6144
        %v6163 = vunpack.c.l.b16 %v6145
        %v6164 = vunpack.c.l.b16 %v6146
        %v6165 = vpack.c.b16 %v6158, %v6157
        %v6166 = vpack.c.b16 %v6160, %v6159
        %v6167 = vpack.c.b16 %v6162, %v6161
        %v6168 = vpack.c.b16 %v6164, %v6163
        %v6174 = vsel %vm5959, %v6148, 0
        %6176 = vmatprep.subr.bf16.mxu0 0
        %6177 = vmatpush1.bf16.msra.mxu0 0
        %6178 = vmatprep.subr.bf16.mxu0 0
        %6179 = vmatpush1.bf16.msra.mxu0 0
        %6180 = vmatprep.subr.bf16.mxu0 0
        %6181 = vmatpush1.bf16.msra.mxu0 0
        %6182 = vmatprep.subr.bf16.mxu0 0
        %6183 = vmatpush1.bf16.msra.mxu0 0
        %6184 = vmatprep.subr.bf16.mxu0 0
        %6185 = vmatpush1.bf16.msra.mxu0 %v6168
        %6186 = vmatprep.subr.bf16.mxu0 0
        %6187 = vmatpush1.bf16.msra.mxu0 %v6167
        %6188 = vmatprep.subr.bf16.mxu0 0
        %6189 = vmatpush1.bf16.msra.mxu0 %v6166
        %6190 = vmatprep.subr.bf16.mxu0 0
        %6191 = vmatpush1.bf16.msra.mxu0 %v6165
        %6192 = vmatprep.subr.bf16.mxu0 0
        %6193 = vmatpush2.bf16.msra.mxu0 0
        %6194 = vmatprep.subr.bf16.mxu0 0
        %6195 = vmatpush2.bf16.msra.mxu0 0
        %6196 = vmatprep.subr.bf16.mxu0 0
        %6197 = vmatpush2.bf16.msra.mxu0 0
        %6198 = vmatprep.subr.bf16.mxu0 0
        %6199 = vmatpush2.bf16.msra.mxu0 0
        %6200 = vmatprep.subr.bf16.mxu0 0
        %6201 = vmatpush2.bf16.msra.mxu0 0
        %6202 = vmatprep.subr.bf16.mxu0 0
        %6203 = vmatpush2.bf16.msra.mxu0 0
        %6204 = vmatprep.subr.bf16.mxu0 0
        %6205 = vmatpush2.bf16.msra.mxu0 0
        %6206 = vmatprep.subr.bf16.mxu0 0
        %6207 = vmatpush2.bf16.msra.mxu0 0
        %6208 = vmatprep.mubr.bf16.mxu0 0
        %6209 = vmatmul.mubr.bf16.gmra.mxu0 %v6174
        %v6210 = vpop.f32.mrf.mxu0
        %v6211 = vadd.f32 0.0, %v6210
        %v6212 = vpop.f32.mrf.mxu0
        %v6213 = vpop.f32.mrf.mxu0
        %v6214 = vpop.f32.mrf.mxu0
        %6215 = vdwg.mxu0
        %v6216 = vadd.f32 %v6134, %v6211
        %6217 = vst [vmem:[#allocation5] sm:$0x1] %v6216
        %v6218 = vld [vmem:[#allocation5] sm:$0x1]
        %s6219 = sadd.s32 %s5969, 3
        %s6220 = smul.u32 %s6219, 8
        %s6221 = smul.addr %s6220, 4
        %s6222 = scalar_lea.vmem %s5, %s6221
        %v6223 = vld [vmem:[%s6222] sm:$0xf]
        %v6224 = vld [vmem:[%s6222 + $0x4] sm:$0xf]
        %v6225 = vld [vmem:[%s6222 + $0x8] sm:$0xf]
        %v6226 = vld [vmem:[%s6222 + $0xc] sm:$0xf]
        %v6227 = vld [vmem:[%s6222 + $0x10] sm:$0xf]
        %v6228 = vld [vmem:[%s6222 + $0x14] sm:$0xf]
        %v6229 = vld [vmem:[%s6222 + $0x18] sm:$0xf]
        %v6230 = vld [vmem:[%s6222 + $0x1c] sm:$0xf]
        %v6231 = vrot.slane %v6063, 1
        %v6240 = vunpack.c.l.b16 %v6223
        %v6241 = vunpack.c.l.b16 %v6224
        %v6242 = vunpack.c.l.b16 %v6225
        %v6243 = vunpack.c.l.b16 %v6226
        %v6244 = vunpack.c.l.b16 %v6227
        %v6245 = vunpack.c.l.b16 %v6228
        %v6246 = vunpack.c.l.b16 %v6229
        %v6247 = vunpack.c.l.b16 %v6230
        %v6248 = vpack.c.b16 %v6241, %v6240
        %v6249 = vpack.c.b16 %v6243, %v6242
        %v6250 = vpack.c.b16 %v6245, %v6244
        %v6251 = vpack.c.b16 %v6247, %v6246
        %v6257 = vsel %vm5959, %v6231, 0
        %6259 = vmatprep.subr.bf16.mxu0 0
        %6260 = vmatpush1.bf16.msra.mxu0 0
        %6261 = vmatprep.subr.bf16.mxu0 0
        %6262 = vmatpush1.bf16.msra.mxu0 0
        %6263 = vmatprep.subr.bf16.mxu0 0
        %6264 = vmatpush1.bf16.msra.mxu0 0
        %6265 = vmatprep.subr.bf16.mxu0 0
        %6266 = vmatpush1.bf16.msra.mxu0 0
        %6267 = vmatprep.subr.bf16.mxu0 0
        %6268 = vmatpush1.bf16.msra.mxu0 %v6251
        %6269 = vmatprep.subr.bf16.mxu0 0
        %6270 = vmatpush1.bf16.msra.mxu0 %v6250
        %6271 = vmatprep.subr.bf16.mxu0 0
        %6272 = vmatpush1.bf16.msra.mxu0 %v6249
        %6273 = vmatprep.subr.bf16.mxu0 0
        %6274 = vmatpush1.bf16.msra.mxu0 %v6248
        %6275 = vmatprep.subr.bf16.mxu0 0
        %6276 = vmatpush2.bf16.msra.mxu0 0
        %6277 = vmatprep.subr.bf16.mxu0 0
        %6278 = vmatpush2.bf16.msra.mxu0 0
        %6279 = vmatprep.subr.bf16.mxu0 0
        %6280 = vmatpush2.bf16.msra.mxu0 0
        %6281 = vmatprep.subr.bf16.mxu0 0
        %6282 = vmatpush2.bf16.msra.mxu0 0
        %6283 = vmatprep.subr.bf16.mxu0 0
        %6284 = vmatpush2.bf16.msra.mxu0 0
        %6285 = vmatprep.subr.bf16.mxu0 0
        %6286 = vmatpush2.bf16.msra.mxu0 0
        %6287 = vmatprep.subr.bf16.mxu0 0
        %6288 = vmatpush2.bf16.msra.mxu0 0
        %6289 = vmatprep.subr.bf16.mxu0 0
        %6290 = vmatpush2.bf16.msra.mxu0 0
        %6291 = vmatprep.mubr.bf16.mxu0 0
        %6292 = vmatmul.mubr.bf16.gmra.mxu0 %v6257
        %v6293 = vpop.f32.mrf.mxu0
        %v6294 = vadd.f32 0.0, %v6293
        %v6295 = vpop.f32.mrf.mxu0
        %v6296 = vpop.f32.mrf.mxu0
        %v6297 = vpop.f32.mrf.mxu0
        %6298 = vdwg.mxu0
        %v6299 = vadd.f32 %v6218, %v6294
        %6300 = vst [vmem:[#allocation5] sm:$0x1] %v6299
        %v6301 = vld [vmem:[#allocation5] sm:$0x1]
        %s6302 = sadd.s32 %s5969, 4
        %s6303 = smul.u32 %s6302, 8
        %s6304 = smul.addr %s6303, 4
        %s6305 = scalar_lea.vmem %s5, %s6304
        %v6306 = vld [vmem:[%s6305] sm:$0xf]
        %v6307 = vld [vmem:[%s6305 + $0x4] sm:$0xf]
        %v6308 = vld [vmem:[%s6305 + $0x8] sm:$0xf]
        %v6309 = vld [vmem:[%s6305 + $0xc] sm:$0xf]
        %v6310 = vld [vmem:[%s6305 + $0x10] sm:$0xf]
        %v6311 = vld [vmem:[%s6305 + $0x14] sm:$0xf]
        %v6312 = vld [vmem:[%s6305 + $0x18] sm:$0xf]
        %v6313 = vld [vmem:[%s6305 + $0x1c] sm:$0xf]
        %v6314 = vrot.slane %v5967, 2
        %v6323 = vunpack.c.l.b16 %v6306
        %v6324 = vunpack.c.l.b16 %v6307
        %v6325 = vunpack.c.l.b16 %v6308
        %v6326 = vunpack.c.l.b16 %v6309
        %v6327 = vunpack.c.l.b16 %v6310
        %v6328 = vunpack.c.l.b16 %v6311
        %v6329 = vunpack.c.l.b16 %v6312
        %v6330 = vunpack.c.l.b16 %v6313
        %v6331 = vpack.c.b16 %v6324, %v6323
        %v6332 = vpack.c.b16 %v6326, %v6325
        %v6333 = vpack.c.b16 %v6328, %v6327
        %v6334 = vpack.c.b16 %v6330, %v6329
        %v6340 = vsel %vm5959, %v6314, 0
        %6342 = vmatprep.subr.bf16.mxu0 0
        %6343 = vmatpush1.bf16.msra.mxu0 0
        %6344 = vmatprep.subr.bf16.mxu0 0
        %6345 = vmatpush1.bf16.msra.mxu0 0
        %6346 = vmatprep.subr.bf16.mxu0 0
        %6347 = vmatpush1.bf16.msra.mxu0 0
        %6348 = vmatprep.subr.bf16.mxu0 0
        %6349 = vmatpush1.bf16.msra.mxu0 0
        %6350 = vmatprep.subr.bf16.mxu0 0
        %6351 = vmatpush1.bf16.msra.mxu0 %v6334
        %6352 = vmatprep.subr.bf16.mxu0 0
        %6353 = vmatpush1.bf16.msra.mxu0 %v6333
        %6354 = vmatprep.subr.bf16.mxu0 0
        %6355 = vmatpush1.bf16.msra.mxu0 %v6332
        %6356 = vmatprep.subr.bf16.mxu0 0
        %6357 = vmatpush1.bf16.msra.mxu0 %v6331
        %6358 = vmatprep.subr.bf16.mxu0 0
        %6359 = vmatpush2.bf16.msra.mxu0 0
        %6360 = vmatprep.subr.bf16.mxu0 0
        %6361 = vmatpush2.bf16.msra.mxu0 0
        %6362 = vmatprep.subr.bf16.mxu0 0
        %6363 = vmatpush2.bf16.msra.mxu0 0
        %6364 = vmatprep.subr.bf16.mxu0 0
        %6365 = vmatpush2.bf16.msra.mxu0 0
        %6366 = vmatprep.subr.bf16.mxu0 0
        %6367 = vmatpush2.bf16.msra.mxu0 0
        %6368 = vmatprep.subr.bf16.mxu0 0
        %6369 = vmatpush2.bf16.msra.mxu0 0
        %6370 = vmatprep.subr.bf16.mxu0 0
        %6371 = vmatpush2.bf16.msra.mxu0 0
        %6372 = vmatprep.subr.bf16.mxu0 0
        %6373 = vmatpush2.bf16.msra.mxu0 0
        %6374 = vmatprep.mubr.bf16.mxu0 0
        %6375 = vmatmul.mubr.bf16.gmra.mxu0 %v6340
        %v6376 = vpop.f32.mrf.mxu0
        %v6377 = vadd.f32 0.0, %v6376
        %v6378 = vpop.f32.mrf.mxu0
        %v6379 = vpop.f32.mrf.mxu0
        %v6380 = vpop.f32.mrf.mxu0
        %6381 = vdwg.mxu0
        %v6382 = vadd.f32 %v6301, %v6377
        %6383 = vst [vmem:[#allocation5] sm:$0x1] %v6382
        %v6384 = vld [vmem:[#allocation5] sm:$0x1]
        %s6385 = sadd.s32 %s5969, 5
        %s6386 = smul.u32 %s6385, 8
        %s6387 = smul.addr %s6386, 4
        %s6388 = scalar_lea.vmem %s5, %s6387
        %v6389 = vld [vmem:[%s6388] sm:$0xf]
        %v6390 = vld [vmem:[%s6388 + $0x4] sm:$0xf]
        %v6391 = vld [vmem:[%s6388 + $0x8] sm:$0xf]
        %v6392 = vld [vmem:[%s6388 + $0xc] sm:$0xf]
        %v6393 = vld [vmem:[%s6388 + $0x10] sm:$0xf]
        %v6394 = vld [vmem:[%s6388 + $0x14] sm:$0xf]
        %v6395 = vld [vmem:[%s6388 + $0x18] sm:$0xf]
        %v6396 = vld [vmem:[%s6388 + $0x1c] sm:$0xf]
        %v6397 = vrot.slane %v6063, 2
        %v6406 = vunpack.c.l.b16 %v6389
        %v6407 = vunpack.c.l.b16 %v6390
        %v6408 = vunpack.c.l.b16 %v6391
        %v6409 = vunpack.c.l.b16 %v6392
        %v6410 = vunpack.c.l.b16 %v6393
        %v6411 = vunpack.c.l.b16 %v6394
        %v6412 = vunpack.c.l.b16 %v6395
        %v6413 = vunpack.c.l.b16 %v6396
        %v6414 = vpack.c.b16 %v6407, %v6406
        %v6415 = vpack.c.b16 %v6409, %v6408
        %v6416 = vpack.c.b16 %v6411, %v6410
        %v6417 = vpack.c.b16 %v6413, %v6412
        %v6423 = vsel %vm5959, %v6397, 0
        %6425 = vmatprep.subr.bf16.mxu0 0
        %6426 = vmatpush1.bf16.msra.mxu0 0
        %6427 = vmatprep.subr.bf16.mxu0 0
        %6428 = vmatpush1.bf16.msra.mxu0 0
        %6429 = vmatprep.subr.bf16.mxu0 0
        %6430 = vmatpush1.bf16.msra.mxu0 0
        %6431 = vmatprep.subr.bf16.mxu0 0
        %6432 = vmatpush1.bf16.msra.mxu0 0
        %6433 = vmatprep.subr.bf16.mxu0 0
        %6434 = vmatpush1.bf16.msra.mxu0 %v6417
        %6435 = vmatprep.subr.bf16.mxu0 0
        %6436 = vmatpush1.bf16.msra.mxu0 %v6416
        %6437 = vmatprep.subr.bf16.mxu0 0
        %6438 = vmatpush1.bf16.msra.mxu0 %v6415
        %6439 = vmatprep.subr.bf16.mxu0 0
        %6440 = vmatpush1.bf16.msra.mxu0 %v6414
        %6441 = vmatprep.subr.bf16.mxu0 0
        %6442 = vmatpush2.bf16.msra.mxu0 0
        %6443 = vmatprep.subr.bf16.mxu0 0
        %6444 = vmatpush2.bf16.msra.mxu0 0
        %6445 = vmatprep.subr.bf16.mxu0 0
        %6446 = vmatpush2.bf16.msra.mxu0 0
        %6447 = vmatprep.subr.bf16.mxu0 0
        %6448 = vmatpush2.bf16.msra.mxu0 0
        %6449 = vmatprep.subr.bf16.mxu0 0
        %6450 = vmatpush2.bf16.msra.mxu0 0
        %6451 = vmatprep.subr.bf16.mxu0 0
        %6452 = vmatpush2.bf16.msra.mxu0 0
        %6453 = vmatprep.subr.bf16.mxu0 0
        %6454 = vmatpush2.bf16.msra.mxu0 0
        %6455 = vmatprep.subr.bf16.mxu0 0
        %6456 = vmatpush2.bf16.msra.mxu0 0
        %6457 = vmatprep.mubr.bf16.mxu0 0
        %6458 = vmatmul.mubr.bf16.gmra.mxu0 %v6423
        %v6459 = vpop.f32.mrf.mxu0
        %v6460 = vadd.f32 0.0, %v6459
        %v6461 = vpop.f32.mrf.mxu0
        %v6462 = vpop.f32.mrf.mxu0
        %v6463 = vpop.f32.mrf.mxu0
        %6464 = vdwg.mxu0
        %v6465 = vadd.f32 %v6384, %v6460
        %6466 = vst [vmem:[#allocation5] sm:$0x1] %v6465
        %v6467 = vld [vmem:[#allocation5] sm:$0x1]
        %s6468 = sadd.s32 %s5969, 6
        %s6469 = smul.u32 %s6468, 8
        %s6470 = smul.addr %s6469, 4
        %s6471 = scalar_lea.vmem %s5, %s6470
        %v6472 = vld [vmem:[%s6471] sm:$0xf]
        %v6473 = vld [vmem:[%s6471 + $0x4] sm:$0xf]
        %v6474 = vld [vmem:[%s6471 + $0x8] sm:$0xf]
        %v6475 = vld [vmem:[%s6471 + $0xc] sm:$0xf]
        %v6476 = vld [vmem:[%s6471 + $0x10] sm:$0xf]
        %v6477 = vld [vmem:[%s6471 + $0x14] sm:$0xf]
        %v6478 = vld [vmem:[%s6471 + $0x18] sm:$0xf]
        %v6479 = vld [vmem:[%s6471 + $0x1c] sm:$0xf]
        %v6480 = vrot.slane %v5967, 3
        %v6489 = vunpack.c.l.b16 %v6472
        %v6490 = vunpack.c.l.b16 %v6473
        %v6491 = vunpack.c.l.b16 %v6474
        %v6492 = vunpack.c.l.b16 %v6475
        %v6493 = vunpack.c.l.b16 %v6476
        %v6494 = vunpack.c.l.b16 %v6477
        %v6495 = vunpack.c.l.b16 %v6478
        %v6496 = vunpack.c.l.b16 %v6479
        %v6497 = vpack.c.b16 %v6490, %v6489
        %v6498 = vpack.c.b16 %v6492, %v6491
        %v6499 = vpack.c.b16 %v6494, %v6493
        %v6500 = vpack.c.b16 %v6496, %v6495
        %v6506 = vsel %vm5959, %v6480, 0
        %6508 = vmatprep.subr.bf16.mxu0 0
        %6509 = vmatpush1.bf16.msra.mxu0 0
        %6510 = vmatprep.subr.bf16.mxu0 0
        %6511 = vmatpush1.bf16.msra.mxu0 0
        %6512 = vmatprep.subr.bf16.mxu0 0
        %6513 = vmatpush1.bf16.msra.mxu0 0
        %6514 = vmatprep.subr.bf16.mxu0 0
        %6515 = vmatpush1.bf16.msra.mxu0 0
        %6516 = vmatprep.subr.bf16.mxu0 0
        %6517 = vmatpush1.bf16.msra.mxu0 %v6500
        %6518 = vmatprep.subr.bf16.mxu0 0
        %6519 = vmatpush1.bf16.msra.mxu0 %v6499
        %6520 = vmatprep.subr.bf16.mxu0 0
        %6521 = vmatpush1.bf16.msra.mxu0 %v6498
        %6522 = vmatprep.subr.bf16.mxu0 0
        %6523 = vmatpush1.bf16.msra.mxu0 %v6497
        %6524 = vmatprep.subr.bf16.mxu0 0
        %6525 = vmatpush2.bf16.msra.mxu0 0
        %6526 = vmatprep.subr.bf16.mxu0 0
        %6527 = vmatpush2.bf16.msra.mxu0 0
        %6528 = vmatprep.subr.bf16.mxu0 0
        %6529 = vmatpush2.bf16.msra.mxu0 0
        %6530 = vmatprep.subr.bf16.mxu0 0
        %6531 = vmatpush2.bf16.msra.mxu0 0
        %6532 = vmatprep.subr.bf16.mxu0 0
        %6533 = vmatpush2.bf16.msra.mxu0 0
        %6534 = vmatprep.subr.bf16.mxu0 0
        %6535 = vmatpush2.bf16.msra.mxu0 0
        %6536 = vmatprep.subr.bf16.mxu0 0
        %6537 = vmatpush2.bf16.msra.mxu0 0
        %6538 = vmatprep.subr.bf16.mxu0 0
        %6539 = vmatpush2.bf16.msra.mxu0 0
        %6540 = vmatprep.mubr.bf16.mxu0 0
        %6541 = vmatmul.mubr.bf16.gmra.mxu0 %v6506
        %v6542 = vpop.f32.mrf.mxu0
        %v6543 = vadd.f32 0.0, %v6542
        %v6544 = vpop.f32.mrf.mxu0
        %v6545 = vpop.f32.mrf.mxu0
        %v6546 = vpop.f32.mrf.mxu0
        %6547 = vdwg.mxu0
        %v6548 = vadd.f32 %v6467, %v6543
        %6549 = vst [vmem:[#allocation5] sm:$0x1] %v6548
      $region68: #{mnist500k_forward.1} parent=55 // loop_footer
        %s2557 = sadd.s32 1, %s2553
      $region69: #{mnist500k_forward.1} parent=55 // loop_footer_branch
        %2552 = sbr.rel target = $region65
      $region70: #{mnist500k_forward.1} parent=55 // loop_exit
        _
      %v6550 = vld [vmem:[#allocation5] sm:$0x1]
      %v6551 = vld [vmem:[%s6] sm:$0x1]
      %v6552 = vadd.f32 %v6550, %v6551
      %v6553 = vpack.c.bf16 %v6552, %v6552
      %v6554 = vld [vmem:[%s7] sm:$0xf]
      %v6555 = vld [vmem:[%s7 + $0x4] sm:$0xf]
      %v6556 = vld [vmem:[%s7 + $0x8] sm:$0xf]
      %v6557 = vld [vmem:[%s7 + $0xc] sm:$0xf]
      %v6558 = vld [vmem:[%s7 + $0x10] sm:$0xf]
      %v6559 = vld [vmem:[%s7 + $0x14] sm:$0xf]
      %v6560 = vld [vmem:[%s7 + $0x18] sm:$0xf]
      %v6561 = vld [vmem:[%s7 + $0x1c] sm:$0xf]
      %v6562 = vld [vmem:[%s7 + $0x20] sm:$0xf]
      %v6563 = vld [vmem:[%s7 + $0x24] sm:$0xf]
      %v6564 = vld [vmem:[%s7 + $0x28] sm:$0xf]
      %v6565 = vld [vmem:[%s7 + $0x2c] sm:$0xf]
      %v6566 = vld [vmem:[%s7 + $0x30] sm:$0xf]
      %v6567 = vld [vmem:[%s7 + $0x34] sm:$0xf]
      %v6568 = vld [vmem:[%s7 + $0x38] sm:$0xf]
      %v6569 = vld [vmem:[%s7 + $0x3c] sm:$0xf]
      %v6570 = vld [vmem:[%s8] sm:$0x1]
      %v6587 = vunpack.c.l.b16 %v6554
      %v6588 = vunpack.c.l.b16 %v6555
      %v6589 = vunpack.c.l.b16 %v6556
      %v6590 = vunpack.c.l.b16 %v6557
      %v6591 = vunpack.c.l.b16 %v6558
      %v6592 = vunpack.c.l.b16 %v6559
      %v6593 = vunpack.c.l.b16 %v6560
      %v6594 = vunpack.c.l.b16 %v6561
      %v6595 = vunpack.c.l.b16 %v6562
      %v6596 = vunpack.c.l.b16 %v6563
      %v6597 = vunpack.c.l.b16 %v6564
      %v6598 = vunpack.c.l.b16 %v6565
      %v6599 = vunpack.c.l.b16 %v6566
      %v6600 = vunpack.c.l.b16 %v6567
      %v6601 = vunpack.c.l.b16 %v6568
      %v6602 = vunpack.c.l.b16 %v6569
      %v6603 = vpack.c.b16 %v6588, %v6587
      %v6604 = vpack.c.b16 %v6590, %v6589
      %v6605 = vpack.c.b16 %v6592, %v6591
      %v6606 = vpack.c.b16 %v6594, %v6593
      %v6607 = vpack.c.b16 %v6596, %v6595
      %v6608 = vpack.c.b16 %v6598, %v6597
      %v6609 = vpack.c.b16 %v6600, %v6599
      %v6610 = vpack.c.b16 %v6602, %v6601
      %6619 = vmatprep.subr.bf16.mxu0 0
      %6620 = vmatpush1.bf16.msra.mxu0 %v6610
      %6621 = vmatprep.subr.bf16.mxu0 0
      %6622 = vmatpush1.bf16.msra.mxu0 %v6609
      %6623 = vmatprep.subr.bf16.mxu0 0
      %6624 = vmatpush1.bf16.msra.mxu0 %v6608
      %6625 = vmatprep.subr.bf16.mxu0 0
      %6626 = vmatpush1.bf16.msra.mxu0 %v6607
      %6627 = vmatprep.subr.bf16.mxu0 0
      %6628 = vmatpush1.bf16.msra.mxu0 %v6606
      %6629 = vmatprep.subr.bf16.mxu0 0
      %6630 = vmatpush1.bf16.msra.mxu0 %v6605
      %6631 = vmatprep.subr.bf16.mxu0 0
      %6632 = vmatpush1.bf16.msra.mxu0 %v6604
      %6633 = vmatprep.subr.bf16.mxu0 0
      %6634 = vmatpush1.bf16.msra.mxu0 %v6603
      %6635 = vmatprep.subr.bf16.mxu0 0
      %6636 = vmatpush2.bf16.msra.mxu0 0
      %6637 = vmatprep.subr.bf16.mxu0 0
      %6638 = vmatpush2.bf16.msra.mxu0 0
      %6639 = vmatprep.subr.bf16.mxu0 0
      %6640 = vmatpush2.bf16.msra.mxu0 0
      %6641 = vmatprep.subr.bf16.mxu0 0
      %6642 = vmatpush2.bf16.msra.mxu0 0
      %6643 = vmatprep.subr.bf16.mxu0 0
      %6644 = vmatpush2.bf16.msra.mxu0 0
      %6645 = vmatprep.subr.bf16.mxu0 0
      %6646 = vmatpush2.bf16.msra.mxu0 0
      %6647 = vmatprep.subr.bf16.mxu0 0
      %6648 = vmatpush2.bf16.msra.mxu0 0
      %6649 = vmatprep.subr.bf16.mxu0 0
      %6650 = vmatpush2.bf16.msra.mxu0 0
      %6651 = vmatprep.mubr.bf16.mxu0 0
      %6652 = vmatmul.mubr.bf16.gmra.mxu0 %v6553
      %v6653 = vpop.f32.mrf.mxu0
      %v6654 = vadd.f32 %v6570, %v6653
      %v6655 = vpop.f32.mrf.mxu0
      %v6656 = vpop.f32.mrf.mxu0
      %v6657 = vpop.f32.mrf.mxu0
      %6658 = vdwg.mxu0
      %vm6659 = vcmask 73728
      %6660 = vst.msk [vmem:[%s328] sm:$0x1] %vm6659, %v6654
      %p6661 = scmp.lt.s32.totalorder %s20, 1
      %s6662 = scalar_select %p6661, %s20, 1
      %s6663 = scalar_lea.vmem %s9, %s6662
      // Predicated region
      $region71: #{mnist500k_forward.1} parent=55 // pred_check
        %p6664 = pneg %p232
      $region72: #{mnist500k_forward.1} parent=55 // pred_check_branch
        %6666 = sbr.rel (%p6664) target = $region74
      $region73: #{mnist500k_forward.1} parent=55 // pred_region
        _
      $region74: #{mnist500k_forward.1} parent=55 // pred_fallthru
        _
    $region56: #{mnist500k_forward.1} parent=5 // pred_fallthru
      _
    %p6667 = scmp.le.s32.totalorder 2, %s15
    // Predicated region
    $region75: #{mnist500k_forward.1} parent=5 // pred_check
      %p6668 = pneg %p6667
    $region76: #{mnist500k_forward.1} parent=5 // pred_check_branch
      %6670 = sbr.rel (%p6668) target = $region78
    $region77: #{mnist500k_forward.1} parent=5 // pred_region
      %s6671 = ssub.s32 %s15, 2
      // Predicated region
      $region79: #{mnist500k_forward.1} parent=77 // pred_check
        %p6672 = pneg %p238
      $region80: #{mnist500k_forward.1} parent=77 // pred_check_branch
        %6674 = sbr.rel (%p6672) target = $region82
      $region81: #{mnist500k_forward.1} parent=77 // pred_region
        %p6675 = scmp.lt.s32.totalorder %s21, 1
        %s6676 = scalar_select %p6675, %s21, 1
        %s6677 = scalar_lea.vmem %s9, %s6676
      $region82: #{mnist500k_forward.1} parent=77 // pred_fallthru
        _
    $region78: #{mnist500k_forward.1} parent=5 // pred_fallthru
      _
  $region6: #{mnist500k_forward.1} parent=0 // loop_footer
    %s19 = sadd.s32 1, %s15
  $region7: #{mnist500k_forward.1} parent=0 // loop_footer_branch
    %14 = sbr.rel target = $region3
  $region8: #{mnist500k_forward.1} parent=0 // loop_exit
    _

</llo_original>
